<compile_context>
chip_gen: v7x
topology: tpu7x:2x2x1
jax: 0.10.0
libtpu: 0.0.40
codegen_flags: <defaults>
</compile_context>

<pallas_src>
import numpy as np
import jax
import jax.numpy as jnp
from jax import lax
from jax.experimental import pallas as pl
from jax.experimental.pallas import tpu as pltpu


# ----------------------------------------------------------------------------
# Pallas kernel: NB batch elements per grid step, stacked along sublanes.
# ----------------------------------------------------------------------------
def caser_kernel(items_ref, user_ref, wc_ref, bh_ref, w1h_ref, b1_ref,
                 w2z_ref, w2u_ref, b2_ref, out_ref):
    NB, TC = out_ref.shape
    NBL, E = items_ref.shape
    L = NBL // NB
    T = w2z_ref.shape[1]
    C = w2z_ref.shape[2]
    LFh = bh_ref.shape[1]
    f32 = jnp.float32

    # ---- in-kernel causal lag expansion: feats[(b,t), j*E+e] = items[b, t-j, e] ----
    items = items_ref[...]                                       # (NB*L, E) f32
    row = lax.broadcasted_iota(jnp.int32, (NBL, E), 0) % L       # time index within group
    parts = [items]
    for j in range(1, L):
        shifted = pltpu.roll(items, j, 0)                        # shifted[r] = items[r-j]
        # rows with t < j would pull from the previous batch group -> zero (causal pad)
        parts.append(jnp.where(row >= j, shifted, 0.0))
    feats = jnp.concatenate(parts, axis=1).astype(jnp.bfloat16)  # (NB*L, L*E)

    # ---- single fused matmul: all horizontal convs + (conv_v folded into fc1) ----
    hz = jnp.dot(feats, wc_ref[...], preferred_element_type=f32)  # (NB*L, L*Fh + E)
    hconv = hz[:, :LFh]                                           # lane-aligned split
    zvert = hz[:, LFh:]                                           # (NB*L, E)

    hconv = jnp.maximum(hconv + bh_ref[...], 0.0)                 # act_conv = ReLU

    # ---- vectorized causal cummax over time (Hillis-Steele doubling + row mask) ----
    # NOTE: masking the shifted value to 0 is only a no-op under max because
    # hconv >= 0 after ReLU; if act_conv changes, switch the mask fill to -inf.
    rowc = lax.broadcasted_iota(jnp.int32, hconv.shape, 0) % L
    s = 1
    while s < L:
        shifted = pltpu.roll(hconv, s, 0)
        hconv = jnp.maximum(hconv, jnp.where(rowc >= s, shifted, 0.0))
        s *= 2

    # ---- fc1 (act_fc = ReLU); conv_v bias + fc1 bias folded into b1_ref ----
    z = zvert + jnp.dot(hconv.astype(jnp.bfloat16), w1h_ref[...],
                        preferred_element_type=f32)
    z = jnp.maximum(z + b1_ref[...], 0.0)                         # (NB*L, E)

    # ---- vectorized candidate scoring over all NB rows; lane-packed output ----
    z_last = z.reshape(NB, L, E)[:, L - T:, :]                    # (NB, T, E)
    user = user_ref[...].astype(f32)                              # (NB, E)
    w2z = w2z_ref[...].astype(f32)                                # (NB, T, C, E)
    w2u = w2u_ref[...].astype(f32)
    for t in range(T):                                            # T is small & static
        s_t = (jnp.sum(w2z[:, t] * z_last[:, t, :][:, None, :], axis=-1)
               + jnp.sum(w2u[:, t] * user[:, None, :], axis=-1))  # (NB, C)
        out_ref[:, t * C:(t + 1) * C] = s_t + b2_ref[:, t * C:(t + 1) * C]


# ----------------------------------------------------------------------------
# One-time host-side weight re-indexing (do NOT rebuild per forward call).
# ----------------------------------------------------------------------------
def prepare_caser_weights(params):
    E = params["item_emb"].shape[1]
    Fv = params["conv_v_w"].shape[0]
    Fh = params["conv_h_w"][0].shape[0]
    L = len(params["conv_h_w"])
    f32, bf16 = jnp.float32, jnp.bfloat16

    # Fused horizontal-conv weight: Whb[j*E+e, h*Fh+f] = conv_h_w[h][f, 0, h-j, e]
    Whb = np.zeros((L * E, L * Fh), np.float32)
    for h in range(L):
        w = np.asarray(params["conv_h_w"][h])[:, 0, :, :]        # (Fh, h+1, E)
        for j in range(h + 1):
            Whb[j * E:(j + 1) * E, h * Fh:(h + 1) * Fh] = w[:, h - j, :].T
    bh_row = np.concatenate([np.asarray(params["conv_h_b"][h]) for h in range(L)])

    # Fold conv_v (+ bias) into fc1's vertical columns (inference; dropout = identity).
    W1T = np.asarray(params["fc1_w"]).T.astype(np.float32)       # (D, E)
    W1T_v = W1T[:Fv * E].reshape(Fv, E, E)                       # (Fv, E_in, E_out)
    wv_rev = np.asarray(params["conv_v_w"])[:, 0, ::-1, 0]       # (Fv, L): wv[f, L-1-j]
    A = np.einsum("fj,feo->jeo", wv_rev, W1T_v).reshape(L * E, E)
    b1_fold = np.asarray(params["fc1_b"]) + np.einsum(
        "f,feo->o", np.asarray(params["conv_v_b"]), W1T_v)

    # fc1 horizontal rows permuted from (f*L + h) to (h*Fh + f) order.
    W1h = W1T[Fv * E:].reshape(Fh, L, E).transpose(1, 0, 2).reshape(L * Fh, E)

    return {
        "Wc": jnp.asarray(np.concatenate([Whb, A], axis=1), bf16),   # (L*E, L*Fh + E)
        "bh_row": jnp.asarray(bh_row, f32)[None, :],                 # (1, L*Fh)
        "W1h": jnp.asarray(W1h, bf16),                               # (L*Fh, E)
        "b1": jnp.asarray(b1_fold, f32)[None, :],                    # (1, E)
        "item_emb": jnp.asarray(params["item_emb"], f32),
        "user_emb": jnp.asarray(params["user_emb"], bf16),
        "W2": jnp.asarray(params["W2"], bf16),
        "b2": jnp.asarray(params["b2"], f32),
    }


def _pick_nb(B, L):
    """Batch-packing factor: fill the MXU row dim (NB*L >= 256 for v6e/v7x), keep NB a
    multiple of 8 for sublane alignment, and prefer >=2 grid steps (v7x dual TC) when B
    allows without dropping below 128 matmul rows."""
    nb = 8 * max(1, -(-256 // (8 * L)))
    while (nb % 16 == 0) and nb * L > 128 and -(-B // nb) < 2 and -(-B // (nb // 2)) >= 2:
        nb //= 2
    return nb


# ----------------------------------------------------------------------------
# Wrapper: embedding gathers (XLA glue), batch padding and pallas_call.
# ----------------------------------------------------------------------------
def caser_forward_pallas(prepared, input_seqs, poss_item_seqs, user_var):
    B, L = input_seqs.shape
    T, C = poss_item_seqs.shape[1], poss_item_seqs.shape[2]
    E = prepared["item_emb"].shape[1]
    LFh = prepared["bh_row"].shape[1]
    f32 = jnp.float32

    NB = _pick_nb(B, L)
    B_pad = -(-B // NB) * NB
    if B_pad != B:
        pad = B_pad - B
        input_seqs = jnp.concatenate(
            [input_seqs, jnp.zeros((pad, L), input_seqs.dtype)], axis=0)
        poss_item_seqs = jnp.concatenate(
            [poss_item_seqs, jnp.zeros((pad, T, C), poss_item_seqs.dtype)], axis=0)
        user_var = jnp.concatenate(
            [user_var, jnp.zeros((pad,), user_var.dtype)], axis=0)

    # Embedding gathers; activations stay compact — lag expansion happens in-kernel.
    items_flat = prepared["item_emb"][input_seqs].reshape(B_pad * L, E)   # f32
    user_g = prepared["user_emb"][user_var]                               # (B_pad, E) bf16
    w2_g = prepared["W2"][poss_item_seqs]                                 # (B_pad,T,C,2E) bf16
    w2z_g, w2u_g = w2_g[..., :E], w2_g[..., E:]
    b2_g = prepared["b2"][poss_item_seqs][..., 0].reshape(B_pad, T * C)   # f32

    # Per-step VMEM footprint is < 2 MiB even at NB=32, so the default scoped VMEM
    # limit is fine on v5e/v6e (128 MiB) and v7x (64 MiB).  TODO(synk): if T*C or NB is
    # scaled up, re-budget against v7x's 64 MiB and set vmem_limit_bytes explicitly.
    grid_spec = pltpu.PrefetchScalarGridSpec(
        num_scalar_prefetch=0,
        grid=(B_pad // NB,),
        in_specs=[
            pl.BlockSpec((NB * L, E), lambda b: (b, 0)),            # compact item slab
            pl.BlockSpec((NB, E), lambda b: (b, 0)),                # user embeddings
            pl.BlockSpec((L * E, LFh + E), lambda b: (0, 0)),       # fused conv_h | conv_v@fc1
            pl.BlockSpec((1, LFh), lambda b: (0, 0)),               # conv_h bias row
            pl.BlockSpec((LFh, E), lambda b: (0, 0)),               # fc1 horizontal rows
            pl.BlockSpec((1, E), lambda b: (0, 0)),                 # folded fc1 bias
            pl.BlockSpec((NB, T, C, E), lambda b: (b, 0, 0, 0)),    # W2 z-half (bf16)
            pl.BlockSpec((NB, T, C, E), lambda b: (b, 0, 0, 0)),    # W2 user-half (bf16)
            pl.BlockSpec((NB, T * C), lambda b: (b, 0)),            # b2 (flattened)
        ],
        out_specs=pl.BlockSpec((NB, T * C), lambda b: (b, 0)),      # lane-packed scores
    )
    out = pl.pallas_call(
        caser_kernel,
        out_shape=jax.ShapeDtypeStruct((B_pad, T * C), f32),
        grid_spec=grid_spec,
        compiler_params=pltpu.CompilerParams(dimension_semantics=("parallel",)),
    )(items_flat, user_g, prepared["Wc"], prepared["bh_row"], prepared["W1h"],
      prepared["b1"], w2z_g, w2u_g, b2_g)
    return out[:B].reshape(B, T, C)


# ----------------------------------------------------------------------------
# Pure-JAX reference that mirrors the PyTorch forward (for validation).
# ----------------------------------------------------------------------------
def caser_forward_reference(params, input_seqs, poss_item_seqs, user_var):
    B, L = input_seqs.shape
    E = params["item_emb"].shape[1]
    Fv = params["conv_v_w"].shape[0]
    Fh = params["conv_h_w"][0].shape[0]
    HI = jax.lax.Precision.HIGHEST

    item_embs = params["item_emb"][input_seqs]                   # (B, L, E)
    x = item_embs[:, None, :, :]                                 # NCHW: (B, 1, L, E)
    user_emb = params["user_emb"][user_var]                      # (B, E)

    pad = jnp.pad(x, ((0, 0), (0, 0), (L - 1, 0), (0, 0)))
    out_v = lax.conv_general_dilated(
        pad, params["conv_v_w"], (1, 1), "VALID",
        dimension_numbers=("NCHW", "OIHW", "NCHW"), precision=HI)
    out_v = out_v + params["conv_v_b"][None, :, None, None]       # (B, Fv, L, E)
    out_v = jnp.transpose(out_v, (0, 2, 1, 3)).reshape(B, L, Fv * E)

    out_hs = []
    for h in range(L):
        padh = jnp.pad(x, ((0, 0), (0, 0), (h, 0), (0, 0)))
        co = lax.conv_general_dilated(
            padh, params["conv_h_w"][h], (1, 1), "VALID",
            dimension_numbers=("NCHW", "OIHW", "NCHW"), precision=HI)
        co = jax.nn.relu(co + params["conv_h_b"][h][None, :, None, None])  # (B,Fh,L,1)
        out_hs.append(lax.cummax(co, axis=2))
    out_hs = jnp.stack(out_hs, axis=0)                            # (L, B, Fh, L, 1)
    out_h = jnp.transpose(out_hs, (1, 3, 2, 4, 0)).reshape(B, L, Fh * L)

    out = jnp.concatenate([out_v, out_h], axis=2)
    z = jax.nn.relu(jnp.einsum("bld,od->blo", out, params["fc1_w"],
                               precision=HI) + params["fc1_b"])
    ue = jnp.repeat(user_emb[:, None, :], L, axis=1)
    xx = jnp.concatenate([z, ue], axis=-1)[:, :, None, :]         # (B, L, 1, 2E)
    w2 = params["W2"][poss_item_seqs]                             # (B, T, C, 2E)
    b2 = params["b2"][poss_item_seqs]                             # (B, T, C, 1)
    xx = xx[:, L - poss_item_seqs.shape[1]:, :, :]
    return (w2 * xx).sum(-1) + b2[..., 0]


# ----------------------------------------------------------------------------
def init_params(key, num_users, num_items, L, E, Fv, Fh):
    ks = jax.random.split(key, 10)
    s = 0.1
    return {
        "user_emb": (jax.random.normal(ks[0], (num_users + 1, E)) * s).astype(jnp.float32),
        "item_emb": (jax.random.normal(ks[1], (num_items + 1, E)) * s).astype(jnp.float32),
        "conv_v_w": (jax.random.normal(ks[2], (Fv, 1, L, 1)) * s).astype(jnp.float32),
        "conv_v_b": (jax.random.normal(ks[3], (Fv,)) * s).astype(jnp.float32),
        "conv_h_w": [(jax.random.normal(jax.random.fold_in(ks[4], h),
                                        (Fh, 1, h + 1, E)) * s).astype(jnp.float32)
                     for h in range(L)],
        "conv_h_b": [(jax.random.normal(jax.random.fold_in(ks[5], h),
                                        (Fh,)) * s).astype(jnp.float32)
                     for h in range(L)],
        "fc1_w": (jax.random.normal(ks[6], (E, Fv * E + Fh * L)) * s).astype(jnp.float32),
        "fc1_b": (jax.random.normal(ks[7], (E,)) * s).astype(jnp.float32),
        "W2": (jax.random.normal(ks[8], (num_items + 1, 2 * E)) * s).astype(jnp.float32),
        "b2": (jax.random.normal(ks[9], (num_items + 1, 1)) * s).astype(jnp.float32),
    }


if __name__ == "__main__":
    B, L, E = 2, 8, 32          # batch, lookback, emb_size
    Fv, Fh = 4, 16              # num_ver_filters, num_hor_filters
    T, C = 4, 6                 # target timesteps, candidates per step
    num_items, num_users = 50, 10

    key = jax.random.PRNGKey(0)
    pkey, k1, k2, k3 = jax.random.split(key, 4)
    params = init_params(pkey, num_users, num_items, L, E, Fv, Fh)

    input_seqs = jax.random.randint(k1, (B, L), 0, num_items + 1)
    poss_item_seqs = jax.random.randint(k2, (B, T, C), 0, num_items + 1)
    user_var = jax.random.randint(k3, (B,), 0, num_users + 1)

    # TODO(synk): dropout is modeled as identity (inference); train-time dropout would
    # not commute with the conv_v/fc1 fold.
    prepared = prepare_caser_weights(params)     # one-time host-side re-indexing
    out = caser_forward_pallas(prepared, input_seqs, poss_item_seqs, user_var)
    out = jax.block_until_ready(out)

    ref = caser_forward_reference(params, input_seqs, poss_item_seqs, user_var)
    np.testing.assert_allclose(np.asarray(out), np.asarray(ref), rtol=2e-2, atol=2e-2)

    print("KERNEL_OK")
</pallas_src>

<mosaic_0001>
module attributes {stable_mosaic.version = 11 : i64} {
  func.func @caser_kernel(%arg0: i32, %arg1: memref<256x32xf32, #tpu.memory_space<vmem>>, %arg2: memref<32x32xbf16, #tpu.memory_space<vmem>>, %arg3: memref<256x160xbf16, #tpu.memory_space<vmem>>, %arg4: memref<1x128xf32, #tpu.memory_space<vmem>>, %arg5: memref<128x32xbf16, #tpu.memory_space<vmem>>, %arg6: memref<1x32xf32, #tpu.memory_space<vmem>>, %arg7: memref<32x4x6x32xbf16, #tpu.memory_space<vmem>>, %arg8: memref<32x4x6x32xbf16, #tpu.memory_space<vmem>>, %arg9: memref<32x24xf32, #tpu.memory_space<vmem>>, %arg10: memref<32x24xf32, #tpu.memory_space<vmem>>) attributes {dimension_semantics = [#tpu.dimension_semantics<parallel>], iteration_bounds = array<i64: 1>, scalar_prefetch = 0 : i64, scratch_operands = 0 : i64, tpu.core_type = #tpu.core_type<tc>, window_params = [{transform_indices = @transform_0, window_bounds = array<i64: 256, 32>}, {transform_indices = @transform_1, window_bounds = array<i64: 32, 32>}, {pipeline_mode = #tpu.pipeline_mode<synchronous>, transform_indices = @transform_2, window_bounds = array<i64: 256, 160>}, {pipeline_mode = #tpu.pipeline_mode<synchronous>, transform_indices = @transform_3, window_bounds = array<i64: 1, 128>}, {pipeline_mode = #tpu.pipeline_mode<synchronous>, transform_indices = @transform_4, window_bounds = array<i64: 128, 32>}, {pipeline_mode = #tpu.pipeline_mode<synchronous>, transform_indices = @transform_5, window_bounds = array<i64: 1, 32>}, {transform_indices = @transform_6, window_bounds = array<i64: 32, 4, 6, 32>}, {transform_indices = @transform_7, window_bounds = array<i64: 32, 4, 6, 32>}, {transform_indices = @transform_8, window_bounds = array<i64: 32, 24>}, {transform_indices = @transform_9, window_bounds = array<i64: 32, 24>}]} {
    %c0 = arith.constant 0 : index
    %c0_0 = arith.constant 0 : index
    %0 = vector.load %arg1[%c0, %c0_0] : memref<256x32xf32, #tpu.memory_space<vmem>>, vector<256x32xf32>
    %1 = tpu.iota {dimensions = array<i32: 0>} : vector<256x32xi32>
    %c8_i32 = arith.constant 8 : i32
    %c0_i32 = arith.constant 0 : i32
    %2 = arith.cmpi eq, %c8_i32, %c0_i32 : i32
    %c1_i32 = arith.constant 1 : i32
    %3 = arith.select %2, %c1_i32, %c8_i32 : i32
    %4 = vector.broadcast %3 : i32 to vector<256x32xi32>
    %5 = arith.remsi %1, %4 : vector<256x32xi32>
    %c0_i32_1 = arith.constant 0 : i32
    %6 = vector.broadcast %c0_i32_1 : i32 to vector<256x32xi32>
    %7 = arith.cmpi ne, %5, %6 : vector<256x32xi32>
    %c0_i32_2 = arith.constant 0 : i32
    %8 = vector.broadcast %c0_i32_2 : i32 to vector<256x32xi32>
    %9 = arith.cmpi slt, %5, %8 : vector<256x32xi32>
    %c0_i32_3 = arith.constant 0 : i32
    %10 = arith.cmpi slt, %3, %c0_i32_3 : i32
    %11 = vector.broadcast %10 : i1 to vector<256x32xi1>
    %12 = vector.broadcast %11 : vector<256x32xi1> to vector<256x32xi1>
    %13 = arith.xori %9, %12 : vector<256x32xi1>
    %14 = arith.andi %13, %7 : vector<256x32xi1>
    %15 = vector.broadcast %3 : i32 to vector<256x32xi32>
    %16 = arith.addi %5, %15 : vector<256x32xi32>
    %17 = arith.select %14, %16, %5 : vector<256x32xi1>, vector<256x32xi32>
    %c1_i32_4 = arith.constant 1 : i32
    %18 = tpu.dynamic_rotate %0 by %c1_i32_4 dim 0 : vector<256x32xf32>, i32 -> vector<256x32xf32>
    %c1_i32_5 = arith.constant 1 : i32
    %19 = vector.broadcast %c1_i32_5 : i32 to vector<256x32xi32>
    %20 = arith.cmpi sge, %17, %19 : vector<256x32xi32>
    %cst = arith.constant 0.000000e+00 : f32
    %21 = vector.broadcast %cst : f32 to vector<256x32xf32>
    %22 = arith.select %20, %18, %21 : vector<256x32xi1>, vector<256x32xf32>
    %c2_i32 = arith.constant 2 : i32
    %23 = tpu.dynamic_rotate %0 by %c2_i32 dim 0 : vector<256x32xf32>, i32 -> vector<256x32xf32>
    %c2_i32_6 = arith.constant 2 : i32
    %24 = vector.broadcast %c2_i32_6 : i32 to vector<256x32xi32>
    %25 = arith.cmpi sge, %17, %24 : vector<256x32xi32>
    %cst_7 = arith.constant 0.000000e+00 : f32
    %26 = vector.broadcast %cst_7 : f32 to vector<256x32xf32>
    %27 = arith.select %25, %23, %26 : vector<256x32xi1>, vector<256x32xf32>
    %c3_i32 = arith.constant 3 : i32
    %28 = tpu.dynamic_rotate %0 by %c3_i32 dim 0 : vector<256x32xf32>, i32 -> vector<256x32xf32>
    %c3_i32_8 = arith.constant 3 : i32
    %29 = vector.broadcast %c3_i32_8 : i32 to vector<256x32xi32>
    %30 = arith.cmpi sge, %17, %29 : vector<256x32xi32>
    %cst_9 = arith.constant 0.000000e+00 : f32
    %31 = vector.broadcast %cst_9 : f32 to vector<256x32xf32>
    %32 = arith.select %30, %28, %31 : vector<256x32xi1>, vector<256x32xf32>
    %c4_i32 = arith.constant 4 : i32
    %33 = tpu.dynamic_rotate %0 by %c4_i32 dim 0 : vector<256x32xf32>, i32 -> vector<256x32xf32>
    %c4_i32_10 = arith.constant 4 : i32
    %34 = vector.broadcast %c4_i32_10 : i32 to vector<256x32xi32>
    %35 = arith.cmpi sge, %17, %34 : vector<256x32xi32>
    %cst_11 = arith.constant 0.000000e+00 : f32
    %36 = vector.broadcast %cst_11 : f32 to vector<256x32xf32>
    %37 = arith.select %35, %33, %36 : vector<256x32xi1>, vector<256x32xf32>
    %c5_i32 = arith.constant 5 : i32
    %38 = tpu.dynamic_rotate %0 by %c5_i32 dim 0 : vector<256x32xf32>, i32 -> vector<256x32xf32>
    %c5_i32_12 = arith.constant 5 : i32
    %39 = vector.broadcast %c5_i32_12 : i32 to vector<256x32xi32>
    %40 = arith.cmpi sge, %17, %39 : vector<256x32xi32>
    %cst_13 = arith.constant 0.000000e+00 : f32
    %41 = vector.broadcast %cst_13 : f32 to vector<256x32xf32>
    %42 = arith.select %40, %38, %41 : vector<256x32xi1>, vector<256x32xf32>
    %c6_i32 = arith.constant 6 : i32
    %43 = tpu.dynamic_rotate %0 by %c6_i32 dim 0 : vector<256x32xf32>, i32 -> vector<256x32xf32>
    %c6_i32_14 = arith.constant 6 : i32
    %44 = vector.broadcast %c6_i32_14 : i32 to vector<256x32xi32>
    %45 = arith.cmpi sge, %17, %44 : vector<256x32xi32>
    %cst_15 = arith.constant 0.000000e+00 : f32
    %46 = vector.broadcast %cst_15 : f32 to vector<256x32xf32>
    %47 = arith.select %45, %43, %46 : vector<256x32xi1>, vector<256x32xf32>
    %c7_i32 = arith.constant 7 : i32
    %48 = tpu.dynamic_rotate %0 by %c7_i32 dim 0 : vector<256x32xf32>, i32 -> vector<256x32xf32>
    %c7_i32_16 = arith.constant 7 : i32
    %49 = vector.broadcast %c7_i32_16 : i32 to vector<256x32xi32>
    %50 = arith.cmpi sge, %17, %49 : vector<256x32xi32>
    %cst_17 = arith.constant 0.000000e+00 : f32
    %51 = vector.broadcast %cst_17 : f32 to vector<256x32xf32>
    %52 = arith.select %50, %48, %51 : vector<256x32xi1>, vector<256x32xf32>
    %53 = tpu.concatenate %0, %22, %27, %32, %37, %42, %47, %52 in 1 : vector<256x32xf32>, vector<256x32xf32>, vector<256x32xf32>, vector<256x32xf32>, vector<256x32xf32>, vector<256x32xf32>, vector<256x32xf32>, vector<256x32xf32> -> vector<256x256xf32>
    %54 = arith.truncf %53 : vector<256x256xf32> to vector<256x256xbf16>
    %c0_18 = arith.constant 0 : index
    %c0_19 = arith.constant 0 : index
    %55 = vector.load %arg3[%c0_18, %c0_19] : memref<256x160xbf16, #tpu.memory_space<vmem>>, vector<256x160xbf16>
    %cst_20 = arith.constant dense<0.000000e+00> : vector<256x160xf32>
    %56 = tpu.matmul %54, %55, %cst_20 {dimension_numbers = #tpu.dot_dimension_numbers<[1], [0], [0], [1], [0, 0, 1, 1], [], []>} : vector<256x256xbf16>, vector<256x160xbf16>, vector<256x160xf32> -> vector<256x160xf32>
    %57 = vector.extract_strided_slice %56 {offsets = [0, 0], sizes = [256, 128], strides = [1, 1]} : vector<256x160xf32> to vector<256x128xf32>
    %58 = vector.extract_strided_slice %56 {offsets = [0, 128], sizes = [256, 32], strides = [1, 1]} : vector<256x160xf32> to vector<256x32xf32>
    %c0_21 = arith.constant 0 : index
    %c0_22 = arith.constant 0 : index
    %59 = vector.load %arg4[%c0_21, %c0_22] : memref<1x128xf32, #tpu.memory_space<vmem>>, vector<1x128xf32>
    %60 = vector.broadcast %59 : vector<1x128xf32> to vector<256x128xf32>
    %61 = arith.addf %57, %60 : vector<256x128xf32>
    %cst_23 = arith.constant 0.000000e+00 : f32
    %62 = vector.broadcast %cst_23 : f32 to vector<256x128xf32>
    %63 = arith.maximumf %61, %62 : vector<256x128xf32>
    %64 = tpu.iota {dimensions = array<i32: 0>} : vector<256x128xi32>
    %c8_i32_24 = arith.constant 8 : i32
    %c0_i32_25 = arith.constant 0 : i32
    %65 = arith.cmpi eq, %c8_i32_24, %c0_i32_25 : i32
    %c1_i32_26 = arith.constant 1 : i32
    %66 = arith.select %65, %c1_i32_26, %c8_i32_24 : i32
    %67 = vector.broadcast %66 : i32 to vector<256x128xi32>
    %68 = arith.remsi %64, %67 : vector<256x128xi32>
    %c0_i32_27 = arith.constant 0 : i32
    %69 = vector.broadcast %c0_i32_27 : i32 to vector<256x128xi32>
    %70 = arith.cmpi ne, %68, %69 : vector<256x128xi32>
    %c0_i32_28 = arith.constant 0 : i32
    %71 = vector.broadcast %c0_i32_28 : i32 to vector<256x128xi32>
    %72 = arith.cmpi slt, %68, %71 : vector<256x128xi32>
    %c0_i32_29 = arith.constant 0 : i32
    %73 = arith.cmpi slt, %66, %c0_i32_29 : i32
    %74 = vector.broadcast %73 : i1 to vector<256x128xi1>
    %75 = vector.broadcast %74 : vector<256x128xi1> to vector<256x128xi1>
    %76 = arith.xori %72, %75 : vector<256x128xi1>
    %77 = arith.andi %76, %70 : vector<256x128xi1>
    %78 = vector.broadcast %66 : i32 to vector<256x128xi32>
    %79 = arith.addi %68, %78 : vector<256x128xi32>
    %80 = arith.select %77, %79, %68 : vector<256x128xi1>, vector<256x128xi32>
    %c1_i32_30 = arith.constant 1 : i32
    %81 = tpu.dynamic_rotate %63 by %c1_i32_30 dim 0 : vector<256x128xf32>, i32 -> vector<256x128xf32>
    %c1_i32_31 = arith.constant 1 : i32
    %82 = vector.broadcast %c1_i32_31 : i32 to vector<256x128xi32>
    %83 = arith.cmpi sge, %80, %82 : vector<256x128xi32>
    %cst_32 = arith.constant 0.000000e+00 : f32
    %84 = vector.broadcast %cst_32 : f32 to vector<256x128xf32>
    %85 = arith.select %83, %81, %84 : vector<256x128xi1>, vector<256x128xf32>
    %86 = arith.maximumf %63, %85 : vector<256x128xf32>
    %c2_i32_33 = arith.constant 2 : i32
    %87 = tpu.dynamic_rotate %86 by %c2_i32_33 dim 0 : vector<256x128xf32>, i32 -> vector<256x128xf32>
    %c2_i32_34 = arith.constant 2 : i32
    %88 = vector.broadcast %c2_i32_34 : i32 to vector<256x128xi32>
    %89 = arith.cmpi sge, %80, %88 : vector<256x128xi32>
    %cst_35 = arith.constant 0.000000e+00 : f32
    %90 = vector.broadcast %cst_35 : f32 to vector<256x128xf32>
    %91 = arith.select %89, %87, %90 : vector<256x128xi1>, vector<256x128xf32>
    %92 = arith.maximumf %86, %91 : vector<256x128xf32>
    %c4_i32_36 = arith.constant 4 : i32
    %93 = tpu.dynamic_rotate %92 by %c4_i32_36 dim 0 : vector<256x128xf32>, i32 -> vector<256x128xf32>
    %c4_i32_37 = arith.constant 4 : i32
    %94 = vector.broadcast %c4_i32_37 : i32 to vector<256x128xi32>
    %95 = arith.cmpi sge, %80, %94 : vector<256x128xi32>
    %cst_38 = arith.constant 0.000000e+00 : f32
    %96 = vector.broadcast %cst_38 : f32 to vector<256x128xf32>
    %97 = arith.select %95, %93, %96 : vector<256x128xi1>, vector<256x128xf32>
    %98 = arith.maximumf %92, %97 : vector<256x128xf32>
    %99 = arith.truncf %98 : vector<256x128xf32> to vector<256x128xbf16>
    %c0_39 = arith.constant 0 : index
    %c0_40 = arith.constant 0 : index
    %100 = vector.load %arg5[%c0_39, %c0_40] : memref<128x32xbf16, #tpu.memory_space<vmem>>, vector<128x32xbf16>
    %cst_41 = arith.constant dense<0.000000e+00> : vector<256x32xf32>
    %101 = tpu.matmul %99, %100, %cst_41 {dimension_numbers = #tpu.dot_dimension_numbers<[1], [0], [0], [1], [0, 0, 1, 1], [], []>} : vector<256x128xbf16>, vector<128x32xbf16>, vector<256x32xf32> -> vector<256x32xf32>
    %102 = arith.addf %58, %101 : vector<256x32xf32>
    %c0_42 = arith.constant 0 : index
    %c0_43 = arith.constant 0 : index
    %103 = vector.load %arg6[%c0_42, %c0_43] : memref<1x32xf32, #tpu.memory_space<vmem>>, vector<1x32xf32>
    %104 = vector.broadcast %103 : vector<1x32xf32> to vector<256x32xf32>
    %105 = arith.addf %102, %104 : vector<256x32xf32>
    %cst_44 = arith.constant 0.000000e+00 : f32
    %106 = vector.broadcast %cst_44 : f32 to vector<256x32xf32>
    %107 = arith.maximumf %105, %106 : vector<256x32xf32>
    %108 = vector.shape_cast %107 : vector<256x32xf32> to vector<32x8x32xf32>
    %109 = vector.extract_strided_slice %108 {offsets = [0, 4, 0], sizes = [32, 4, 32], strides = [1, 1, 1]} : vector<32x8x32xf32> to vector<32x4x32xf32>
    %c0_45 = arith.constant 0 : index
    %c0_46 = arith.constant 0 : index
    %110 = vector.load %arg2[%c0_45, %c0_46] : memref<32x32xbf16, #tpu.memory_space<vmem>>, vector<32x32xbf16>
    %111 = arith.extf %110 : vector<32x32xbf16> to vector<32x32xf32>
    %c0_47 = arith.constant 0 : index
    %c0_48 = arith.constant 0 : index
    %c0_49 = arith.constant 0 : index
    %c0_50 = arith.constant 0 : index
    %112 = vector.load %arg7[%c0_47, %c0_48, %c0_49, %c0_50] : memref<32x4x6x32xbf16, #tpu.memory_space<vmem>>, vector<32x4x6x32xbf16>
    %113 = arith.extf %112 : vector<32x4x6x32xbf16> to vector<32x4x6x32xf32>
    %c0_51 = arith.constant 0 : index
    %c0_52 = arith.constant 0 : index
    %c0_53 = arith.constant 0 : index
    %c0_54 = arith.constant 0 : index
    %114 = vector.load %arg8[%c0_51, %c0_52, %c0_53, %c0_54] : memref<32x4x6x32xbf16, #tpu.memory_space<vmem>>, vector<32x4x6x32xbf16>
    %115 = arith.extf %114 : vector<32x4x6x32xbf16> to vector<32x4x6x32xf32>
    %116 = vector.extract_strided_slice %113 {offsets = [0, 0, 0, 0], sizes = [32, 1, 6, 32], strides = [1, 1, 1, 1]} : vector<32x4x6x32xf32> to vector<32x1x6x32xf32>
    %117 = vector.shape_cast %116 : vector<32x1x6x32xf32> to vector<32x6x32xf32>
    %118 = vector.extract_strided_slice %109 {offsets = [0, 0, 0], sizes = [32, 1, 32], strides = [1, 1, 1]} : vector<32x4x32xf32> to vector<32x1x32xf32>
    %119 = vector.shape_cast %118 : vector<32x1x32xf32> to vector<32x32xf32>
    %120 = vector.shape_cast %119 : vector<32x32xf32> to vector<32x1x32xf32>
    %121 = vector.broadcast %120 : vector<32x1x32xf32> to vector<32x6x32xf32>
    %122 = arith.mulf %117, %121 : vector<32x6x32xf32>
    %cst_55 = arith.constant dense<0.000000e+00> : vector<32x6xf32>
    %123 = vector.multi_reduction <add>, %122, %cst_55 [2] : vector<32x6x32xf32> to vector<32x6xf32>
    %124 = vector.extract_strided_slice %115 {offsets = [0, 0, 0, 0], sizes = [32, 1, 6, 32], strides = [1, 1, 1, 1]} : vector<32x4x6x32xf32> to vector<32x1x6x32xf32>
    %125 = vector.shape_cast %124 : vector<32x1x6x32xf32> to vector<32x6x32xf32>
    %126 = vector.shape_cast %111 : vector<32x32xf32> to vector<32x1x32xf32>
    %127 = vector.broadcast %126 : vector<32x1x32xf32> to vector<32x6x32xf32>
    %128 = arith.mulf %125, %127 : vector<32x6x32xf32>
    %cst_56 = arith.constant dense<0.000000e+00> : vector<32x6xf32>
    %129 = vector.multi_reduction <add>, %128, %cst_56 [2] : vector<32x6x32xf32> to vector<32x6xf32>
    %130 = arith.addf %123, %129 : vector<32x6xf32>
    %c0_57 = arith.constant 0 : index
    %c0_58 = arith.constant 0 : index
    %131 = vector.load %arg9[%c0_57, %c0_58] : memref<32x24xf32, #tpu.memory_space<vmem>>, vector<32x6xf32>
    %132 = arith.addf %130, %131 : vector<32x6xf32>
    %c0_59 = arith.constant 0 : index
    %c0_60 = arith.constant 0 : index
    %133 = vector.load %arg10[%c0_59, %c0_60] : memref<32x24xf32, #tpu.memory_space<vmem>>, vector<32x6xf32>
    tpu.vector_store %arg10[%c0_59, %c0_60], %132 {strides = array<i32>} : memref<32x24xf32, #tpu.memory_space<vmem>>, vector<32x6xf32>,
    %134 = vector.extract_strided_slice %113 {offsets = [0, 1, 0, 0], sizes = [32, 1, 6, 32], strides = [1, 1, 1, 1]} : vector<32x4x6x32xf32> to vector<32x1x6x32xf32>
    %135 = vector.shape_cast %134 : vector<32x1x6x32xf32> to vector<32x6x32xf32>
    %136 = vector.extract_strided_slice %109 {offsets = [0, 1, 0], sizes = [32, 1, 32], strides = [1, 1, 1]} : vector<32x4x32xf32> to vector<32x1x32xf32>
    %137 = vector.shape_cast %136 : vector<32x1x32xf32> to vector<32x32xf32>
    %138 = vector.shape_cast %137 : vector<32x32xf32> to vector<32x1x32xf32>
    %139 = vector.broadcast %138 : vector<32x1x32xf32> to vector<32x6x32xf32>
    %140 = arith.mulf %135, %139 : vector<32x6x32xf32>
    %cst_61 = arith.constant dense<0.000000e+00> : vector<32x6xf32>
    %141 = vector.multi_reduction <add>, %140, %cst_61 [2] : vector<32x6x32xf32> to vector<32x6xf32>
    %142 = vector.extract_strided_slice %115 {offsets = [0, 1, 0, 0], sizes = [32, 1, 6, 32], strides = [1, 1, 1, 1]} : vector<32x4x6x32xf32> to vector<32x1x6x32xf32>
    %143 = vector.shape_cast %142 : vector<32x1x6x32xf32> to vector<32x6x32xf32>
    %144 = vector.shape_cast %111 : vector<32x32xf32> to vector<32x1x32xf32>
    %145 = vector.broadcast %144 : vector<32x1x32xf32> to vector<32x6x32xf32>
    %146 = arith.mulf %143, %145 : vector<32x6x32xf32>
    %cst_62 = arith.constant dense<0.000000e+00> : vector<32x6xf32>
    %147 = vector.multi_reduction <add>, %146, %cst_62 [2] : vector<32x6x32xf32> to vector<32x6xf32>
    %148 = arith.addf %141, %147 : vector<32x6xf32>
    %c0_63 = arith.constant 0 : index
    %c6 = arith.constant 6 : index
    %149 = vector.load %arg9[%c0_63, %c6] : memref<32x24xf32, #tpu.memory_space<vmem>>, vector<32x6xf32>
    %150 = arith.addf %148, %149 : vector<32x6xf32>
    %c0_64 = arith.constant 0 : index
    %c6_65 = arith.constant 6 : index
    %151 = vector.load %arg10[%c0_64, %c6_65] : memref<32x24xf32, #tpu.memory_space<vmem>>, vector<32x6xf32>
    tpu.vector_store %arg10[%c0_64, %c6_65], %150 {strides = array<i32>} : memref<32x24xf32, #tpu.memory_space<vmem>>, vector<32x6xf32>,
    %152 = vector.extract_strided_slice %113 {offsets = [0, 2, 0, 0], sizes = [32, 1, 6, 32], strides = [1, 1, 1, 1]} : vector<32x4x6x32xf32> to vector<32x1x6x32xf32>
    %153 = vector.shape_cast %152 : vector<32x1x6x32xf32> to vector<32x6x32xf32>
    %154 = vector.extract_strided_slice %109 {offsets = [0, 2, 0], sizes = [32, 1, 32], strides = [1, 1, 1]} : vector<32x4x32xf32> to vector<32x1x32xf32>
    %155 = vector.shape_cast %154 : vector<32x1x32xf32> to vector<32x32xf32>
    %156 = vector.shape_cast %155 : vector<32x32xf32> to vector<32x1x32xf32>
    %157 = vector.broadcast %156 : vector<32x1x32xf32> to vector<32x6x32xf32>
    %158 = arith.mulf %153, %157 : vector<32x6x32xf32>
    %cst_66 = arith.constant dense<0.000000e+00> : vector<32x6xf32>
    %159 = vector.multi_reduction <add>, %158, %cst_66 [2] : vector<32x6x32xf32> to vector<32x6xf32>
    %160 = vector.extract_strided_slice %115 {offsets = [0, 2, 0, 0], sizes = [32, 1, 6, 32], strides = [1, 1, 1, 1]} : vector<32x4x6x32xf32> to vector<32x1x6x32xf32>
    %161 = vector.shape_cast %160 : vector<32x1x6x32xf32> to vector<32x6x32xf32>
    %162 = vector.shape_cast %111 : vector<32x32xf32> to vector<32x1x32xf32>
    %163 = vector.broadcast %162 : vector<32x1x32xf32> to vector<32x6x32xf32>
    %164 = arith.mulf %161, %163 : vector<32x6x32xf32>
    %cst_67 = arith.constant dense<0.000000e+00> : vector<32x6xf32>
    %165 = vector.multi_reduction <add>, %164, %cst_67 [2] : vector<32x6x32xf32> to vector<32x6xf32>
    %166 = arith.addf %159, %165 : vector<32x6xf32>
    %c0_68 = arith.constant 0 : index
    %c12 = arith.constant 12 : index
    %167 = vector.load %arg9[%c0_68, %c12] : memref<32x24xf32, #tpu.memory_space<vmem>>, vector<32x6xf32>
    %168 = arith.addf %166, %167 : vector<32x6xf32>
    %c0_69 = arith.constant 0 : index
    %c12_70 = arith.constant 12 : index
    %169 = vector.load %arg10[%c0_69, %c12_70] : memref<32x24xf32, #tpu.memory_space<vmem>>, vector<32x6xf32>
    tpu.vector_store %arg10[%c0_69, %c12_70], %168 {strides = array<i32>} : memref<32x24xf32, #tpu.memory_space<vmem>>, vector<32x6xf32>,
    %170 = vector.extract_strided_slice %113 {offsets = [0, 3, 0, 0], sizes = [32, 1, 6, 32], strides = [1, 1, 1, 1]} : vector<32x4x6x32xf32> to vector<32x1x6x32xf32>
    %171 = vector.shape_cast %170 : vector<32x1x6x32xf32> to vector<32x6x32xf32>
    %172 = vector.extract_strided_slice %109 {offsets = [0, 3, 0], sizes = [32, 1, 32], strides = [1, 1, 1]} : vector<32x4x32xf32> to vector<32x1x32xf32>
    %173 = vector.shape_cast %172 : vector<32x1x32xf32> to vector<32x32xf32>
    %174 = vector.shape_cast %173 : vector<32x32xf32> to vector<32x1x32xf32>
    %175 = vector.broadcast %174 : vector<32x1x32xf32> to vector<32x6x32xf32>
    %176 = arith.mulf %171, %175 : vector<32x6x32xf32>
    %cst_71 = arith.constant dense<0.000000e+00> : vector<32x6xf32>
    %177 = vector.multi_reduction <add>, %176, %cst_71 [2] : vector<32x6x32xf32> to vector<32x6xf32>
    %178 = vector.extract_strided_slice %115 {offsets = [0, 3, 0, 0], sizes = [32, 1, 6, 32], strides = [1, 1, 1, 1]} : vector<32x4x6x32xf32> to vector<32x1x6x32xf32>
    %179 = vector.shape_cast %178 : vector<32x1x6x32xf32> to vector<32x6x32xf32>
    %180 = vector.shape_cast %111 : vector<32x32xf32> to vector<32x1x32xf32>
    %181 = vector.broadcast %180 : vector<32x1x32xf32> to vector<32x6x32xf32>
    %182 = arith.mulf %179, %181 : vector<32x6x32xf32>
    %cst_72 = arith.constant dense<0.000000e+00> : vector<32x6xf32>
    %183 = vector.multi_reduction <add>, %182, %cst_72 [2] : vector<32x6x32xf32> to vector<32x6xf32>
    %184 = arith.addf %177, %183 : vector<32x6xf32>
    %c0_73 = arith.constant 0 : index
    %c18 = arith.constant 18 : index
    %185 = vector.load %arg9[%c0_73, %c18] : memref<32x24xf32, #tpu.memory_space<vmem>>, vector<32x6xf32>
    %186 = arith.addf %184, %185 : vector<32x6xf32>
    %c0_74 = arith.constant 0 : index
    %c18_75 = arith.constant 18 : index
    %187 = vector.load %arg10[%c0_74, %c18_75] : memref<32x24xf32, #tpu.memory_space<vmem>>, vector<32x6xf32>
    tpu.vector_store %arg10[%c0_74, %c18_75], %186 {strides = array<i32>} : memref<32x24xf32, #tpu.memory_space<vmem>>, vector<32x6xf32>,
    return
  }
  func.func @transform_0(%arg0: i32) -> (i32, i32) {
    %c0_i32 = arith.constant 0 : i32
    %c0_i32_0 = arith.constant 0 : i32
    return %arg0, %c0_i32 : i32, i32
  }
  func.func @transform_1(%arg0: i32) -> (i32, i32) {
    %c0_i32 = arith.constant 0 : i32
    %c0_i32_0 = arith.constant 0 : i32
    return %arg0, %c0_i32 : i32, i32
  }
  func.func @transform_2(%arg0: i32) -> (i32, i32) {
    %c0_i32 = arith.constant 0 : i32
    %c0_i32_0 = arith.constant 0 : i32
    %c0_i32_1 = arith.constant 0 : i32
    return %c0_i32, %c0_i32_0 : i32, i32
  }
  func.func @transform_3(%arg0: i32) -> (i32, i32) {
    %c0_i32 = arith.constant 0 : i32
    %c0_i32_0 = arith.constant 0 : i32
    %c0_i32_1 = arith.constant 0 : i32
    return %c0_i32, %c0_i32_0 : i32, i32
  }
  func.func @transform_4(%arg0: i32) -> (i32, i32) {
    %c0_i32 = arith.constant 0 : i32
    %c0_i32_0 = arith.constant 0 : i32
    %c0_i32_1 = arith.constant 0 : i32
    return %c0_i32, %c0_i32_0 : i32, i32
  }
  func.func @transform_5(%arg0: i32) -> (i32, i32) {
    %c0_i32 = arith.constant 0 : i32
    %c0_i32_0 = arith.constant 0 : i32
    %c0_i32_1 = arith.constant 0 : i32
    return %c0_i32, %c0_i32_0 : i32, i32
  }
  func.func @transform_6(%arg0: i32) -> (i32, i32, i32, i32) {
    %c0_i32 = arith.constant 0 : i32
    %c0_i32_0 = arith.constant 0 : i32
    %c0_i32_1 = arith.constant 0 : i32
    %c0_i32_2 = arith.constant 0 : i32
    return %arg0, %c0_i32, %c0_i32_0, %c0_i32_1 : i32, i32, i32, i32
  }
  func.func @transform_7(%arg0: i32) -> (i32, i32, i32, i32) {
    %c0_i32 = arith.constant 0 : i32
    %c0_i32_0 = arith.constant 0 : i32
    %c0_i32_1 = arith.constant 0 : i32
    %c0_i32_2 = arith.constant 0 : i32
    return %arg0, %c0_i32, %c0_i32_0, %c0_i32_1 : i32, i32, i32, i32
  }
  func.func @transform_8(%arg0: i32) -> (i32, i32) {
    %c0_i32 = arith.constant 0 : i32
    %c0_i32_0 = arith.constant 0 : i32
    return %arg0, %c0_i32 : i32, i32
  }
  func.func @transform_9(%arg0: i32) -> (i32, i32) {
    %c0_i32 = arith.constant 0 : i32
    %c0_i32_0 = arith.constant 0 : i32
    return %arg0, %c0_i32 : i32, i32
  }
}

</mosaic_0001>

<llo_original>
// kernel: tpu_custom_call.1
$region0: #{tpu_custom_call.1}
  #allocation0 [shape = 'u32[]', space=smem, size = 0x4, offset = 0x4, fixed_abs, tag = 'smem constant byte address 0x4 - core index']
  #allocation1 [shape = 'u32[144,128]{1,0:T(1,128)}', space=vmem, size = 0x12000, scoped, tag = 'internal scratch']
  %s0 = inlined_call_operand.vmem [shape: f32[256,32], index: 0, kind: input, shape index: {}]
  %s1 = inlined_call_operand.vmem [shape: bf16[32,32], index: 1, kind: input, shape index: {}]
  %s2 = inlined_call_operand.vmem [shape: bf16[256,160], index: 2, kind: input, shape index: {}]
  %s3 = inlined_call_operand.vmem [shape: f32[1,128], index: 3, kind: input, shape index: {}]
  %s4 = inlined_call_operand.vmem [shape: bf16[128,32], index: 4, kind: input, shape index: {}]
  %s5 = inlined_call_operand.vmem [shape: f32[1,32], index: 5, kind: input, shape index: {}]
  %s6 = inlined_call_operand.vmem [shape: bf16[32,4,6,32], index: 6, kind: input, shape index: {}]
  %s7 = inlined_call_operand.vmem [shape: bf16[32,4,6,32], index: 7, kind: input, shape index: {}]
  %s8 = inlined_call_operand.vmem [shape: f32[32,24], index: 8, kind: input, shape index: {}]
  %s9 = inlined_call_operand.vmem [shape: f32[32,24], index: 9, kind: output, shape index: {}]
  %s10 = sld [smem:[#allocation0]]
  $region46: #{tpu_custom_call.1} parent=0
    _
  %s12 = ssub.s32 1, %s10
  %s13 = scalar_select 0, %s12, %s10
  // Predicated region
  $region2: #{tpu_custom_call.1} parent=0 // pred_check
    _
  $region3: #{tpu_custom_call.1} parent=0 // pred_check_branch
    %15 = sbr.rel (0) target = $region5
  $region4: #{tpu_custom_call.1} parent=0 // pred_region
    _
  $region5: #{tpu_custom_call.1} parent=0 // pred_fallthru
    _
  // Predicated region
  $region6: #{tpu_custom_call.1} parent=0 // pred_check
    _
  $region7: #{tpu_custom_call.1} parent=0 // pred_check_branch
    %17 = sbr.rel (0) target = $region9
  $region8: #{tpu_custom_call.1} parent=0 // pred_region
    _
  $region9: #{tpu_custom_call.1} parent=0 // pred_fallthru
    _
  // Predicated region
  $region10: #{tpu_custom_call.1} parent=0 // pred_check
    _
  $region11: #{tpu_custom_call.1} parent=0 // pred_check_branch
    %19 = sbr.rel (0) target = $region13
  $region12: #{tpu_custom_call.1} parent=0 // pred_region
    _
  $region13: #{tpu_custom_call.1} parent=0 // pred_fallthru
    _
  // Predicated region
  $region14: #{tpu_custom_call.1} parent=0 // pred_check
    _
  $region15: #{tpu_custom_call.1} parent=0 // pred_check_branch
    %21 = sbr.rel (0) target = $region17
  $region16: #{tpu_custom_call.1} parent=0 // pred_region
    _
  $region17: #{tpu_custom_call.1} parent=0 // pred_fallthru
    _
  // Predicated region
  $region18: #{tpu_custom_call.1} parent=0 // pred_check
    _
  $region19: #{tpu_custom_call.1} parent=0 // pred_check_branch
    %23 = sbr.rel (0) target = $region21
  $region20: #{tpu_custom_call.1} parent=0 // pred_region
    _
  $region21: #{tpu_custom_call.1} parent=0 // pred_fallthru
    _
  // Predicated region
  $region22: #{tpu_custom_call.1} parent=0 // pred_check
    _
  $region23: #{tpu_custom_call.1} parent=0 // pred_check_branch
    %25 = sbr.rel (0) target = $region25
  $region24: #{tpu_custom_call.1} parent=0 // pred_region
    _
  $region25: #{tpu_custom_call.1} parent=0 // pred_fallthru
    _
  // Predicated region
  $region26: #{tpu_custom_call.1} parent=0 // pred_check
    _
  $region27: #{tpu_custom_call.1} parent=0 // pred_check_branch
    %27 = sbr.rel (0) target = $region29
  $region28: #{tpu_custom_call.1} parent=0 // pred_region
    _
  $region29: #{tpu_custom_call.1} parent=0 // pred_fallthru
    _
  // Predicated region
  $region30: #{tpu_custom_call.1} parent=0 // pred_check
    _
  $region31: #{tpu_custom_call.1} parent=0 // pred_check_branch
    %29 = sbr.rel (0) target = $region33
  $region32: #{tpu_custom_call.1} parent=0 // pred_region
    _
  $region33: #{tpu_custom_call.1} parent=0 // pred_fallthru
    _
  // Predicated region
  $region34: #{tpu_custom_call.1} parent=0 // pred_check
    _
  $region35: #{tpu_custom_call.1} parent=0 // pred_check_branch
    %31 = sbr.rel (0) target = $region37
  $region36: #{tpu_custom_call.1} parent=0 // pred_region
    _
  $region37: #{tpu_custom_call.1} parent=0 // pred_fallthru
    _
  %v33 = vld [vmem:[%s0] sm:$0xff]
  %v34 = vld [vmem:[%s0 + $0x8] sm:$0xff]
  %v35 = vld [vmem:[%s0 + $0x10] sm:$0xff]
  %v36 = vld [vmem:[%s0 + $0x18] sm:$0xff]
  %v37 = vld [vmem:[%s0 + $0x20] sm:$0xff]
  %v38 = vld [vmem:[%s0 + $0x28] sm:$0xff]
  %v39 = vld [vmem:[%s0 + $0x30] sm:$0xff]
  %v40 = vld [vmem:[%s0 + $0x38] sm:$0xff]
  %v41 = vld [vmem:[%s0 + $0x40] sm:$0xff]
  %v42 = vld [vmem:[%s0 + $0x48] sm:$0xff]
  %v43 = vld [vmem:[%s0 + $0x50] sm:$0xff]
  %v44 = vld [vmem:[%s0 + $0x58] sm:$0xff]
  %v45 = vld [vmem:[%s0 + $0x60] sm:$0xff]
  %v46 = vld [vmem:[%s0 + $0x68] sm:$0xff]
  %v47 = vld [vmem:[%s0 + $0x70] sm:$0xff]
  %v48 = vld [vmem:[%s0 + $0x78] sm:$0xff]
  %v49 = vld [vmem:[%s0 + $0x80] sm:$0xff]
  %v50 = vld [vmem:[%s0 + $0x88] sm:$0xff]
  %v51 = vld [vmem:[%s0 + $0x90] sm:$0xff]
  %v52 = vld [vmem:[%s0 + $0x98] sm:$0xff]
  %v53 = vld [vmem:[%s0 + $0xa0] sm:$0xff]
  %v54 = vld [vmem:[%s0 + $0xa8] sm:$0xff]
  %v55 = vld [vmem:[%s0 + $0xb0] sm:$0xff]
  %v56 = vld [vmem:[%s0 + $0xb8] sm:$0xff]
  %v57 = vld [vmem:[%s0 + $0xc0] sm:$0xff]
  %v58 = vld [vmem:[%s0 + $0xc8] sm:$0xff]
  %v59 = vld [vmem:[%s0 + $0xd0] sm:$0xff]
  %v60 = vld [vmem:[%s0 + $0xd8] sm:$0xff]
  %v61 = vld [vmem:[%s0 + $0xe0] sm:$0xff]
  %v62 = vld [vmem:[%s0 + $0xe8] sm:$0xff]
  %v63 = vld [vmem:[%s0 + $0xf0] sm:$0xff]
  %v64 = vld [vmem:[%s0 + $0xf8] sm:$0xff]
  %v65 = vlaneseq
  %v66 = vshrl.u32 %v65, 7
  %v67 = vadd.s32 %v66, 8
  %v68 = vadd.s32 %v66, 16
  %v69 = vadd.s32 %v66, 24
  %v70 = vadd.s32 %v66, 32
  %v71 = vadd.s32 %v66, 40
  %v72 = vadd.s32 %v66, 48
  %v73 = vadd.s32 %v66, 56
  %v74 = vadd.s32 %v66, 64
  %v75 = vadd.s32 %v66, 72
  %v76 = vadd.s32 %v66, 80
  %v77 = vadd.s32 %v66, 88
  %v78 = vadd.s32 %v66, 96
  %v79 = vadd.s32 %v66, 104
  %v80 = vadd.s32 %v66, 112
  %v81 = vadd.s32 %v66, 120
  %v82 = vadd.s32 %v66, 128
  %v83 = vadd.s32 %v66, 136
  %v84 = vadd.s32 %v66, 144
  %v85 = vadd.s32 %v66, 152
  %v86 = vadd.s32 %v66, 160
  %v87 = vadd.s32 %v66, 168
  %v88 = vadd.s32 %v66, 176
  %v89 = vadd.s32 %v66, 184
  %v90 = vadd.s32 %v66, 192
  %v91 = vadd.s32 %v66, 200
  %v92 = vadd.s32 %v66, 208
  %v93 = vadd.s32 %v66, 216
  %v94 = vadd.s32 %v66, 224
  %v95 = vadd.s32 %v66, 232
  %v96 = vadd.s32 %v66, 240
  %v97 = vadd.s32 %v66, 248
  %vm98 = vcmp.lt.s32.totalorder %v66, 0
  %v99 = vsub.s32 0, %v66
  %v100 = vsel %vm98, %v99, %v66
  %v101 = vshrl.u32 %v100, 3
  %v102 = vand.u32 %v100, 7
  %v103 = vsub.s32 0, %v102
  %v104 = vsel %vm98, %v103, %v102
  %vm105 = vcmp.lt.s32.totalorder %v67, 0
  %v106 = vsub.s32 0, %v67
  %v107 = vsel %vm105, %v106, %v67
  %v108 = vshrl.u32 %v107, 3
  %v109 = vand.u32 %v107, 7
  %v110 = vsub.s32 0, %v109
  %v111 = vsel %vm105, %v110, %v109
  %vm112 = vcmp.lt.s32.totalorder %v68, 0
  %v113 = vsub.s32 0, %v68
  %v114 = vsel %vm112, %v113, %v68
  %v115 = vshrl.u32 %v114, 3
  %v116 = vand.u32 %v114, 7
  %v117 = vsub.s32 0, %v116
  %v118 = vsel %vm112, %v117, %v116
  %vm119 = vcmp.lt.s32.totalorder %v69, 0
  %v120 = vsub.s32 0, %v69
  %v121 = vsel %vm119, %v120, %v69
  %v122 = vshrl.u32 %v121, 3
  %v123 = vand.u32 %v121, 7
  %v124 = vsub.s32 0, %v123
  %v125 = vsel %vm119, %v124, %v123
  %vm126 = vcmp.lt.s32.totalorder %v70, 0
  %v127 = vsub.s32 0, %v70
  %v128 = vsel %vm126, %v127, %v70
  %v129 = vshrl.u32 %v128, 3
  %v130 = vand.u32 %v128, 7
  %v131 = vsub.s32 0, %v130
  %v132 = vsel %vm126, %v131, %v130
  %vm133 = vcmp.lt.s32.totalorder %v71, 0
  %v134 = vsub.s32 0, %v71
  %v135 = vsel %vm133, %v134, %v71
  %v136 = vshrl.u32 %v135, 3
  %v137 = vand.u32 %v135, 7
  %v138 = vsub.s32 0, %v137
  %v139 = vsel %vm133, %v138, %v137
  %vm140 = vcmp.lt.s32.totalorder %v72, 0
  %v141 = vsub.s32 0, %v72
  %v142 = vsel %vm140, %v141, %v72
  %v143 = vshrl.u32 %v142, 3
  %v144 = vand.u32 %v142, 7
  %v145 = vsub.s32 0, %v144
  %v146 = vsel %vm140, %v145, %v144
  %vm147 = vcmp.lt.s32.totalorder %v73, 0
  %v148 = vsub.s32 0, %v73
  %v149 = vsel %vm147, %v148, %v73
  %v150 = vshrl.u32 %v149, 3
  %v151 = vand.u32 %v149, 7
  %v152 = vsub.s32 0, %v151
  %v153 = vsel %vm147, %v152, %v151
  %vm154 = vcmp.lt.s32.totalorder %v74, 0
  %v155 = vsub.s32 0, %v74
  %v156 = vsel %vm154, %v155, %v74
  %v157 = vshrl.u32 %v156, 3
  %v158 = vand.u32 %v156, 7
  %v159 = vsub.s32 0, %v158
  %v160 = vsel %vm154, %v159, %v158
  %vm161 = vcmp.lt.s32.totalorder %v75, 0
  %v162 = vsub.s32 0, %v75
  %v163 = vsel %vm161, %v162, %v75
  %v164 = vshrl.u32 %v163, 3
  %v165 = vand.u32 %v163, 7
  %v166 = vsub.s32 0, %v165
  %v167 = vsel %vm161, %v166, %v165
  %vm168 = vcmp.lt.s32.totalorder %v76, 0
  %v169 = vsub.s32 0, %v76
  %v170 = vsel %vm168, %v169, %v76
  %v171 = vshrl.u32 %v170, 3
  %v172 = vand.u32 %v170, 7
  %v173 = vsub.s32 0, %v172
  %v174 = vsel %vm168, %v173, %v172
  %vm175 = vcmp.lt.s32.totalorder %v77, 0
  %v176 = vsub.s32 0, %v77
  %v177 = vsel %vm175, %v176, %v77
  %v178 = vshrl.u32 %v177, 3
  %v179 = vand.u32 %v177, 7
  %v180 = vsub.s32 0, %v179
  %v181 = vsel %vm175, %v180, %v179
  %vm182 = vcmp.lt.s32.totalorder %v78, 0
  %v183 = vsub.s32 0, %v78
  %v184 = vsel %vm182, %v183, %v78
  %v185 = vshrl.u32 %v184, 3
  %v186 = vand.u32 %v184, 7
  %v187 = vsub.s32 0, %v186
  %v188 = vsel %vm182, %v187, %v186
  %vm189 = vcmp.lt.s32.totalorder %v79, 0
  %v190 = vsub.s32 0, %v79
  %v191 = vsel %vm189, %v190, %v79
  %v192 = vshrl.u32 %v191, 3
  %v193 = vand.u32 %v191, 7
  %v194 = vsub.s32 0, %v193
  %v195 = vsel %vm189, %v194, %v193
  %vm196 = vcmp.lt.s32.totalorder %v80, 0
  %v197 = vsub.s32 0, %v80
  %v198 = vsel %vm196, %v197, %v80
  %v199 = vshrl.u32 %v198, 3
  %v200 = vand.u32 %v198, 7
  %v201 = vsub.s32 0, %v200
  %v202 = vsel %vm196, %v201, %v200
  %vm203 = vcmp.lt.s32.totalorder %v81, 0
  %v204 = vsub.s32 0, %v81
  %v205 = vsel %vm203, %v204, %v81
  %v206 = vshrl.u32 %v205, 3
  %v207 = vand.u32 %v205, 7
  %v208 = vsub.s32 0, %v207
  %v209 = vsel %vm203, %v208, %v207
  %vm210 = vcmp.lt.s32.totalorder %v82, 0
  %v211 = vsub.s32 0, %v82
  %v212 = vsel %vm210, %v211, %v82
  %v213 = vshrl.u32 %v212, 3
  %v214 = vand.u32 %v212, 7
  %v215 = vsub.s32 0, %v214
  %v216 = vsel %vm210, %v215, %v214
  %vm217 = vcmp.lt.s32.totalorder %v83, 0
  %v218 = vsub.s32 0, %v83
  %v219 = vsel %vm217, %v218, %v83
  %v220 = vshrl.u32 %v219, 3
  %v221 = vand.u32 %v219, 7
  %v222 = vsub.s32 0, %v221
  %v223 = vsel %vm217, %v222, %v221
  %vm224 = vcmp.lt.s32.totalorder %v84, 0
  %v225 = vsub.s32 0, %v84
  %v226 = vsel %vm224, %v225, %v84
  %v227 = vshrl.u32 %v226, 3
  %v228 = vand.u32 %v226, 7
  %v229 = vsub.s32 0, %v228
  %v230 = vsel %vm224, %v229, %v228
  %vm231 = vcmp.lt.s32.totalorder %v85, 0
  %v232 = vsub.s32 0, %v85
  %v233 = vsel %vm231, %v232, %v85
  %v234 = vshrl.u32 %v233, 3
  %v235 = vand.u32 %v233, 7
  %v236 = vsub.s32 0, %v235
  %v237 = vsel %vm231, %v236, %v235
  %vm238 = vcmp.lt.s32.totalorder %v86, 0
  %v239 = vsub.s32 0, %v86
  %v240 = vsel %vm238, %v239, %v86
  %v241 = vshrl.u32 %v240, 3
  %v242 = vand.u32 %v240, 7
  %v243 = vsub.s32 0, %v242
  %v244 = vsel %vm238, %v243, %v242
  %vm245 = vcmp.lt.s32.totalorder %v87, 0
  %v246 = vsub.s32 0, %v87
  %v247 = vsel %vm245, %v246, %v87
  %v248 = vshrl.u32 %v247, 3
  %v249 = vand.u32 %v247, 7
  %v250 = vsub.s32 0, %v249
  %v251 = vsel %vm245, %v250, %v249
  %vm252 = vcmp.lt.s32.totalorder %v88, 0
  %v253 = vsub.s32 0, %v88
  %v254 = vsel %vm252, %v253, %v88
  %v255 = vshrl.u32 %v254, 3
  %v256 = vand.u32 %v254, 7
  %v257 = vsub.s32 0, %v256
  %v258 = vsel %vm252, %v257, %v256
  %vm259 = vcmp.lt.s32.totalorder %v89, 0
  %v260 = vsub.s32 0, %v89
  %v261 = vsel %vm259, %v260, %v89
  %v262 = vshrl.u32 %v261, 3
  %v263 = vand.u32 %v261, 7
  %v264 = vsub.s32 0, %v263
  %v265 = vsel %vm259, %v264, %v263
  %vm266 = vcmp.lt.s32.totalorder %v90, 0
  %v267 = vsub.s32 0, %v90
  %v268 = vsel %vm266, %v267, %v90
  %v269 = vshrl.u32 %v268, 3
  %v270 = vand.u32 %v268, 7
  %v271 = vsub.s32 0, %v270
  %v272 = vsel %vm266, %v271, %v270
  %vm273 = vcmp.lt.s32.totalorder %v91, 0
  %v274 = vsub.s32 0, %v91
  %v275 = vsel %vm273, %v274, %v91
  %v276 = vshrl.u32 %v275, 3
  %v277 = vand.u32 %v275, 7
  %v278 = vsub.s32 0, %v277
  %v279 = vsel %vm273, %v278, %v277
  %vm280 = vcmp.lt.s32.totalorder %v92, 0
  %v281 = vsub.s32 0, %v92
  %v282 = vsel %vm280, %v281, %v92
  %v283 = vshrl.u32 %v282, 3
  %v284 = vand.u32 %v282, 7
  %v285 = vsub.s32 0, %v284
  %v286 = vsel %vm280, %v285, %v284
  %vm287 = vcmp.lt.s32.totalorder %v93, 0
  %v288 = vsub.s32 0, %v93
  %v289 = vsel %vm287, %v288, %v93
  %v290 = vshrl.u32 %v289, 3
  %v291 = vand.u32 %v289, 7
  %v292 = vsub.s32 0, %v291
  %v293 = vsel %vm287, %v292, %v291
  %vm294 = vcmp.lt.s32.totalorder %v94, 0
  %v295 = vsub.s32 0, %v94
  %v296 = vsel %vm294, %v295, %v94
  %v297 = vshrl.u32 %v296, 3
  %v298 = vand.u32 %v296, 7
  %v299 = vsub.s32 0, %v298
  %v300 = vsel %vm294, %v299, %v298
  %vm301 = vcmp.lt.s32.totalorder %v95, 0
  %v302 = vsub.s32 0, %v95
  %v303 = vsel %vm301, %v302, %v95
  %v304 = vshrl.u32 %v303, 3
  %v305 = vand.u32 %v303, 7
  %v306 = vsub.s32 0, %v305
  %v307 = vsel %vm301, %v306, %v305
  %vm308 = vcmp.lt.s32.totalorder %v96, 0
  %v309 = vsub.s32 0, %v96
  %v310 = vsel %vm308, %v309, %v96
  %v311 = vshrl.u32 %v310, 3
  %v312 = vand.u32 %v310, 7
  %v313 = vsub.s32 0, %v312
  %v314 = vsel %vm308, %v313, %v312
  %vm315 = vcmp.lt.s32.totalorder %v97, 0
  %v316 = vsub.s32 0, %v97
  %v317 = vsel %vm315, %v316, %v97
  %v318 = vshrl.u32 %v317, 3
  %v319 = vand.u32 %v317, 7
  %v320 = vsub.s32 0, %v319
  %v321 = vsel %vm315, %v320, %v319
  %vm322 = vcmp.ne.s32.totalorder %v104, 0
  %vm323 = vcmp.ne.s32.totalorder %v111, 0
  %vm324 = vcmp.ne.s32.totalorder %v118, 0
  %vm325 = vcmp.ne.s32.totalorder %v125, 0
  %vm326 = vcmp.ne.s32.totalorder %v132, 0
  %vm327 = vcmp.ne.s32.totalorder %v139, 0
  %vm328 = vcmp.ne.s32.totalorder %v146, 0
  %vm329 = vcmp.ne.s32.totalorder %v153, 0
  %vm330 = vcmp.ne.s32.totalorder %v160, 0
  %vm331 = vcmp.ne.s32.totalorder %v167, 0
  %vm332 = vcmp.ne.s32.totalorder %v174, 0
  %vm333 = vcmp.ne.s32.totalorder %v181, 0
  %vm334 = vcmp.ne.s32.totalorder %v188, 0
  %vm335 = vcmp.ne.s32.totalorder %v195, 0
  %vm336 = vcmp.ne.s32.totalorder %v202, 0
  %vm337 = vcmp.ne.s32.totalorder %v209, 0
  %vm338 = vcmp.ne.s32.totalorder %v216, 0
  %vm339 = vcmp.ne.s32.totalorder %v223, 0
  %vm340 = vcmp.ne.s32.totalorder %v230, 0
  %vm341 = vcmp.ne.s32.totalorder %v237, 0
  %vm342 = vcmp.ne.s32.totalorder %v244, 0
  %vm343 = vcmp.ne.s32.totalorder %v251, 0
  %vm344 = vcmp.ne.s32.totalorder %v258, 0
  %vm345 = vcmp.ne.s32.totalorder %v265, 0
  %vm346 = vcmp.ne.s32.totalorder %v272, 0
  %vm347 = vcmp.ne.s32.totalorder %v279, 0
  %vm348 = vcmp.ne.s32.totalorder %v286, 0
  %vm349 = vcmp.ne.s32.totalorder %v293, 0
  %vm350 = vcmp.ne.s32.totalorder %v300, 0
  %vm351 = vcmp.ne.s32.totalorder %v307, 0
  %vm352 = vcmp.ne.s32.totalorder %v314, 0
  %vm353 = vcmp.ne.s32.totalorder %v321, 0
  %vm354 = vcmp.lt.s32.totalorder %v104, 0
  %vm355 = vcmp.lt.s32.totalorder %v111, 0
  %vm356 = vcmp.lt.s32.totalorder %v118, 0
  %vm357 = vcmp.lt.s32.totalorder %v125, 0
  %vm358 = vcmp.lt.s32.totalorder %v132, 0
  %vm359 = vcmp.lt.s32.totalorder %v139, 0
  %vm360 = vcmp.lt.s32.totalorder %v146, 0
  %vm361 = vcmp.lt.s32.totalorder %v153, 0
  %vm362 = vcmp.lt.s32.totalorder %v160, 0
  %vm363 = vcmp.lt.s32.totalorder %v167, 0
  %vm364 = vcmp.lt.s32.totalorder %v174, 0
  %vm365 = vcmp.lt.s32.totalorder %v181, 0
  %vm366 = vcmp.lt.s32.totalorder %v188, 0
  %vm367 = vcmp.lt.s32.totalorder %v195, 0
  %vm368 = vcmp.lt.s32.totalorder %v202, 0
  %vm369 = vcmp.lt.s32.totalorder %v209, 0
  %vm370 = vcmp.lt.s32.totalorder %v216, 0
  %vm371 = vcmp.lt.s32.totalorder %v223, 0
  %vm372 = vcmp.lt.s32.totalorder %v230, 0
  %vm373 = vcmp.lt.s32.totalorder %v237, 0
  %vm374 = vcmp.lt.s32.totalorder %v244, 0
  %vm375 = vcmp.lt.s32.totalorder %v251, 0
  %vm376 = vcmp.lt.s32.totalorder %v258, 0
  %vm377 = vcmp.lt.s32.totalorder %v265, 0
  %vm378 = vcmp.lt.s32.totalorder %v272, 0
  %vm379 = vcmp.lt.s32.totalorder %v279, 0
  %vm380 = vcmp.lt.s32.totalorder %v286, 0
  %vm381 = vcmp.lt.s32.totalorder %v293, 0
  %vm382 = vcmp.lt.s32.totalorder %v300, 0
  %vm383 = vcmp.lt.s32.totalorder %v307, 0
  %vm384 = vcmp.lt.s32.totalorder %v314, 0
  %vm385 = vcmp.lt.s32.totalorder %v321, 0
  %vm386 = vmand %vm354, %vm322
  %vm387 = vmand %vm355, %vm323
  %vm388 = vmand %vm356, %vm324
  %vm389 = vmand %vm357, %vm325
  %vm390 = vmand %vm358, %vm326
  %vm391 = vmand %vm359, %vm327
  %vm392 = vmand %vm360, %vm328
  %vm393 = vmand %vm361, %vm329
  %vm394 = vmand %vm362, %vm330
  %vm395 = vmand %vm363, %vm331
  %vm396 = vmand %vm364, %vm332
  %vm397 = vmand %vm365, %vm333
  %vm398 = vmand %vm366, %vm334
  %vm399 = vmand %vm367, %vm335
  %vm400 = vmand %vm368, %vm336
  %vm401 = vmand %vm369, %vm337
  %vm402 = vmand %vm370, %vm338
  %vm403 = vmand %vm371, %vm339
  %vm404 = vmand %vm372, %vm340
  %vm405 = vmand %vm373, %vm341
  %vm406 = vmand %vm374, %vm342
  %vm407 = vmand %vm375, %vm343
  %vm408 = vmand %vm376, %vm344
  %vm409 = vmand %vm377, %vm345
  %vm410 = vmand %vm378, %vm346
  %vm411 = vmand %vm379, %vm347
  %vm412 = vmand %vm380, %vm348
  %vm413 = vmand %vm381, %vm349
  %vm414 = vmand %vm382, %vm350
  %vm415 = vmand %vm383, %vm351
  %vm416 = vmand %vm384, %vm352
  %vm417 = vmand %vm385, %vm353
  %v418 = vadd.s32 %v104, 8
  %v419 = vadd.s32 %v111, 8
  %v420 = vadd.s32 %v118, 8
  %v421 = vadd.s32 %v125, 8
  %v422 = vadd.s32 %v132, 8
  %v423 = vadd.s32 %v139, 8
  %v424 = vadd.s32 %v146, 8
  %v425 = vadd.s32 %v153, 8
  %v426 = vadd.s32 %v160, 8
  %v427 = vadd.s32 %v167, 8
  %v428 = vadd.s32 %v174, 8
  %v429 = vadd.s32 %v181, 8
  %v430 = vadd.s32 %v188, 8
  %v431 = vadd.s32 %v195, 8
  %v432 = vadd.s32 %v202, 8
  %v433 = vadd.s32 %v209, 8
  %v434 = vadd.s32 %v216, 8
  %v435 = vadd.s32 %v223, 8
  %v436 = vadd.s32 %v230, 8
  %v437 = vadd.s32 %v237, 8
  %v438 = vadd.s32 %v244, 8
  %v439 = vadd.s32 %v251, 8
  %v440 = vadd.s32 %v258, 8
  %v441 = vadd.s32 %v265, 8
  %v442 = vadd.s32 %v272, 8
  %v443 = vadd.s32 %v279, 8
  %v444 = vadd.s32 %v286, 8
  %v445 = vadd.s32 %v293, 8
  %v446 = vadd.s32 %v300, 8
  %v447 = vadd.s32 %v307, 8
  %v448 = vadd.s32 %v314, 8
  %v449 = vadd.s32 %v321, 8
  %v450 = vsel %vm386, %v418, %v104
  %v451 = vsel %vm387, %v419, %v111
  %v452 = vsel %vm388, %v420, %v118
  %v453 = vsel %vm389, %v421, %v125
  %v454 = vsel %vm390, %v422, %v132
  %v455 = vsel %vm391, %v423, %v139
  %v456 = vsel %vm392, %v424, %v146
  %v457 = vsel %vm393, %v425, %v153
  %v458 = vsel %vm394, %v426, %v160
  %v459 = vsel %vm395, %v427, %v167
  %v460 = vsel %vm396, %v428, %v174
  %v461 = vsel %vm397, %v429, %v181
  %v462 = vsel %vm398, %v430, %v188
  %v463 = vsel %vm399, %v431, %v195
  %v464 = vsel %vm400, %v432, %v202
  %v465 = vsel %vm401, %v433, %v209
  %v466 = vsel %vm402, %v434, %v216
  %v467 = vsel %vm403, %v435, %v223
  %v468 = vsel %vm404, %v436, %v230
  %v469 = vsel %vm405, %v437, %v237
  %v470 = vsel %vm406, %v438, %v244
  %v471 = vsel %vm407, %v439, %v251
  %v472 = vsel %vm408, %v440, %v258
  %v473 = vsel %vm409, %v441, %v265
  %v474 = vsel %vm410, %v442, %v272
  %v475 = vsel %vm411, %v443, %v279
  %v476 = vsel %vm412, %v444, %v286
  %v477 = vsel %vm413, %v445, %v293
  %v478 = vsel %vm414, %v446, %v300
  %v479 = vsel %vm415, %v447, %v307
  %v480 = vsel %vm416, %v448, %v314
  %v481 = vsel %vm417, %v449, %v321
  %v482 = vrot.slane %v33, 7
  %v483 = vrot.slane %v34, 7
  %v484 = vrot.slane %v35, 7
  %v485 = vrot.slane %v36, 7
  %v486 = vrot.slane %v37, 7
  %v487 = vrot.slane %v38, 7
  %v488 = vrot.slane %v39, 7
  %v489 = vrot.slane %v40, 7
  %v490 = vrot.slane %v41, 7
  %v491 = vrot.slane %v42, 7
  %v492 = vrot.slane %v43, 7
  %v493 = vrot.slane %v44, 7
  %v494 = vrot.slane %v45, 7
  %v495 = vrot.slane %v46, 7
  %v496 = vrot.slane %v47, 7
  %v497 = vrot.slane %v48, 7
  %v498 = vrot.slane %v49, 7
  %v499 = vrot.slane %v50, 7
  %v500 = vrot.slane %v51, 7
  %v501 = vrot.slane %v52, 7
  %v502 = vrot.slane %v53, 7
  %v503 = vrot.slane %v54, 7
  %v504 = vrot.slane %v55, 7
  %v505 = vrot.slane %v56, 7
  %v506 = vrot.slane %v57, 7
  %v507 = vrot.slane %v58, 7
  %v508 = vrot.slane %v59, 7
  %v509 = vrot.slane %v60, 7
  %v510 = vrot.slane %v61, 7
  %v511 = vrot.slane %v62, 7
  %v512 = vrot.slane %v63, 7
  %v513 = vrot.slane %v64, 7
  %vm514 = vcmp.lt.s32.totalorder %v66, 1
  %v515 = vsel %vm514, %v512, %v513
  %v516 = vsel %vm514, %v511, %v512
  %v517 = vsel %vm514, %v510, %v511
  %v518 = vsel %vm514, %v509, %v510
  %v519 = vsel %vm514, %v508, %v509
  %v520 = vsel %vm514, %v507, %v508
  %v521 = vsel %vm514, %v506, %v507
  %v522 = vsel %vm514, %v505, %v506
  %v523 = vsel %vm514, %v504, %v505
  %v524 = vsel %vm514, %v503, %v504
  %v525 = vsel %vm514, %v502, %v503
  %v526 = vsel %vm514, %v501, %v502
  %v527 = vsel %vm514, %v500, %v501
  %v528 = vsel %vm514, %v499, %v500
  %v529 = vsel %vm514, %v498, %v499
  %v530 = vsel %vm514, %v497, %v498
  %v531 = vsel %vm514, %v496, %v497
  %v532 = vsel %vm514, %v495, %v496
  %v533 = vsel %vm514, %v494, %v495
  %v534 = vsel %vm514, %v493, %v494
  %v535 = vsel %vm514, %v492, %v493
  %v536 = vsel %vm514, %v491, %v492
  %v537 = vsel %vm514, %v490, %v491
  %v538 = vsel %vm514, %v489, %v490
  %v539 = vsel %vm514, %v488, %v489
  %v540 = vsel %vm514, %v487, %v488
  %v541 = vsel %vm514, %v486, %v487
  %v542 = vsel %vm514, %v485, %v486
  %v543 = vsel %vm514, %v484, %v485
  %v544 = vsel %vm514, %v483, %v484
  %v545 = vsel %vm514, %v482, %v483
  %v546 = vsel %vm514, %v513, %v482
  %vm547 = vcmp.ge.s32.totalorder %v450, 1
  %vm548 = vcmp.ge.s32.totalorder %v451, 1
  %vm549 = vcmp.ge.s32.totalorder %v452, 1
  %vm550 = vcmp.ge.s32.totalorder %v453, 1
  %vm551 = vcmp.ge.s32.totalorder %v454, 1
  %vm552 = vcmp.ge.s32.totalorder %v455, 1
  %vm553 = vcmp.ge.s32.totalorder %v456, 1
  %vm554 = vcmp.ge.s32.totalorder %v457, 1
  %vm555 = vcmp.ge.s32.totalorder %v458, 1
  %vm556 = vcmp.ge.s32.totalorder %v459, 1
  %vm557 = vcmp.ge.s32.totalorder %v460, 1
  %vm558 = vcmp.ge.s32.totalorder %v461, 1
  %vm559 = vcmp.ge.s32.totalorder %v462, 1
  %vm560 = vcmp.ge.s32.totalorder %v463, 1
  %vm561 = vcmp.ge.s32.totalorder %v464, 1
  %vm562 = vcmp.ge.s32.totalorder %v465, 1
  %vm563 = vcmp.ge.s32.totalorder %v466, 1
  %vm564 = vcmp.ge.s32.totalorder %v467, 1
  %vm565 = vcmp.ge.s32.totalorder %v468, 1
  %vm566 = vcmp.ge.s32.totalorder %v469, 1
  %vm567 = vcmp.ge.s32.totalorder %v470, 1
  %vm568 = vcmp.ge.s32.totalorder %v471, 1
  %vm569 = vcmp.ge.s32.totalorder %v472, 1
  %vm570 = vcmp.ge.s32.totalorder %v473, 1
  %vm571 = vcmp.ge.s32.totalorder %v474, 1
  %vm572 = vcmp.ge.s32.totalorder %v475, 1
  %vm573 = vcmp.ge.s32.totalorder %v476, 1
  %vm574 = vcmp.ge.s32.totalorder %v477, 1
  %vm575 = vcmp.ge.s32.totalorder %v478, 1
  %vm576 = vcmp.ge.s32.totalorder %v479, 1
  %vm577 = vcmp.ge.s32.totalorder %v480, 1
  %vm578 = vcmp.ge.s32.totalorder %v481, 1
  %v579 = vsel %vm547, %v546, 0.0
  %v580 = vsel %vm548, %v545, 0.0
  %v581 = vsel %vm549, %v544, 0.0
  %v582 = vsel %vm550, %v543, 0.0
  %v583 = vsel %vm551, %v542, 0.0
  %v584 = vsel %vm552, %v541, 0.0
  %v585 = vsel %vm553, %v540, 0.0
  %v586 = vsel %vm554, %v539, 0.0
  %v587 = vsel %vm555, %v538, 0.0
  %v588 = vsel %vm556, %v537, 0.0
  %v589 = vsel %vm557, %v536, 0.0
  %v590 = vsel %vm558, %v535, 0.0
  %v591 = vsel %vm559, %v534, 0.0
  %v592 = vsel %vm560, %v533, 0.0
  %v593 = vsel %vm561, %v532, 0.0
  %v594 = vsel %vm562, %v531, 0.0
  %v595 = vsel %vm563, %v530, 0.0
  %v596 = vsel %vm564, %v529, 0.0
  %v597 = vsel %vm565, %v528, 0.0
  %v598 = vsel %vm566, %v527, 0.0
  %v599 = vsel %vm567, %v526, 0.0
  %v600 = vsel %vm568, %v525, 0.0
  %v601 = vsel %vm569, %v524, 0.0
  %v602 = vsel %vm570, %v523, 0.0
  %v603 = vsel %vm571, %v522, 0.0
  %v604 = vsel %vm572, %v521, 0.0
  %v605 = vsel %vm573, %v520, 0.0
  %v606 = vsel %vm574, %v519, 0.0
  %v607 = vsel %vm575, %v518, 0.0
  %v608 = vsel %vm576, %v517, 0.0
  %v609 = vsel %vm577, %v516, 0.0
  %v610 = vsel %vm578, %v515, 0.0
  %v611 = vrot.slane %v33, 6
  %v612 = vrot.slane %v34, 6
  %v613 = vrot.slane %v35, 6
  %v614 = vrot.slane %v36, 6
  %v615 = vrot.slane %v37, 6
  %v616 = vrot.slane %v38, 6
  %v617 = vrot.slane %v39, 6
  %v618 = vrot.slane %v40, 6
  %v619 = vrot.slane %v41, 6
  %v620 = vrot.slane %v42, 6
  %v621 = vrot.slane %v43, 6
  %v622 = vrot.slane %v44, 6
  %v623 = vrot.slane %v45, 6
  %v624 = vrot.slane %v46, 6
  %v625 = vrot.slane %v47, 6
  %v626 = vrot.slane %v48, 6
  %v627 = vrot.slane %v49, 6
  %v628 = vrot.slane %v50, 6
  %v629 = vrot.slane %v51, 6
  %v630 = vrot.slane %v52, 6
  %v631 = vrot.slane %v53, 6
  %v632 = vrot.slane %v54, 6
  %v633 = vrot.slane %v55, 6
  %v634 = vrot.slane %v56, 6
  %v635 = vrot.slane %v57, 6
  %v636 = vrot.slane %v58, 6
  %v637 = vrot.slane %v59, 6
  %v638 = vrot.slane %v60, 6
  %v639 = vrot.slane %v61, 6
  %v640 = vrot.slane %v62, 6
  %v641 = vrot.slane %v63, 6
  %v642 = vrot.slane %v64, 6
  %vm643 = vcmp.lt.s32.totalorder %v66, 2
  %v644 = vsel %vm643, %v641, %v642
  %v645 = vsel %vm643, %v640, %v641
  %v646 = vsel %vm643, %v639, %v640
  %v647 = vsel %vm643, %v638, %v639
  %v648 = vsel %vm643, %v637, %v638
  %v649 = vsel %vm643, %v636, %v637
  %v650 = vsel %vm643, %v635, %v636
  %v651 = vsel %vm643, %v634, %v635
  %v652 = vsel %vm643, %v633, %v634
  %v653 = vsel %vm643, %v632, %v633
  %v654 = vsel %vm643, %v631, %v632
  %v655 = vsel %vm643, %v630, %v631
  %v656 = vsel %vm643, %v629, %v630
  %v657 = vsel %vm643, %v628, %v629
  %v658 = vsel %vm643, %v627, %v628
  %v659 = vsel %vm643, %v626, %v627
  %v660 = vsel %vm643, %v625, %v626
  %v661 = vsel %vm643, %v624, %v625
  %v662 = vsel %vm643, %v623, %v624
  %v663 = vsel %vm643, %v622, %v623
  %v664 = vsel %vm643, %v621, %v622
  %v665 = vsel %vm643, %v620, %v621
  %v666 = vsel %vm643, %v619, %v620
  %v667 = vsel %vm643, %v618, %v619
  %v668 = vsel %vm643, %v617, %v618
  %v669 = vsel %vm643, %v616, %v617
  %v670 = vsel %vm643, %v615, %v616
  %v671 = vsel %vm643, %v614, %v615
  %v672 = vsel %vm643, %v613, %v614
  %v673 = vsel %vm643, %v612, %v613
  %v674 = vsel %vm643, %v611, %v612
  %v675 = vsel %vm643, %v642, %v611
  %vm676 = vcmp.ge.s32.totalorder %v450, 2
  %vm677 = vcmp.ge.s32.totalorder %v451, 2
  %vm678 = vcmp.ge.s32.totalorder %v452, 2
  %vm679 = vcmp.ge.s32.totalorder %v453, 2
  %vm680 = vcmp.ge.s32.totalorder %v454, 2
  %vm681 = vcmp.ge.s32.totalorder %v455, 2
  %vm682 = vcmp.ge.s32.totalorder %v456, 2
  %vm683 = vcmp.ge.s32.totalorder %v457, 2
  %vm684 = vcmp.ge.s32.totalorder %v458, 2
  %vm685 = vcmp.ge.s32.totalorder %v459, 2
  %vm686 = vcmp.ge.s32.totalorder %v460, 2
  %vm687 = vcmp.ge.s32.totalorder %v461, 2
  %vm688 = vcmp.ge.s32.totalorder %v462, 2
  %vm689 = vcmp.ge.s32.totalorder %v463, 2
  %vm690 = vcmp.ge.s32.totalorder %v464, 2
  %vm691 = vcmp.ge.s32.totalorder %v465, 2
  %vm692 = vcmp.ge.s32.totalorder %v466, 2
  %vm693 = vcmp.ge.s32.totalorder %v467, 2
  %vm694 = vcmp.ge.s32.totalorder %v468, 2
  %vm695 = vcmp.ge.s32.totalorder %v469, 2
  %vm696 = vcmp.ge.s32.totalorder %v470, 2
  %vm697 = vcmp.ge.s32.totalorder %v471, 2
  %vm698 = vcmp.ge.s32.totalorder %v472, 2
  %vm699 = vcmp.ge.s32.totalorder %v473, 2
  %vm700 = vcmp.ge.s32.totalorder %v474, 2
  %vm701 = vcmp.ge.s32.totalorder %v475, 2
  %vm702 = vcmp.ge.s32.totalorder %v476, 2
  %vm703 = vcmp.ge.s32.totalorder %v477, 2
  %vm704 = vcmp.ge.s32.totalorder %v478, 2
  %vm705 = vcmp.ge.s32.totalorder %v479, 2
  %vm706 = vcmp.ge.s32.totalorder %v480, 2
  %vm707 = vcmp.ge.s32.totalorder %v481, 2
  %v708 = vsel %vm676, %v675, 0.0
  %v709 = vsel %vm677, %v674, 0.0
  %v710 = vsel %vm678, %v673, 0.0
  %v711 = vsel %vm679, %v672, 0.0
  %v712 = vsel %vm680, %v671, 0.0
  %v713 = vsel %vm681, %v670, 0.0
  %v714 = vsel %vm682, %v669, 0.0
  %v715 = vsel %vm683, %v668, 0.0
  %v716 = vsel %vm684, %v667, 0.0
  %v717 = vsel %vm685, %v666, 0.0
  %v718 = vsel %vm686, %v665, 0.0
  %v719 = vsel %vm687, %v664, 0.0
  %v720 = vsel %vm688, %v663, 0.0
  %v721 = vsel %vm689, %v662, 0.0
  %v722 = vsel %vm690, %v661, 0.0
  %v723 = vsel %vm691, %v660, 0.0
  %v724 = vsel %vm692, %v659, 0.0
  %v725 = vsel %vm693, %v658, 0.0
  %v726 = vsel %vm694, %v657, 0.0
  %v727 = vsel %vm695, %v656, 0.0
  %v728 = vsel %vm696, %v655, 0.0
  %v729 = vsel %vm697, %v654, 0.0
  %v730 = vsel %vm698, %v653, 0.0
  %v731 = vsel %vm699, %v652, 0.0
  %v732 = vsel %vm700, %v651, 0.0
  %v733 = vsel %vm701, %v650, 0.0
  %v734 = vsel %vm702, %v649, 0.0
  %v735 = vsel %vm703, %v648, 0.0
  %v736 = vsel %vm704, %v647, 0.0
  %v737 = vsel %vm705, %v646, 0.0
  %v738 = vsel %vm706, %v645, 0.0
  %v739 = vsel %vm707, %v644, 0.0
  %v740 = vrot.slane %v33, 5
  %v741 = vrot.slane %v34, 5
  %v742 = vrot.slane %v35, 5
  %v743 = vrot.slane %v36, 5
  %v744 = vrot.slane %v37, 5
  %v745 = vrot.slane %v38, 5
  %v746 = vrot.slane %v39, 5
  %v747 = vrot.slane %v40, 5
  %v748 = vrot.slane %v41, 5
  %v749 = vrot.slane %v42, 5
  %v750 = vrot.slane %v43, 5
  %v751 = vrot.slane %v44, 5
  %v752 = vrot.slane %v45, 5
  %v753 = vrot.slane %v46, 5
  %v754 = vrot.slane %v47, 5
  %v755 = vrot.slane %v48, 5
  %v756 = vrot.slane %v49, 5
  %v757 = vrot.slane %v50, 5
  %v758 = vrot.slane %v51, 5
  %v759 = vrot.slane %v52, 5
  %v760 = vrot.slane %v53, 5
  %v761 = vrot.slane %v54, 5
  %v762 = vrot.slane %v55, 5
  %v763 = vrot.slane %v56, 5
  %v764 = vrot.slane %v57, 5
  %v765 = vrot.slane %v58, 5
  %v766 = vrot.slane %v59, 5
  %v767 = vrot.slane %v60, 5
  %v768 = vrot.slane %v61, 5
  %v769 = vrot.slane %v62, 5
  %v770 = vrot.slane %v63, 5
  %v771 = vrot.slane %v64, 5
  %vm772 = vcmp.lt.s32.totalorder %v66, 3
  %v773 = vsel %vm772, %v770, %v771
  %v774 = vsel %vm772, %v769, %v770
  %v775 = vsel %vm772, %v768, %v769
  %v776 = vsel %vm772, %v767, %v768
  %v777 = vsel %vm772, %v766, %v767
  %v778 = vsel %vm772, %v765, %v766
  %v779 = vsel %vm772, %v764, %v765
  %v780 = vsel %vm772, %v763, %v764
  %v781 = vsel %vm772, %v762, %v763
  %v782 = vsel %vm772, %v761, %v762
  %v783 = vsel %vm772, %v760, %v761
  %v784 = vsel %vm772, %v759, %v760
  %v785 = vsel %vm772, %v758, %v759
  %v786 = vsel %vm772, %v757, %v758
  %v787 = vsel %vm772, %v756, %v757
  %v788 = vsel %vm772, %v755, %v756
  %v789 = vsel %vm772, %v754, %v755
  %v790 = vsel %vm772, %v753, %v754
  %v791 = vsel %vm772, %v752, %v753
  %v792 = vsel %vm772, %v751, %v752
  %v793 = vsel %vm772, %v750, %v751
  %v794 = vsel %vm772, %v749, %v750
  %v795 = vsel %vm772, %v748, %v749
  %v796 = vsel %vm772, %v747, %v748
  %v797 = vsel %vm772, %v746, %v747
  %v798 = vsel %vm772, %v745, %v746
  %v799 = vsel %vm772, %v744, %v745
  %v800 = vsel %vm772, %v743, %v744
  %v801 = vsel %vm772, %v742, %v743
  %v802 = vsel %vm772, %v741, %v742
  %v803 = vsel %vm772, %v740, %v741
  %v804 = vsel %vm772, %v771, %v740
  %vm805 = vcmp.ge.s32.totalorder %v450, 3
  %vm806 = vcmp.ge.s32.totalorder %v451, 3
  %vm807 = vcmp.ge.s32.totalorder %v452, 3
  %vm808 = vcmp.ge.s32.totalorder %v453, 3
  %vm809 = vcmp.ge.s32.totalorder %v454, 3
  %vm810 = vcmp.ge.s32.totalorder %v455, 3
  %vm811 = vcmp.ge.s32.totalorder %v456, 3
  %vm812 = vcmp.ge.s32.totalorder %v457, 3
  %vm813 = vcmp.ge.s32.totalorder %v458, 3
  %vm814 = vcmp.ge.s32.totalorder %v459, 3
  %vm815 = vcmp.ge.s32.totalorder %v460, 3
  %vm816 = vcmp.ge.s32.totalorder %v461, 3
  %vm817 = vcmp.ge.s32.totalorder %v462, 3
  %vm818 = vcmp.ge.s32.totalorder %v463, 3
  %vm819 = vcmp.ge.s32.totalorder %v464, 3
  %vm820 = vcmp.ge.s32.totalorder %v465, 3
  %vm821 = vcmp.ge.s32.totalorder %v466, 3
  %vm822 = vcmp.ge.s32.totalorder %v467, 3
  %vm823 = vcmp.ge.s32.totalorder %v468, 3
  %vm824 = vcmp.ge.s32.totalorder %v469, 3
  %vm825 = vcmp.ge.s32.totalorder %v470, 3
  %vm826 = vcmp.ge.s32.totalorder %v471, 3
  %vm827 = vcmp.ge.s32.totalorder %v472, 3
  %vm828 = vcmp.ge.s32.totalorder %v473, 3
  %vm829 = vcmp.ge.s32.totalorder %v474, 3
  %vm830 = vcmp.ge.s32.totalorder %v475, 3
  %vm831 = vcmp.ge.s32.totalorder %v476, 3
  %vm832 = vcmp.ge.s32.totalorder %v477, 3
  %vm833 = vcmp.ge.s32.totalorder %v478, 3
  %vm834 = vcmp.ge.s32.totalorder %v479, 3
  %vm835 = vcmp.ge.s32.totalorder %v480, 3
  %vm836 = vcmp.ge.s32.totalorder %v481, 3
  %v837 = vsel %vm805, %v804, 0.0
  %v838 = vsel %vm806, %v803, 0.0
  %v839 = vsel %vm807, %v802, 0.0
  %v840 = vsel %vm808, %v801, 0.0
  %v841 = vsel %vm809, %v800, 0.0
  %v842 = vsel %vm810, %v799, 0.0
  %v843 = vsel %vm811, %v798, 0.0
  %v844 = vsel %vm812, %v797, 0.0
  %v845 = vsel %vm813, %v796, 0.0
  %v846 = vsel %vm814, %v795, 0.0
  %v847 = vsel %vm815, %v794, 0.0
  %v848 = vsel %vm816, %v793, 0.0
  %v849 = vsel %vm817, %v792, 0.0
  %v850 = vsel %vm818, %v791, 0.0
  %v851 = vsel %vm819, %v790, 0.0
  %v852 = vsel %vm820, %v789, 0.0
  %v853 = vsel %vm821, %v788, 0.0
  %v854 = vsel %vm822, %v787, 0.0
  %v855 = vsel %vm823, %v786, 0.0
  %v856 = vsel %vm824, %v785, 0.0
  %v857 = vsel %vm825, %v784, 0.0
  %v858 = vsel %vm826, %v783, 0.0
  %v859 = vsel %vm827, %v782, 0.0
  %v860 = vsel %vm828, %v781, 0.0
  %v861 = vsel %vm829, %v780, 0.0
  %v862 = vsel %vm830, %v779, 0.0
  %v863 = vsel %vm831, %v778, 0.0
  %v864 = vsel %vm832, %v777, 0.0
  %v865 = vsel %vm833, %v776, 0.0
  %v866 = vsel %vm834, %v775, 0.0
  %v867 = vsel %vm835, %v774, 0.0
  %v868 = vsel %vm836, %v773, 0.0
  %v869 = vrot.slane %v33, 4
  %v870 = vrot.slane %v34, 4
  %v871 = vrot.slane %v35, 4
  %v872 = vrot.slane %v36, 4
  %v873 = vrot.slane %v37, 4
  %v874 = vrot.slane %v38, 4
  %v875 = vrot.slane %v39, 4
  %v876 = vrot.slane %v40, 4
  %v877 = vrot.slane %v41, 4
  %v878 = vrot.slane %v42, 4
  %v879 = vrot.slane %v43, 4
  %v880 = vrot.slane %v44, 4
  %v881 = vrot.slane %v45, 4
  %v882 = vrot.slane %v46, 4
  %v883 = vrot.slane %v47, 4
  %v884 = vrot.slane %v48, 4
  %v885 = vrot.slane %v49, 4
  %v886 = vrot.slane %v50, 4
  %v887 = vrot.slane %v51, 4
  %v888 = vrot.slane %v52, 4
  %v889 = vrot.slane %v53, 4
  %v890 = vrot.slane %v54, 4
  %v891 = vrot.slane %v55, 4
  %v892 = vrot.slane %v56, 4
  %v893 = vrot.slane %v57, 4
  %v894 = vrot.slane %v58, 4
  %v895 = vrot.slane %v59, 4
  %v896 = vrot.slane %v60, 4
  %v897 = vrot.slane %v61, 4
  %v898 = vrot.slane %v62, 4
  %v899 = vrot.slane %v63, 4
  %v900 = vrot.slane %v64, 4
  %vm901 = vcmp.lt.s32.totalorder %v66, 4
  %v902 = vsel %vm901, %v899, %v900
  %v903 = vsel %vm901, %v898, %v899
  %v904 = vsel %vm901, %v897, %v898
  %v905 = vsel %vm901, %v896, %v897
  %v906 = vsel %vm901, %v895, %v896
  %v907 = vsel %vm901, %v894, %v895
  %v908 = vsel %vm901, %v893, %v894
  %v909 = vsel %vm901, %v892, %v893
  %v910 = vsel %vm901, %v891, %v892
  %v911 = vsel %vm901, %v890, %v891
  %v912 = vsel %vm901, %v889, %v890
  %v913 = vsel %vm901, %v888, %v889
  %v914 = vsel %vm901, %v887, %v888
  %v915 = vsel %vm901, %v886, %v887
  %v916 = vsel %vm901, %v885, %v886
  %v917 = vsel %vm901, %v884, %v885
  %v918 = vsel %vm901, %v883, %v884
  %v919 = vsel %vm901, %v882, %v883
  %v920 = vsel %vm901, %v881, %v882
  %v921 = vsel %vm901, %v880, %v881
  %v922 = vsel %vm901, %v879, %v880
  %v923 = vsel %vm901, %v878, %v879
  %v924 = vsel %vm901, %v877, %v878
  %v925 = vsel %vm901, %v876, %v877
  %v926 = vsel %vm901, %v875, %v876
  %v927 = vsel %vm901, %v874, %v875
  %v928 = vsel %vm901, %v873, %v874
  %v929 = vsel %vm901, %v872, %v873
  %v930 = vsel %vm901, %v871, %v872
  %v931 = vsel %vm901, %v870, %v871
  %v932 = vsel %vm901, %v869, %v870
  %v933 = vsel %vm901, %v900, %v869
  %vm934 = vcmp.ge.s32.totalorder %v450, 4
  %vm935 = vcmp.ge.s32.totalorder %v451, 4
  %vm936 = vcmp.ge.s32.totalorder %v452, 4
  %vm937 = vcmp.ge.s32.totalorder %v453, 4
  %vm938 = vcmp.ge.s32.totalorder %v454, 4
  %vm939 = vcmp.ge.s32.totalorder %v455, 4
  %vm940 = vcmp.ge.s32.totalorder %v456, 4
  %vm941 = vcmp.ge.s32.totalorder %v457, 4
  %vm942 = vcmp.ge.s32.totalorder %v458, 4
  %vm943 = vcmp.ge.s32.totalorder %v459, 4
  %vm944 = vcmp.ge.s32.totalorder %v460, 4
  %vm945 = vcmp.ge.s32.totalorder %v461, 4
  %vm946 = vcmp.ge.s32.totalorder %v462, 4
  %vm947 = vcmp.ge.s32.totalorder %v463, 4
  %vm948 = vcmp.ge.s32.totalorder %v464, 4
  %vm949 = vcmp.ge.s32.totalorder %v465, 4
  %vm950 = vcmp.ge.s32.totalorder %v466, 4
  %vm951 = vcmp.ge.s32.totalorder %v467, 4
  %vm952 = vcmp.ge.s32.totalorder %v468, 4
  %vm953 = vcmp.ge.s32.totalorder %v469, 4
  %vm954 = vcmp.ge.s32.totalorder %v470, 4
  %vm955 = vcmp.ge.s32.totalorder %v471, 4
  %vm956 = vcmp.ge.s32.totalorder %v472, 4
  %vm957 = vcmp.ge.s32.totalorder %v473, 4
  %vm958 = vcmp.ge.s32.totalorder %v474, 4
  %vm959 = vcmp.ge.s32.totalorder %v475, 4
  %vm960 = vcmp.ge.s32.totalorder %v476, 4
  %vm961 = vcmp.ge.s32.totalorder %v477, 4
  %vm962 = vcmp.ge.s32.totalorder %v478, 4
  %vm963 = vcmp.ge.s32.totalorder %v479, 4
  %vm964 = vcmp.ge.s32.totalorder %v480, 4
  %vm965 = vcmp.ge.s32.totalorder %v481, 4
  %v966 = vsel %vm934, %v933, 0.0
  %v967 = vsel %vm935, %v932, 0.0
  %v968 = vsel %vm936, %v931, 0.0
  %v969 = vsel %vm937, %v930, 0.0
  %v970 = vsel %vm938, %v929, 0.0
  %v971 = vsel %vm939, %v928, 0.0
  %v972 = vsel %vm940, %v927, 0.0
  %v973 = vsel %vm941, %v926, 0.0
  %v974 = vsel %vm942, %v925, 0.0
  %v975 = vsel %vm943, %v924, 0.0
  %v976 = vsel %vm944, %v923, 0.0
  %v977 = vsel %vm945, %v922, 0.0
  %v978 = vsel %vm946, %v921, 0.0
  %v979 = vsel %vm947, %v920, 0.0
  %v980 = vsel %vm948, %v919, 0.0
  %v981 = vsel %vm949, %v918, 0.0
  %v982 = vsel %vm950, %v917, 0.0
  %v983 = vsel %vm951, %v916, 0.0
  %v984 = vsel %vm952, %v915, 0.0
  %v985 = vsel %vm953, %v914, 0.0
  %v986 = vsel %vm954, %v913, 0.0
  %v987 = vsel %vm955, %v912, 0.0
  %v988 = vsel %vm956, %v911, 0.0
  %v989 = vsel %vm957, %v910, 0.0
  %v990 = vsel %vm958, %v909, 0.0
  %v991 = vsel %vm959, %v908, 0.0
  %v992 = vsel %vm960, %v907, 0.0
  %v993 = vsel %vm961, %v906, 0.0
  %v994 = vsel %vm962, %v905, 0.0
  %v995 = vsel %vm963, %v904, 0.0
  %v996 = vsel %vm964, %v903, 0.0
  %v997 = vsel %vm965, %v902, 0.0
  %v998 = vrot.slane %v33, 3
  %v999 = vrot.slane %v34, 3
  %v1000 = vrot.slane %v35, 3
  %v1001 = vrot.slane %v36, 3
  %v1002 = vrot.slane %v37, 3
  %v1003 = vrot.slane %v38, 3
  %v1004 = vrot.slane %v39, 3
  %v1005 = vrot.slane %v40, 3
  %v1006 = vrot.slane %v41, 3
  %v1007 = vrot.slane %v42, 3
  %v1008 = vrot.slane %v43, 3
  %v1009 = vrot.slane %v44, 3
  %v1010 = vrot.slane %v45, 3
  %v1011 = vrot.slane %v46, 3
  %v1012 = vrot.slane %v47, 3
  %v1013 = vrot.slane %v48, 3
  %v1014 = vrot.slane %v49, 3
  %v1015 = vrot.slane %v50, 3
  %v1016 = vrot.slane %v51, 3
  %v1017 = vrot.slane %v52, 3
  %v1018 = vrot.slane %v53, 3
  %v1019 = vrot.slane %v54, 3
  %v1020 = vrot.slane %v55, 3
  %v1021 = vrot.slane %v56, 3
  %v1022 = vrot.slane %v57, 3
  %v1023 = vrot.slane %v58, 3
  %v1024 = vrot.slane %v59, 3
  %v1025 = vrot.slane %v60, 3
  %v1026 = vrot.slane %v61, 3
  %v1027 = vrot.slane %v62, 3
  %v1028 = vrot.slane %v63, 3
  %v1029 = vrot.slane %v64, 3
  %vm1030 = vcmp.lt.s32.totalorder %v66, 5
  %v1031 = vsel %vm1030, %v1028, %v1029
  %v1032 = vsel %vm1030, %v1027, %v1028
  %v1033 = vsel %vm1030, %v1026, %v1027
  %v1034 = vsel %vm1030, %v1025, %v1026
  %v1035 = vsel %vm1030, %v1024, %v1025
  %v1036 = vsel %vm1030, %v1023, %v1024
  %v1037 = vsel %vm1030, %v1022, %v1023
  %v1038 = vsel %vm1030, %v1021, %v1022
  %v1039 = vsel %vm1030, %v1020, %v1021
  %v1040 = vsel %vm1030, %v1019, %v1020
  %v1041 = vsel %vm1030, %v1018, %v1019
  %v1042 = vsel %vm1030, %v1017, %v1018
  %v1043 = vsel %vm1030, %v1016, %v1017
  %v1044 = vsel %vm1030, %v1015, %v1016
  %v1045 = vsel %vm1030, %v1014, %v1015
  %v1046 = vsel %vm1030, %v1013, %v1014
  %v1047 = vsel %vm1030, %v1012, %v1013
  %v1048 = vsel %vm1030, %v1011, %v1012
  %v1049 = vsel %vm1030, %v1010, %v1011
  %v1050 = vsel %vm1030, %v1009, %v1010
  %v1051 = vsel %vm1030, %v1008, %v1009
  %v1052 = vsel %vm1030, %v1007, %v1008
  %v1053 = vsel %vm1030, %v1006, %v1007
  %v1054 = vsel %vm1030, %v1005, %v1006
  %v1055 = vsel %vm1030, %v1004, %v1005
  %v1056 = vsel %vm1030, %v1003, %v1004
  %v1057 = vsel %vm1030, %v1002, %v1003
  %v1058 = vsel %vm1030, %v1001, %v1002
  %v1059 = vsel %vm1030, %v1000, %v1001
  %v1060 = vsel %vm1030, %v999, %v1000
  %v1061 = vsel %vm1030, %v998, %v999
  %v1062 = vsel %vm1030, %v1029, %v998
  %vm1063 = vcmp.ge.s32.totalorder %v450, 5
  %vm1064 = vcmp.ge.s32.totalorder %v451, 5
  %vm1065 = vcmp.ge.s32.totalorder %v452, 5
  %vm1066 = vcmp.ge.s32.totalorder %v453, 5
  %vm1067 = vcmp.ge.s32.totalorder %v454, 5
  %vm1068 = vcmp.ge.s32.totalorder %v455, 5
  %vm1069 = vcmp.ge.s32.totalorder %v456, 5
  %vm1070 = vcmp.ge.s32.totalorder %v457, 5
  %vm1071 = vcmp.ge.s32.totalorder %v458, 5
  %vm1072 = vcmp.ge.s32.totalorder %v459, 5
  %vm1073 = vcmp.ge.s32.totalorder %v460, 5
  %vm1074 = vcmp.ge.s32.totalorder %v461, 5
  %vm1075 = vcmp.ge.s32.totalorder %v462, 5
  %vm1076 = vcmp.ge.s32.totalorder %v463, 5
  %vm1077 = vcmp.ge.s32.totalorder %v464, 5
  %vm1078 = vcmp.ge.s32.totalorder %v465, 5
  %vm1079 = vcmp.ge.s32.totalorder %v466, 5
  %vm1080 = vcmp.ge.s32.totalorder %v467, 5
  %vm1081 = vcmp.ge.s32.totalorder %v468, 5
  %vm1082 = vcmp.ge.s32.totalorder %v469, 5
  %vm1083 = vcmp.ge.s32.totalorder %v470, 5
  %vm1084 = vcmp.ge.s32.totalorder %v471, 5
  %vm1085 = vcmp.ge.s32.totalorder %v472, 5
  %vm1086 = vcmp.ge.s32.totalorder %v473, 5
  %vm1087 = vcmp.ge.s32.totalorder %v474, 5
  %vm1088 = vcmp.ge.s32.totalorder %v475, 5
  %vm1089 = vcmp.ge.s32.totalorder %v476, 5
  %vm1090 = vcmp.ge.s32.totalorder %v477, 5
  %vm1091 = vcmp.ge.s32.totalorder %v478, 5
  %vm1092 = vcmp.ge.s32.totalorder %v479, 5
  %vm1093 = vcmp.ge.s32.totalorder %v480, 5
  %vm1094 = vcmp.ge.s32.totalorder %v481, 5
  %v1095 = vsel %vm1063, %v1062, 0.0
  %v1096 = vsel %vm1064, %v1061, 0.0
  %v1097 = vsel %vm1065, %v1060, 0.0
  %v1098 = vsel %vm1066, %v1059, 0.0
  %v1099 = vsel %vm1067, %v1058, 0.0
  %v1100 = vsel %vm1068, %v1057, 0.0
  %v1101 = vsel %vm1069, %v1056, 0.0
  %v1102 = vsel %vm1070, %v1055, 0.0
  %v1103 = vsel %vm1071, %v1054, 0.0
  %v1104 = vsel %vm1072, %v1053, 0.0
  %v1105 = vsel %vm1073, %v1052, 0.0
  %v1106 = vsel %vm1074, %v1051, 0.0
  %v1107 = vsel %vm1075, %v1050, 0.0
  %v1108 = vsel %vm1076, %v1049, 0.0
  %v1109 = vsel %vm1077, %v1048, 0.0
  %v1110 = vsel %vm1078, %v1047, 0.0
  %v1111 = vsel %vm1079, %v1046, 0.0
  %v1112 = vsel %vm1080, %v1045, 0.0
  %v1113 = vsel %vm1081, %v1044, 0.0
  %v1114 = vsel %vm1082, %v1043, 0.0
  %v1115 = vsel %vm1083, %v1042, 0.0
  %v1116 = vsel %vm1084, %v1041, 0.0
  %v1117 = vsel %vm1085, %v1040, 0.0
  %v1118 = vsel %vm1086, %v1039, 0.0
  %v1119 = vsel %vm1087, %v1038, 0.0
  %v1120 = vsel %vm1088, %v1037, 0.0
  %v1121 = vsel %vm1089, %v1036, 0.0
  %v1122 = vsel %vm1090, %v1035, 0.0
  %v1123 = vsel %vm1091, %v1034, 0.0
  %v1124 = vsel %vm1092, %v1033, 0.0
  %v1125 = vsel %vm1093, %v1032, 0.0
  %v1126 = vsel %vm1094, %v1031, 0.0
  %v1127 = vrot.slane %v33, 2
  %v1128 = vrot.slane %v34, 2
  %v1129 = vrot.slane %v35, 2
  %v1130 = vrot.slane %v36, 2
  %v1131 = vrot.slane %v37, 2
  %v1132 = vrot.slane %v38, 2
  %v1133 = vrot.slane %v39, 2
  %v1134 = vrot.slane %v40, 2
  %v1135 = vrot.slane %v41, 2
  %v1136 = vrot.slane %v42, 2
  %v1137 = vrot.slane %v43, 2
  %v1138 = vrot.slane %v44, 2
  %v1139 = vrot.slane %v45, 2
  %v1140 = vrot.slane %v46, 2
  %v1141 = vrot.slane %v47, 2
  %v1142 = vrot.slane %v48, 2
  %v1143 = vrot.slane %v49, 2
  %v1144 = vrot.slane %v50, 2
  %v1145 = vrot.slane %v51, 2
  %v1146 = vrot.slane %v52, 2
  %v1147 = vrot.slane %v53, 2
  %v1148 = vrot.slane %v54, 2
  %v1149 = vrot.slane %v55, 2
  %v1150 = vrot.slane %v56, 2
  %v1151 = vrot.slane %v57, 2
  %v1152 = vrot.slane %v58, 2
  %v1153 = vrot.slane %v59, 2
  %v1154 = vrot.slane %v60, 2
  %v1155 = vrot.slane %v61, 2
  %v1156 = vrot.slane %v62, 2
  %v1157 = vrot.slane %v63, 2
  %v1158 = vrot.slane %v64, 2
  %vm1159 = vcmp.lt.s32.totalorder %v66, 6
  %v1160 = vsel %vm1159, %v1157, %v1158
  %v1161 = vsel %vm1159, %v1156, %v1157
  %v1162 = vsel %vm1159, %v1155, %v1156
  %v1163 = vsel %vm1159, %v1154, %v1155
  %v1164 = vsel %vm1159, %v1153, %v1154
  %v1165 = vsel %vm1159, %v1152, %v1153
  %v1166 = vsel %vm1159, %v1151, %v1152
  %v1167 = vsel %vm1159, %v1150, %v1151
  %v1168 = vsel %vm1159, %v1149, %v1150
  %v1169 = vsel %vm1159, %v1148, %v1149
  %v1170 = vsel %vm1159, %v1147, %v1148
  %v1171 = vsel %vm1159, %v1146, %v1147
  %v1172 = vsel %vm1159, %v1145, %v1146
  %v1173 = vsel %vm1159, %v1144, %v1145
  %v1174 = vsel %vm1159, %v1143, %v1144
  %v1175 = vsel %vm1159, %v1142, %v1143
  %v1176 = vsel %vm1159, %v1141, %v1142
  %v1177 = vsel %vm1159, %v1140, %v1141
  %v1178 = vsel %vm1159, %v1139, %v1140
  %v1179 = vsel %vm1159, %v1138, %v1139
  %v1180 = vsel %vm1159, %v1137, %v1138
  %v1181 = vsel %vm1159, %v1136, %v1137
  %v1182 = vsel %vm1159, %v1135, %v1136
  %v1183 = vsel %vm1159, %v1134, %v1135
  %v1184 = vsel %vm1159, %v1133, %v1134
  %v1185 = vsel %vm1159, %v1132, %v1133
  %v1186 = vsel %vm1159, %v1131, %v1132
  %v1187 = vsel %vm1159, %v1130, %v1131
  %v1188 = vsel %vm1159, %v1129, %v1130
  %v1189 = vsel %vm1159, %v1128, %v1129
  %v1190 = vsel %vm1159, %v1127, %v1128
  %v1191 = vsel %vm1159, %v1158, %v1127
  %vm1192 = vcmp.ge.s32.totalorder %v450, 6
  %vm1193 = vcmp.ge.s32.totalorder %v451, 6
  %vm1194 = vcmp.ge.s32.totalorder %v452, 6
  %vm1195 = vcmp.ge.s32.totalorder %v453, 6
  %vm1196 = vcmp.ge.s32.totalorder %v454, 6
  %vm1197 = vcmp.ge.s32.totalorder %v455, 6
  %vm1198 = vcmp.ge.s32.totalorder %v456, 6
  %vm1199 = vcmp.ge.s32.totalorder %v457, 6
  %vm1200 = vcmp.ge.s32.totalorder %v458, 6
  %vm1201 = vcmp.ge.s32.totalorder %v459, 6
  %vm1202 = vcmp.ge.s32.totalorder %v460, 6
  %vm1203 = vcmp.ge.s32.totalorder %v461, 6
  %vm1204 = vcmp.ge.s32.totalorder %v462, 6
  %vm1205 = vcmp.ge.s32.totalorder %v463, 6
  %vm1206 = vcmp.ge.s32.totalorder %v464, 6
  %vm1207 = vcmp.ge.s32.totalorder %v465, 6
  %vm1208 = vcmp.ge.s32.totalorder %v466, 6
  %vm1209 = vcmp.ge.s32.totalorder %v467, 6
  %vm1210 = vcmp.ge.s32.totalorder %v468, 6
  %vm1211 = vcmp.ge.s32.totalorder %v469, 6
  %vm1212 = vcmp.ge.s32.totalorder %v470, 6
  %vm1213 = vcmp.ge.s32.totalorder %v471, 6
  %vm1214 = vcmp.ge.s32.totalorder %v472, 6
  %vm1215 = vcmp.ge.s32.totalorder %v473, 6
  %vm1216 = vcmp.ge.s32.totalorder %v474, 6
  %vm1217 = vcmp.ge.s32.totalorder %v475, 6
  %vm1218 = vcmp.ge.s32.totalorder %v476, 6
  %vm1219 = vcmp.ge.s32.totalorder %v477, 6
  %vm1220 = vcmp.ge.s32.totalorder %v478, 6
  %vm1221 = vcmp.ge.s32.totalorder %v479, 6
  %vm1222 = vcmp.ge.s32.totalorder %v480, 6
  %vm1223 = vcmp.ge.s32.totalorder %v481, 6
  %v1224 = vsel %vm1192, %v1191, 0.0
  %v1225 = vsel %vm1193, %v1190, 0.0
  %v1226 = vsel %vm1194, %v1189, 0.0
  %v1227 = vsel %vm1195, %v1188, 0.0
  %v1228 = vsel %vm1196, %v1187, 0.0
  %v1229 = vsel %vm1197, %v1186, 0.0
  %v1230 = vsel %vm1198, %v1185, 0.0
  %v1231 = vsel %vm1199, %v1184, 0.0
  %v1232 = vsel %vm1200, %v1183, 0.0
  %v1233 = vsel %vm1201, %v1182, 0.0
  %v1234 = vsel %vm1202, %v1181, 0.0
  %v1235 = vsel %vm1203, %v1180, 0.0
  %v1236 = vsel %vm1204, %v1179, 0.0
  %v1237 = vsel %vm1205, %v1178, 0.0
  %v1238 = vsel %vm1206, %v1177, 0.0
  %v1239 = vsel %vm1207, %v1176, 0.0
  %v1240 = vsel %vm1208, %v1175, 0.0
  %v1241 = vsel %vm1209, %v1174, 0.0
  %v1242 = vsel %vm1210, %v1173, 0.0
  %v1243 = vsel %vm1211, %v1172, 0.0
  %v1244 = vsel %vm1212, %v1171, 0.0
  %v1245 = vsel %vm1213, %v1170, 0.0
  %v1246 = vsel %vm1214, %v1169, 0.0
  %v1247 = vsel %vm1215, %v1168, 0.0
  %v1248 = vsel %vm1216, %v1167, 0.0
  %v1249 = vsel %vm1217, %v1166, 0.0
  %v1250 = vsel %vm1218, %v1165, 0.0
  %v1251 = vsel %vm1219, %v1164, 0.0
  %v1252 = vsel %vm1220, %v1163, 0.0
  %v1253 = vsel %vm1221, %v1162, 0.0
  %v1254 = vsel %vm1222, %v1161, 0.0
  %v1255 = vsel %vm1223, %v1160, 0.0
  %v1256 = vrot.slane %v33, 1
  %v1257 = vrot.slane %v34, 1
  %v1258 = vrot.slane %v35, 1
  %v1259 = vrot.slane %v36, 1
  %v1260 = vrot.slane %v37, 1
  %v1261 = vrot.slane %v38, 1
  %v1262 = vrot.slane %v39, 1
  %v1263 = vrot.slane %v40, 1
  %v1264 = vrot.slane %v41, 1
  %v1265 = vrot.slane %v42, 1
  %v1266 = vrot.slane %v43, 1
  %v1267 = vrot.slane %v44, 1
  %v1268 = vrot.slane %v45, 1
  %v1269 = vrot.slane %v46, 1
  %v1270 = vrot.slane %v47, 1
  %v1271 = vrot.slane %v48, 1
  %v1272 = vrot.slane %v49, 1
  %v1273 = vrot.slane %v50, 1
  %v1274 = vrot.slane %v51, 1
  %v1275 = vrot.slane %v52, 1
  %v1276 = vrot.slane %v53, 1
  %v1277 = vrot.slane %v54, 1
  %v1278 = vrot.slane %v55, 1
  %v1279 = vrot.slane %v56, 1
  %v1280 = vrot.slane %v57, 1
  %v1281 = vrot.slane %v58, 1
  %v1282 = vrot.slane %v59, 1
  %v1283 = vrot.slane %v60, 1
  %v1284 = vrot.slane %v61, 1
  %v1285 = vrot.slane %v62, 1
  %v1286 = vrot.slane %v63, 1
  %v1287 = vrot.slane %v64, 1
  %vm1288 = vcmp.lt.s32.totalorder %v66, 7
  %v1289 = vsel %vm1288, %v1286, %v1287
  %v1290 = vsel %vm1288, %v1285, %v1286
  %v1291 = vsel %vm1288, %v1284, %v1285
  %v1292 = vsel %vm1288, %v1283, %v1284
  %v1293 = vsel %vm1288, %v1282, %v1283
  %v1294 = vsel %vm1288, %v1281, %v1282
  %v1295 = vsel %vm1288, %v1280, %v1281
  %v1296 = vsel %vm1288, %v1279, %v1280
  %v1297 = vsel %vm1288, %v1278, %v1279
  %v1298 = vsel %vm1288, %v1277, %v1278
  %v1299 = vsel %vm1288, %v1276, %v1277
  %v1300 = vsel %vm1288, %v1275, %v1276
  %v1301 = vsel %vm1288, %v1274, %v1275
  %v1302 = vsel %vm1288, %v1273, %v1274
  %v1303 = vsel %vm1288, %v1272, %v1273
  %v1304 = vsel %vm1288, %v1271, %v1272
  %v1305 = vsel %vm1288, %v1270, %v1271
  %v1306 = vsel %vm1288, %v1269, %v1270
  %v1307 = vsel %vm1288, %v1268, %v1269
  %v1308 = vsel %vm1288, %v1267, %v1268
  %v1309 = vsel %vm1288, %v1266, %v1267
  %v1310 = vsel %vm1288, %v1265, %v1266
  %v1311 = vsel %vm1288, %v1264, %v1265
  %v1312 = vsel %vm1288, %v1263, %v1264
  %v1313 = vsel %vm1288, %v1262, %v1263
  %v1314 = vsel %vm1288, %v1261, %v1262
  %v1315 = vsel %vm1288, %v1260, %v1261
  %v1316 = vsel %vm1288, %v1259, %v1260
  %v1317 = vsel %vm1288, %v1258, %v1259
  %v1318 = vsel %vm1288, %v1257, %v1258
  %v1319 = vsel %vm1288, %v1256, %v1257
  %v1320 = vsel %vm1288, %v1287, %v1256
  %vm1321 = vcmp.ge.s32.totalorder %v450, 7
  %vm1322 = vcmp.ge.s32.totalorder %v451, 7
  %vm1323 = vcmp.ge.s32.totalorder %v452, 7
  %vm1324 = vcmp.ge.s32.totalorder %v453, 7
  %vm1325 = vcmp.ge.s32.totalorder %v454, 7
  %vm1326 = vcmp.ge.s32.totalorder %v455, 7
  %vm1327 = vcmp.ge.s32.totalorder %v456, 7
  %vm1328 = vcmp.ge.s32.totalorder %v457, 7
  %vm1329 = vcmp.ge.s32.totalorder %v458, 7
  %vm1330 = vcmp.ge.s32.totalorder %v459, 7
  %vm1331 = vcmp.ge.s32.totalorder %v460, 7
  %vm1332 = vcmp.ge.s32.totalorder %v461, 7
  %vm1333 = vcmp.ge.s32.totalorder %v462, 7
  %vm1334 = vcmp.ge.s32.totalorder %v463, 7
  %vm1335 = vcmp.ge.s32.totalorder %v464, 7
  %vm1336 = vcmp.ge.s32.totalorder %v465, 7
  %vm1337 = vcmp.ge.s32.totalorder %v466, 7
  %vm1338 = vcmp.ge.s32.totalorder %v467, 7
  %vm1339 = vcmp.ge.s32.totalorder %v468, 7
  %vm1340 = vcmp.ge.s32.totalorder %v469, 7
  %vm1341 = vcmp.ge.s32.totalorder %v470, 7
  %vm1342 = vcmp.ge.s32.totalorder %v471, 7
  %vm1343 = vcmp.ge.s32.totalorder %v472, 7
  %vm1344 = vcmp.ge.s32.totalorder %v473, 7
  %vm1345 = vcmp.ge.s32.totalorder %v474, 7
  %vm1346 = vcmp.ge.s32.totalorder %v475, 7
  %vm1347 = vcmp.ge.s32.totalorder %v476, 7
  %vm1348 = vcmp.ge.s32.totalorder %v477, 7
  %vm1349 = vcmp.ge.s32.totalorder %v478, 7
  %vm1350 = vcmp.ge.s32.totalorder %v479, 7
  %vm1351 = vcmp.ge.s32.totalorder %v480, 7
  %vm1352 = vcmp.ge.s32.totalorder %v481, 7
  %v1353 = vsel %vm1321, %v1320, 0.0
  %v1354 = vsel %vm1322, %v1319, 0.0
  %v1355 = vsel %vm1323, %v1318, 0.0
  %v1356 = vsel %vm1324, %v1317, 0.0
  %v1357 = vsel %vm1325, %v1316, 0.0
  %v1358 = vsel %vm1326, %v1315, 0.0
  %v1359 = vsel %vm1327, %v1314, 0.0
  %v1360 = vsel %vm1328, %v1313, 0.0
  %v1361 = vsel %vm1329, %v1312, 0.0
  %v1362 = vsel %vm1330, %v1311, 0.0
  %v1363 = vsel %vm1331, %v1310, 0.0
  %v1364 = vsel %vm1332, %v1309, 0.0
  %v1365 = vsel %vm1333, %v1308, 0.0
  %v1366 = vsel %vm1334, %v1307, 0.0
  %v1367 = vsel %vm1335, %v1306, 0.0
  %v1368 = vsel %vm1336, %v1305, 0.0
  %v1369 = vsel %vm1337, %v1304, 0.0
  %v1370 = vsel %vm1338, %v1303, 0.0
  %v1371 = vsel %vm1339, %v1302, 0.0
  %v1372 = vsel %vm1340, %v1301, 0.0
  %v1373 = vsel %vm1341, %v1300, 0.0
  %v1374 = vsel %vm1342, %v1299, 0.0
  %v1375 = vsel %vm1343, %v1298, 0.0
  %v1376 = vsel %vm1344, %v1297, 0.0
  %v1377 = vsel %vm1345, %v1296, 0.0
  %v1378 = vsel %vm1346, %v1295, 0.0
  %v1379 = vsel %vm1347, %v1294, 0.0
  %v1380 = vsel %vm1348, %v1293, 0.0
  %v1381 = vsel %vm1349, %v1292, 0.0
  %v1382 = vsel %vm1350, %v1291, 0.0
  %v1383 = vsel %vm1351, %v1290, 0.0
  %v1384 = vsel %vm1352, %v1289, 0.0
  %1417 = vrot.lane.b32.xlu0 %v579, 32
  %v1418 = vpop.permute.xlu0 %1417
  %1419 = vrot.lane.b32.xlu0 %v580, 32
  %v1420 = vpop.permute.xlu0 %1419
  %1421 = vrot.lane.b32.xlu0 %v581, 32
  %v1422 = vpop.permute.xlu0 %1421
  %1423 = vrot.lane.b32.xlu0 %v582, 32
  %v1424 = vpop.permute.xlu0 %1423
  %1425 = vrot.lane.b32.xlu0 %v583, 32
  %v1426 = vpop.permute.xlu0 %1425
  %1427 = vrot.lane.b32.xlu0 %v584, 32
  %v1428 = vpop.permute.xlu0 %1427
  %1429 = vrot.lane.b32.xlu0 %v585, 32
  %v1430 = vpop.permute.xlu0 %1429
  %1431 = vrot.lane.b32.xlu0 %v586, 32
  %v1432 = vpop.permute.xlu0 %1431
  %1433 = vrot.lane.b32.xlu0 %v587, 32
  %v1434 = vpop.permute.xlu0 %1433
  %1435 = vrot.lane.b32.xlu0 %v588, 32
  %v1436 = vpop.permute.xlu0 %1435
  %1437 = vrot.lane.b32.xlu0 %v589, 32
  %v1438 = vpop.permute.xlu0 %1437
  %1439 = vrot.lane.b32.xlu0 %v590, 32
  %v1440 = vpop.permute.xlu0 %1439
  %1441 = vrot.lane.b32.xlu0 %v591, 32
  %v1442 = vpop.permute.xlu0 %1441
  %1443 = vrot.lane.b32.xlu0 %v592, 32
  %v1444 = vpop.permute.xlu0 %1443
  %1445 = vrot.lane.b32.xlu0 %v593, 32
  %v1446 = vpop.permute.xlu0 %1445
  %1447 = vrot.lane.b32.xlu0 %v594, 32
  %v1448 = vpop.permute.xlu0 %1447
  %1449 = vrot.lane.b32.xlu0 %v595, 32
  %v1450 = vpop.permute.xlu0 %1449
  %1451 = vrot.lane.b32.xlu0 %v596, 32
  %v1452 = vpop.permute.xlu0 %1451
  %1453 = vrot.lane.b32.xlu0 %v597, 32
  %v1454 = vpop.permute.xlu0 %1453
  %1455 = vrot.lane.b32.xlu0 %v598, 32
  %v1456 = vpop.permute.xlu0 %1455
  %1457 = vrot.lane.b32.xlu0 %v599, 32
  %v1458 = vpop.permute.xlu0 %1457
  %1459 = vrot.lane.b32.xlu0 %v600, 32
  %v1460 = vpop.permute.xlu0 %1459
  %1461 = vrot.lane.b32.xlu0 %v601, 32
  %v1462 = vpop.permute.xlu0 %1461
  %1463 = vrot.lane.b32.xlu0 %v602, 32
  %v1464 = vpop.permute.xlu0 %1463
  %1465 = vrot.lane.b32.xlu0 %v603, 32
  %v1466 = vpop.permute.xlu0 %1465
  %1467 = vrot.lane.b32.xlu0 %v604, 32
  %v1468 = vpop.permute.xlu0 %1467
  %1469 = vrot.lane.b32.xlu0 %v605, 32
  %v1470 = vpop.permute.xlu0 %1469
  %1471 = vrot.lane.b32.xlu0 %v606, 32
  %v1472 = vpop.permute.xlu0 %1471
  %1473 = vrot.lane.b32.xlu0 %v607, 32
  %v1474 = vpop.permute.xlu0 %1473
  %1475 = vrot.lane.b32.xlu0 %v608, 32
  %v1476 = vpop.permute.xlu0 %1475
  %1477 = vrot.lane.b32.xlu0 %v609, 32
  %v1478 = vpop.permute.xlu0 %1477
  %1479 = vrot.lane.b32.xlu0 %v610, 32
  %v1480 = vpop.permute.xlu0 %1479
  %1545 = vrot.lane.b32.xlu0 %v708, 64
  %v1546 = vpop.permute.xlu0 %1545
  %1547 = vrot.lane.b32.xlu0 %v709, 64
  %v1548 = vpop.permute.xlu0 %1547
  %1549 = vrot.lane.b32.xlu0 %v710, 64
  %v1550 = vpop.permute.xlu0 %1549
  %1551 = vrot.lane.b32.xlu0 %v711, 64
  %v1552 = vpop.permute.xlu0 %1551
  %1553 = vrot.lane.b32.xlu0 %v712, 64
  %v1554 = vpop.permute.xlu0 %1553
  %1555 = vrot.lane.b32.xlu0 %v713, 64
  %v1556 = vpop.permute.xlu0 %1555
  %1557 = vrot.lane.b32.xlu0 %v714, 64
  %v1558 = vpop.permute.xlu0 %1557
  %1559 = vrot.lane.b32.xlu0 %v715, 64
  %v1560 = vpop.permute.xlu0 %1559
  %1561 = vrot.lane.b32.xlu0 %v716, 64
  %v1562 = vpop.permute.xlu0 %1561
  %1563 = vrot.lane.b32.xlu0 %v717, 64
  %v1564 = vpop.permute.xlu0 %1563
  %1565 = vrot.lane.b32.xlu0 %v718, 64
  %v1566 = vpop.permute.xlu0 %1565
  %1567 = vrot.lane.b32.xlu0 %v719, 64
  %v1568 = vpop.permute.xlu0 %1567
  %1569 = vrot.lane.b32.xlu0 %v720, 64
  %v1570 = vpop.permute.xlu0 %1569
  %1571 = vrot.lane.b32.xlu0 %v721, 64
  %v1572 = vpop.permute.xlu0 %1571
  %1573 = vrot.lane.b32.xlu0 %v722, 64
  %v1574 = vpop.permute.xlu0 %1573
  %1575 = vrot.lane.b32.xlu0 %v723, 64
  %v1576 = vpop.permute.xlu0 %1575
  %1577 = vrot.lane.b32.xlu0 %v724, 64
  %v1578 = vpop.permute.xlu0 %1577
  %1579 = vrot.lane.b32.xlu0 %v725, 64
  %v1580 = vpop.permute.xlu0 %1579
  %1581 = vrot.lane.b32.xlu0 %v726, 64
  %v1582 = vpop.permute.xlu0 %1581
  %1583 = vrot.lane.b32.xlu0 %v727, 64
  %v1584 = vpop.permute.xlu0 %1583
  %1585 = vrot.lane.b32.xlu0 %v728, 64
  %v1586 = vpop.permute.xlu0 %1585
  %1587 = vrot.lane.b32.xlu0 %v729, 64
  %v1588 = vpop.permute.xlu0 %1587
  %1589 = vrot.lane.b32.xlu0 %v730, 64
  %v1590 = vpop.permute.xlu0 %1589
  %1591 = vrot.lane.b32.xlu0 %v731, 64
  %v1592 = vpop.permute.xlu0 %1591
  %1593 = vrot.lane.b32.xlu0 %v732, 64
  %v1594 = vpop.permute.xlu0 %1593
  %1595 = vrot.lane.b32.xlu0 %v733, 64
  %v1596 = vpop.permute.xlu0 %1595
  %1597 = vrot.lane.b32.xlu0 %v734, 64
  %v1598 = vpop.permute.xlu0 %1597
  %1599 = vrot.lane.b32.xlu0 %v735, 64
  %v1600 = vpop.permute.xlu0 %1599
  %1601 = vrot.lane.b32.xlu0 %v736, 64
  %v1602 = vpop.permute.xlu0 %1601
  %1603 = vrot.lane.b32.xlu0 %v737, 64
  %v1604 = vpop.permute.xlu0 %1603
  %1605 = vrot.lane.b32.xlu0 %v738, 64
  %v1606 = vpop.permute.xlu0 %1605
  %1607 = vrot.lane.b32.xlu0 %v739, 64
  %v1608 = vpop.permute.xlu0 %1607
  %1673 = vrot.lane.b32.xlu0 %v837, 96
  %v1674 = vpop.permute.xlu0 %1673
  %1675 = vrot.lane.b32.xlu0 %v838, 96
  %v1676 = vpop.permute.xlu0 %1675
  %1677 = vrot.lane.b32.xlu0 %v839, 96
  %v1678 = vpop.permute.xlu0 %1677
  %1679 = vrot.lane.b32.xlu0 %v840, 96
  %v1680 = vpop.permute.xlu0 %1679
  %1681 = vrot.lane.b32.xlu0 %v841, 96
  %v1682 = vpop.permute.xlu0 %1681
  %1683 = vrot.lane.b32.xlu0 %v842, 96
  %v1684 = vpop.permute.xlu0 %1683
  %1685 = vrot.lane.b32.xlu0 %v843, 96
  %v1686 = vpop.permute.xlu0 %1685
  %1687 = vrot.lane.b32.xlu0 %v844, 96
  %v1688 = vpop.permute.xlu0 %1687
  %1689 = vrot.lane.b32.xlu0 %v845, 96
  %v1690 = vpop.permute.xlu0 %1689
  %1691 = vrot.lane.b32.xlu0 %v846, 96
  %v1692 = vpop.permute.xlu0 %1691
  %1693 = vrot.lane.b32.xlu0 %v847, 96
  %v1694 = vpop.permute.xlu0 %1693
  %1695 = vrot.lane.b32.xlu0 %v848, 96
  %v1696 = vpop.permute.xlu0 %1695
  %1697 = vrot.lane.b32.xlu0 %v849, 96
  %v1698 = vpop.permute.xlu0 %1697
  %1699 = vrot.lane.b32.xlu0 %v850, 96
  %v1700 = vpop.permute.xlu0 %1699
  %1701 = vrot.lane.b32.xlu0 %v851, 96
  %v1702 = vpop.permute.xlu0 %1701
  %1703 = vrot.lane.b32.xlu0 %v852, 96
  %v1704 = vpop.permute.xlu0 %1703
  %1705 = vrot.lane.b32.xlu0 %v853, 96
  %v1706 = vpop.permute.xlu0 %1705
  %1707 = vrot.lane.b32.xlu0 %v854, 96
  %v1708 = vpop.permute.xlu0 %1707
  %1709 = vrot.lane.b32.xlu0 %v855, 96
  %v1710 = vpop.permute.xlu0 %1709
  %1711 = vrot.lane.b32.xlu0 %v856, 96
  %v1712 = vpop.permute.xlu0 %1711
  %1713 = vrot.lane.b32.xlu0 %v857, 96
  %v1714 = vpop.permute.xlu0 %1713
  %1715 = vrot.lane.b32.xlu0 %v858, 96
  %v1716 = vpop.permute.xlu0 %1715
  %1717 = vrot.lane.b32.xlu0 %v859, 96
  %v1718 = vpop.permute.xlu0 %1717
  %1719 = vrot.lane.b32.xlu0 %v860, 96
  %v1720 = vpop.permute.xlu0 %1719
  %1721 = vrot.lane.b32.xlu0 %v861, 96
  %v1722 = vpop.permute.xlu0 %1721
  %1723 = vrot.lane.b32.xlu0 %v862, 96
  %v1724 = vpop.permute.xlu0 %1723
  %1725 = vrot.lane.b32.xlu0 %v863, 96
  %v1726 = vpop.permute.xlu0 %1725
  %1727 = vrot.lane.b32.xlu0 %v864, 96
  %v1728 = vpop.permute.xlu0 %1727
  %1729 = vrot.lane.b32.xlu0 %v865, 96
  %v1730 = vpop.permute.xlu0 %1729
  %1731 = vrot.lane.b32.xlu0 %v866, 96
  %v1732 = vpop.permute.xlu0 %1731
  %1733 = vrot.lane.b32.xlu0 %v867, 96
  %v1734 = vpop.permute.xlu0 %1733
  %1735 = vrot.lane.b32.xlu0 %v868, 96
  %v1736 = vpop.permute.xlu0 %1735
  %1801 = vrot.lane.b32.xlu0 %v1095, 32
  %v1802 = vpop.permute.xlu0 %1801
  %1803 = vrot.lane.b32.xlu0 %v1096, 32
  %v1804 = vpop.permute.xlu0 %1803
  %1805 = vrot.lane.b32.xlu0 %v1097, 32
  %v1806 = vpop.permute.xlu0 %1805
  %1807 = vrot.lane.b32.xlu0 %v1098, 32
  %v1808 = vpop.permute.xlu0 %1807
  %1809 = vrot.lane.b32.xlu0 %v1099, 32
  %v1810 = vpop.permute.xlu0 %1809
  %1811 = vrot.lane.b32.xlu0 %v1100, 32
  %v1812 = vpop.permute.xlu0 %1811
  %1813 = vrot.lane.b32.xlu0 %v1101, 32
  %v1814 = vpop.permute.xlu0 %1813
  %1815 = vrot.lane.b32.xlu0 %v1102, 32
  %v1816 = vpop.permute.xlu0 %1815
  %1817 = vrot.lane.b32.xlu0 %v1103, 32
  %v1818 = vpop.permute.xlu0 %1817
  %1819 = vrot.lane.b32.xlu0 %v1104, 32
  %v1820 = vpop.permute.xlu0 %1819
  %1821 = vrot.lane.b32.xlu0 %v1105, 32
  %v1822 = vpop.permute.xlu0 %1821
  %1823 = vrot.lane.b32.xlu0 %v1106, 32
  %v1824 = vpop.permute.xlu0 %1823
  %1825 = vrot.lane.b32.xlu0 %v1107, 32
  %v1826 = vpop.permute.xlu0 %1825
  %1827 = vrot.lane.b32.xlu0 %v1108, 32
  %v1828 = vpop.permute.xlu0 %1827
  %1829 = vrot.lane.b32.xlu0 %v1109, 32
  %v1830 = vpop.permute.xlu0 %1829
  %1831 = vrot.lane.b32.xlu0 %v1110, 32
  %v1832 = vpop.permute.xlu0 %1831
  %1833 = vrot.lane.b32.xlu0 %v1111, 32
  %v1834 = vpop.permute.xlu0 %1833
  %1835 = vrot.lane.b32.xlu0 %v1112, 32
  %v1836 = vpop.permute.xlu0 %1835
  %1837 = vrot.lane.b32.xlu0 %v1113, 32
  %v1838 = vpop.permute.xlu0 %1837
  %1839 = vrot.lane.b32.xlu0 %v1114, 32
  %v1840 = vpop.permute.xlu0 %1839
  %1841 = vrot.lane.b32.xlu0 %v1115, 32
  %v1842 = vpop.permute.xlu0 %1841
  %1843 = vrot.lane.b32.xlu0 %v1116, 32
  %v1844 = vpop.permute.xlu0 %1843
  %1845 = vrot.lane.b32.xlu0 %v1117, 32
  %v1846 = vpop.permute.xlu0 %1845
  %1847 = vrot.lane.b32.xlu0 %v1118, 32
  %v1848 = vpop.permute.xlu0 %1847
  %1849 = vrot.lane.b32.xlu0 %v1119, 32
  %v1850 = vpop.permute.xlu0 %1849
  %1851 = vrot.lane.b32.xlu0 %v1120, 32
  %v1852 = vpop.permute.xlu0 %1851
  %1853 = vrot.lane.b32.xlu0 %v1121, 32
  %v1854 = vpop.permute.xlu0 %1853
  %1855 = vrot.lane.b32.xlu0 %v1122, 32
  %v1856 = vpop.permute.xlu0 %1855
  %1857 = vrot.lane.b32.xlu0 %v1123, 32
  %v1858 = vpop.permute.xlu0 %1857
  %1859 = vrot.lane.b32.xlu0 %v1124, 32
  %v1860 = vpop.permute.xlu0 %1859
  %1861 = vrot.lane.b32.xlu0 %v1125, 32
  %v1862 = vpop.permute.xlu0 %1861
  %1863 = vrot.lane.b32.xlu0 %v1126, 32
  %v1864 = vpop.permute.xlu0 %1863
  %1929 = vrot.lane.b32.xlu0 %v1224, 64
  %v1930 = vpop.permute.xlu0 %1929
  %1931 = vrot.lane.b32.xlu0 %v1225, 64
  %v1932 = vpop.permute.xlu0 %1931
  %1933 = vrot.lane.b32.xlu0 %v1226, 64
  %v1934 = vpop.permute.xlu0 %1933
  %1935 = vrot.lane.b32.xlu0 %v1227, 64
  %v1936 = vpop.permute.xlu0 %1935
  %1937 = vrot.lane.b32.xlu0 %v1228, 64
  %v1938 = vpop.permute.xlu0 %1937
  %1939 = vrot.lane.b32.xlu0 %v1229, 64
  %v1940 = vpop.permute.xlu0 %1939
  %1941 = vrot.lane.b32.xlu0 %v1230, 64
  %v1942 = vpop.permute.xlu0 %1941
  %1943 = vrot.lane.b32.xlu0 %v1231, 64
  %v1944 = vpop.permute.xlu0 %1943
  %1945 = vrot.lane.b32.xlu0 %v1232, 64
  %v1946 = vpop.permute.xlu0 %1945
  %1947 = vrot.lane.b32.xlu0 %v1233, 64
  %v1948 = vpop.permute.xlu0 %1947
  %1949 = vrot.lane.b32.xlu0 %v1234, 64
  %v1950 = vpop.permute.xlu0 %1949
  %1951 = vrot.lane.b32.xlu0 %v1235, 64
  %v1952 = vpop.permute.xlu0 %1951
  %1953 = vrot.lane.b32.xlu0 %v1236, 64
  %v1954 = vpop.permute.xlu0 %1953
  %1955 = vrot.lane.b32.xlu0 %v1237, 64
  %v1956 = vpop.permute.xlu0 %1955
  %1957 = vrot.lane.b32.xlu0 %v1238, 64
  %v1958 = vpop.permute.xlu0 %1957
  %1959 = vrot.lane.b32.xlu0 %v1239, 64
  %v1960 = vpop.permute.xlu0 %1959
  %1961 = vrot.lane.b32.xlu0 %v1240, 64
  %v1962 = vpop.permute.xlu0 %1961
  %1963 = vrot.lane.b32.xlu0 %v1241, 64
  %v1964 = vpop.permute.xlu0 %1963
  %1965 = vrot.lane.b32.xlu0 %v1242, 64
  %v1966 = vpop.permute.xlu0 %1965
  %1967 = vrot.lane.b32.xlu0 %v1243, 64
  %v1968 = vpop.permute.xlu0 %1967
  %1969 = vrot.lane.b32.xlu0 %v1244, 64
  %v1970 = vpop.permute.xlu0 %1969
  %1971 = vrot.lane.b32.xlu0 %v1245, 64
  %v1972 = vpop.permute.xlu0 %1971
  %1973 = vrot.lane.b32.xlu0 %v1246, 64
  %v1974 = vpop.permute.xlu0 %1973
  %1975 = vrot.lane.b32.xlu0 %v1247, 64
  %v1976 = vpop.permute.xlu0 %1975
  %1977 = vrot.lane.b32.xlu0 %v1248, 64
  %v1978 = vpop.permute.xlu0 %1977
  %1979 = vrot.lane.b32.xlu0 %v1249, 64
  %v1980 = vpop.permute.xlu0 %1979
  %1981 = vrot.lane.b32.xlu0 %v1250, 64
  %v1982 = vpop.permute.xlu0 %1981
  %1983 = vrot.lane.b32.xlu0 %v1251, 64
  %v1984 = vpop.permute.xlu0 %1983
  %1985 = vrot.lane.b32.xlu0 %v1252, 64
  %v1986 = vpop.permute.xlu0 %1985
  %1987 = vrot.lane.b32.xlu0 %v1253, 64
  %v1988 = vpop.permute.xlu0 %1987
  %1989 = vrot.lane.b32.xlu0 %v1254, 64
  %v1990 = vpop.permute.xlu0 %1989
  %1991 = vrot.lane.b32.xlu0 %v1255, 64
  %v1992 = vpop.permute.xlu0 %1991
  %2057 = vrot.lane.b32.xlu0 %v1353, 96
  %v2058 = vpop.permute.xlu0 %2057
  %2059 = vrot.lane.b32.xlu0 %v1354, 96
  %v2060 = vpop.permute.xlu0 %2059
  %2061 = vrot.lane.b32.xlu0 %v1355, 96
  %v2062 = vpop.permute.xlu0 %2061
  %2063 = vrot.lane.b32.xlu0 %v1356, 96
  %v2064 = vpop.permute.xlu0 %2063
  %2065 = vrot.lane.b32.xlu0 %v1357, 96
  %v2066 = vpop.permute.xlu0 %2065
  %2067 = vrot.lane.b32.xlu0 %v1358, 96
  %v2068 = vpop.permute.xlu0 %2067
  %2069 = vrot.lane.b32.xlu0 %v1359, 96
  %v2070 = vpop.permute.xlu0 %2069
  %2071 = vrot.lane.b32.xlu0 %v1360, 96
  %v2072 = vpop.permute.xlu0 %2071
  %2073 = vrot.lane.b32.xlu0 %v1361, 96
  %v2074 = vpop.permute.xlu0 %2073
  %2075 = vrot.lane.b32.xlu0 %v1362, 96
  %v2076 = vpop.permute.xlu0 %2075
  %2077 = vrot.lane.b32.xlu0 %v1363, 96
  %v2078 = vpop.permute.xlu0 %2077
  %2079 = vrot.lane.b32.xlu0 %v1364, 96
  %v2080 = vpop.permute.xlu0 %2079
  %2081 = vrot.lane.b32.xlu0 %v1365, 96
  %v2082 = vpop.permute.xlu0 %2081
  %2083 = vrot.lane.b32.xlu0 %v1366, 96
  %v2084 = vpop.permute.xlu0 %2083
  %2085 = vrot.lane.b32.xlu0 %v1367, 96
  %v2086 = vpop.permute.xlu0 %2085
  %2087 = vrot.lane.b32.xlu0 %v1368, 96
  %v2088 = vpop.permute.xlu0 %2087
  %2089 = vrot.lane.b32.xlu0 %v1369, 96
  %v2090 = vpop.permute.xlu0 %2089
  %2091 = vrot.lane.b32.xlu0 %v1370, 96
  %v2092 = vpop.permute.xlu0 %2091
  %2093 = vrot.lane.b32.xlu0 %v1371, 96
  %v2094 = vpop.permute.xlu0 %2093
  %2095 = vrot.lane.b32.xlu0 %v1372, 96
  %v2096 = vpop.permute.xlu0 %2095
  %2097 = vrot.lane.b32.xlu0 %v1373, 96
  %v2098 = vpop.permute.xlu0 %2097
  %2099 = vrot.lane.b32.xlu0 %v1374, 96
  %v2100 = vpop.permute.xlu0 %2099
  %2101 = vrot.lane.b32.xlu0 %v1375, 96
  %v2102 = vpop.permute.xlu0 %2101
  %2103 = vrot.lane.b32.xlu0 %v1376, 96
  %v2104 = vpop.permute.xlu0 %2103
  %2105 = vrot.lane.b32.xlu0 %v1377, 96
  %v2106 = vpop.permute.xlu0 %2105
  %2107 = vrot.lane.b32.xlu0 %v1378, 96
  %v2108 = vpop.permute.xlu0 %2107
  %2109 = vrot.lane.b32.xlu0 %v1379, 96
  %v2110 = vpop.permute.xlu0 %2109
  %2111 = vrot.lane.b32.xlu0 %v1380, 96
  %v2112 = vpop.permute.xlu0 %2111
  %2113 = vrot.lane.b32.xlu0 %v1381, 96
  %v2114 = vpop.permute.xlu0 %2113
  %2115 = vrot.lane.b32.xlu0 %v1382, 96
  %v2116 = vpop.permute.xlu0 %2115
  %2117 = vrot.lane.b32.xlu0 %v1383, 96
  %v2118 = vpop.permute.xlu0 %2117
  %2119 = vrot.lane.b32.xlu0 %v1384, 96
  %v2120 = vpop.permute.xlu0 %2119
  %vm2153 = vcmask 261120
  %v2154 = vsel %vm2153, %v33, %v1418
  %v2155 = vsel %vm2153, %v34, %v1420
  %v2156 = vsel %vm2153, %v35, %v1422
  %v2157 = vsel %vm2153, %v36, %v1424
  %v2158 = vsel %vm2153, %v37, %v1426
  %v2159 = vsel %vm2153, %v38, %v1428
  %v2160 = vsel %vm2153, %v39, %v1430
  %v2161 = vsel %vm2153, %v40, %v1432
  %v2162 = vsel %vm2153, %v41, %v1434
  %v2163 = vsel %vm2153, %v42, %v1436
  %v2164 = vsel %vm2153, %v43, %v1438
  %v2165 = vsel %vm2153, %v44, %v1440
  %v2166 = vsel %vm2153, %v45, %v1442
  %v2167 = vsel %vm2153, %v46, %v1444
  %v2168 = vsel %vm2153, %v47, %v1446
  %v2169 = vsel %vm2153, %v48, %v1448
  %v2170 = vsel %vm2153, %v49, %v1450
  %v2171 = vsel %vm2153, %v50, %v1452
  %v2172 = vsel %vm2153, %v51, %v1454
  %v2173 = vsel %vm2153, %v52, %v1456
  %v2174 = vsel %vm2153, %v53, %v1458
  %v2175 = vsel %vm2153, %v54, %v1460
  %v2176 = vsel %vm2153, %v55, %v1462
  %v2177 = vsel %vm2153, %v56, %v1464
  %v2178 = vsel %vm2153, %v57, %v1466
  %v2179 = vsel %vm2153, %v58, %v1468
  %v2180 = vsel %vm2153, %v59, %v1470
  %v2181 = vsel %vm2153, %v60, %v1472
  %v2182 = vsel %vm2153, %v61, %v1474
  %v2183 = vsel %vm2153, %v62, %v1476
  %v2184 = vsel %vm2153, %v63, %v1478
  %v2185 = vsel %vm2153, %v64, %v1480
  %vm2186 = vcmask 523264
  %v2187 = vsel %vm2186, %v2154, %v1546
  %v2188 = vsel %vm2186, %v2155, %v1548
  %v2189 = vsel %vm2186, %v2156, %v1550
  %v2190 = vsel %vm2186, %v2157, %v1552
  %v2191 = vsel %vm2186, %v2158, %v1554
  %v2192 = vsel %vm2186, %v2159, %v1556
  %v2193 = vsel %vm2186, %v2160, %v1558
  %v2194 = vsel %vm2186, %v2161, %v1560
  %v2195 = vsel %vm2186, %v2162, %v1562
  %v2196 = vsel %vm2186, %v2163, %v1564
  %v2197 = vsel %vm2186, %v2164, %v1566
  %v2198 = vsel %vm2186, %v2165, %v1568
  %v2199 = vsel %vm2186, %v2166, %v1570
  %v2200 = vsel %vm2186, %v2167, %v1572
  %v2201 = vsel %vm2186, %v2168, %v1574
  %v2202 = vsel %vm2186, %v2169, %v1576
  %v2203 = vsel %vm2186, %v2170, %v1578
  %v2204 = vsel %vm2186, %v2171, %v1580
  %v2205 = vsel %vm2186, %v2172, %v1582
  %v2206 = vsel %vm2186, %v2173, %v1584
  %v2207 = vsel %vm2186, %v2174, %v1586
  %v2208 = vsel %vm2186, %v2175, %v1588
  %v2209 = vsel %vm2186, %v2176, %v1590
  %v2210 = vsel %vm2186, %v2177, %v1592
  %v2211 = vsel %vm2186, %v2178, %v1594
  %v2212 = vsel %vm2186, %v2179, %v1596
  %v2213 = vsel %vm2186, %v2180, %v1598
  %v2214 = vsel %vm2186, %v2181, %v1600
  %v2215 = vsel %vm2186, %v2182, %v1602
  %v2216 = vsel %vm2186, %v2183, %v1604
  %v2217 = vsel %vm2186, %v2184, %v1606
  %v2218 = vsel %vm2186, %v2185, %v1608
  %vm2219 = vcmask 785408
  %v2220 = vsel %vm2219, %v2187, %v1674
  %v2221 = vsel %vm2219, %v2188, %v1676
  %v2222 = vsel %vm2219, %v2189, %v1678
  %v2223 = vsel %vm2219, %v2190, %v1680
  %v2224 = vsel %vm2219, %v2191, %v1682
  %v2225 = vsel %vm2219, %v2192, %v1684
  %v2226 = vsel %vm2219, %v2193, %v1686
  %v2227 = vsel %vm2219, %v2194, %v1688
  %v2228 = vsel %vm2219, %v2195, %v1690
  %v2229 = vsel %vm2219, %v2196, %v1692
  %v2230 = vsel %vm2219, %v2197, %v1694
  %v2231 = vsel %vm2219, %v2198, %v1696
  %v2232 = vsel %vm2219, %v2199, %v1698
  %v2233 = vsel %vm2219, %v2200, %v1700
  %v2234 = vsel %vm2219, %v2201, %v1702
  %v2235 = vsel %vm2219, %v2202, %v1704
  %v2236 = vsel %vm2219, %v2203, %v1706
  %v2237 = vsel %vm2219, %v2204, %v1708
  %v2238 = vsel %vm2219, %v2205, %v1710
  %v2239 = vsel %vm2219, %v2206, %v1712
  %v2240 = vsel %vm2219, %v2207, %v1714
  %v2241 = vsel %vm2219, %v2208, %v1716
  %v2242 = vsel %vm2219, %v2209, %v1718
  %v2243 = vsel %vm2219, %v2210, %v1720
  %v2244 = vsel %vm2219, %v2211, %v1722
  %v2245 = vsel %vm2219, %v2212, %v1724
  %v2246 = vsel %vm2219, %v2213, %v1726
  %v2247 = vsel %vm2219, %v2214, %v1728
  %v2248 = vsel %vm2219, %v2215, %v1730
  %v2249 = vsel %vm2219, %v2216, %v1732
  %v2250 = vsel %vm2219, %v2217, %v1734
  %v2251 = vsel %vm2219, %v2218, %v1736
  %v2252 = vsel %vm2153, %v966, %v1802
  %v2253 = vsel %vm2153, %v967, %v1804
  %v2254 = vsel %vm2153, %v968, %v1806
  %v2255 = vsel %vm2153, %v969, %v1808
  %v2256 = vsel %vm2153, %v970, %v1810
  %v2257 = vsel %vm2153, %v971, %v1812
  %v2258 = vsel %vm2153, %v972, %v1814
  %v2259 = vsel %vm2153, %v973, %v1816
  %v2260 = vsel %vm2153, %v974, %v1818
  %v2261 = vsel %vm2153, %v975, %v1820
  %v2262 = vsel %vm2153, %v976, %v1822
  %v2263 = vsel %vm2153, %v977, %v1824
  %v2264 = vsel %vm2153, %v978, %v1826
  %v2265 = vsel %vm2153, %v979, %v1828
  %v2266 = vsel %vm2153, %v980, %v1830
  %v2267 = vsel %vm2153, %v981, %v1832
  %v2268 = vsel %vm2153, %v982, %v1834
  %v2269 = vsel %vm2153, %v983, %v1836
  %v2270 = vsel %vm2153, %v984, %v1838
  %v2271 = vsel %vm2153, %v985, %v1840
  %v2272 = vsel %vm2153, %v986, %v1842
  %v2273 = vsel %vm2153, %v987, %v1844
  %v2274 = vsel %vm2153, %v988, %v1846
  %v2275 = vsel %vm2153, %v989, %v1848
  %v2276 = vsel %vm2153, %v990, %v1850
  %v2277 = vsel %vm2153, %v991, %v1852
  %v2278 = vsel %vm2153, %v992, %v1854
  %v2279 = vsel %vm2153, %v993, %v1856
  %v2280 = vsel %vm2153, %v994, %v1858
  %v2281 = vsel %vm2153, %v995, %v1860
  %v2282 = vsel %vm2153, %v996, %v1862
  %v2283 = vsel %vm2153, %v997, %v1864
  %v2284 = vsel %vm2186, %v2252, %v1930
  %v2285 = vsel %vm2186, %v2253, %v1932
  %v2286 = vsel %vm2186, %v2254, %v1934
  %v2287 = vsel %vm2186, %v2255, %v1936
  %v2288 = vsel %vm2186, %v2256, %v1938
  %v2289 = vsel %vm2186, %v2257, %v1940
  %v2290 = vsel %vm2186, %v2258, %v1942
  %v2291 = vsel %vm2186, %v2259, %v1944
  %v2292 = vsel %vm2186, %v2260, %v1946
  %v2293 = vsel %vm2186, %v2261, %v1948
  %v2294 = vsel %vm2186, %v2262, %v1950
  %v2295 = vsel %vm2186, %v2263, %v1952
  %v2296 = vsel %vm2186, %v2264, %v1954
  %v2297 = vsel %vm2186, %v2265, %v1956
  %v2298 = vsel %vm2186, %v2266, %v1958
  %v2299 = vsel %vm2186, %v2267, %v1960
  %v2300 = vsel %vm2186, %v2268, %v1962
  %v2301 = vsel %vm2186, %v2269, %v1964
  %v2302 = vsel %vm2186, %v2270, %v1966
  %v2303 = vsel %vm2186, %v2271, %v1968
  %v2304 = vsel %vm2186, %v2272, %v1970
  %v2305 = vsel %vm2186, %v2273, %v1972
  %v2306 = vsel %vm2186, %v2274, %v1974
  %v2307 = vsel %vm2186, %v2275, %v1976
  %v2308 = vsel %vm2186, %v2276, %v1978
  %v2309 = vsel %vm2186, %v2277, %v1980
  %v2310 = vsel %vm2186, %v2278, %v1982
  %v2311 = vsel %vm2186, %v2279, %v1984
  %v2312 = vsel %vm2186, %v2280, %v1986
  %v2313 = vsel %vm2186, %v2281, %v1988
  %v2314 = vsel %vm2186, %v2282, %v1990
  %v2315 = vsel %vm2186, %v2283, %v1992
  %v2316 = vsel %vm2219, %v2284, %v2058
  %v2317 = vsel %vm2219, %v2285, %v2060
  %v2318 = vsel %vm2219, %v2286, %v2062
  %v2319 = vsel %vm2219, %v2287, %v2064
  %v2320 = vsel %vm2219, %v2288, %v2066
  %v2321 = vsel %vm2219, %v2289, %v2068
  %v2322 = vsel %vm2219, %v2290, %v2070
  %v2323 = vsel %vm2219, %v2291, %v2072
  %v2324 = vsel %vm2219, %v2292, %v2074
  %v2325 = vsel %vm2219, %v2293, %v2076
  %v2326 = vsel %vm2219, %v2294, %v2078
  %v2327 = vsel %vm2219, %v2295, %v2080
  %v2328 = vsel %vm2219, %v2296, %v2082
  %v2329 = vsel %vm2219, %v2297, %v2084
  %v2330 = vsel %vm2219, %v2298, %v2086
  %v2331 = vsel %vm2219, %v2299, %v2088
  %v2332 = vsel %vm2219, %v2300, %v2090
  %v2333 = vsel %vm2219, %v2301, %v2092
  %v2334 = vsel %vm2219, %v2302, %v2094
  %v2335 = vsel %vm2219, %v2303, %v2096
  %v2336 = vsel %vm2219, %v2304, %v2098
  %v2337 = vsel %vm2219, %v2305, %v2100
  %v2338 = vsel %vm2219, %v2306, %v2102
  %v2339 = vsel %vm2219, %v2307, %v2104
  %v2340 = vsel %vm2219, %v2308, %v2106
  %v2341 = vsel %vm2219, %v2309, %v2108
  %v2342 = vsel %vm2219, %v2310, %v2110
  %v2343 = vsel %vm2219, %v2311, %v2112
  %v2344 = vsel %vm2219, %v2312, %v2114
  %v2345 = vsel %vm2219, %v2313, %v2116
  %v2346 = vsel %vm2219, %v2314, %v2118
  %v2347 = vsel %vm2219, %v2315, %v2120
  %v2348 = vpack.c.bf16 %v2221, %v2220
  %v2349 = vpack.c.bf16 %v2317, %v2316
  %v2350 = vpack.c.bf16 %v2223, %v2222
  %v2351 = vpack.c.bf16 %v2319, %v2318
  %v2352 = vpack.c.bf16 %v2225, %v2224
  %v2353 = vpack.c.bf16 %v2321, %v2320
  %v2354 = vpack.c.bf16 %v2227, %v2226
  %v2355 = vpack.c.bf16 %v2323, %v2322
  %v2356 = vpack.c.bf16 %v2229, %v2228
  %v2357 = vpack.c.bf16 %v2325, %v2324
  %v2358 = vpack.c.bf16 %v2231, %v2230
  %v2359 = vpack.c.bf16 %v2327, %v2326
  %v2360 = vpack.c.bf16 %v2233, %v2232
  %v2361 = vpack.c.bf16 %v2329, %v2328
  %v2362 = vpack.c.bf16 %v2235, %v2234
  %v2363 = vpack.c.bf16 %v2331, %v2330
  %v2364 = vpack.c.bf16 %v2237, %v2236
  %v2365 = vpack.c.bf16 %v2333, %v2332
  %v2366 = vpack.c.bf16 %v2239, %v2238
  %v2367 = vpack.c.bf16 %v2335, %v2334
  %v2368 = vpack.c.bf16 %v2241, %v2240
  %v2369 = vpack.c.bf16 %v2337, %v2336
  %v2370 = vpack.c.bf16 %v2243, %v2242
  %v2371 = vpack.c.bf16 %v2339, %v2338
  %v2372 = vpack.c.bf16 %v2245, %v2244
  %v2373 = vpack.c.bf16 %v2341, %v2340
  %v2374 = vpack.c.bf16 %v2247, %v2246
  %v2375 = vpack.c.bf16 %v2343, %v2342
  %v2376 = vpack.c.bf16 %v2249, %v2248
  %v2377 = vpack.c.bf16 %v2345, %v2344
  %v2378 = vpack.c.bf16 %v2251, %v2250
  %v2379 = vpack.c.bf16 %v2347, %v2346
  %v2380 = vld [vmem:[%s2] sm:$0xff]
  %v2381 = vld [vmem:[%s2 + $0x8] sm:$0xff]
  %v2382 = vld [vmem:[%s2 + $0x10] sm:$0xff]
  %v2383 = vld [vmem:[%s2 + $0x18] sm:$0xff]
  %v2384 = vld [vmem:[%s2 + $0x20] sm:$0xff]
  %v2385 = vld [vmem:[%s2 + $0x28] sm:$0xff]
  %v2386 = vld [vmem:[%s2 + $0x30] sm:$0xff]
  %v2387 = vld [vmem:[%s2 + $0x38] sm:$0xff]
  %v2388 = vld [vmem:[%s2 + $0x40] sm:$0xff]
  %v2389 = vld [vmem:[%s2 + $0x48] sm:$0xff]
  %v2390 = vld [vmem:[%s2 + $0x50] sm:$0xff]
  %v2391 = vld [vmem:[%s2 + $0x58] sm:$0xff]
  %v2392 = vld [vmem:[%s2 + $0x60] sm:$0xff]
  %v2393 = vld [vmem:[%s2 + $0x68] sm:$0xff]
  %v2394 = vld [vmem:[%s2 + $0x70] sm:$0xff]
  %v2395 = vld [vmem:[%s2 + $0x78] sm:$0xff]
  %v2396 = vld [vmem:[%s2 + $0x80] sm:$0xff]
  %v2397 = vld [vmem:[%s2 + $0x88] sm:$0xff]
  %v2398 = vld [vmem:[%s2 + $0x90] sm:$0xff]
  %v2399 = vld [vmem:[%s2 + $0x98] sm:$0xff]
  %v2400 = vld [vmem:[%s2 + $0xa0] sm:$0xff]
  %v2401 = vld [vmem:[%s2 + $0xa8] sm:$0xff]
  %v2402 = vld [vmem:[%s2 + $0xb0] sm:$0xff]
  %v2403 = vld [vmem:[%s2 + $0xb8] sm:$0xff]
  %v2404 = vld [vmem:[%s2 + $0xc0] sm:$0xff]
  %v2405 = vld [vmem:[%s2 + $0xc8] sm:$0xff]
  %v2406 = vld [vmem:[%s2 + $0xd0] sm:$0xff]
  %v2407 = vld [vmem:[%s2 + $0xd8] sm:$0xff]
  %v2408 = vld [vmem:[%s2 + $0xe0] sm:$0xff]
  %v2409 = vld [vmem:[%s2 + $0xe8] sm:$0xff]
  %v2410 = vld [vmem:[%s2 + $0xf0] sm:$0xff]
  %v2411 = vld [vmem:[%s2 + $0xf8] sm:$0xff]
  %v2444 = vunpack.c.l.b16 %v2380
  %v2445 = vunpack.c.h.b16 %v2380
  %v2446 = vunpack.c.l.b16 %v2381
  %v2447 = vunpack.c.h.b16 %v2381
  %v2448 = vunpack.c.l.b16 %v2382
  %v2449 = vunpack.c.h.b16 %v2382
  %v2450 = vunpack.c.l.b16 %v2383
  %v2451 = vunpack.c.h.b16 %v2383
  %v2452 = vunpack.c.l.b16 %v2384
  %v2453 = vunpack.c.h.b16 %v2384
  %v2454 = vunpack.c.l.b16 %v2385
  %v2455 = vunpack.c.h.b16 %v2385
  %v2456 = vunpack.c.l.b16 %v2386
  %v2457 = vunpack.c.h.b16 %v2386
  %v2458 = vunpack.c.l.b16 %v2387
  %v2459 = vunpack.c.h.b16 %v2387
  %v2460 = vunpack.c.l.b16 %v2388
  %v2461 = vunpack.c.h.b16 %v2388
  %v2462 = vunpack.c.l.b16 %v2389
  %v2463 = vunpack.c.h.b16 %v2389
  %v2464 = vunpack.c.l.b16 %v2390
  %v2465 = vunpack.c.h.b16 %v2390
  %v2466 = vunpack.c.l.b16 %v2391
  %v2467 = vunpack.c.h.b16 %v2391
  %v2468 = vunpack.c.l.b16 %v2392
  %v2469 = vunpack.c.h.b16 %v2392
  %v2470 = vunpack.c.l.b16 %v2393
  %v2471 = vunpack.c.h.b16 %v2393
  %v2472 = vunpack.c.l.b16 %v2394
  %v2473 = vunpack.c.h.b16 %v2394
  %v2474 = vunpack.c.l.b16 %v2395
  %v2475 = vunpack.c.h.b16 %v2395
  %v2476 = vunpack.c.l.b16 %v2396
  %v2477 = vunpack.c.h.b16 %v2396
  %v2478 = vunpack.c.l.b16 %v2397
  %v2479 = vunpack.c.h.b16 %v2397
  %v2480 = vunpack.c.l.b16 %v2398
  %v2481 = vunpack.c.h.b16 %v2398
  %v2482 = vunpack.c.l.b16 %v2399
  %v2483 = vunpack.c.h.b16 %v2399
  %v2484 = vunpack.c.l.b16 %v2400
  %v2485 = vunpack.c.h.b16 %v2400
  %v2486 = vunpack.c.l.b16 %v2401
  %v2487 = vunpack.c.h.b16 %v2401
  %v2488 = vunpack.c.l.b16 %v2402
  %v2489 = vunpack.c.h.b16 %v2402
  %v2490 = vunpack.c.l.b16 %v2403
  %v2491 = vunpack.c.h.b16 %v2403
  %v2492 = vunpack.c.l.b16 %v2404
  %v2493 = vunpack.c.h.b16 %v2404
  %v2494 = vunpack.c.l.b16 %v2405
  %v2495 = vunpack.c.h.b16 %v2405
  %v2496 = vunpack.c.l.b16 %v2406
  %v2497 = vunpack.c.h.b16 %v2406
  %v2498 = vunpack.c.l.b16 %v2407
  %v2499 = vunpack.c.h.b16 %v2407
  %v2500 = vunpack.c.l.b16 %v2408
  %v2501 = vunpack.c.h.b16 %v2408
  %v2502 = vunpack.c.l.b16 %v2409
  %v2503 = vunpack.c.h.b16 %v2409
  %v2504 = vunpack.c.l.b16 %v2410
  %v2505 = vunpack.c.h.b16 %v2410
  %v2506 = vunpack.c.l.b16 %v2411
  %v2507 = vunpack.c.h.b16 %v2411
  %v2508 = vpack.c.b16 %v2446, %v2444
  %v2509 = vpack.c.b16 %v2447, %v2445
  %v2510 = vpack.c.b16 %v2450, %v2448
  %v2511 = vpack.c.b16 %v2451, %v2449
  %v2512 = vpack.c.b16 %v2454, %v2452
  %v2513 = vpack.c.b16 %v2455, %v2453
  %v2514 = vpack.c.b16 %v2458, %v2456
  %v2515 = vpack.c.b16 %v2459, %v2457
  %v2516 = vpack.c.b16 %v2462, %v2460
  %v2517 = vpack.c.b16 %v2463, %v2461
  %v2518 = vpack.c.b16 %v2466, %v2464
  %v2519 = vpack.c.b16 %v2467, %v2465
  %v2520 = vpack.c.b16 %v2470, %v2468
  %v2521 = vpack.c.b16 %v2471, %v2469
  %v2522 = vpack.c.b16 %v2474, %v2472
  %v2523 = vpack.c.b16 %v2475, %v2473
  %v2524 = vpack.c.b16 %v2478, %v2476
  %v2525 = vpack.c.b16 %v2479, %v2477
  %v2526 = vpack.c.b16 %v2482, %v2480
  %v2527 = vpack.c.b16 %v2483, %v2481
  %v2528 = vpack.c.b16 %v2486, %v2484
  %v2529 = vpack.c.b16 %v2487, %v2485
  %v2530 = vpack.c.b16 %v2490, %v2488
  %v2531 = vpack.c.b16 %v2491, %v2489
  %v2532 = vpack.c.b16 %v2494, %v2492
  %v2533 = vpack.c.b16 %v2495, %v2493
  %v2534 = vpack.c.b16 %v2498, %v2496
  %v2535 = vpack.c.b16 %v2499, %v2497
  %v2536 = vpack.c.b16 %v2502, %v2500
  %v2537 = vpack.c.b16 %v2503, %v2501
  %v2538 = vpack.c.b16 %v2506, %v2504
  %v2539 = vpack.c.b16 %v2507, %v2505
  %2572 = vmatprep.subr.bf16.mxu0 %v2509
  %2573 = vmatpush1.bf16.msra.mxu0 %v2508
  %2574 = vmatprep.subr.bf16.mxu0 %v2511
  %2575 = vmatpush1.bf16.msra.mxu0 %v2510
  %2576 = vmatprep.subr.bf16.mxu0 %v2513
  %2577 = vmatpush1.bf16.msra.mxu0 %v2512
  %2578 = vmatprep.subr.bf16.mxu0 %v2515
  %2579 = vmatpush1.bf16.msra.mxu0 %v2514
  %2580 = vmatprep.subr.bf16.mxu0 %v2517
  %2581 = vmatpush1.bf16.msra.mxu0 %v2516
  %2582 = vmatprep.subr.bf16.mxu0 %v2519
  %2583 = vmatpush1.bf16.msra.mxu0 %v2518
  %2584 = vmatprep.subr.bf16.mxu0 %v2521
  %2585 = vmatpush1.bf16.msra.mxu0 %v2520
  %2586 = vmatprep.subr.bf16.mxu0 %v2523
  %2587 = vmatpush1.bf16.msra.mxu0 %v2522
  %2588 = vmatprep.subr.bf16.mxu0 %v2525
  %2589 = vmatpush1.bf16.msra.mxu0 %v2524
  %2590 = vmatprep.subr.bf16.mxu0 %v2527
  %2591 = vmatpush1.bf16.msra.mxu0 %v2526
  %2592 = vmatprep.subr.bf16.mxu0 %v2529
  %2593 = vmatpush1.bf16.msra.mxu0 %v2528
  %2594 = vmatprep.subr.bf16.mxu0 %v2531
  %2595 = vmatpush1.bf16.msra.mxu0 %v2530
  %2596 = vmatprep.subr.bf16.mxu0 %v2533
  %2597 = vmatpush1.bf16.msra.mxu0 %v2532
  %2598 = vmatprep.subr.bf16.mxu0 %v2535
  %2599 = vmatpush1.bf16.msra.mxu0 %v2534
  %2600 = vmatprep.subr.bf16.mxu0 %v2537
  %2601 = vmatpush1.bf16.msra.mxu0 %v2536
  %2602 = vmatprep.subr.bf16.mxu0 %v2539
  %2603 = vmatpush1.bf16.msra.mxu0 %v2538
  %2604 = vmatprep.mubr.bf16.mxu0 %v2349
  %2605 = vmatmul.mubr.bf16.gmra.mrb[0].mxu0 %v2348
  %v2606 = vpop.f32.mrb[0].mxu0
  %v2607 = vadd.f32 0.0, %v2606
  %v2608 = vpop.f32.mrb[0].mxu0
  %v2609 = vadd.f32 0.0, %v2608
  %v2610 = vpop.f32.mrb[0].mxu0
  %v2611 = vadd.f32 0.0, %v2610
  %v2612 = vpop.f32.mrb[0].mxu0
  %v2613 = vadd.f32 0.0, %v2612
  %2614 = vmatprep.mubr.bf16.mxu0 %v2351
  %2615 = vmatmul.mubr.bf16.gmra.mrb[0].mxu0 %v2350
  %v2616 = vpop.f32.mrb[0].mxu0
  %v2617 = vadd.f32 0.0, %v2616
  %v2618 = vpop.f32.mrb[0].mxu0
  %v2619 = vadd.f32 0.0, %v2618
  %v2620 = vpop.f32.mrb[0].mxu0
  %v2621 = vadd.f32 0.0, %v2620
  %v2622 = vpop.f32.mrb[0].mxu0
  %v2623 = vadd.f32 0.0, %v2622
  %2624 = vmatprep.mubr.bf16.mxu0 %v2353
  %2625 = vmatmul.mubr.bf16.gmra.mrb[0].mxu0 %v2352
  %v2626 = vpop.f32.mrb[0].mxu0
  %v2627 = vadd.f32 0.0, %v2626
  %v2628 = vpop.f32.mrb[0].mxu0
  %v2629 = vadd.f32 0.0, %v2628
  %v2630 = vpop.f32.mrb[0].mxu0
  %v2631 = vadd.f32 0.0, %v2630
  %v2632 = vpop.f32.mrb[0].mxu0
  %v2633 = vadd.f32 0.0, %v2632
  %2634 = vmatprep.mubr.bf16.mxu0 %v2355
  %2635 = vmatmul.mubr.bf16.gmra.mrb[0].mxu0 %v2354
  %v2636 = vpop.f32.mrb[0].mxu0
  %v2637 = vadd.f32 0.0, %v2636
  %v2638 = vpop.f32.mrb[0].mxu0
  %v2639 = vadd.f32 0.0, %v2638
  %v2640 = vpop.f32.mrb[0].mxu0
  %v2641 = vadd.f32 0.0, %v2640
  %v2642 = vpop.f32.mrb[0].mxu0
  %v2643 = vadd.f32 0.0, %v2642
  %2644 = vmatprep.mubr.bf16.mxu0 %v2357
  %2645 = vmatmul.mubr.bf16.gmra.mrb[0].mxu0 %v2356
  %v2646 = vpop.f32.mrb[0].mxu0
  %v2647 = vadd.f32 0.0, %v2646
  %v2648 = vpop.f32.mrb[0].mxu0
  %v2649 = vadd.f32 0.0, %v2648
  %v2650 = vpop.f32.mrb[0].mxu0
  %v2651 = vadd.f32 0.0, %v2650
  %v2652 = vpop.f32.mrb[0].mxu0
  %v2653 = vadd.f32 0.0, %v2652
  %2654 = vmatprep.mubr.bf16.mxu0 %v2359
  %2655 = vmatmul.mubr.bf16.gmra.mrb[0].mxu0 %v2358
  %v2656 = vpop.f32.mrb[0].mxu0
  %v2657 = vadd.f32 0.0, %v2656
  %v2658 = vpop.f32.mrb[0].mxu0
  %v2659 = vadd.f32 0.0, %v2658
  %v2660 = vpop.f32.mrb[0].mxu0
  %v2661 = vadd.f32 0.0, %v2660
  %v2662 = vpop.f32.mrb[0].mxu0
  %v2663 = vadd.f32 0.0, %v2662
  %2664 = vmatprep.mubr.bf16.mxu0 %v2361
  %2665 = vmatmul.mubr.bf16.gmra.mrb[0].mxu0 %v2360
  %v2666 = vpop.f32.mrb[0].mxu0
  %v2667 = vadd.f32 0.0, %v2666
  %v2668 = vpop.f32.mrb[0].mxu0
  %v2669 = vadd.f32 0.0, %v2668
  %v2670 = vpop.f32.mrb[0].mxu0
  %v2671 = vadd.f32 0.0, %v2670
  %v2672 = vpop.f32.mrb[0].mxu0
  %v2673 = vadd.f32 0.0, %v2672
  %2674 = vmatprep.mubr.bf16.mxu0 %v2363
  %2675 = vmatmul.mubr.bf16.gmra.mrb[0].mxu0 %v2362
  %v2676 = vpop.f32.mrb[0].mxu0
  %v2677 = vadd.f32 0.0, %v2676
  %v2678 = vpop.f32.mrb[0].mxu0
  %v2679 = vadd.f32 0.0, %v2678
  %v2680 = vpop.f32.mrb[0].mxu0
  %v2681 = vadd.f32 0.0, %v2680
  %v2682 = vpop.f32.mrb[0].mxu0
  %v2683 = vadd.f32 0.0, %v2682
  %2684 = vmatprep.mubr.bf16.mxu0 %v2365
  %2685 = vmatmul.mubr.bf16.gmra.mrb[0].mxu0 %v2364
  %v2686 = vpop.f32.mrb[0].mxu0
  %v2687 = vadd.f32 0.0, %v2686
  %v2688 = vpop.f32.mrb[0].mxu0
  %v2689 = vadd.f32 0.0, %v2688
  %v2690 = vpop.f32.mrb[0].mxu0
  %v2691 = vadd.f32 0.0, %v2690
  %v2692 = vpop.f32.mrb[0].mxu0
  %v2693 = vadd.f32 0.0, %v2692
  %2694 = vmatprep.mubr.bf16.mxu0 %v2367
  %2695 = vmatmul.mubr.bf16.gmra.mrb[0].mxu0 %v2366
  %v2696 = vpop.f32.mrb[0].mxu0
  %v2697 = vadd.f32 0.0, %v2696
  %v2698 = vpop.f32.mrb[0].mxu0
  %v2699 = vadd.f32 0.0, %v2698
  %v2700 = vpop.f32.mrb[0].mxu0
  %v2701 = vadd.f32 0.0, %v2700
  %v2702 = vpop.f32.mrb[0].mxu0
  %v2703 = vadd.f32 0.0, %v2702
  %2704 = vmatprep.mubr.bf16.mxu0 %v2369
  %2705 = vmatmul.mubr.bf16.gmra.mrb[0].mxu0 %v2368
  %v2706 = vpop.f32.mrb[0].mxu0
  %v2707 = vadd.f32 0.0, %v2706
  %v2708 = vpop.f32.mrb[0].mxu0
  %v2709 = vadd.f32 0.0, %v2708
  %v2710 = vpop.f32.mrb[0].mxu0
  %v2711 = vadd.f32 0.0, %v2710
  %v2712 = vpop.f32.mrb[0].mxu0
  %v2713 = vadd.f32 0.0, %v2712
  %2714 = vmatprep.mubr.bf16.mxu0 %v2371
  %2715 = vmatmul.mubr.bf16.gmra.mrb[0].mxu0 %v2370
  %v2716 = vpop.f32.mrb[0].mxu0
  %v2717 = vadd.f32 0.0, %v2716
  %v2718 = vpop.f32.mrb[0].mxu0
  %v2719 = vadd.f32 0.0, %v2718
  %v2720 = vpop.f32.mrb[0].mxu0
  %v2721 = vadd.f32 0.0, %v2720
  %v2722 = vpop.f32.mrb[0].mxu0
  %v2723 = vadd.f32 0.0, %v2722
  %2724 = vmatprep.mubr.bf16.mxu0 %v2373
  %2725 = vmatmul.mubr.bf16.gmra.mrb[0].mxu0 %v2372
  %v2726 = vpop.f32.mrb[0].mxu0
  %v2727 = vadd.f32 0.0, %v2726
  %v2728 = vpop.f32.mrb[0].mxu0
  %v2729 = vadd.f32 0.0, %v2728
  %v2730 = vpop.f32.mrb[0].mxu0
  %v2731 = vadd.f32 0.0, %v2730
  %v2732 = vpop.f32.mrb[0].mxu0
  %v2733 = vadd.f32 0.0, %v2732
  %2734 = vmatprep.mubr.bf16.mxu0 %v2375
  %2735 = vmatmul.mubr.bf16.gmra.mrb[0].mxu0 %v2374
  %v2736 = vpop.f32.mrb[0].mxu0
  %v2737 = vadd.f32 0.0, %v2736
  %v2738 = vpop.f32.mrb[0].mxu0
  %v2739 = vadd.f32 0.0, %v2738
  %v2740 = vpop.f32.mrb[0].mxu0
  %v2741 = vadd.f32 0.0, %v2740
  %v2742 = vpop.f32.mrb[0].mxu0
  %v2743 = vadd.f32 0.0, %v2742
  %2744 = vmatprep.mubr.bf16.mxu0 %v2377
  %2745 = vmatmul.mubr.bf16.gmra.mrb[0].mxu0 %v2376
  %v2746 = vpop.f32.mrb[0].mxu0
  %v2747 = vadd.f32 0.0, %v2746
  %v2748 = vpop.f32.mrb[0].mxu0
  %v2749 = vadd.f32 0.0, %v2748
  %v2750 = vpop.f32.mrb[0].mxu0
  %v2751 = vadd.f32 0.0, %v2750
  %v2752 = vpop.f32.mrb[0].mxu0
  %v2753 = vadd.f32 0.0, %v2752
  %2754 = vmatprep.mubr.bf16.mxu0 %v2379
  %2755 = vmatmul.mubr.bf16.gmra.mrb[0].mxu0 %v2378
  %v2756 = vpop.f32.mrb[0].mxu0
  %v2757 = vadd.f32 0.0, %v2756
  %v2758 = vpop.f32.mrb[0].mxu0
  %v2759 = vadd.f32 0.0, %v2758
  %v2760 = vpop.f32.mrb[0].mxu0
  %v2761 = vadd.f32 0.0, %v2760
  %v2762 = vpop.f32.mrb[0].mxu0
  %v2763 = vadd.f32 0.0, %v2762
  %2764 = vdwg.mxu0
  %v2765 = vld [vmem:[%s3] sm:$0x1]
  %v2767 = vlaneseq
  %v2768 = vshrl.u32 %v2767, 7
  %v2769 = vsub.s32 0, %v2768
  %v2770 = vrot.slane %v2765, %v2769
  %v2772 = vadd.f32 %v2607, %v2770
  %v2773 = vadd.f32 %v2611, %v2770
  %v2774 = vadd.f32 %v2617, %v2770
  %v2775 = vadd.f32 %v2621, %v2770
  %v2776 = vadd.f32 %v2627, %v2770
  %v2777 = vadd.f32 %v2631, %v2770
  %v2778 = vadd.f32 %v2637, %v2770
  %v2779 = vadd.f32 %v2641, %v2770
  %v2780 = vadd.f32 %v2647, %v2770
  %v2781 = vadd.f32 %v2651, %v2770
  %v2782 = vadd.f32 %v2657, %v2770
  %v2783 = vadd.f32 %v2661, %v2770
  %v2784 = vadd.f32 %v2667, %v2770
  %v2785 = vadd.f32 %v2671, %v2770
  %v2786 = vadd.f32 %v2677, %v2770
  %v2787 = vadd.f32 %v2681, %v2770
  %v2788 = vadd.f32 %v2687, %v2770
  %v2789 = vadd.f32 %v2691, %v2770
  %v2790 = vadd.f32 %v2697, %v2770
  %v2791 = vadd.f32 %v2701, %v2770
  %v2792 = vadd.f32 %v2707, %v2770
  %v2793 = vadd.f32 %v2711, %v2770
  %v2794 = vadd.f32 %v2717, %v2770
  %v2795 = vadd.f32 %v2721, %v2770
  %v2796 = vadd.f32 %v2727, %v2770
  %v2797 = vadd.f32 %v2731, %v2770
  %v2798 = vadd.f32 %v2737, %v2770
  %v2799 = vadd.f32 %v2741, %v2770
  %v2800 = vadd.f32 %v2747, %v2770
  %v2801 = vadd.f32 %v2751, %v2770
  %v2802 = vadd.f32 %v2757, %v2770
  %v2803 = vadd.f32 %v2761, %v2770
  %v2804 = vmax.f32 %v2772, 0.0
  %v2805 = vmax.f32 %v2773, 0.0
  %v2806 = vmax.f32 %v2774, 0.0
  %v2807 = vmax.f32 %v2775, 0.0
  %v2808 = vmax.f32 %v2776, 0.0
  %v2809 = vmax.f32 %v2777, 0.0
  %v2810 = vmax.f32 %v2778, 0.0
  %v2811 = vmax.f32 %v2779, 0.0
  %v2812 = vmax.f32 %v2780, 0.0
  %v2813 = vmax.f32 %v2781, 0.0
  %v2814 = vmax.f32 %v2782, 0.0
  %v2815 = vmax.f32 %v2783, 0.0
  %v2816 = vmax.f32 %v2784, 0.0
  %v2817 = vmax.f32 %v2785, 0.0
  %v2818 = vmax.f32 %v2786, 0.0
  %v2819 = vmax.f32 %v2787, 0.0
  %v2820 = vmax.f32 %v2788, 0.0
  %v2821 = vmax.f32 %v2789, 0.0
  %v2822 = vmax.f32 %v2790, 0.0
  %v2823 = vmax.f32 %v2791, 0.0
  %v2824 = vmax.f32 %v2792, 0.0
  %v2825 = vmax.f32 %v2793, 0.0
  %v2826 = vmax.f32 %v2794, 0.0
  %v2827 = vmax.f32 %v2795, 0.0
  %v2828 = vmax.f32 %v2796, 0.0
  %v2829 = vmax.f32 %v2797, 0.0
  %v2830 = vmax.f32 %v2798, 0.0
  %v2831 = vmax.f32 %v2799, 0.0
  %v2832 = vmax.f32 %v2800, 0.0
  %v2833 = vmax.f32 %v2801, 0.0
  %v2834 = vmax.f32 %v2802, 0.0
  %v2835 = vmax.f32 %v2803, 0.0
  %v2836 = vrot.slane %v2804, 7
  %v2837 = vrot.slane %v2805, 7
  %v2838 = vrot.slane %v2806, 7
  %v2839 = vrot.slane %v2807, 7
  %v2840 = vrot.slane %v2808, 7
  %v2841 = vrot.slane %v2809, 7
  %v2842 = vrot.slane %v2810, 7
  %v2843 = vrot.slane %v2811, 7
  %v2844 = vrot.slane %v2812, 7
  %v2845 = vrot.slane %v2813, 7
  %v2846 = vrot.slane %v2814, 7
  %v2847 = vrot.slane %v2815, 7
  %v2848 = vrot.slane %v2816, 7
  %v2849 = vrot.slane %v2817, 7
  %v2850 = vrot.slane %v2818, 7
  %v2851 = vrot.slane %v2819, 7
  %v2852 = vrot.slane %v2820, 7
  %v2853 = vrot.slane %v2821, 7
  %v2854 = vrot.slane %v2822, 7
  %v2855 = vrot.slane %v2823, 7
  %v2856 = vrot.slane %v2824, 7
  %v2857 = vrot.slane %v2825, 7
  %v2858 = vrot.slane %v2826, 7
  %v2859 = vrot.slane %v2827, 7
  %v2860 = vrot.slane %v2828, 7
  %v2861 = vrot.slane %v2829, 7
  %v2862 = vrot.slane %v2830, 7
  %v2863 = vrot.slane %v2831, 7
  %v2864 = vrot.slane %v2832, 7
  %v2865 = vrot.slane %v2833, 7
  %v2866 = vrot.slane %v2834, 7
  %v2867 = vrot.slane %v2835, 7
  %v2868 = vsel %vm514, %v2866, %v2867
  %v2869 = vsel %vm514, %v2865, %v2866
  %v2870 = vsel %vm514, %v2864, %v2865
  %v2871 = vsel %vm514, %v2863, %v2864
  %v2872 = vsel %vm514, %v2862, %v2863
  %v2873 = vsel %vm514, %v2861, %v2862
  %v2874 = vsel %vm514, %v2860, %v2861
  %v2875 = vsel %vm514, %v2859, %v2860
  %v2876 = vsel %vm514, %v2858, %v2859
  %v2877 = vsel %vm514, %v2857, %v2858
  %v2878 = vsel %vm514, %v2856, %v2857
  %v2879 = vsel %vm514, %v2855, %v2856
  %v2880 = vsel %vm514, %v2854, %v2855
  %v2881 = vsel %vm514, %v2853, %v2854
  %v2882 = vsel %vm514, %v2852, %v2853
  %v2883 = vsel %vm514, %v2851, %v2852
  %v2884 = vsel %vm514, %v2850, %v2851
  %v2885 = vsel %vm514, %v2849, %v2850
  %v2886 = vsel %vm514, %v2848, %v2849
  %v2887 = vsel %vm514, %v2847, %v2848
  %v2888 = vsel %vm514, %v2846, %v2847
  %v2889 = vsel %vm514, %v2845, %v2846
  %v2890 = vsel %vm514, %v2844, %v2845
  %v2891 = vsel %vm514, %v2843, %v2844
  %v2892 = vsel %vm514, %v2842, %v2843
  %v2893 = vsel %vm514, %v2841, %v2842
  %v2894 = vsel %vm514, %v2840, %v2841
  %v2895 = vsel %vm514, %v2839, %v2840
  %v2896 = vsel %vm514, %v2838, %v2839
  %v2897 = vsel %vm514, %v2837, %v2838
  %v2898 = vsel %vm514, %v2836, %v2837
  %v2899 = vsel %vm514, %v2867, %v2836
  %v2900 = vsel %vm547, %v2899, 0.0
  %v2901 = vsel %vm548, %v2898, 0.0
  %v2902 = vsel %vm549, %v2897, 0.0
  %v2903 = vsel %vm550, %v2896, 0.0
  %v2904 = vsel %vm551, %v2895, 0.0
  %v2905 = vsel %vm552, %v2894, 0.0
  %v2906 = vsel %vm553, %v2893, 0.0
  %v2907 = vsel %vm554, %v2892, 0.0
  %v2908 = vsel %vm555, %v2891, 0.0
  %v2909 = vsel %vm556, %v2890, 0.0
  %v2910 = vsel %vm557, %v2889, 0.0
  %v2911 = vsel %vm558, %v2888, 0.0
  %v2912 = vsel %vm559, %v2887, 0.0
  %v2913 = vsel %vm560, %v2886, 0.0
  %v2914 = vsel %vm561, %v2885, 0.0
  %v2915 = vsel %vm562, %v2884, 0.0
  %v2916 = vsel %vm563, %v2883, 0.0
  %v2917 = vsel %vm564, %v2882, 0.0
  %v2918 = vsel %vm565, %v2881, 0.0
  %v2919 = vsel %vm566, %v2880, 0.0
  %v2920 = vsel %vm567, %v2879, 0.0
  %v2921 = vsel %vm568, %v2878, 0.0
  %v2922 = vsel %vm569, %v2877, 0.0
  %v2923 = vsel %vm570, %v2876, 0.0
  %v2924 = vsel %vm571, %v2875, 0.0
  %v2925 = vsel %vm572, %v2874, 0.0
  %v2926 = vsel %vm573, %v2873, 0.0
  %v2927 = vsel %vm574, %v2872, 0.0
  %v2928 = vsel %vm575, %v2871, 0.0
  %v2929 = vsel %vm576, %v2870, 0.0
  %v2930 = vsel %vm577, %v2869, 0.0
  %v2931 = vsel %vm578, %v2868, 0.0
  %v2932 = vmax.f32 %v2804, %v2900
  %v2933 = vmax.f32 %v2805, %v2901
  %v2934 = vmax.f32 %v2806, %v2902
  %v2935 = vmax.f32 %v2807, %v2903
  %v2936 = vmax.f32 %v2808, %v2904
  %v2937 = vmax.f32 %v2809, %v2905
  %v2938 = vmax.f32 %v2810, %v2906
  %v2939 = vmax.f32 %v2811, %v2907
  %v2940 = vmax.f32 %v2812, %v2908
  %v2941 = vmax.f32 %v2813, %v2909
  %v2942 = vmax.f32 %v2814, %v2910
  %v2943 = vmax.f32 %v2815, %v2911
  %v2944 = vmax.f32 %v2816, %v2912
  %v2945 = vmax.f32 %v2817, %v2913
  %v2946 = vmax.f32 %v2818, %v2914
  %v2947 = vmax.f32 %v2819, %v2915
  %v2948 = vmax.f32 %v2820, %v2916
  %v2949 = vmax.f32 %v2821, %v2917
  %v2950 = vmax.f32 %v2822, %v2918
  %v2951 = vmax.f32 %v2823, %v2919
  %v2952 = vmax.f32 %v2824, %v2920
  %v2953 = vmax.f32 %v2825, %v2921
  %v2954 = vmax.f32 %v2826, %v2922
  %v2955 = vmax.f32 %v2827, %v2923
  %v2956 = vmax.f32 %v2828, %v2924
  %v2957 = vmax.f32 %v2829, %v2925
  %v2958 = vmax.f32 %v2830, %v2926
  %v2959 = vmax.f32 %v2831, %v2927
  %v2960 = vmax.f32 %v2832, %v2928
  %v2961 = vmax.f32 %v2833, %v2929
  %v2962 = vmax.f32 %v2834, %v2930
  %v2963 = vmax.f32 %v2835, %v2931
  %v2964 = vrot.slane %v2932, 6
  %v2965 = vrot.slane %v2933, 6
  %v2966 = vrot.slane %v2934, 6
  %v2967 = vrot.slane %v2935, 6
  %v2968 = vrot.slane %v2936, 6
  %v2969 = vrot.slane %v2937, 6
  %v2970 = vrot.slane %v2938, 6
  %v2971 = vrot.slane %v2939, 6
  %v2972 = vrot.slane %v2940, 6
  %v2973 = vrot.slane %v2941, 6
  %v2974 = vrot.slane %v2942, 6
  %v2975 = vrot.slane %v2943, 6
  %v2976 = vrot.slane %v2944, 6
  %v2977 = vrot.slane %v2945, 6
  %v2978 = vrot.slane %v2946, 6
  %v2979 = vrot.slane %v2947, 6
  %v2980 = vrot.slane %v2948, 6
  %v2981 = vrot.slane %v2949, 6
  %v2982 = vrot.slane %v2950, 6
  %v2983 = vrot.slane %v2951, 6
  %v2984 = vrot.slane %v2952, 6
  %v2985 = vrot.slane %v2953, 6
  %v2986 = vrot.slane %v2954, 6
  %v2987 = vrot.slane %v2955, 6
  %v2988 = vrot.slane %v2956, 6
  %v2989 = vrot.slane %v2957, 6
  %v2990 = vrot.slane %v2958, 6
  %v2991 = vrot.slane %v2959, 6
  %v2992 = vrot.slane %v2960, 6
  %v2993 = vrot.slane %v2961, 6
  %v2994 = vrot.slane %v2962, 6
  %v2995 = vrot.slane %v2963, 6
  %v2996 = vsel %vm643, %v2994, %v2995
  %v2997 = vsel %vm643, %v2993, %v2994
  %v2998 = vsel %vm643, %v2992, %v2993
  %v2999 = vsel %vm643, %v2991, %v2992
  %v3000 = vsel %vm643, %v2990, %v2991
  %v3001 = vsel %vm643, %v2989, %v2990
  %v3002 = vsel %vm643, %v2988, %v2989
  %v3003 = vsel %vm643, %v2987, %v2988
  %v3004 = vsel %vm643, %v2986, %v2987
  %v3005 = vsel %vm643, %v2985, %v2986
  %v3006 = vsel %vm643, %v2984, %v2985
  %v3007 = vsel %vm643, %v2983, %v2984
  %v3008 = vsel %vm643, %v2982, %v2983
  %v3009 = vsel %vm643, %v2981, %v2982
  %v3010 = vsel %vm643, %v2980, %v2981
  %v3011 = vsel %vm643, %v2979, %v2980
  %v3012 = vsel %vm643, %v2978, %v2979
  %v3013 = vsel %vm643, %v2977, %v2978
  %v3014 = vsel %vm643, %v2976, %v2977
  %v3015 = vsel %vm643, %v2975, %v2976
  %v3016 = vsel %vm643, %v2974, %v2975
  %v3017 = vsel %vm643, %v2973, %v2974
  %v3018 = vsel %vm643, %v2972, %v2973
  %v3019 = vsel %vm643, %v2971, %v2972
  %v3020 = vsel %vm643, %v2970, %v2971
  %v3021 = vsel %vm643, %v2969, %v2970
  %v3022 = vsel %vm643, %v2968, %v2969
  %v3023 = vsel %vm643, %v2967, %v2968
  %v3024 = vsel %vm643, %v2966, %v2967
  %v3025 = vsel %vm643, %v2965, %v2966
  %v3026 = vsel %vm643, %v2964, %v2965
  %v3027 = vsel %vm643, %v2995, %v2964
  %v3028 = vsel %vm676, %v3027, 0.0
  %v3029 = vsel %vm677, %v3026, 0.0
  %v3030 = vsel %vm678, %v3025, 0.0
  %v3031 = vsel %vm679, %v3024, 0.0
  %v3032 = vsel %vm680, %v3023, 0.0
  %v3033 = vsel %vm681, %v3022, 0.0
  %v3034 = vsel %vm682, %v3021, 0.0
  %v3035 = vsel %vm683, %v3020, 0.0
  %v3036 = vsel %vm684, %v3019, 0.0
  %v3037 = vsel %vm685, %v3018, 0.0
  %v3038 = vsel %vm686, %v3017, 0.0
  %v3039 = vsel %vm687, %v3016, 0.0
  %v3040 = vsel %vm688, %v3015, 0.0
  %v3041 = vsel %vm689, %v3014, 0.0
  %v3042 = vsel %vm690, %v3013, 0.0
  %v3043 = vsel %vm691, %v3012, 0.0
  %v3044 = vsel %vm692, %v3011, 0.0
  %v3045 = vsel %vm693, %v3010, 0.0
  %v3046 = vsel %vm694, %v3009, 0.0
  %v3047 = vsel %vm695, %v3008, 0.0
  %v3048 = vsel %vm696, %v3007, 0.0
  %v3049 = vsel %vm697, %v3006, 0.0
  %v3050 = vsel %vm698, %v3005, 0.0
  %v3051 = vsel %vm699, %v3004, 0.0
  %v3052 = vsel %vm700, %v3003, 0.0
  %v3053 = vsel %vm701, %v3002, 0.0
  %v3054 = vsel %vm702, %v3001, 0.0
  %v3055 = vsel %vm703, %v3000, 0.0
  %v3056 = vsel %vm704, %v2999, 0.0
  %v3057 = vsel %vm705, %v2998, 0.0
  %v3058 = vsel %vm706, %v2997, 0.0
  %v3059 = vsel %vm707, %v2996, 0.0
  %v3060 = vmax.f32 %v2932, %v3028
  %v3061 = vmax.f32 %v2933, %v3029
  %v3062 = vmax.f32 %v2934, %v3030
  %v3063 = vmax.f32 %v2935, %v3031
  %v3064 = vmax.f32 %v2936, %v3032
  %v3065 = vmax.f32 %v2937, %v3033
  %v3066 = vmax.f32 %v2938, %v3034
  %v3067 = vmax.f32 %v2939, %v3035
  %v3068 = vmax.f32 %v2940, %v3036
  %v3069 = vmax.f32 %v2941, %v3037
  %v3070 = vmax.f32 %v2942, %v3038
  %v3071 = vmax.f32 %v2943, %v3039
  %v3072 = vmax.f32 %v2944, %v3040
  %v3073 = vmax.f32 %v2945, %v3041
  %v3074 = vmax.f32 %v2946, %v3042
  %v3075 = vmax.f32 %v2947, %v3043
  %v3076 = vmax.f32 %v2948, %v3044
  %v3077 = vmax.f32 %v2949, %v3045
  %v3078 = vmax.f32 %v2950, %v3046
  %v3079 = vmax.f32 %v2951, %v3047
  %v3080 = vmax.f32 %v2952, %v3048
  %v3081 = vmax.f32 %v2953, %v3049
  %v3082 = vmax.f32 %v2954, %v3050
  %v3083 = vmax.f32 %v2955, %v3051
  %v3084 = vmax.f32 %v2956, %v3052
  %v3085 = vmax.f32 %v2957, %v3053
  %v3086 = vmax.f32 %v2958, %v3054
  %v3087 = vmax.f32 %v2959, %v3055
  %v3088 = vmax.f32 %v2960, %v3056
  %v3089 = vmax.f32 %v2961, %v3057
  %v3090 = vmax.f32 %v2962, %v3058
  %v3091 = vmax.f32 %v2963, %v3059
  %v3092 = vrot.slane %v3060, 4
  %v3093 = vrot.slane %v3061, 4
  %v3094 = vrot.slane %v3062, 4
  %v3095 = vrot.slane %v3063, 4
  %v3096 = vrot.slane %v3064, 4
  %v3097 = vrot.slane %v3065, 4
  %v3098 = vrot.slane %v3066, 4
  %v3099 = vrot.slane %v3067, 4
  %v3100 = vrot.slane %v3068, 4
  %v3101 = vrot.slane %v3069, 4
  %v3102 = vrot.slane %v3070, 4
  %v3103 = vrot.slane %v3071, 4
  %v3104 = vrot.slane %v3072, 4
  %v3105 = vrot.slane %v3073, 4
  %v3106 = vrot.slane %v3074, 4
  %v3107 = vrot.slane %v3075, 4
  %v3108 = vrot.slane %v3076, 4
  %v3109 = vrot.slane %v3077, 4
  %v3110 = vrot.slane %v3078, 4
  %v3111 = vrot.slane %v3079, 4
  %v3112 = vrot.slane %v3080, 4
  %v3113 = vrot.slane %v3081, 4
  %v3114 = vrot.slane %v3082, 4
  %v3115 = vrot.slane %v3083, 4
  %v3116 = vrot.slane %v3084, 4
  %v3117 = vrot.slane %v3085, 4
  %v3118 = vrot.slane %v3086, 4
  %v3119 = vrot.slane %v3087, 4
  %v3120 = vrot.slane %v3088, 4
  %v3121 = vrot.slane %v3089, 4
  %v3122 = vrot.slane %v3090, 4
  %v3123 = vrot.slane %v3091, 4
  %v3124 = vsel %vm901, %v3122, %v3123
  %v3125 = vsel %vm901, %v3121, %v3122
  %v3126 = vsel %vm901, %v3120, %v3121
  %v3127 = vsel %vm901, %v3119, %v3120
  %v3128 = vsel %vm901, %v3118, %v3119
  %v3129 = vsel %vm901, %v3117, %v3118
  %v3130 = vsel %vm901, %v3116, %v3117
  %v3131 = vsel %vm901, %v3115, %v3116
  %v3132 = vsel %vm901, %v3114, %v3115
  %v3133 = vsel %vm901, %v3113, %v3114
  %v3134 = vsel %vm901, %v3112, %v3113
  %v3135 = vsel %vm901, %v3111, %v3112
  %v3136 = vsel %vm901, %v3110, %v3111
  %v3137 = vsel %vm901, %v3109, %v3110
  %v3138 = vsel %vm901, %v3108, %v3109
  %v3139 = vsel %vm901, %v3107, %v3108
  %v3140 = vsel %vm901, %v3106, %v3107
  %v3141 = vsel %vm901, %v3105, %v3106
  %v3142 = vsel %vm901, %v3104, %v3105
  %v3143 = vsel %vm901, %v3103, %v3104
  %v3144 = vsel %vm901, %v3102, %v3103
  %v3145 = vsel %vm901, %v3101, %v3102
  %v3146 = vsel %vm901, %v3100, %v3101
  %v3147 = vsel %vm901, %v3099, %v3100
  %v3148 = vsel %vm901, %v3098, %v3099
  %v3149 = vsel %vm901, %v3097, %v3098
  %v3150 = vsel %vm901, %v3096, %v3097
  %v3151 = vsel %vm901, %v3095, %v3096
  %v3152 = vsel %vm901, %v3094, %v3095
  %v3153 = vsel %vm901, %v3093, %v3094
  %v3154 = vsel %vm901, %v3092, %v3093
  %v3155 = vsel %vm901, %v3123, %v3092
  %v3156 = vsel %vm934, %v3155, 0.0
  %v3157 = vsel %vm935, %v3154, 0.0
  %v3158 = vsel %vm936, %v3153, 0.0
  %v3159 = vsel %vm937, %v3152, 0.0
  %v3160 = vsel %vm938, %v3151, 0.0
  %v3161 = vsel %vm939, %v3150, 0.0
  %v3162 = vsel %vm940, %v3149, 0.0
  %v3163 = vsel %vm941, %v3148, 0.0
  %v3164 = vsel %vm942, %v3147, 0.0
  %v3165 = vsel %vm943, %v3146, 0.0
  %v3166 = vsel %vm944, %v3145, 0.0
  %v3167 = vsel %vm945, %v3144, 0.0
  %v3168 = vsel %vm946, %v3143, 0.0
  %v3169 = vsel %vm947, %v3142, 0.0
  %v3170 = vsel %vm948, %v3141, 0.0
  %v3171 = vsel %vm949, %v3140, 0.0
  %v3172 = vsel %vm950, %v3139, 0.0
  %v3173 = vsel %vm951, %v3138, 0.0
  %v3174 = vsel %vm952, %v3137, 0.0
  %v3175 = vsel %vm953, %v3136, 0.0
  %v3176 = vsel %vm954, %v3135, 0.0
  %v3177 = vsel %vm955, %v3134, 0.0
  %v3178 = vsel %vm956, %v3133, 0.0
  %v3179 = vsel %vm957, %v3132, 0.0
  %v3180 = vsel %vm958, %v3131, 0.0
  %v3181 = vsel %vm959, %v3130, 0.0
  %v3182 = vsel %vm960, %v3129, 0.0
  %v3183 = vsel %vm961, %v3128, 0.0
  %v3184 = vsel %vm962, %v3127, 0.0
  %v3185 = vsel %vm963, %v3126, 0.0
  %v3186 = vsel %vm964, %v3125, 0.0
  %v3187 = vsel %vm965, %v3124, 0.0
  %v3188 = vmax.f32 %v3060, %v3156
  %v3189 = vmax.f32 %v3061, %v3157
  %v3190 = vmax.f32 %v3062, %v3158
  %v3191 = vmax.f32 %v3063, %v3159
  %v3192 = vmax.f32 %v3064, %v3160
  %v3193 = vmax.f32 %v3065, %v3161
  %v3194 = vmax.f32 %v3066, %v3162
  %v3195 = vmax.f32 %v3067, %v3163
  %v3196 = vmax.f32 %v3068, %v3164
  %v3197 = vmax.f32 %v3069, %v3165
  %v3198 = vmax.f32 %v3070, %v3166
  %v3199 = vmax.f32 %v3071, %v3167
  %v3200 = vmax.f32 %v3072, %v3168
  %v3201 = vmax.f32 %v3073, %v3169
  %v3202 = vmax.f32 %v3074, %v3170
  %v3203 = vmax.f32 %v3075, %v3171
  %v3204 = vmax.f32 %v3076, %v3172
  %v3205 = vmax.f32 %v3077, %v3173
  %v3206 = vmax.f32 %v3078, %v3174
  %v3207 = vmax.f32 %v3079, %v3175
  %v3208 = vmax.f32 %v3080, %v3176
  %v3209 = vmax.f32 %v3081, %v3177
  %v3210 = vmax.f32 %v3082, %v3178
  %v3211 = vmax.f32 %v3083, %v3179
  %v3212 = vmax.f32 %v3084, %v3180
  %v3213 = vmax.f32 %v3085, %v3181
  %v3214 = vmax.f32 %v3086, %v3182
  %v3215 = vmax.f32 %v3087, %v3183
  %v3216 = vmax.f32 %v3088, %v3184
  %v3217 = vmax.f32 %v3089, %v3185
  %v3218 = vmax.f32 %v3090, %v3186
  %v3219 = vmax.f32 %v3091, %v3187
  %v3220 = vpack.c.bf16 %v3189, %v3188
  %v3221 = vpack.c.bf16 %v3191, %v3190
  %v3222 = vpack.c.bf16 %v3193, %v3192
  %v3223 = vpack.c.bf16 %v3195, %v3194
  %v3224 = vpack.c.bf16 %v3197, %v3196
  %v3225 = vpack.c.bf16 %v3199, %v3198
  %v3226 = vpack.c.bf16 %v3201, %v3200
  %v3227 = vpack.c.bf16 %v3203, %v3202
  %v3228 = vpack.c.bf16 %v3205, %v3204
  %v3229 = vpack.c.bf16 %v3207, %v3206
  %v3230 = vpack.c.bf16 %v3209, %v3208
  %v3231 = vpack.c.bf16 %v3211, %v3210
  %v3232 = vpack.c.bf16 %v3213, %v3212
  %v3233 = vpack.c.bf16 %v3215, %v3214
  %v3234 = vpack.c.bf16 %v3217, %v3216
  %v3235 = vpack.c.bf16 %v3219, %v3218
  %v3236 = vld [vmem:[%s4] sm:$0xf]
  %v3237 = vld [vmem:[%s4 + $0x4] sm:$0xf]
  %v3238 = vld [vmem:[%s4 + $0x8] sm:$0xf]
  %v3239 = vld [vmem:[%s4 + $0xc] sm:$0xf]
  %v3240 = vld [vmem:[%s4 + $0x10] sm:$0xf]
  %v3241 = vld [vmem:[%s4 + $0x14] sm:$0xf]
  %v3242 = vld [vmem:[%s4 + $0x18] sm:$0xf]
  %v3243 = vld [vmem:[%s4 + $0x1c] sm:$0xf]
  %v3244 = vld [vmem:[%s4 + $0x20] sm:$0xf]
  %v3245 = vld [vmem:[%s4 + $0x24] sm:$0xf]
  %v3246 = vld [vmem:[%s4 + $0x28] sm:$0xf]
  %v3247 = vld [vmem:[%s4 + $0x2c] sm:$0xf]
  %v3248 = vld [vmem:[%s4 + $0x30] sm:$0xf]
  %v3249 = vld [vmem:[%s4 + $0x34] sm:$0xf]
  %v3250 = vld [vmem:[%s4 + $0x38] sm:$0xf]
  %v3251 = vld [vmem:[%s4 + $0x3c] sm:$0xf]
  %v3268 = vunpack.c.l.b16 %v3236
  %v3269 = vunpack.c.l.b16 %v3237
  %v3270 = vunpack.c.l.b16 %v3238
  %v3271 = vunpack.c.l.b16 %v3239
  %v3272 = vunpack.c.l.b16 %v3240
  %v3273 = vunpack.c.l.b16 %v3241
  %v3274 = vunpack.c.l.b16 %v3242
  %v3275 = vunpack.c.l.b16 %v3243
  %v3276 = vunpack.c.l.b16 %v3244
  %v3277 = vunpack.c.l.b16 %v3245
  %v3278 = vunpack.c.l.b16 %v3246
  %v3279 = vunpack.c.l.b16 %v3247
  %v3280 = vunpack.c.l.b16 %v3248
  %v3281 = vunpack.c.l.b16 %v3249
  %v3282 = vunpack.c.l.b16 %v3250
  %v3283 = vunpack.c.l.b16 %v3251
  %v3284 = vpack.c.b16 %v3269, %v3268
  %v3285 = vpack.c.b16 %v3271, %v3270
  %v3286 = vpack.c.b16 %v3273, %v3272
  %v3287 = vpack.c.b16 %v3275, %v3274
  %v3288 = vpack.c.b16 %v3277, %v3276
  %v3289 = vpack.c.b16 %v3279, %v3278
  %v3290 = vpack.c.b16 %v3281, %v3280
  %v3291 = vpack.c.b16 %v3283, %v3282
  %3300 = vmatprep.subr.bf16.mxu0 0
  %3301 = vmatpush1.bf16.msra.mxu0 %v3284
  %3302 = vmatprep.subr.bf16.mxu0 0
  %3303 = vmatpush1.bf16.msra.mxu0 %v3285
  %3304 = vmatprep.subr.bf16.mxu0 0
  %3305 = vmatpush1.bf16.msra.mxu0 %v3286
  %3306 = vmatprep.subr.bf16.mxu0 0
  %3307 = vmatpush1.bf16.msra.mxu0 %v3287
  %3308 = vmatprep.subr.bf16.mxu0 0
  %3309 = vmatpush1.bf16.msra.mxu0 %v3288
  %3310 = vmatprep.subr.bf16.mxu0 0
  %3311 = vmatpush1.bf16.msra.mxu0 %v3289
  %3312 = vmatprep.subr.bf16.mxu0 0
  %3313 = vmatpush1.bf16.msra.mxu0 %v3290
  %3314 = vmatprep.subr.bf16.mxu0 0
  %3315 = vmatpush1.bf16.msra.mxu0 %v3291
  %3316 = vmatprep.subr.bf16.mxu0 0
  %3317 = vmatpush1.bf16.msra.mxu0 0
  %3318 = vmatprep.subr.bf16.mxu0 0
  %3319 = vmatpush1.bf16.msra.mxu0 0
  %3320 = vmatprep.subr.bf16.mxu0 0
  %3321 = vmatpush1.bf16.msra.mxu0 0
  %3322 = vmatprep.subr.bf16.mxu0 0
  %3323 = vmatpush1.bf16.msra.mxu0 0
  %3324 = vmatprep.subr.bf16.mxu0 0
  %3325 = vmatpush1.bf16.msra.mxu0 0
  %3326 = vmatprep.subr.bf16.mxu0 0
  %3327 = vmatpush1.bf16.msra.mxu0 0
  %3328 = vmatprep.subr.bf16.mxu0 0
  %3329 = vmatpush1.bf16.msra.mxu0 0
  %3330 = vmatprep.subr.bf16.mxu0 0
  %3331 = vmatpush1.bf16.msra.mxu0 0
  %3332 = vmatprep.mubr.bf16.mxu0 0
  %3333 = vmatmul.mubr.bf16.gmra.mrb[0].mxu0 %v3220
  %v3334 = vpop.f32.mrb[0].mxu0
  %v3335 = vadd.f32 0.0, %v3334
  %v3336 = vpop.f32.mrb[0].mxu0
  %v3337 = vpop.f32.mrb[0].mxu0
  %v3338 = vadd.f32 0.0, %v3337
  %v3339 = vpop.f32.mrb[0].mxu0
  %3340 = vmatprep.mubr.bf16.mxu0 0
  %3341 = vmatmul.mubr.bf16.gmra.mrb[0].mxu0 %v3221
  %v3342 = vpop.f32.mrb[0].mxu0
  %v3343 = vadd.f32 0.0, %v3342
  %v3344 = vpop.f32.mrb[0].mxu0
  %v3345 = vpop.f32.mrb[0].mxu0
  %v3346 = vadd.f32 0.0, %v3345
  %v3347 = vpop.f32.mrb[0].mxu0
  %3348 = vmatprep.mubr.bf16.mxu0 0
  %3349 = vmatmul.mubr.bf16.gmra.mrb[0].mxu0 %v3222
  %v3350 = vpop.f32.mrb[0].mxu0
  %v3351 = vadd.f32 0.0, %v3350
  %v3352 = vpop.f32.mrb[0].mxu0
  %v3353 = vpop.f32.mrb[0].mxu0
  %v3354 = vadd.f32 0.0, %v3353
  %v3355 = vpop.f32.mrb[0].mxu0
  %3356 = vmatprep.mubr.bf16.mxu0 0
  %3357 = vmatmul.mubr.bf16.gmra.mrb[0].mxu0 %v3223
  %v3358 = vpop.f32.mrb[0].mxu0
  %v3359 = vadd.f32 0.0, %v3358
  %v3360 = vpop.f32.mrb[0].mxu0
  %v3361 = vpop.f32.mrb[0].mxu0
  %v3362 = vadd.f32 0.0, %v3361
  %v3363 = vpop.f32.mrb[0].mxu0
  %3364 = vmatprep.mubr.bf16.mxu0 0
  %3365 = vmatmul.mubr.bf16.gmra.mrb[0].mxu0 %v3224
  %v3366 = vpop.f32.mrb[0].mxu0
  %v3367 = vadd.f32 0.0, %v3366
  %v3368 = vpop.f32.mrb[0].mxu0
  %v3369 = vpop.f32.mrb[0].mxu0
  %v3370 = vadd.f32 0.0, %v3369
  %v3371 = vpop.f32.mrb[0].mxu0
  %3372 = vmatprep.mubr.bf16.mxu0 0
  %3373 = vmatmul.mubr.bf16.gmra.mrb[0].mxu0 %v3225
  %v3374 = vpop.f32.mrb[0].mxu0
  %v3375 = vadd.f32 0.0, %v3374
  %v3376 = vpop.f32.mrb[0].mxu0
  %v3377 = vpop.f32.mrb[0].mxu0
  %v3378 = vadd.f32 0.0, %v3377
  %v3379 = vpop.f32.mrb[0].mxu0
  %3380 = vmatprep.mubr.bf16.mxu0 0
  %3381 = vmatmul.mubr.bf16.gmra.mrb[0].mxu0 %v3226
  %v3382 = vpop.f32.mrb[0].mxu0
  %v3383 = vadd.f32 0.0, %v3382
  %v3384 = vpop.f32.mrb[0].mxu0
  %v3385 = vpop.f32.mrb[0].mxu0
  %v3386 = vadd.f32 0.0, %v3385
  %v3387 = vpop.f32.mrb[0].mxu0
  %3388 = vmatprep.mubr.bf16.mxu0 0
  %3389 = vmatmul.mubr.bf16.gmra.mrb[0].mxu0 %v3227
  %v3390 = vpop.f32.mrb[0].mxu0
  %v3391 = vadd.f32 0.0, %v3390
  %v3392 = vpop.f32.mrb[0].mxu0
  %v3393 = vpop.f32.mrb[0].mxu0
  %v3394 = vadd.f32 0.0, %v3393
  %v3395 = vpop.f32.mrb[0].mxu0
  %3396 = vmatprep.mubr.bf16.mxu0 0
  %3397 = vmatmul.mubr.bf16.gmra.mrb[0].mxu0 %v3228
  %v3398 = vpop.f32.mrb[0].mxu0
  %v3399 = vadd.f32 0.0, %v3398
  %v3400 = vpop.f32.mrb[0].mxu0
  %v3401 = vpop.f32.mrb[0].mxu0
  %v3402 = vadd.f32 0.0, %v3401
  %v3403 = vpop.f32.mrb[0].mxu0
  %3404 = vmatprep.mubr.bf16.mxu0 0
  %3405 = vmatmul.mubr.bf16.gmra.mrb[0].mxu0 %v3229
  %v3406 = vpop.f32.mrb[0].mxu0
  %v3407 = vadd.f32 0.0, %v3406
  %v3408 = vpop.f32.mrb[0].mxu0
  %v3409 = vpop.f32.mrb[0].mxu0
  %v3410 = vadd.f32 0.0, %v3409
  %v3411 = vpop.f32.mrb[0].mxu0
  %3412 = vmatprep.mubr.bf16.mxu0 0
  %3413 = vmatmul.mubr.bf16.gmra.mrb[0].mxu0 %v3230
  %v3414 = vpop.f32.mrb[0].mxu0
  %v3415 = vadd.f32 0.0, %v3414
  %v3416 = vpop.f32.mrb[0].mxu0
  %v3417 = vpop.f32.mrb[0].mxu0
  %v3418 = vadd.f32 0.0, %v3417
  %v3419 = vpop.f32.mrb[0].mxu0
  %3420 = vmatprep.mubr.bf16.mxu0 0
  %3421 = vmatmul.mubr.bf16.gmra.mrb[0].mxu0 %v3231
  %v3422 = vpop.f32.mrb[0].mxu0
  %v3423 = vadd.f32 0.0, %v3422
  %v3424 = vpop.f32.mrb[0].mxu0
  %v3425 = vpop.f32.mrb[0].mxu0
  %v3426 = vadd.f32 0.0, %v3425
  %v3427 = vpop.f32.mrb[0].mxu0
  %3428 = vmatprep.mubr.bf16.mxu0 0
  %3429 = vmatmul.mubr.bf16.gmra.mrb[0].mxu0 %v3232
  %v3430 = vpop.f32.mrb[0].mxu0
  %v3431 = vadd.f32 0.0, %v3430
  %v3432 = vpop.f32.mrb[0].mxu0
  %v3433 = vpop.f32.mrb[0].mxu0
  %v3434 = vadd.f32 0.0, %v3433
  %v3435 = vpop.f32.mrb[0].mxu0
  %3436 = vmatprep.mubr.bf16.mxu0 0
  %3437 = vmatmul.mubr.bf16.gmra.mrb[0].mxu0 %v3233
  %v3438 = vpop.f32.mrb[0].mxu0
  %v3439 = vadd.f32 0.0, %v3438
  %v3440 = vpop.f32.mrb[0].mxu0
  %v3441 = vpop.f32.mrb[0].mxu0
  %v3442 = vadd.f32 0.0, %v3441
  %v3443 = vpop.f32.mrb[0].mxu0
  %3444 = vmatprep.mubr.bf16.mxu0 0
  %3445 = vmatmul.mubr.bf16.gmra.mrb[0].mxu0 %v3234
  %v3446 = vpop.f32.mrb[0].mxu0
  %v3447 = vadd.f32 0.0, %v3446
  %v3448 = vpop.f32.mrb[0].mxu0
  %v3449 = vpop.f32.mrb[0].mxu0
  %v3450 = vadd.f32 0.0, %v3449
  %v3451 = vpop.f32.mrb[0].mxu0
  %3452 = vmatprep.mubr.bf16.mxu0 0
  %3453 = vmatmul.mubr.bf16.gmra.mrb[0].mxu0 %v3235
  %v3454 = vpop.f32.mrb[0].mxu0
  %v3455 = vadd.f32 0.0, %v3454
  %v3456 = vpop.f32.mrb[0].mxu0
  %v3457 = vpop.f32.mrb[0].mxu0
  %v3458 = vadd.f32 0.0, %v3457
  %v3459 = vpop.f32.mrb[0].mxu0
  %3460 = vdwg.mxu0
  %v3461 = vadd.f32 %v2609, %v3335
  %v3462 = vadd.f32 %v2613, %v3338
  %v3463 = vadd.f32 %v2619, %v3343
  %v3464 = vadd.f32 %v2623, %v3346
  %v3465 = vadd.f32 %v2629, %v3351
  %v3466 = vadd.f32 %v2633, %v3354
  %v3467 = vadd.f32 %v2639, %v3359
  %v3468 = vadd.f32 %v2643, %v3362
  %v3469 = vadd.f32 %v2649, %v3367
  %v3470 = vadd.f32 %v2653, %v3370
  %v3471 = vadd.f32 %v2659, %v3375
  %v3472 = vadd.f32 %v2663, %v3378
  %v3473 = vadd.f32 %v2669, %v3383
  %v3474 = vadd.f32 %v2673, %v3386
  %v3475 = vadd.f32 %v2679, %v3391
  %v3476 = vadd.f32 %v2683, %v3394
  %v3477 = vadd.f32 %v2689, %v3399
  %v3478 = vadd.f32 %v2693, %v3402
  %v3479 = vadd.f32 %v2699, %v3407
  %v3480 = vadd.f32 %v2703, %v3410
  %v3481 = vadd.f32 %v2709, %v3415
  %v3482 = vadd.f32 %v2713, %v3418
  %v3483 = vadd.f32 %v2719, %v3423
  %v3484 = vadd.f32 %v2723, %v3426
  %v3485 = vadd.f32 %v2729, %v3431
  %v3486 = vadd.f32 %v2733, %v3434
  %v3487 = vadd.f32 %v2739, %v3439
  %v3488 = vadd.f32 %v2743, %v3442
  %v3489 = vadd.f32 %v2749, %v3447
  %v3490 = vadd.f32 %v2753, %v3450
  %v3491 = vadd.f32 %v2759, %v3455
  %v3492 = vadd.f32 %v2763, %v3458
  %v3493 = vld [vmem:[%s5] sm:$0x1]
  %v3495 = vlaneseq
  %v3496 = vshrl.u32 %v3495, 7
  %v3497 = vsub.s32 0, %v3496
  %v3498 = vrot.slane %v3493, %v3497
  %v3500 = vadd.f32 %v3461, %v3498
  %v3501 = vadd.f32 %v3462, %v3498
  %v3502 = vadd.f32 %v3463, %v3498
  %v3503 = vadd.f32 %v3464, %v3498
  %v3504 = vadd.f32 %v3465, %v3498
  %v3505 = vadd.f32 %v3466, %v3498
  %v3506 = vadd.f32 %v3467, %v3498
  %v3507 = vadd.f32 %v3468, %v3498
  %v3508 = vadd.f32 %v3469, %v3498
  %v3509 = vadd.f32 %v3470, %v3498
  %v3510 = vadd.f32 %v3471, %v3498
  %v3511 = vadd.f32 %v3472, %v3498
  %v3512 = vadd.f32 %v3473, %v3498
  %v3513 = vadd.f32 %v3474, %v3498
  %v3514 = vadd.f32 %v3475, %v3498
  %v3515 = vadd.f32 %v3476, %v3498
  %v3516 = vadd.f32 %v3477, %v3498
  %v3517 = vadd.f32 %v3478, %v3498
  %v3518 = vadd.f32 %v3479, %v3498
  %v3519 = vadd.f32 %v3480, %v3498
  %v3520 = vadd.f32 %v3481, %v3498
  %v3521 = vadd.f32 %v3482, %v3498
  %v3522 = vadd.f32 %v3483, %v3498
  %v3523 = vadd.f32 %v3484, %v3498
  %v3524 = vadd.f32 %v3485, %v3498
  %v3525 = vadd.f32 %v3486, %v3498
  %v3526 = vadd.f32 %v3487, %v3498
  %v3527 = vadd.f32 %v3488, %v3498
  %v3528 = vadd.f32 %v3489, %v3498
  %v3529 = vadd.f32 %v3490, %v3498
  %v3530 = vadd.f32 %v3491, %v3498
  %v3531 = vadd.f32 %v3492, %v3498
  %v3532 = vmax.f32 %v3500, 0.0
  %v3533 = vmax.f32 %v3501, 0.0
  %v3534 = vmax.f32 %v3502, 0.0
  %v3535 = vmax.f32 %v3503, 0.0
  %v3536 = vmax.f32 %v3504, 0.0
  %v3537 = vmax.f32 %v3505, 0.0
  %v3538 = vmax.f32 %v3506, 0.0
  %v3539 = vmax.f32 %v3507, 0.0
  %v3540 = vmax.f32 %v3508, 0.0
  %v3541 = vmax.f32 %v3509, 0.0
  %v3542 = vmax.f32 %v3510, 0.0
  %v3543 = vmax.f32 %v3511, 0.0
  %v3544 = vmax.f32 %v3512, 0.0
  %v3545 = vmax.f32 %v3513, 0.0
  %v3546 = vmax.f32 %v3514, 0.0
  %v3547 = vmax.f32 %v3515, 0.0
  %v3548 = vmax.f32 %v3516, 0.0
  %v3549 = vmax.f32 %v3517, 0.0
  %v3550 = vmax.f32 %v3518, 0.0
  %v3551 = vmax.f32 %v3519, 0.0
  %v3552 = vmax.f32 %v3520, 0.0
  %v3553 = vmax.f32 %v3521, 0.0
  %v3554 = vmax.f32 %v3522, 0.0
  %v3555 = vmax.f32 %v3523, 0.0
  %v3556 = vmax.f32 %v3524, 0.0
  %v3557 = vmax.f32 %v3525, 0.0
  %v3558 = vmax.f32 %v3526, 0.0
  %v3559 = vmax.f32 %v3527, 0.0
  %v3560 = vmax.f32 %v3528, 0.0
  %v3561 = vmax.f32 %v3529, 0.0
  %v3562 = vmax.f32 %v3530, 0.0
  %v3563 = vmax.f32 %v3531, 0.0
  %v3564 = vld [vmem:[%s1] sm:$0xf]
  %v3565 = vld [vmem:[%s1 + $0x4] sm:$0xf]
  %v3566 = vld [vmem:[%s1 + $0x8] sm:$0xf]
  %v3567 = vld [vmem:[%s1 + $0xc] sm:$0xf]
  %v3568 = vunpack.c.l.bf16 %v3564
  %v3569 = vunpack.c.l.bf16 %v3565
  %v3570 = vunpack.c.l.bf16 %v3566
  %v3571 = vunpack.c.l.bf16 %v3567
  %v3572 = vld [vmem:[%s6] sm:$0x7]
  %v3573 = vld [vmem:[%s6 + $0x4] sm:$0x7]
  %v3574 = vld [vmem:[%s6 + $0x8] sm:$0x7]
  %v3575 = vld [vmem:[%s6 + $0xc] sm:$0x7]
  %v3576 = vld [vmem:[%s6 + $0x10] sm:$0x7]
  %v3577 = vld [vmem:[%s6 + $0x14] sm:$0x7]
  %v3578 = vld [vmem:[%s6 + $0x18] sm:$0x7]
  %v3579 = vld [vmem:[%s6 + $0x1c] sm:$0x7]
  %v3580 = vld [vmem:[%s6 + $0x20] sm:$0x7]
  %v3581 = vld [vmem:[%s6 + $0x24] sm:$0x7]
  %v3582 = vld [vmem:[%s6 + $0x28] sm:$0x7]
  %v3583 = vld [vmem:[%s6 + $0x2c] sm:$0x7]
  %v3584 = vld [vmem:[%s6 + $0x30] sm:$0x7]
  %v3585 = vld [vmem:[%s6 + $0x34] sm:$0x7]
  %v3586 = vld [vmem:[%s6 + $0x38] sm:$0x7]
  %v3587 = vld [vmem:[%s6 + $0x3c] sm:$0x7]
  %v3588 = vld [vmem:[%s6 + $0x40] sm:$0x7]
  %v3589 = vld [vmem:[%s6 + $0x44] sm:$0x7]
  %v3590 = vld [vmem:[%s6 + $0x48] sm:$0x7]
  %v3591 = vld [vmem:[%s6 + $0x4c] sm:$0x7]
  %v3592 = vld [vmem:[%s6 + $0x50] sm:$0x7]
  %v3593 = vld [vmem:[%s6 + $0x54] sm:$0x7]
  %v3594 = vld [vmem:[%s6 + $0x58] sm:$0x7]
  %v3595 = vld [vmem:[%s6 + $0x5c] sm:$0x7]
  %v3596 = vld [vmem:[%s6 + $0x60] sm:$0x7]
  %v3597 = vld [vmem:[%s6 + $0x64] sm:$0x7]
  %v3598 = vld [vmem:[%s6 + $0x68] sm:$0x7]
  %v3599 = vld [vmem:[%s6 + $0x6c] sm:$0x7]
  %v3600 = vld [vmem:[%s6 + $0x70] sm:$0x7]
  %v3601 = vld [vmem:[%s6 + $0x74] sm:$0x7]
  %v3602 = vld [vmem:[%s6 + $0x78] sm:$0x7]
  %v3603 = vld [vmem:[%s6 + $0x7c] sm:$0x7]
  %v3604 = vld [vmem:[%s6 + $0x80] sm:$0x7]
  %v3605 = vld [vmem:[%s6 + $0x84] sm:$0x7]
  %v3606 = vld [vmem:[%s6 + $0x88] sm:$0x7]
  %v3607 = vld [vmem:[%s6 + $0x8c] sm:$0x7]
  %v3608 = vld [vmem:[%s6 + $0x90] sm:$0x7]
  %v3609 = vld [vmem:[%s6 + $0x94] sm:$0x7]
  %v3610 = vld [vmem:[%s6 + $0x98] sm:$0x7]
  %v3611 = vld [vmem:[%s6 + $0x9c] sm:$0x7]
  %v3612 = vld [vmem:[%s6 + $0xa0] sm:$0x7]
  %v3613 = vld [vmem:[%s6 + $0xa4] sm:$0x7]
  %v3614 = vld [vmem:[%s6 + $0xa8] sm:$0x7]
  %v3615 = vld [vmem:[%s6 + $0xac] sm:$0x7]
  %v3616 = vld [vmem:[%s6 + $0xb0] sm:$0x7]
  %v3617 = vld [vmem:[%s6 + $0xb4] sm:$0x7]
  %v3618 = vld [vmem:[%s6 + $0xb8] sm:$0x7]
  %v3619 = vld [vmem:[%s6 + $0xbc] sm:$0x7]
  %v3620 = vld [vmem:[%s6 + $0xc0] sm:$0x7]
  %v3621 = vld [vmem:[%s6 + $0xc4] sm:$0x7]
  %v3622 = vld [vmem:[%s6 + $0xc8] sm:$0x7]
  %v3623 = vld [vmem:[%s6 + $0xcc] sm:$0x7]
  %v3624 = vld [vmem:[%s6 + $0xd0] sm:$0x7]
  %v3625 = vld [vmem:[%s6 + $0xd4] sm:$0x7]
  %v3626 = vld [vmem:[%s6 + $0xd8] sm:$0x7]
  %v3627 = vld [vmem:[%s6 + $0xdc] sm:$0x7]
  %v3628 = vld [vmem:[%s6 + $0xe0] sm:$0x7]
  %v3629 = vld [vmem:[%s6 + $0xe4] sm:$0x7]
  %v3630 = vld [vmem:[%s6 + $0xe8] sm:$0x7]
  %v3631 = vld [vmem:[%s6 + $0xec] sm:$0x7]
  %v3632 = vld [vmem:[%s6 + $0xf0] sm:$0x7]
  %v3633 = vld [vmem:[%s6 + $0xf4] sm:$0x7]
  %v3634 = vld [vmem:[%s6 + $0xf8] sm:$0x7]
  %v3635 = vld [vmem:[%s6 + $0xfc] sm:$0x7]
  %v3636 = vld [vmem:[%s6 + $0x100] sm:$0x7]
  %v3637 = vld [vmem:[%s6 + $0x104] sm:$0x7]
  %v3638 = vld [vmem:[%s6 + $0x108] sm:$0x7]
  %v3639 = vld [vmem:[%s6 + $0x10c] sm:$0x7]
  %v3640 = vld [vmem:[%s6 + $0x110] sm:$0x7]
  %v3641 = vld [vmem:[%s6 + $0x114] sm:$0x7]
  %v3642 = vld [vmem:[%s6 + $0x118] sm:$0x7]
  %v3643 = vld [vmem:[%s6 + $0x11c] sm:$0x7]
  %v3644 = vld [vmem:[%s6 + $0x120] sm:$0x7]
  %v3645 = vld [vmem:[%s6 + $0x124] sm:$0x7]
  %v3646 = vld [vmem:[%s6 + $0x128] sm:$0x7]
  %v3647 = vld [vmem:[%s6 + $0x12c] sm:$0x7]
  %v3648 = vld [vmem:[%s6 + $0x130] sm:$0x7]
  %v3649 = vld [vmem:[%s6 + $0x134] sm:$0x7]
  %v3650 = vld [vmem:[%s6 + $0x138] sm:$0x7]
  %v3651 = vld [vmem:[%s6 + $0x13c] sm:$0x7]
  %v3652 = vld [vmem:[%s6 + $0x140] sm:$0x7]
  %v3653 = vld [vmem:[%s6 + $0x144] sm:$0x7]
  %v3654 = vld [vmem:[%s6 + $0x148] sm:$0x7]
  %v3655 = vld [vmem:[%s6 + $0x14c] sm:$0x7]
  %v3656 = vld [vmem:[%s6 + $0x150] sm:$0x7]
  %v3657 = vld [vmem:[%s6 + $0x154] sm:$0x7]
  %v3658 = vld [vmem:[%s6 + $0x158] sm:$0x7]
  %v3659 = vld [vmem:[%s6 + $0x15c] sm:$0x7]
  %v3660 = vld [vmem:[%s6 + $0x160] sm:$0x7]
  %v3661 = vld [vmem:[%s6 + $0x164] sm:$0x7]
  %v3662 = vld [vmem:[%s6 + $0x168] sm:$0x7]
  %v3663 = vld [vmem:[%s6 + $0x16c] sm:$0x7]
  %v3664 = vld [vmem:[%s6 + $0x170] sm:$0x7]
  %v3665 = vld [vmem:[%s6 + $0x174] sm:$0x7]
  %v3666 = vld [vmem:[%s6 + $0x178] sm:$0x7]
  %v3667 = vld [vmem:[%s6 + $0x17c] sm:$0x7]
  %v3668 = vld [vmem:[%s6 + $0x180] sm:$0x7]
  %v3669 = vld [vmem:[%s6 + $0x184] sm:$0x7]
  %v3670 = vld [vmem:[%s6 + $0x188] sm:$0x7]
  %v3671 = vld [vmem:[%s6 + $0x18c] sm:$0x7]
  %v3672 = vld [vmem:[%s6 + $0x190] sm:$0x7]
  %v3673 = vld [vmem:[%s6 + $0x194] sm:$0x7]
  %v3674 = vld [vmem:[%s6 + $0x198] sm:$0x7]
  %v3675 = vld [vmem:[%s6 + $0x19c] sm:$0x7]
  %v3676 = vld [vmem:[%s6 + $0x1a0] sm:$0x7]
  %v3677 = vld [vmem:[%s6 + $0x1a4] sm:$0x7]
  %v3678 = vld [vmem:[%s6 + $0x1a8] sm:$0x7]
  %v3679 = vld [vmem:[%s6 + $0x1ac] sm:$0x7]
  %v3680 = vld [vmem:[%s6 + $0x1b0] sm:$0x7]
  %v3681 = vld [vmem:[%s6 + $0x1b4] sm:$0x7]
  %v3682 = vld [vmem:[%s6 + $0x1b8] sm:$0x7]
  %v3683 = vld [vmem:[%s6 + $0x1bc] sm:$0x7]
  %v3684 = vld [vmem:[%s6 + $0x1c0] sm:$0x7]
  %v3685 = vld [vmem:[%s6 + $0x1c4] sm:$0x7]
  %v3686 = vld [vmem:[%s6 + $0x1c8] sm:$0x7]
  %v3687 = vld [vmem:[%s6 + $0x1cc] sm:$0x7]
  %v3688 = vld [vmem:[%s6 + $0x1d0] sm:$0x7]
  %v3689 = vld [vmem:[%s6 + $0x1d4] sm:$0x7]
  %v3690 = vld [vmem:[%s6 + $0x1d8] sm:$0x7]
  %v3691 = vld [vmem:[%s6 + $0x1dc] sm:$0x7]
  %v3692 = vld [vmem:[%s6 + $0x1e0] sm:$0x7]
  %v3693 = vld [vmem:[%s6 + $0x1e4] sm:$0x7]
  %v3694 = vld [vmem:[%s6 + $0x1e8] sm:$0x7]
  %v3695 = vld [vmem:[%s6 + $0x1ec] sm:$0x7]
  %v3696 = vld [vmem:[%s6 + $0x1f0] sm:$0x7]
  %v3697 = vld [vmem:[%s6 + $0x1f4] sm:$0x7]
  %v3698 = vld [vmem:[%s6 + $0x1f8] sm:$0x7]
  %v3699 = vld [vmem:[%s6 + $0x1fc] sm:$0x7]
  %v3700 = vunpack.c.l.bf16 %v3572
  %v3701 = vunpack.c.l.bf16 %v3573
  %v3702 = vunpack.c.l.bf16 %v3574
  %v3703 = vunpack.c.l.bf16 %v3575
  %v3704 = vunpack.c.l.bf16 %v3576
  %v3705 = vunpack.c.l.bf16 %v3577
  %v3706 = vunpack.c.l.bf16 %v3578
  %v3707 = vunpack.c.l.bf16 %v3579
  %v3708 = vunpack.c.l.bf16 %v3580
  %v3709 = vunpack.c.l.bf16 %v3581
  %v3710 = vunpack.c.l.bf16 %v3582
  %v3711 = vunpack.c.l.bf16 %v3583
  %v3712 = vunpack.c.l.bf16 %v3584
  %v3713 = vunpack.c.l.bf16 %v3585
  %v3714 = vunpack.c.l.bf16 %v3586
  %v3715 = vunpack.c.l.bf16 %v3587
  %v3716 = vunpack.c.l.bf16 %v3588
  %v3717 = vunpack.c.l.bf16 %v3589
  %v3718 = vunpack.c.l.bf16 %v3590
  %v3719 = vunpack.c.l.bf16 %v3591
  %v3720 = vunpack.c.l.bf16 %v3592
  %v3721 = vunpack.c.l.bf16 %v3593
  %v3722 = vunpack.c.l.bf16 %v3594
  %v3723 = vunpack.c.l.bf16 %v3595
  %v3724 = vunpack.c.l.bf16 %v3596
  %v3725 = vunpack.c.l.bf16 %v3597
  %v3726 = vunpack.c.l.bf16 %v3598
  %v3727 = vunpack.c.l.bf16 %v3599
  %v3728 = vunpack.c.l.bf16 %v3600
  %v3729 = vunpack.c.l.bf16 %v3601
  %v3730 = vunpack.c.l.bf16 %v3602
  %v3731 = vunpack.c.l.bf16 %v3603
  %v3732 = vunpack.c.l.bf16 %v3604
  %v3733 = vunpack.c.l.bf16 %v3605
  %v3734 = vunpack.c.l.bf16 %v3606
  %v3735 = vunpack.c.l.bf16 %v3607
  %v3736 = vunpack.c.l.bf16 %v3608
  %v3737 = vunpack.c.l.bf16 %v3609
  %v3738 = vunpack.c.l.bf16 %v3610
  %v3739 = vunpack.c.l.bf16 %v3611
  %v3740 = vunpack.c.l.bf16 %v3612
  %v3741 = vunpack.c.l.bf16 %v3613
  %v3742 = vunpack.c.l.bf16 %v3614
  %v3743 = vunpack.c.l.bf16 %v3615
  %v3744 = vunpack.c.l.bf16 %v3616
  %v3745 = vunpack.c.l.bf16 %v3617
  %v3746 = vunpack.c.l.bf16 %v3618
  %v3747 = vunpack.c.l.bf16 %v3619
  %v3748 = vunpack.c.l.bf16 %v3620
  %v3749 = vunpack.c.l.bf16 %v3621
  %v3750 = vunpack.c.l.bf16 %v3622
  %v3751 = vunpack.c.l.bf16 %v3623
  %v3752 = vunpack.c.l.bf16 %v3624
  %v3753 = vunpack.c.l.bf16 %v3625
  %v3754 = vunpack.c.l.bf16 %v3626
  %v3755 = vunpack.c.l.bf16 %v3627
  %v3756 = vunpack.c.l.bf16 %v3628
  %v3757 = vunpack.c.l.bf16 %v3629
  %v3758 = vunpack.c.l.bf16 %v3630
  %v3759 = vunpack.c.l.bf16 %v3631
  %v3760 = vunpack.c.l.bf16 %v3632
  %v3761 = vunpack.c.l.bf16 %v3633
  %v3762 = vunpack.c.l.bf16 %v3634
  %v3763 = vunpack.c.l.bf16 %v3635
  %v3764 = vunpack.c.l.bf16 %v3636
  %v3765 = vunpack.c.l.bf16 %v3637
  %v3766 = vunpack.c.l.bf16 %v3638
  %v3767 = vunpack.c.l.bf16 %v3639
  %v3768 = vunpack.c.l.bf16 %v3640
  %v3769 = vunpack.c.l.bf16 %v3641
  %v3770 = vunpack.c.l.bf16 %v3642
  %v3771 = vunpack.c.l.bf16 %v3643
  %v3772 = vunpack.c.l.bf16 %v3644
  %v3773 = vunpack.c.l.bf16 %v3645
  %v3774 = vunpack.c.l.bf16 %v3646
  %v3775 = vunpack.c.l.bf16 %v3647
  %v3776 = vunpack.c.l.bf16 %v3648
  %v3777 = vunpack.c.l.bf16 %v3649
  %v3778 = vunpack.c.l.bf16 %v3650
  %v3779 = vunpack.c.l.bf16 %v3651
  %v3780 = vunpack.c.l.bf16 %v3652
  %v3781 = vunpack.c.l.bf16 %v3653
  %v3782 = vunpack.c.l.bf16 %v3654
  %v3783 = vunpack.c.l.bf16 %v3655
  %v3784 = vunpack.c.l.bf16 %v3656
  %v3785 = vunpack.c.l.bf16 %v3657
  %v3786 = vunpack.c.l.bf16 %v3658
  %v3787 = vunpack.c.l.bf16 %v3659
  %v3788 = vunpack.c.l.bf16 %v3660
  %v3789 = vunpack.c.l.bf16 %v3661
  %v3790 = vunpack.c.l.bf16 %v3662
  %v3791 = vunpack.c.l.bf16 %v3663
  %v3792 = vunpack.c.l.bf16 %v3664
  %v3793 = vunpack.c.l.bf16 %v3665
  %v3794 = vunpack.c.l.bf16 %v3666
  %v3795 = vunpack.c.l.bf16 %v3667
  %v3796 = vunpack.c.l.bf16 %v3668
  %v3797 = vunpack.c.l.bf16 %v3669
  %v3798 = vunpack.c.l.bf16 %v3670
  %v3799 = vunpack.c.l.bf16 %v3671
  %v3800 = vunpack.c.l.bf16 %v3672
  %v3801 = vunpack.c.l.bf16 %v3673
  %v3802 = vunpack.c.l.bf16 %v3674
  %v3803 = vunpack.c.l.bf16 %v3675
  %v3804 = vunpack.c.l.bf16 %v3676
  %v3805 = vunpack.c.l.bf16 %v3677
  %v3806 = vunpack.c.l.bf16 %v3678
  %v3807 = vunpack.c.l.bf16 %v3679
  %v3808 = vunpack.c.l.bf16 %v3680
  %v3809 = vunpack.c.l.bf16 %v3681
  %v3810 = vunpack.c.l.bf16 %v3682
  %v3811 = vunpack.c.l.bf16 %v3683
  %v3812 = vunpack.c.l.bf16 %v3684
  %v3813 = vunpack.c.l.bf16 %v3685
  %v3814 = vunpack.c.l.bf16 %v3686
  %v3815 = vunpack.c.l.bf16 %v3687
  %v3816 = vunpack.c.l.bf16 %v3688
  %v3817 = vunpack.c.l.bf16 %v3689
  %v3818 = vunpack.c.l.bf16 %v3690
  %v3819 = vunpack.c.l.bf16 %v3691
  %v3820 = vunpack.c.l.bf16 %v3692
  %v3821 = vunpack.c.l.bf16 %v3693
  %v3822 = vunpack.c.l.bf16 %v3694
  %v3823 = vunpack.c.l.bf16 %v3695
  %v3824 = vunpack.c.l.bf16 %v3696
  %v3825 = vunpack.c.l.bf16 %v3697
  %v3826 = vunpack.c.l.bf16 %v3698
  %v3827 = vunpack.c.l.bf16 %v3699
  %v3828 = vld [vmem:[%s7] sm:$0x7]
  %v3829 = vld [vmem:[%s7 + $0x4] sm:$0x7]
  %v3830 = vld [vmem:[%s7 + $0x8] sm:$0x7]
  %v3831 = vld [vmem:[%s7 + $0xc] sm:$0x7]
  %v3832 = vld [vmem:[%s7 + $0x10] sm:$0x7]
  %v3833 = vld [vmem:[%s7 + $0x14] sm:$0x7]
  %v3834 = vld [vmem:[%s7 + $0x18] sm:$0x7]
  %v3835 = vld [vmem:[%s7 + $0x1c] sm:$0x7]
  %v3836 = vld [vmem:[%s7 + $0x20] sm:$0x7]
  %v3837 = vld [vmem:[%s7 + $0x24] sm:$0x7]
  %v3838 = vld [vmem:[%s7 + $0x28] sm:$0x7]
  %v3839 = vld [vmem:[%s7 + $0x2c] sm:$0x7]
  %v3840 = vld [vmem:[%s7 + $0x30] sm:$0x7]
  %v3841 = vld [vmem:[%s7 + $0x34] sm:$0x7]
  %v3842 = vld [vmem:[%s7 + $0x38] sm:$0x7]
  %v3843 = vld [vmem:[%s7 + $0x3c] sm:$0x7]
  %v3844 = vld [vmem:[%s7 + $0x40] sm:$0x7]
  %v3845 = vld [vmem:[%s7 + $0x44] sm:$0x7]
  %v3846 = vld [vmem:[%s7 + $0x48] sm:$0x7]
  %v3847 = vld [vmem:[%s7 + $0x4c] sm:$0x7]
  %v3848 = vld [vmem:[%s7 + $0x50] sm:$0x7]
  %v3849 = vld [vmem:[%s7 + $0x54] sm:$0x7]
  %v3850 = vld [vmem:[%s7 + $0x58] sm:$0x7]
  %v3851 = vld [vmem:[%s7 + $0x5c] sm:$0x7]
  %v3852 = vld [vmem:[%s7 + $0x60] sm:$0x7]
  %v3853 = vld [vmem:[%s7 + $0x64] sm:$0x7]
  %v3854 = vld [vmem:[%s7 + $0x68] sm:$0x7]
  %v3855 = vld [vmem:[%s7 + $0x6c] sm:$0x7]
  %v3856 = vld [vmem:[%s7 + $0x70] sm:$0x7]
  %v3857 = vld [vmem:[%s7 + $0x74] sm:$0x7]
  %v3858 = vld [vmem:[%s7 + $0x78] sm:$0x7]
  %v3859 = vld [vmem:[%s7 + $0x7c] sm:$0x7]
  %v3860 = vld [vmem:[%s7 + $0x80] sm:$0x7]
  %v3861 = vld [vmem:[%s7 + $0x84] sm:$0x7]
  %v3862 = vld [vmem:[%s7 + $0x88] sm:$0x7]
  %v3863 = vld [vmem:[%s7 + $0x8c] sm:$0x7]
  %v3864 = vld [vmem:[%s7 + $0x90] sm:$0x7]
  %v3865 = vld [vmem:[%s7 + $0x94] sm:$0x7]
  %v3866 = vld [vmem:[%s7 + $0x98] sm:$0x7]
  %v3867 = vld [vmem:[%s7 + $0x9c] sm:$0x7]
  %v3868 = vld [vmem:[%s7 + $0xa0] sm:$0x7]
  %v3869 = vld [vmem:[%s7 + $0xa4] sm:$0x7]
  %v3870 = vld [vmem:[%s7 + $0xa8] sm:$0x7]
  %v3871 = vld [vmem:[%s7 + $0xac] sm:$0x7]
  %v3872 = vld [vmem:[%s7 + $0xb0] sm:$0x7]
  %v3873 = vld [vmem:[%s7 + $0xb4] sm:$0x7]
  %v3874 = vld [vmem:[%s7 + $0xb8] sm:$0x7]
  %v3875 = vld [vmem:[%s7 + $0xbc] sm:$0x7]
  %v3876 = vld [vmem:[%s7 + $0xc0] sm:$0x7]
  %v3877 = vld [vmem:[%s7 + $0xc4] sm:$0x7]
  %v3878 = vld [vmem:[%s7 + $0xc8] sm:$0x7]
  %v3879 = vld [vmem:[%s7 + $0xcc] sm:$0x7]
  %v3880 = vld [vmem:[%s7 + $0xd0] sm:$0x7]
  %v3881 = vld [vmem:[%s7 + $0xd4] sm:$0x7]
  %v3882 = vld [vmem:[%s7 + $0xd8] sm:$0x7]
  %v3883 = vld [vmem:[%s7 + $0xdc] sm:$0x7]
  %v3884 = vld [vmem:[%s7 + $0xe0] sm:$0x7]
  %v3885 = vld [vmem:[%s7 + $0xe4] sm:$0x7]
  %v3886 = vld [vmem:[%s7 + $0xe8] sm:$0x7]
  %v3887 = vld [vmem:[%s7 + $0xec] sm:$0x7]
  %v3888 = vld [vmem:[%s7 + $0xf0] sm:$0x7]
  %v3889 = vld [vmem:[%s7 + $0xf4] sm:$0x7]
  %v3890 = vld [vmem:[%s7 + $0xf8] sm:$0x7]
  %v3891 = vld [vmem:[%s7 + $0xfc] sm:$0x7]
  %v3892 = vld [vmem:[%s7 + $0x100] sm:$0x7]
  %v3893 = vld [vmem:[%s7 + $0x104] sm:$0x7]
  %v3894 = vld [vmem:[%s7 + $0x108] sm:$0x7]
  %v3895 = vld [vmem:[%s7 + $0x10c] sm:$0x7]
  %v3896 = vld [vmem:[%s7 + $0x110] sm:$0x7]
  %v3897 = vld [vmem:[%s7 + $0x114] sm:$0x7]
  %v3898 = vld [vmem:[%s7 + $0x118] sm:$0x7]
  %v3899 = vld [vmem:[%s7 + $0x11c] sm:$0x7]
  %v3900 = vld [vmem:[%s7 + $0x120] sm:$0x7]
  %v3901 = vld [vmem:[%s7 + $0x124] sm:$0x7]
  %v3902 = vld [vmem:[%s7 + $0x128] sm:$0x7]
  %v3903 = vld [vmem:[%s7 + $0x12c] sm:$0x7]
  %v3904 = vld [vmem:[%s7 + $0x130] sm:$0x7]
  %v3905 = vld [vmem:[%s7 + $0x134] sm:$0x7]
  %v3906 = vld [vmem:[%s7 + $0x138] sm:$0x7]
  %v3907 = vld [vmem:[%s7 + $0x13c] sm:$0x7]
  %v3908 = vld [vmem:[%s7 + $0x140] sm:$0x7]
  %v3909 = vld [vmem:[%s7 + $0x144] sm:$0x7]
  %v3910 = vld [vmem:[%s7 + $0x148] sm:$0x7]
  %v3911 = vld [vmem:[%s7 + $0x14c] sm:$0x7]
  %v3912 = vld [vmem:[%s7 + $0x150] sm:$0x7]
  %v3913 = vld [vmem:[%s7 + $0x154] sm:$0x7]
  %v3914 = vld [vmem:[%s7 + $0x158] sm:$0x7]
  %v3915 = vld [vmem:[%s7 + $0x15c] sm:$0x7]
  %v3916 = vld [vmem:[%s7 + $0x160] sm:$0x7]
  %v3917 = vld [vmem:[%s7 + $0x164] sm:$0x7]
  %v3918 = vld [vmem:[%s7 + $0x168] sm:$0x7]
  %v3919 = vld [vmem:[%s7 + $0x16c] sm:$0x7]
  %v3920 = vld [vmem:[%s7 + $0x170] sm:$0x7]
  %v3921 = vld [vmem:[%s7 + $0x174] sm:$0x7]
  %v3922 = vld [vmem:[%s7 + $0x178] sm:$0x7]
  %v3923 = vld [vmem:[%s7 + $0x17c] sm:$0x7]
  %v3924 = vld [vmem:[%s7 + $0x180] sm:$0x7]
  %v3925 = vld [vmem:[%s7 + $0x184] sm:$0x7]
  %v3926 = vld [vmem:[%s7 + $0x188] sm:$0x7]
  %v3927 = vld [vmem:[%s7 + $0x18c] sm:$0x7]
  %v3928 = vld [vmem:[%s7 + $0x190] sm:$0x7]
  %v3929 = vld [vmem:[%s7 + $0x194] sm:$0x7]
  %v3930 = vld [vmem:[%s7 + $0x198] sm:$0x7]
  %v3931 = vld [vmem:[%s7 + $0x19c] sm:$0x7]
  %v3932 = vld [vmem:[%s7 + $0x1a0] sm:$0x7]
  %v3933 = vld [vmem:[%s7 + $0x1a4] sm:$0x7]
  %v3934 = vld [vmem:[%s7 + $0x1a8] sm:$0x7]
  %v3935 = vld [vmem:[%s7 + $0x1ac] sm:$0x7]
  %v3936 = vld [vmem:[%s7 + $0x1b0] sm:$0x7]
  %v3937 = vld [vmem:[%s7 + $0x1b4] sm:$0x7]
  %v3938 = vld [vmem:[%s7 + $0x1b8] sm:$0x7]
  %v3939 = vld [vmem:[%s7 + $0x1bc] sm:$0x7]
  %v3940 = vld [vmem:[%s7 + $0x1c0] sm:$0x7]
  %v3941 = vld [vmem:[%s7 + $0x1c4] sm:$0x7]
  %v3942 = vld [vmem:[%s7 + $0x1c8] sm:$0x7]
  %v3943 = vld [vmem:[%s7 + $0x1cc] sm:$0x7]
  %v3944 = vld [vmem:[%s7 + $0x1d0] sm:$0x7]
  %v3945 = vld [vmem:[%s7 + $0x1d4] sm:$0x7]
  %v3946 = vld [vmem:[%s7 + $0x1d8] sm:$0x7]
  %v3947 = vld [vmem:[%s7 + $0x1dc] sm:$0x7]
  %v3948 = vld [vmem:[%s7 + $0x1e0] sm:$0x7]
  %v3949 = vld [vmem:[%s7 + $0x1e4] sm:$0x7]
  %v3950 = vld [vmem:[%s7 + $0x1e8] sm:$0x7]
  %v3951 = vld [vmem:[%s7 + $0x1ec] sm:$0x7]
  %v3952 = vld [vmem:[%s7 + $0x1f0] sm:$0x7]
  %v3953 = vld [vmem:[%s7 + $0x1f4] sm:$0x7]
  %v3954 = vld [vmem:[%s7 + $0x1f8] sm:$0x7]
  %v3955 = vld [vmem:[%s7 + $0x1fc] sm:$0x7]
  %v3956 = vunpack.c.l.bf16 %v3828
  %v3957 = vunpack.c.l.bf16 %v3829
  %v3958 = vunpack.c.l.bf16 %v3830
  %v3959 = vunpack.c.l.bf16 %v3831
  %v3960 = vunpack.c.l.bf16 %v3832
  %v3961 = vunpack.c.l.bf16 %v3833
  %v3962 = vunpack.c.l.bf16 %v3834
  %v3963 = vunpack.c.l.bf16 %v3835
  %v3964 = vunpack.c.l.bf16 %v3836
  %v3965 = vunpack.c.l.bf16 %v3837
  %v3966 = vunpack.c.l.bf16 %v3838
  %v3967 = vunpack.c.l.bf16 %v3839
  %v3968 = vunpack.c.l.bf16 %v3840
  %v3969 = vunpack.c.l.bf16 %v3841
  %v3970 = vunpack.c.l.bf16 %v3842
  %v3971 = vunpack.c.l.bf16 %v3843
  %v3972 = vunpack.c.l.bf16 %v3844
  %v3973 = vunpack.c.l.bf16 %v3845
  %v3974 = vunpack.c.l.bf16 %v3846
  %v3975 = vunpack.c.l.bf16 %v3847
  %v3976 = vunpack.c.l.bf16 %v3848
  %v3977 = vunpack.c.l.bf16 %v3849
  %v3978 = vunpack.c.l.bf16 %v3850
  %v3979 = vunpack.c.l.bf16 %v3851
  %v3980 = vunpack.c.l.bf16 %v3852
  %v3981 = vunpack.c.l.bf16 %v3853
  %v3982 = vunpack.c.l.bf16 %v3854
  %v3983 = vunpack.c.l.bf16 %v3855
  %v3984 = vunpack.c.l.bf16 %v3856
  %v3985 = vunpack.c.l.bf16 %v3857
  %v3986 = vunpack.c.l.bf16 %v3858
  %v3987 = vunpack.c.l.bf16 %v3859
  %v3988 = vunpack.c.l.bf16 %v3860
  %v3989 = vunpack.c.l.bf16 %v3861
  %v3990 = vunpack.c.l.bf16 %v3862
  %v3991 = vunpack.c.l.bf16 %v3863
  %v3992 = vunpack.c.l.bf16 %v3864
  %v3993 = vunpack.c.l.bf16 %v3865
  %v3994 = vunpack.c.l.bf16 %v3866
  %v3995 = vunpack.c.l.bf16 %v3867
  %v3996 = vunpack.c.l.bf16 %v3868
  %v3997 = vunpack.c.l.bf16 %v3869
  %v3998 = vunpack.c.l.bf16 %v3870
  %v3999 = vunpack.c.l.bf16 %v3871
  %v4000 = vunpack.c.l.bf16 %v3872
  %v4001 = vunpack.c.l.bf16 %v3873
  %v4002 = vunpack.c.l.bf16 %v3874
  %v4003 = vunpack.c.l.bf16 %v3875
  %v4004 = vunpack.c.l.bf16 %v3876
  %v4005 = vunpack.c.l.bf16 %v3877
  %v4006 = vunpack.c.l.bf16 %v3878
  %v4007 = vunpack.c.l.bf16 %v3879
  %v4008 = vunpack.c.l.bf16 %v3880
  %v4009 = vunpack.c.l.bf16 %v3881
  %v4010 = vunpack.c.l.bf16 %v3882
  %v4011 = vunpack.c.l.bf16 %v3883
  %v4012 = vunpack.c.l.bf16 %v3884
  %v4013 = vunpack.c.l.bf16 %v3885
  %v4014 = vunpack.c.l.bf16 %v3886
  %v4015 = vunpack.c.l.bf16 %v3887
  %v4016 = vunpack.c.l.bf16 %v3888
  %v4017 = vunpack.c.l.bf16 %v3889
  %v4018 = vunpack.c.l.bf16 %v3890
  %v4019 = vunpack.c.l.bf16 %v3891
  %v4020 = vunpack.c.l.bf16 %v3892
  %v4021 = vunpack.c.l.bf16 %v3893
  %v4022 = vunpack.c.l.bf16 %v3894
  %v4023 = vunpack.c.l.bf16 %v3895
  %v4024 = vunpack.c.l.bf16 %v3896
  %v4025 = vunpack.c.l.bf16 %v3897
  %v4026 = vunpack.c.l.bf16 %v3898
  %v4027 = vunpack.c.l.bf16 %v3899
  %v4028 = vunpack.c.l.bf16 %v3900
  %v4029 = vunpack.c.l.bf16 %v3901
  %v4030 = vunpack.c.l.bf16 %v3902
  %v4031 = vunpack.c.l.bf16 %v3903
  %v4032 = vunpack.c.l.bf16 %v3904
  %v4033 = vunpack.c.l.bf16 %v3905
  %v4034 = vunpack.c.l.bf16 %v3906
  %v4035 = vunpack.c.l.bf16 %v3907
  %v4036 = vunpack.c.l.bf16 %v3908
  %v4037 = vunpack.c.l.bf16 %v3909
  %v4038 = vunpack.c.l.bf16 %v3910
  %v4039 = vunpack.c.l.bf16 %v3911
  %v4040 = vunpack.c.l.bf16 %v3912
  %v4041 = vunpack.c.l.bf16 %v3913
  %v4042 = vunpack.c.l.bf16 %v3914
  %v4043 = vunpack.c.l.bf16 %v3915
  %v4044 = vunpack.c.l.bf16 %v3916
  %v4045 = vunpack.c.l.bf16 %v3917
  %v4046 = vunpack.c.l.bf16 %v3918
  %v4047 = vunpack.c.l.bf16 %v3919
  %v4048 = vunpack.c.l.bf16 %v3920
  %v4049 = vunpack.c.l.bf16 %v3921
  %v4050 = vunpack.c.l.bf16 %v3922
  %v4051 = vunpack.c.l.bf16 %v3923
  %v4052 = vunpack.c.l.bf16 %v3924
  %v4053 = vunpack.c.l.bf16 %v3925
  %v4054 = vunpack.c.l.bf16 %v3926
  %v4055 = vunpack.c.l.bf16 %v3927
  %v4056 = vunpack.c.l.bf16 %v3928
  %v4057 = vunpack.c.l.bf16 %v3929
  %v4058 = vunpack.c.l.bf16 %v3930
  %v4059 = vunpack.c.l.bf16 %v3931
  %v4060 = vunpack.c.l.bf16 %v3932
  %v4061 = vunpack.c.l.bf16 %v3933
  %v4062 = vunpack.c.l.bf16 %v3934
  %v4063 = vunpack.c.l.bf16 %v3935
  %v4064 = vunpack.c.l.bf16 %v3936
  %v4065 = vunpack.c.l.bf16 %v3937
  %v4066 = vunpack.c.l.bf16 %v3938
  %v4067 = vunpack.c.l.bf16 %v3939
  %v4068 = vunpack.c.l.bf16 %v3940
  %v4069 = vunpack.c.l.bf16 %v3941
  %v4070 = vunpack.c.l.bf16 %v3942
  %v4071 = vunpack.c.l.bf16 %v3943
  %v4072 = vunpack.c.l.bf16 %v3944
  %v4073 = vunpack.c.l.bf16 %v3945
  %v4074 = vunpack.c.l.bf16 %v3946
  %v4075 = vunpack.c.l.bf16 %v3947
  %v4076 = vunpack.c.l.bf16 %v3948
  %v4077 = vunpack.c.l.bf16 %v3949
  %v4078 = vunpack.c.l.bf16 %v3950
  %v4079 = vunpack.c.l.bf16 %v3951
  %v4080 = vunpack.c.l.bf16 %v3952
  %v4081 = vunpack.c.l.bf16 %v3953
  %v4082 = vunpack.c.l.bf16 %v3954
  %v4083 = vunpack.c.l.bf16 %v3955
  %v4084 = vlaneseq
  %v4085 = vshrl.u32 %v4084, 7
  %v4086 = vsub.s32 4, %v4085
  %v4087 = vrot.slane %v3532, %v4086
  %v4088 = vlaneseq
  %v4089 = vshrl.u32 %v4088, 7
  %v4090 = vsub.s32 4, %v4089
  %v4091 = vrot.slane %v3533, %v4090
  %v4092 = vlaneseq
  %v4093 = vshrl.u32 %v4092, 7
  %v4094 = vsub.s32 4, %v4093
  %v4095 = vrot.slane %v3534, %v4094
  %v4096 = vlaneseq
  %v4097 = vshrl.u32 %v4096, 7
  %v4098 = vsub.s32 4, %v4097
  %v4099 = vrot.slane %v3535, %v4098
  %v4100 = vlaneseq
  %v4101 = vshrl.u32 %v4100, 7
  %v4102 = vsub.s32 4, %v4101
  %v4103 = vrot.slane %v3536, %v4102
  %v4104 = vlaneseq
  %v4105 = vshrl.u32 %v4104, 7
  %v4106 = vsub.s32 4, %v4105
  %v4107 = vrot.slane %v3537, %v4106
  %v4108 = vlaneseq
  %v4109 = vshrl.u32 %v4108, 7
  %v4110 = vsub.s32 4, %v4109
  %v4111 = vrot.slane %v3538, %v4110
  %v4112 = vlaneseq
  %v4113 = vshrl.u32 %v4112, 7
  %v4114 = vsub.s32 4, %v4113
  %v4115 = vrot.slane %v3539, %v4114
  %v4116 = vlaneseq
  %v4117 = vshrl.u32 %v4116, 7
  %v4118 = vsub.s32 4, %v4117
  %v4119 = vrot.slane %v3540, %v4118
  %v4120 = vlaneseq
  %v4121 = vshrl.u32 %v4120, 7
  %v4122 = vsub.s32 4, %v4121
  %v4123 = vrot.slane %v3541, %v4122
  %v4124 = vlaneseq
  %v4125 = vshrl.u32 %v4124, 7
  %v4126 = vsub.s32 4, %v4125
  %v4127 = vrot.slane %v3542, %v4126
  %v4128 = vlaneseq
  %v4129 = vshrl.u32 %v4128, 7
  %v4130 = vsub.s32 4, %v4129
  %v4131 = vrot.slane %v3543, %v4130
  %v4132 = vlaneseq
  %v4133 = vshrl.u32 %v4132, 7
  %v4134 = vsub.s32 4, %v4133
  %v4135 = vrot.slane %v3544, %v4134
  %v4136 = vlaneseq
  %v4137 = vshrl.u32 %v4136, 7
  %v4138 = vsub.s32 4, %v4137
  %v4139 = vrot.slane %v3545, %v4138
  %v4140 = vlaneseq
  %v4141 = vshrl.u32 %v4140, 7
  %v4142 = vsub.s32 4, %v4141
  %v4143 = vrot.slane %v3546, %v4142
  %v4144 = vlaneseq
  %v4145 = vshrl.u32 %v4144, 7
  %v4146 = vsub.s32 4, %v4145
  %v4147 = vrot.slane %v3547, %v4146
  %v4148 = vlaneseq
  %v4149 = vshrl.u32 %v4148, 7
  %v4150 = vsub.s32 4, %v4149
  %v4151 = vrot.slane %v3548, %v4150
  %v4152 = vlaneseq
  %v4153 = vshrl.u32 %v4152, 7
  %v4154 = vsub.s32 4, %v4153
  %v4155 = vrot.slane %v3549, %v4154
  %v4156 = vlaneseq
  %v4157 = vshrl.u32 %v4156, 7
  %v4158 = vsub.s32 4, %v4157
  %v4159 = vrot.slane %v3550, %v4158
  %v4160 = vlaneseq
  %v4161 = vshrl.u32 %v4160, 7
  %v4162 = vsub.s32 4, %v4161
  %v4163 = vrot.slane %v3551, %v4162
  %v4164 = vlaneseq
  %v4165 = vshrl.u32 %v4164, 7
  %v4166 = vsub.s32 4, %v4165
  %v4167 = vrot.slane %v3552, %v4166
  %v4168 = vlaneseq
  %v4169 = vshrl.u32 %v4168, 7
  %v4170 = vsub.s32 4, %v4169
  %v4171 = vrot.slane %v3553, %v4170
  %v4172 = vlaneseq
  %v4173 = vshrl.u32 %v4172, 7
  %v4174 = vsub.s32 4, %v4173
  %v4175 = vrot.slane %v3554, %v4174
  %v4176 = vlaneseq
  %v4177 = vshrl.u32 %v4176, 7
  %v4178 = vsub.s32 4, %v4177
  %v4179 = vrot.slane %v3555, %v4178
  %v4180 = vlaneseq
  %v4181 = vshrl.u32 %v4180, 7
  %v4182 = vsub.s32 4, %v4181
  %v4183 = vrot.slane %v3556, %v4182
  %v4184 = vlaneseq
  %v4185 = vshrl.u32 %v4184, 7
  %v4186 = vsub.s32 4, %v4185
  %v4187 = vrot.slane %v3557, %v4186
  %v4188 = vlaneseq
  %v4189 = vshrl.u32 %v4188, 7
  %v4190 = vsub.s32 4, %v4189
  %v4191 = vrot.slane %v3558, %v4190
  %v4192 = vlaneseq
  %v4193 = vshrl.u32 %v4192, 7
  %v4194 = vsub.s32 4, %v4193
  %v4195 = vrot.slane %v3559, %v4194
  %v4196 = vlaneseq
  %v4197 = vshrl.u32 %v4196, 7
  %v4198 = vsub.s32 4, %v4197
  %v4199 = vrot.slane %v3560, %v4198
  %v4200 = vlaneseq
  %v4201 = vshrl.u32 %v4200, 7
  %v4202 = vsub.s32 4, %v4201
  %v4203 = vrot.slane %v3561, %v4202
  %v4204 = vlaneseq
  %v4205 = vshrl.u32 %v4204, 7
  %v4206 = vsub.s32 4, %v4205
  %v4207 = vrot.slane %v3562, %v4206
  %v4208 = vlaneseq
  %v4209 = vshrl.u32 %v4208, 7
  %v4210 = vsub.s32 4, %v4209
  %v4211 = vrot.slane %v3563, %v4210
  %v4212 = vmul.f32 %v3700, %v4087
  %v4213 = vmul.f32 %v3704, %v4091
  %v4214 = vmul.f32 %v3708, %v4095
  %v4215 = vmul.f32 %v3712, %v4099
  %v4216 = vmul.f32 %v3716, %v4103
  %v4217 = vmul.f32 %v3720, %v4107
  %v4218 = vmul.f32 %v3724, %v4111
  %v4219 = vmul.f32 %v3728, %v4115
  %v4220 = vmul.f32 %v3732, %v4119
  %v4221 = vmul.f32 %v3736, %v4123
  %v4222 = vmul.f32 %v3740, %v4127
  %v4223 = vmul.f32 %v3744, %v4131
  %v4224 = vmul.f32 %v3748, %v4135
  %v4225 = vmul.f32 %v3752, %v4139
  %v4226 = vmul.f32 %v3756, %v4143
  %v4227 = vmul.f32 %v3760, %v4147
  %v4228 = vmul.f32 %v3764, %v4151
  %v4229 = vmul.f32 %v3768, %v4155
  %v4230 = vmul.f32 %v3772, %v4159
  %v4231 = vmul.f32 %v3776, %v4163
  %v4232 = vmul.f32 %v3780, %v4167
  %v4233 = vmul.f32 %v3784, %v4171
  %v4234 = vmul.f32 %v3788, %v4175
  %v4235 = vmul.f32 %v3792, %v4179
  %v4236 = vmul.f32 %v3796, %v4183
  %v4237 = vmul.f32 %v3800, %v4187
  %v4238 = vmul.f32 %v3804, %v4191
  %v4239 = vmul.f32 %v3808, %v4195
  %v4240 = vmul.f32 %v3812, %v4199
  %v4241 = vmul.f32 %v3816, %v4203
  %v4242 = vmul.f32 %v3820, %v4207
  %v4243 = vmul.f32 %v3824, %v4211
  %vm4244 = vcmask 259072
  %v4245 = vsel %vm4244, %v4212, 0.0
  %4246 = vadd.xlane.f32.xlu0 %v4245
  %v4247 = vpop.xlane.xlu0 %4246
  %v4248 = vsel %vm4244, %v4213, 0.0
  %4249 = vadd.xlane.f32.xlu0 %v4248
  %v4250 = vpop.xlane.xlu0 %4249
  %v4251 = vsel %vm4244, %v4214, 0.0
  %4252 = vadd.xlane.f32.xlu0 %v4251
  %v4253 = vpop.xlane.xlu0 %4252
  %v4254 = vsel %vm4244, %v4215, 0.0
  %4255 = vadd.xlane.f32.xlu0 %v4254
  %v4256 = vpop.xlane.xlu0 %4255
  %v4257 = vsel %vm4244, %v4216, 0.0
  %4258 = vadd.xlane.f32.xlu0 %v4257
  %v4259 = vpop.xlane.xlu0 %4258
  %v4260 = vsel %vm4244, %v4217, 0.0
  %4261 = vadd.xlane.f32.xlu0 %v4260
  %v4262 = vpop.xlane.xlu0 %4261
  %v4263 = vsel %vm4244, %v4218, 0.0
  %4264 = vadd.xlane.f32.xlu0 %v4263
  %v4265 = vpop.xlane.xlu0 %4264
  %v4266 = vsel %vm4244, %v4219, 0.0
  %4267 = vadd.xlane.f32.xlu0 %v4266
  %v4268 = vpop.xlane.xlu0 %4267
  %v4269 = vsel %vm4244, %v4220, 0.0
  %4270 = vadd.xlane.f32.xlu0 %v4269
  %v4271 = vpop.xlane.xlu0 %4270
  %v4272 = vsel %vm4244, %v4221, 0.0
  %4273 = vadd.xlane.f32.xlu0 %v4272
  %v4274 = vpop.xlane.xlu0 %4273
  %v4275 = vsel %vm4244, %v4222, 0.0
  %4276 = vadd.xlane.f32.xlu0 %v4275
  %v4277 = vpop.xlane.xlu0 %4276
  %v4278 = vsel %vm4244, %v4223, 0.0
  %4279 = vadd.xlane.f32.xlu0 %v4278
  %v4280 = vpop.xlane.xlu0 %4279
  %v4281 = vsel %vm4244, %v4224, 0.0
  %4282 = vadd.xlane.f32.xlu0 %v4281
  %v4283 = vpop.xlane.xlu0 %4282
  %v4284 = vsel %vm4244, %v4225, 0.0
  %4285 = vadd.xlane.f32.xlu0 %v4284
  %v4286 = vpop.xlane.xlu0 %4285
  %v4287 = vsel %vm4244, %v4226, 0.0
  %4288 = vadd.xlane.f32.xlu0 %v4287
  %v4289 = vpop.xlane.xlu0 %4288
  %v4290 = vsel %vm4244, %v4227, 0.0
  %4291 = vadd.xlane.f32.xlu0 %v4290
  %v4292 = vpop.xlane.xlu0 %4291
  %v4293 = vsel %vm4244, %v4228, 0.0
  %4294 = vadd.xlane.f32.xlu0 %v4293
  %v4295 = vpop.xlane.xlu0 %4294
  %v4296 = vsel %vm4244, %v4229, 0.0
  %4297 = vadd.xlane.f32.xlu0 %v4296
  %v4298 = vpop.xlane.xlu0 %4297
  %v4299 = vsel %vm4244, %v4230, 0.0
  %4300 = vadd.xlane.f32.xlu0 %v4299
  %v4301 = vpop.xlane.xlu0 %4300
  %v4302 = vsel %vm4244, %v4231, 0.0
  %4303 = vadd.xlane.f32.xlu0 %v4302
  %v4304 = vpop.xlane.xlu0 %4303
  %v4305 = vsel %vm4244, %v4232, 0.0
  %4306 = vadd.xlane.f32.xlu0 %v4305
  %v4307 = vpop.xlane.xlu0 %4306
  %v4308 = vsel %vm4244, %v4233, 0.0
  %4309 = vadd.xlane.f32.xlu0 %v4308
  %v4310 = vpop.xlane.xlu0 %4309
  %v4311 = vsel %vm4244, %v4234, 0.0
  %4312 = vadd.xlane.f32.xlu0 %v4311
  %v4313 = vpop.xlane.xlu0 %4312
  %v4314 = vsel %vm4244, %v4235, 0.0
  %4315 = vadd.xlane.f32.xlu0 %v4314
  %v4316 = vpop.xlane.xlu0 %4315
  %v4317 = vsel %vm4244, %v4236, 0.0
  %4318 = vadd.xlane.f32.xlu0 %v4317
  %v4319 = vpop.xlane.xlu0 %4318
  %v4320 = vsel %vm4244, %v4237, 0.0
  %4321 = vadd.xlane.f32.xlu0 %v4320
  %v4322 = vpop.xlane.xlu0 %4321
  %v4323 = vsel %vm4244, %v4238, 0.0
  %4324 = vadd.xlane.f32.xlu0 %v4323
  %v4325 = vpop.xlane.xlu0 %4324
  %v4326 = vsel %vm4244, %v4239, 0.0
  %4327 = vadd.xlane.f32.xlu0 %v4326
  %v4328 = vpop.xlane.xlu0 %4327
  %v4329 = vsel %vm4244, %v4240, 0.0
  %4330 = vadd.xlane.f32.xlu0 %v4329
  %v4331 = vpop.xlane.xlu0 %4330
  %v4332 = vsel %vm4244, %v4241, 0.0
  %4333 = vadd.xlane.f32.xlu0 %v4332
  %v4334 = vpop.xlane.xlu0 %4333
  %v4335 = vsel %vm4244, %v4242, 0.0
  %4336 = vadd.xlane.f32.xlu0 %v4335
  %v4337 = vpop.xlane.xlu0 %4336
  %v4338 = vsel %vm4244, %v4243, 0.0
  %4339 = vadd.xlane.f32.xlu0 %v4338
  %v4340 = vpop.xlane.xlu0 %4339
  %v4345 = vcombine.high %v3568, %v3568
  %v4347 = vunpack.c.l.s4 1966171168
  %v4348 = vunpack.c.0.s8 %v4347
  %v4349 = vlaneseq
  %v4350 = vshrl.u32 %v4349, 7
  %v4351 = vsub.s32 %v4348, %v4350
  %v4352 = vrot.slane %v3568, %v4351
  %v4354 = vunpack.c.l.s4 1966171168
  %v4355 = vunpack.c.0.s8 %v4354
  %v4356 = vlaneseq
  %v4357 = vshrl.u32 %v4356, 7
  %v4358 = vsub.s32 %v4355, %v4357
  %v4359 = vrot.slane %v4345, %v4358
  %v4360 = vcombine.high %v4352, %v4352
  %v4361 = vcombine.high %v4359, %v4359
  %v4363 = vunpack.c.l.s4 1966171168
  %v4364 = vunpack.c.0.s8 %v4363
  %v4365 = vlaneseq
  %v4366 = vshrl.u32 %v4365, 7
  %v4367 = vsub.s32 %v4364, %v4366
  %v4368 = vrot.slane %v4352, %v4367
  %v4370 = vunpack.c.l.s4 1966171168
  %v4371 = vunpack.c.0.s8 %v4370
  %v4372 = vlaneseq
  %v4373 = vshrl.u32 %v4372, 7
  %v4374 = vsub.s32 %v4371, %v4373
  %v4375 = vrot.slane %v4359, %v4374
  %v4377 = vunpack.c.l.s4 1966171168
  %v4378 = vunpack.c.0.s8 %v4377
  %v4379 = vlaneseq
  %v4380 = vshrl.u32 %v4379, 7
  %v4381 = vsub.s32 %v4378, %v4380
  %v4382 = vrot.slane %v4360, %v4381
  %v4384 = vunpack.c.l.s4 1966171168
  %v4385 = vunpack.c.0.s8 %v4384
  %v4386 = vlaneseq
  %v4387 = vshrl.u32 %v4386, 7
  %v4388 = vsub.s32 %v4385, %v4387
  %v4389 = vrot.slane %v4361, %v4388
  %v4390 = vcombine.high %v4368, %v4368
  %v4391 = vcombine.high %v4375, %v4375
  %v4392 = vcombine.high %v4382, %v4382
  %v4393 = vcombine.high %v4389, %v4389
  %v4394 = vcombine.high %v3569, %v3569
  %v4396 = vunpack.c.l.s4 1966171168
  %v4397 = vunpack.c.0.s8 %v4396
  %v4398 = vlaneseq
  %v4399 = vshrl.u32 %v4398, 7
  %v4400 = vsub.s32 %v4397, %v4399
  %v4401 = vrot.slane %v3569, %v4400
  %v4403 = vunpack.c.l.s4 1966171168
  %v4404 = vunpack.c.0.s8 %v4403
  %v4405 = vlaneseq
  %v4406 = vshrl.u32 %v4405, 7
  %v4407 = vsub.s32 %v4404, %v4406
  %v4408 = vrot.slane %v4394, %v4407
  %v4409 = vcombine.high %v4401, %v4401
  %v4410 = vcombine.high %v4408, %v4408
  %v4412 = vunpack.c.l.s4 1966171168
  %v4413 = vunpack.c.0.s8 %v4412
  %v4414 = vlaneseq
  %v4415 = vshrl.u32 %v4414, 7
  %v4416 = vsub.s32 %v4413, %v4415
  %v4417 = vrot.slane %v4401, %v4416
  %v4419 = vunpack.c.l.s4 1966171168
  %v4420 = vunpack.c.0.s8 %v4419
  %v4421 = vlaneseq
  %v4422 = vshrl.u32 %v4421, 7
  %v4423 = vsub.s32 %v4420, %v4422
  %v4424 = vrot.slane %v4408, %v4423
  %v4426 = vunpack.c.l.s4 1966171168
  %v4427 = vunpack.c.0.s8 %v4426
  %v4428 = vlaneseq
  %v4429 = vshrl.u32 %v4428, 7
  %v4430 = vsub.s32 %v4427, %v4429
  %v4431 = vrot.slane %v4409, %v4430
  %v4433 = vunpack.c.l.s4 1966171168
  %v4434 = vunpack.c.0.s8 %v4433
  %v4435 = vlaneseq
  %v4436 = vshrl.u32 %v4435, 7
  %v4437 = vsub.s32 %v4434, %v4436
  %v4438 = vrot.slane %v4410, %v4437
  %v4439 = vcombine.high %v4417, %v4417
  %v4440 = vcombine.high %v4424, %v4424
  %v4441 = vcombine.high %v4431, %v4431
  %v4442 = vcombine.high %v4438, %v4438
  %v4443 = vcombine.high %v3570, %v3570
  %v4445 = vunpack.c.l.s4 1966171168
  %v4446 = vunpack.c.0.s8 %v4445
  %v4447 = vlaneseq
  %v4448 = vshrl.u32 %v4447, 7
  %v4449 = vsub.s32 %v4446, %v4448
  %v4450 = vrot.slane %v3570, %v4449
  %v4452 = vunpack.c.l.s4 1966171168
  %v4453 = vunpack.c.0.s8 %v4452
  %v4454 = vlaneseq
  %v4455 = vshrl.u32 %v4454, 7
  %v4456 = vsub.s32 %v4453, %v4455
  %v4457 = vrot.slane %v4443, %v4456
  %v4458 = vcombine.high %v4450, %v4450
  %v4459 = vcombine.high %v4457, %v4457
  %v4461 = vunpack.c.l.s4 1966171168
  %v4462 = vunpack.c.0.s8 %v4461
  %v4463 = vlaneseq
  %v4464 = vshrl.u32 %v4463, 7
  %v4465 = vsub.s32 %v4462, %v4464
  %v4466 = vrot.slane %v4450, %v4465
  %v4468 = vunpack.c.l.s4 1966171168
  %v4469 = vunpack.c.0.s8 %v4468
  %v4470 = vlaneseq
  %v4471 = vshrl.u32 %v4470, 7
  %v4472 = vsub.s32 %v4469, %v4471
  %v4473 = vrot.slane %v4457, %v4472
  %v4475 = vunpack.c.l.s4 1966171168
  %v4476 = vunpack.c.0.s8 %v4475
  %v4477 = vlaneseq
  %v4478 = vshrl.u32 %v4477, 7
  %v4479 = vsub.s32 %v4476, %v4478
  %v4480 = vrot.slane %v4458, %v4479
  %v4482 = vunpack.c.l.s4 1966171168
  %v4483 = vunpack.c.0.s8 %v4482
  %v4484 = vlaneseq
  %v4485 = vshrl.u32 %v4484, 7
  %v4486 = vsub.s32 %v4483, %v4485
  %v4487 = vrot.slane %v4459, %v4486
  %v4488 = vcombine.high %v4466, %v4466
  %v4489 = vcombine.high %v4473, %v4473
  %v4490 = vcombine.high %v4480, %v4480
  %v4491 = vcombine.high %v4487, %v4487
  %v4492 = vcombine.high %v3571, %v3571
  %v4494 = vunpack.c.l.s4 1966171168
  %v4495 = vunpack.c.0.s8 %v4494
  %v4496 = vlaneseq
  %v4497 = vshrl.u32 %v4496, 7
  %v4498 = vsub.s32 %v4495, %v4497
  %v4499 = vrot.slane %v3571, %v4498
  %v4501 = vunpack.c.l.s4 1966171168
  %v4502 = vunpack.c.0.s8 %v4501
  %v4503 = vlaneseq
  %v4504 = vshrl.u32 %v4503, 7
  %v4505 = vsub.s32 %v4502, %v4504
  %v4506 = vrot.slane %v4492, %v4505
  %v4507 = vcombine.high %v4499, %v4499
  %v4508 = vcombine.high %v4506, %v4506
  %v4510 = vunpack.c.l.s4 1966171168
  %v4511 = vunpack.c.0.s8 %v4510
  %v4512 = vlaneseq
  %v4513 = vshrl.u32 %v4512, 7
  %v4514 = vsub.s32 %v4511, %v4513
  %v4515 = vrot.slane %v4499, %v4514
  %v4517 = vunpack.c.l.s4 1966171168
  %v4518 = vunpack.c.0.s8 %v4517
  %v4519 = vlaneseq
  %v4520 = vshrl.u32 %v4519, 7
  %v4521 = vsub.s32 %v4518, %v4520
  %v4522 = vrot.slane %v4506, %v4521
  %v4524 = vunpack.c.l.s4 1966171168
  %v4525 = vunpack.c.0.s8 %v4524
  %v4526 = vlaneseq
  %v4527 = vshrl.u32 %v4526, 7
  %v4528 = vsub.s32 %v4525, %v4527
  %v4529 = vrot.slane %v4507, %v4528
  %v4531 = vunpack.c.l.s4 1966171168
  %v4532 = vunpack.c.0.s8 %v4531
  %v4533 = vlaneseq
  %v4534 = vshrl.u32 %v4533, 7
  %v4535 = vsub.s32 %v4532, %v4534
  %v4536 = vrot.slane %v4508, %v4535
  %v4537 = vcombine.high %v4515, %v4515
  %v4538 = vcombine.high %v4522, %v4522
  %v4539 = vcombine.high %v4529, %v4529
  %v4540 = vcombine.high %v4536, %v4536
  %v4541 = vlaneseq
  %v4542 = vshrl.u32 %v4541, 7
  %v4543 = vsub.s32 0, %v4542
  %v4544 = vrot.slane %v4368, %v4543
  %v4545 = vlaneseq
  %v4546 = vshrl.u32 %v4545, 7
  %v4547 = vsub.s32 0, %v4546
  %v4548 = vrot.slane %v4382, %v4547
  %v4549 = vlaneseq
  %v4550 = vshrl.u32 %v4549, 7
  %v4551 = vsub.s32 0, %v4550
  %v4552 = vrot.slane %v4390, %v4551
  %v4553 = vlaneseq
  %v4554 = vshrl.u32 %v4553, 7
  %v4555 = vsub.s32 0, %v4554
  %v4556 = vrot.slane %v4392, %v4555
  %v4557 = vlaneseq
  %v4558 = vshrl.u32 %v4557, 7
  %v4559 = vsub.s32 0, %v4558
  %v4560 = vrot.slane %v4375, %v4559
  %v4561 = vlaneseq
  %v4562 = vshrl.u32 %v4561, 7
  %v4563 = vsub.s32 0, %v4562
  %v4564 = vrot.slane %v4389, %v4563
  %v4565 = vlaneseq
  %v4566 = vshrl.u32 %v4565, 7
  %v4567 = vsub.s32 0, %v4566
  %v4568 = vrot.slane %v4391, %v4567
  %v4569 = vlaneseq
  %v4570 = vshrl.u32 %v4569, 7
  %v4571 = vsub.s32 0, %v4570
  %v4572 = vrot.slane %v4393, %v4571
  %v4573 = vlaneseq
  %v4574 = vshrl.u32 %v4573, 7
  %v4575 = vsub.s32 0, %v4574
  %v4576 = vrot.slane %v4417, %v4575
  %v4577 = vlaneseq
  %v4578 = vshrl.u32 %v4577, 7
  %v4579 = vsub.s32 0, %v4578
  %v4580 = vrot.slane %v4431, %v4579
  %v4581 = vlaneseq
  %v4582 = vshrl.u32 %v4581, 7
  %v4583 = vsub.s32 0, %v4582
  %v4584 = vrot.slane %v4439, %v4583
  %v4585 = vlaneseq
  %v4586 = vshrl.u32 %v4585, 7
  %v4587 = vsub.s32 0, %v4586
  %v4588 = vrot.slane %v4441, %v4587
  %v4589 = vlaneseq
  %v4590 = vshrl.u32 %v4589, 7
  %v4591 = vsub.s32 0, %v4590
  %v4592 = vrot.slane %v4424, %v4591
  %v4593 = vlaneseq
  %v4594 = vshrl.u32 %v4593, 7
  %v4595 = vsub.s32 0, %v4594
  %v4596 = vrot.slane %v4438, %v4595
  %v4597 = vlaneseq
  %v4598 = vshrl.u32 %v4597, 7
  %v4599 = vsub.s32 0, %v4598
  %v4600 = vrot.slane %v4440, %v4599
  %v4601 = vlaneseq
  %v4602 = vshrl.u32 %v4601, 7
  %v4603 = vsub.s32 0, %v4602
  %v4604 = vrot.slane %v4442, %v4603
  %v4605 = vlaneseq
  %v4606 = vshrl.u32 %v4605, 7
  %v4607 = vsub.s32 0, %v4606
  %v4608 = vrot.slane %v4466, %v4607
  %v4609 = vlaneseq
  %v4610 = vshrl.u32 %v4609, 7
  %v4611 = vsub.s32 0, %v4610
  %v4612 = vrot.slane %v4480, %v4611
  %v4613 = vlaneseq
  %v4614 = vshrl.u32 %v4613, 7
  %v4615 = vsub.s32 0, %v4614
  %v4616 = vrot.slane %v4488, %v4615
  %v4617 = vlaneseq
  %v4618 = vshrl.u32 %v4617, 7
  %v4619 = vsub.s32 0, %v4618
  %v4620 = vrot.slane %v4490, %v4619
  %v4621 = vlaneseq
  %v4622 = vshrl.u32 %v4621, 7
  %v4623 = vsub.s32 0, %v4622
  %v4624 = vrot.slane %v4473, %v4623
  %v4625 = vlaneseq
  %v4626 = vshrl.u32 %v4625, 7
  %v4627 = vsub.s32 0, %v4626
  %v4628 = vrot.slane %v4487, %v4627
  %v4629 = vlaneseq
  %v4630 = vshrl.u32 %v4629, 7
  %v4631 = vsub.s32 0, %v4630
  %v4632 = vrot.slane %v4489, %v4631
  %v4633 = vlaneseq
  %v4634 = vshrl.u32 %v4633, 7
  %v4635 = vsub.s32 0, %v4634
  %v4636 = vrot.slane %v4491, %v4635
  %v4637 = vlaneseq
  %v4638 = vshrl.u32 %v4637, 7
  %v4639 = vsub.s32 0, %v4638
  %v4640 = vrot.slane %v4515, %v4639
  %v4641 = vlaneseq
  %v4642 = vshrl.u32 %v4641, 7
  %v4643 = vsub.s32 0, %v4642
  %v4644 = vrot.slane %v4529, %v4643
  %v4645 = vlaneseq
  %v4646 = vshrl.u32 %v4645, 7
  %v4647 = vsub.s32 0, %v4646
  %v4648 = vrot.slane %v4537, %v4647
  %v4649 = vlaneseq
  %v4650 = vshrl.u32 %v4649, 7
  %v4651 = vsub.s32 0, %v4650
  %v4652 = vrot.slane %v4539, %v4651
  %v4653 = vlaneseq
  %v4654 = vshrl.u32 %v4653, 7
  %v4655 = vsub.s32 0, %v4654
  %v4656 = vrot.slane %v4522, %v4655
  %v4657 = vlaneseq
  %v4658 = vshrl.u32 %v4657, 7
  %v4659 = vsub.s32 0, %v4658
  %v4660 = vrot.slane %v4536, %v4659
  %v4661 = vlaneseq
  %v4662 = vshrl.u32 %v4661, 7
  %v4663 = vsub.s32 0, %v4662
  %v4664 = vrot.slane %v4538, %v4663
  %v4665 = vlaneseq
  %v4666 = vshrl.u32 %v4665, 7
  %v4667 = vsub.s32 0, %v4666
  %v4668 = vrot.slane %v4540, %v4667
  %v4701 = vmul.f32 %v3956, %v4544
  %v4702 = vmul.f32 %v3960, %v4548
  %v4703 = vmul.f32 %v3964, %v4552
  %v4704 = vmul.f32 %v3968, %v4556
  %v4705 = vmul.f32 %v3972, %v4560
  %v4706 = vmul.f32 %v3976, %v4564
  %v4707 = vmul.f32 %v3980, %v4568
  %v4708 = vmul.f32 %v3984, %v4572
  %v4709 = vmul.f32 %v3988, %v4576
  %v4710 = vmul.f32 %v3992, %v4580
  %v4711 = vmul.f32 %v3996, %v4584
  %v4712 = vmul.f32 %v4000, %v4588
  %v4713 = vmul.f32 %v4004, %v4592
  %v4714 = vmul.f32 %v4008, %v4596
  %v4715 = vmul.f32 %v4012, %v4600
  %v4716 = vmul.f32 %v4016, %v4604
  %v4717 = vmul.f32 %v4020, %v4608
  %v4718 = vmul.f32 %v4024, %v4612
  %v4719 = vmul.f32 %v4028, %v4616
  %v4720 = vmul.f32 %v4032, %v4620
  %v4721 = vmul.f32 %v4036, %v4624
  %v4722 = vmul.f32 %v4040, %v4628
  %v4723 = vmul.f32 %v4044, %v4632
  %v4724 = vmul.f32 %v4048, %v4636
  %v4725 = vmul.f32 %v4052, %v4640
  %v4726 = vmul.f32 %v4056, %v4644
  %v4727 = vmul.f32 %v4060, %v4648
  %v4728 = vmul.f32 %v4064, %v4652
  %v4729 = vmul.f32 %v4068, %v4656
  %v4730 = vmul.f32 %v4072, %v4660
  %v4731 = vmul.f32 %v4076, %v4664
  %v4732 = vmul.f32 %v4080, %v4668
  %v4733 = vsel %vm4244, %v4701, 0.0
  %4734 = vadd.xlane.f32.xlu0 %v4733
  %v4735 = vpop.xlane.xlu0 %4734
  %v4736 = vsel %vm4244, %v4702, 0.0
  %4737 = vadd.xlane.f32.xlu0 %v4736
  %v4738 = vpop.xlane.xlu0 %4737
  %v4739 = vsel %vm4244, %v4703, 0.0
  %4740 = vadd.xlane.f32.xlu0 %v4739
  %v4741 = vpop.xlane.xlu0 %4740
  %v4742 = vsel %vm4244, %v4704, 0.0
  %4743 = vadd.xlane.f32.xlu0 %v4742
  %v4744 = vpop.xlane.xlu0 %4743
  %v4745 = vsel %vm4244, %v4705, 0.0
  %4746 = vadd.xlane.f32.xlu0 %v4745
  %v4747 = vpop.xlane.xlu0 %4746
  %v4748 = vsel %vm4244, %v4706, 0.0
  %4749 = vadd.xlane.f32.xlu0 %v4748
  %v4750 = vpop.xlane.xlu0 %4749
  %v4751 = vsel %vm4244, %v4707, 0.0
  %4752 = vadd.xlane.f32.xlu0 %v4751
  %v4753 = vpop.xlane.xlu0 %4752
  %v4754 = vsel %vm4244, %v4708, 0.0
  %4755 = vadd.xlane.f32.xlu0 %v4754
  %v4756 = vpop.xlane.xlu0 %4755
  %v4757 = vsel %vm4244, %v4709, 0.0
  %4758 = vadd.xlane.f32.xlu0 %v4757
  %v4759 = vpop.xlane.xlu0 %4758
  %v4760 = vsel %vm4244, %v4710, 0.0
  %4761 = vadd.xlane.f32.xlu0 %v4760
  %v4762 = vpop.xlane.xlu0 %4761
  %v4763 = vsel %vm4244, %v4711, 0.0
  %4764 = vadd.xlane.f32.xlu0 %v4763
  %v4765 = vpop.xlane.xlu0 %4764
  %v4766 = vsel %vm4244, %v4712, 0.0
  %4767 = vadd.xlane.f32.xlu0 %v4766
  %v4768 = vpop.xlane.xlu0 %4767
  %v4769 = vsel %vm4244, %v4713, 0.0
  %4770 = vadd.xlane.f32.xlu0 %v4769
  %v4771 = vpop.xlane.xlu0 %4770
  %v4772 = vsel %vm4244, %v4714, 0.0
  %4773 = vadd.xlane.f32.xlu0 %v4772
  %v4774 = vpop.xlane.xlu0 %4773
  %v4775 = vsel %vm4244, %v4715, 0.0
  %4776 = vadd.xlane.f32.xlu0 %v4775
  %v4777 = vpop.xlane.xlu0 %4776
  %v4778 = vsel %vm4244, %v4716, 0.0
  %4779 = vadd.xlane.f32.xlu0 %v4778
  %v4780 = vpop.xlane.xlu0 %4779
  %v4781 = vsel %vm4244, %v4717, 0.0
  %4782 = vadd.xlane.f32.xlu0 %v4781
  %v4783 = vpop.xlane.xlu0 %4782
  %v4784 = vsel %vm4244, %v4718, 0.0
  %4785 = vadd.xlane.f32.xlu0 %v4784
  %v4786 = vpop.xlane.xlu0 %4785
  %v4787 = vsel %vm4244, %v4719, 0.0
  %4788 = vadd.xlane.f32.xlu0 %v4787
  %v4789 = vpop.xlane.xlu0 %4788
  %v4790 = vsel %vm4244, %v4720, 0.0
  %4791 = vadd.xlane.f32.xlu0 %v4790
  %v4792 = vpop.xlane.xlu0 %4791
  %v4793 = vsel %vm4244, %v4721, 0.0
  %4794 = vadd.xlane.f32.xlu0 %v4793
  %v4795 = vpop.xlane.xlu0 %4794
  %v4796 = vsel %vm4244, %v4722, 0.0
  %4797 = vadd.xlane.f32.xlu0 %v4796
  %v4798 = vpop.xlane.xlu0 %4797
  %v4799 = vsel %vm4244, %v4723, 0.0
  %4800 = vadd.xlane.f32.xlu0 %v4799
  %v4801 = vpop.xlane.xlu0 %4800
  %v4802 = vsel %vm4244, %v4724, 0.0
  %4803 = vadd.xlane.f32.xlu0 %v4802
  %v4804 = vpop.xlane.xlu0 %4803
  %v4805 = vsel %vm4244, %v4725, 0.0
  %4806 = vadd.xlane.f32.xlu0 %v4805
  %v4807 = vpop.xlane.xlu0 %4806
  %v4808 = vsel %vm4244, %v4726, 0.0
  %4809 = vadd.xlane.f32.xlu0 %v4808
  %v4810 = vpop.xlane.xlu0 %4809
  %v4811 = vsel %vm4244, %v4727, 0.0
  %4812 = vadd.xlane.f32.xlu0 %v4811
  %v4813 = vpop.xlane.xlu0 %4812
  %v4814 = vsel %vm4244, %v4728, 0.0
  %4815 = vadd.xlane.f32.xlu0 %v4814
  %v4816 = vpop.xlane.xlu0 %4815
  %v4817 = vsel %vm4244, %v4729, 0.0
  %4818 = vadd.xlane.f32.xlu0 %v4817
  %v4819 = vpop.xlane.xlu0 %4818
  %v4820 = vsel %vm4244, %v4730, 0.0
  %4821 = vadd.xlane.f32.xlu0 %v4820
  %v4822 = vpop.xlane.xlu0 %4821
  %v4823 = vsel %vm4244, %v4731, 0.0
  %4824 = vadd.xlane.f32.xlu0 %v4823
  %v4825 = vpop.xlane.xlu0 %4824
  %v4826 = vsel %vm4244, %v4732, 0.0
  %4827 = vadd.xlane.f32.xlu0 %v4826
  %v4828 = vpop.xlane.xlu0 %4827
  %v4829 = vadd.f32 %v4247, %v4735
  %v4830 = vadd.f32 %v4250, %v4738
  %v4831 = vadd.f32 %v4253, %v4741
  %v4832 = vadd.f32 %v4256, %v4744
  %v4833 = vadd.f32 %v4259, %v4747
  %v4834 = vadd.f32 %v4262, %v4750
  %v4835 = vadd.f32 %v4265, %v4753
  %v4836 = vadd.f32 %v4268, %v4756
  %v4837 = vadd.f32 %v4271, %v4759
  %v4838 = vadd.f32 %v4274, %v4762
  %v4839 = vadd.f32 %v4277, %v4765
  %v4840 = vadd.f32 %v4280, %v4768
  %v4841 = vadd.f32 %v4283, %v4771
  %v4842 = vadd.f32 %v4286, %v4774
  %v4843 = vadd.f32 %v4289, %v4777
  %v4844 = vadd.f32 %v4292, %v4780
  %v4845 = vadd.f32 %v4295, %v4783
  %v4846 = vadd.f32 %v4298, %v4786
  %v4847 = vadd.f32 %v4301, %v4789
  %v4848 = vadd.f32 %v4304, %v4792
  %v4849 = vadd.f32 %v4307, %v4795
  %v4850 = vadd.f32 %v4310, %v4798
  %v4851 = vadd.f32 %v4313, %v4801
  %v4852 = vadd.f32 %v4316, %v4804
  %v4853 = vadd.f32 %v4319, %v4807
  %v4854 = vadd.f32 %v4322, %v4810
  %v4855 = vadd.f32 %v4325, %v4813
  %v4856 = vadd.f32 %v4328, %v4816
  %v4857 = vadd.f32 %v4331, %v4819
  %v4858 = vadd.f32 %v4334, %v4822
  %v4859 = vadd.f32 %v4337, %v4825
  %v4860 = vadd.f32 %v4340, %v4828
  %v4861 = vld [vmem:[%s8] sm:$0xff]
  %v4862 = vld [vmem:[%s8 + $0x8] sm:$0xff]
  %v4863 = vld [vmem:[%s8 + $0x10] sm:$0xff]
  %v4864 = vld [vmem:[%s8 + $0x18] sm:$0xff]
  %v4869 = vlaneseq
  %v4870 = vshrl.u32 %v4869, 7
  %v4871 = vsub.s32 0, %v4870
  %v4872 = vrot.slane %v4861, %v4871
  %4874 = vbcast.lane.b32.xlu0 %v4872, 256
  %v4875 = vpop.permute.xlu0 %4874
  %v4876 = vlaneseq
  %v4877 = vshrl.u32 %v4876, 7
  %v4878 = vsub.s32 1, %v4877
  %v4879 = vrot.slane %v4861, %v4878
  %4881 = vbcast.lane.b32.xlu0 %v4879, 256
  %v4882 = vpop.permute.xlu0 %4881
  %v4883 = vlaneseq
  %v4884 = vshrl.u32 %v4883, 7
  %v4885 = vsub.s32 2, %v4884
  %v4886 = vrot.slane %v4861, %v4885
  %4888 = vbcast.lane.b32.xlu0 %v4886, 256
  %v4889 = vpop.permute.xlu0 %4888
  %v4890 = vlaneseq
  %v4891 = vshrl.u32 %v4890, 7
  %v4892 = vsub.s32 3, %v4891
  %v4893 = vrot.slane %v4861, %v4892
  %4895 = vbcast.lane.b32.xlu0 %v4893, 256
  %v4896 = vpop.permute.xlu0 %4895
  %v4897 = vlaneseq
  %v4898 = vshrl.u32 %v4897, 7
  %v4899 = vsub.s32 4, %v4898
  %v4900 = vrot.slane %v4861, %v4899
  %4902 = vbcast.lane.b32.xlu0 %v4900, 256
  %v4903 = vpop.permute.xlu0 %4902
  %v4904 = vlaneseq
  %v4905 = vshrl.u32 %v4904, 7
  %v4906 = vsub.s32 5, %v4905
  %v4907 = vrot.slane %v4861, %v4906
  %4909 = vbcast.lane.b32.xlu0 %v4907, 256
  %v4910 = vpop.permute.xlu0 %4909
  %v4911 = vlaneseq
  %v4912 = vshrl.u32 %v4911, 7
  %v4913 = vsub.s32 6, %v4912
  %v4914 = vrot.slane %v4861, %v4913
  %4916 = vbcast.lane.b32.xlu0 %v4914, 256
  %v4917 = vpop.permute.xlu0 %4916
  %v4918 = vlaneseq
  %v4919 = vshrl.u32 %v4918, 7
  %v4920 = vsub.s32 7, %v4919
  %v4921 = vrot.slane %v4861, %v4920
  %4923 = vbcast.lane.b32.xlu0 %v4921, 256
  %v4924 = vpop.permute.xlu0 %4923
  %v4925 = vlaneseq
  %v4926 = vshrl.u32 %v4925, 7
  %v4927 = vsub.s32 0, %v4926
  %v4928 = vrot.slane %v4862, %v4927
  %4930 = vbcast.lane.b32.xlu0 %v4928, 256
  %v4931 = vpop.permute.xlu0 %4930
  %v4932 = vlaneseq
  %v4933 = vshrl.u32 %v4932, 7
  %v4934 = vsub.s32 1, %v4933
  %v4935 = vrot.slane %v4862, %v4934
  %4937 = vbcast.lane.b32.xlu0 %v4935, 256
  %v4938 = vpop.permute.xlu0 %4937
  %v4939 = vlaneseq
  %v4940 = vshrl.u32 %v4939, 7
  %v4941 = vsub.s32 2, %v4940
  %v4942 = vrot.slane %v4862, %v4941
  %4944 = vbcast.lane.b32.xlu0 %v4942, 256
  %v4945 = vpop.permute.xlu0 %4944
  %v4946 = vlaneseq
  %v4947 = vshrl.u32 %v4946, 7
  %v4948 = vsub.s32 3, %v4947
  %v4949 = vrot.slane %v4862, %v4948
  %4951 = vbcast.lane.b32.xlu0 %v4949, 256
  %v4952 = vpop.permute.xlu0 %4951
  %v4953 = vlaneseq
  %v4954 = vshrl.u32 %v4953, 7
  %v4955 = vsub.s32 4, %v4954
  %v4956 = vrot.slane %v4862, %v4955
  %4958 = vbcast.lane.b32.xlu0 %v4956, 256
  %v4959 = vpop.permute.xlu0 %4958
  %v4960 = vlaneseq
  %v4961 = vshrl.u32 %v4960, 7
  %v4962 = vsub.s32 5, %v4961
  %v4963 = vrot.slane %v4862, %v4962
  %4965 = vbcast.lane.b32.xlu0 %v4963, 256
  %v4966 = vpop.permute.xlu0 %4965
  %v4967 = vlaneseq
  %v4968 = vshrl.u32 %v4967, 7
  %v4969 = vsub.s32 6, %v4968
  %v4970 = vrot.slane %v4862, %v4969
  %4972 = vbcast.lane.b32.xlu0 %v4970, 256
  %v4973 = vpop.permute.xlu0 %4972
  %v4974 = vlaneseq
  %v4975 = vshrl.u32 %v4974, 7
  %v4976 = vsub.s32 7, %v4975
  %v4977 = vrot.slane %v4862, %v4976
  %4979 = vbcast.lane.b32.xlu0 %v4977, 256
  %v4980 = vpop.permute.xlu0 %4979
  %v4981 = vlaneseq
  %v4982 = vshrl.u32 %v4981, 7
  %v4983 = vsub.s32 0, %v4982
  %v4984 = vrot.slane %v4863, %v4983
  %4986 = vbcast.lane.b32.xlu0 %v4984, 256
  %v4987 = vpop.permute.xlu0 %4986
  %v4988 = vlaneseq
  %v4989 = vshrl.u32 %v4988, 7
  %v4990 = vsub.s32 1, %v4989
  %v4991 = vrot.slane %v4863, %v4990
  %4993 = vbcast.lane.b32.xlu0 %v4991, 256
  %v4994 = vpop.permute.xlu0 %4993
  %v4995 = vlaneseq
  %v4996 = vshrl.u32 %v4995, 7
  %v4997 = vsub.s32 2, %v4996
  %v4998 = vrot.slane %v4863, %v4997
  %5000 = vbcast.lane.b32.xlu0 %v4998, 256
  %v5001 = vpop.permute.xlu0 %5000
  %v5002 = vlaneseq
  %v5003 = vshrl.u32 %v5002, 7
  %v5004 = vsub.s32 3, %v5003
  %v5005 = vrot.slane %v4863, %v5004
  %5007 = vbcast.lane.b32.xlu0 %v5005, 256
  %v5008 = vpop.permute.xlu0 %5007
  %v5009 = vlaneseq
  %v5010 = vshrl.u32 %v5009, 7
  %v5011 = vsub.s32 4, %v5010
  %v5012 = vrot.slane %v4863, %v5011
  %5014 = vbcast.lane.b32.xlu0 %v5012, 256
  %v5015 = vpop.permute.xlu0 %5014
  %v5016 = vlaneseq
  %v5017 = vshrl.u32 %v5016, 7
  %v5018 = vsub.s32 5, %v5017
  %v5019 = vrot.slane %v4863, %v5018
  %5021 = vbcast.lane.b32.xlu0 %v5019, 256
  %v5022 = vpop.permute.xlu0 %5021
  %v5023 = vlaneseq
  %v5024 = vshrl.u32 %v5023, 7
  %v5025 = vsub.s32 6, %v5024
  %v5026 = vrot.slane %v4863, %v5025
  %5028 = vbcast.lane.b32.xlu0 %v5026, 256
  %v5029 = vpop.permute.xlu0 %5028
  %v5030 = vlaneseq
  %v5031 = vshrl.u32 %v5030, 7
  %v5032 = vsub.s32 7, %v5031
  %v5033 = vrot.slane %v4863, %v5032
  %5035 = vbcast.lane.b32.xlu0 %v5033, 256
  %v5036 = vpop.permute.xlu0 %5035
  %v5037 = vlaneseq
  %v5038 = vshrl.u32 %v5037, 7
  %v5039 = vsub.s32 0, %v5038
  %v5040 = vrot.slane %v4864, %v5039
  %5042 = vbcast.lane.b32.xlu0 %v5040, 256
  %v5043 = vpop.permute.xlu0 %5042
  %v5044 = vlaneseq
  %v5045 = vshrl.u32 %v5044, 7
  %v5046 = vsub.s32 1, %v5045
  %v5047 = vrot.slane %v4864, %v5046
  %5049 = vbcast.lane.b32.xlu0 %v5047, 256
  %v5050 = vpop.permute.xlu0 %5049
  %v5051 = vlaneseq
  %v5052 = vshrl.u32 %v5051, 7
  %v5053 = vsub.s32 2, %v5052
  %v5054 = vrot.slane %v4864, %v5053
  %5056 = vbcast.lane.b32.xlu0 %v5054, 256
  %v5057 = vpop.permute.xlu0 %5056
  %v5058 = vlaneseq
  %v5059 = vshrl.u32 %v5058, 7
  %v5060 = vsub.s32 3, %v5059
  %v5061 = vrot.slane %v4864, %v5060
  %5063 = vbcast.lane.b32.xlu0 %v5061, 256
  %v5064 = vpop.permute.xlu0 %5063
  %v5065 = vlaneseq
  %v5066 = vshrl.u32 %v5065, 7
  %v5067 = vsub.s32 4, %v5066
  %v5068 = vrot.slane %v4864, %v5067
  %5070 = vbcast.lane.b32.xlu0 %v5068, 256
  %v5071 = vpop.permute.xlu0 %5070
  %v5072 = vlaneseq
  %v5073 = vshrl.u32 %v5072, 7
  %v5074 = vsub.s32 5, %v5073
  %v5075 = vrot.slane %v4864, %v5074
  %5077 = vbcast.lane.b32.xlu0 %v5075, 256
  %v5078 = vpop.permute.xlu0 %5077
  %v5079 = vlaneseq
  %v5080 = vshrl.u32 %v5079, 7
  %v5081 = vsub.s32 6, %v5080
  %v5082 = vrot.slane %v4864, %v5081
  %5084 = vbcast.lane.b32.xlu0 %v5082, 256
  %v5085 = vpop.permute.xlu0 %5084
  %v5086 = vlaneseq
  %v5087 = vshrl.u32 %v5086, 7
  %v5088 = vsub.s32 7, %v5087
  %v5089 = vrot.slane %v4864, %v5088
  %5091 = vbcast.lane.b32.xlu0 %v5089, 256
  %v5092 = vpop.permute.xlu0 %5091
  %v5125 = vadd.f32 %v4829, %v4875
  %v5126 = vadd.f32 %v4830, %v4882
  %v5127 = vadd.f32 %v4831, %v4889
  %v5128 = vadd.f32 %v4832, %v4896
  %v5129 = vadd.f32 %v4833, %v4903
  %v5130 = vadd.f32 %v4834, %v4910
  %v5131 = vadd.f32 %v4835, %v4917
  %v5132 = vadd.f32 %v4836, %v4924
  %v5133 = vadd.f32 %v4837, %v4931
  %v5134 = vadd.f32 %v4838, %v4938
  %v5135 = vadd.f32 %v4839, %v4945
  %v5136 = vadd.f32 %v4840, %v4952
  %v5137 = vadd.f32 %v4841, %v4959
  %v5138 = vadd.f32 %v4842, %v4966
  %v5139 = vadd.f32 %v4843, %v4973
  %v5140 = vadd.f32 %v4844, %v4980
  %v5141 = vadd.f32 %v4845, %v4987
  %v5142 = vadd.f32 %v4846, %v4994
  %v5143 = vadd.f32 %v4847, %v5001
  %v5144 = vadd.f32 %v4848, %v5008
  %v5145 = vadd.f32 %v4849, %v5015
  %v5146 = vadd.f32 %v4850, %v5022
  %v5147 = vadd.f32 %v4851, %v5029
  %v5148 = vadd.f32 %v4852, %v5036
  %v5149 = vadd.f32 %v4853, %v5043
  %v5150 = vadd.f32 %v4854, %v5050
  %v5151 = vadd.f32 %v4855, %v5057
  %v5152 = vadd.f32 %v4856, %v5064
  %v5153 = vadd.f32 %v4857, %v5071
  %v5154 = vadd.f32 %v4858, %v5078
  %v5155 = vadd.f32 %v4859, %v5085
  %v5156 = vadd.f32 %v4860, %v5092
  %5189 = vset.pattern.permute.xlu0 0
  %5190 = vperm.xlu0 %5189, %v5125
  %v5191 = vpop.permute.xlu0 %5190
  %5192 = vset.pattern.permute.xlu0 0
  %5193 = vperm.xlu0 %5192, %v5126
  %v5194 = vpop.permute.xlu0 %5193
  %5195 = vset.pattern.permute.xlu0 0
  %5196 = vperm.xlu0 %5195, %v5127
  %v5197 = vpop.permute.xlu0 %5196
  %5198 = vset.pattern.permute.xlu0 0
  %5199 = vperm.xlu0 %5198, %v5128
  %v5200 = vpop.permute.xlu0 %5199
  %5201 = vset.pattern.permute.xlu0 0
  %5202 = vperm.xlu0 %5201, %v5129
  %v5203 = vpop.permute.xlu0 %5202
  %5204 = vset.pattern.permute.xlu0 0
  %5205 = vperm.xlu0 %5204, %v5130
  %v5206 = vpop.permute.xlu0 %5205
  %5207 = vset.pattern.permute.xlu0 0
  %5208 = vperm.xlu0 %5207, %v5131
  %v5209 = vpop.permute.xlu0 %5208
  %5210 = vset.pattern.permute.xlu0 0
  %5211 = vperm.xlu0 %5210, %v5132
  %v5212 = vpop.permute.xlu0 %5211
  %5213 = vset.pattern.permute.xlu0 0
  %5214 = vperm.xlu0 %5213, %v5133
  %v5215 = vpop.permute.xlu0 %5214
  %5216 = vset.pattern.permute.xlu0 0
  %5217 = vperm.xlu0 %5216, %v5134
  %v5218 = vpop.permute.xlu0 %5217
  %5219 = vset.pattern.permute.xlu0 0
  %5220 = vperm.xlu0 %5219, %v5135
  %v5221 = vpop.permute.xlu0 %5220
  %5222 = vset.pattern.permute.xlu0 0
  %5223 = vperm.xlu0 %5222, %v5136
  %v5224 = vpop.permute.xlu0 %5223
  %5225 = vset.pattern.permute.xlu0 0
  %5226 = vperm.xlu0 %5225, %v5137
  %v5227 = vpop.permute.xlu0 %5226
  %5228 = vset.pattern.permute.xlu0 0
  %5229 = vperm.xlu0 %5228, %v5138
  %v5230 = vpop.permute.xlu0 %5229
  %5231 = vset.pattern.permute.xlu0 0
  %5232 = vperm.xlu0 %5231, %v5139
  %v5233 = vpop.permute.xlu0 %5232
  %5234 = vset.pattern.permute.xlu0 0
  %5235 = vperm.xlu0 %5234, %v5140
  %v5236 = vpop.permute.xlu0 %5235
  %5237 = vset.pattern.permute.xlu0 0
  %5238 = vperm.xlu0 %5237, %v5141
  %v5239 = vpop.permute.xlu0 %5238
  %5240 = vset.pattern.permute.xlu0 0
  %5241 = vperm.xlu0 %5240, %v5142
  %v5242 = vpop.permute.xlu0 %5241
  %5243 = vset.pattern.permute.xlu0 0
  %5244 = vperm.xlu0 %5243, %v5143
  %v5245 = vpop.permute.xlu0 %5244
  %5246 = vset.pattern.permute.xlu0 0
  %5247 = vperm.xlu0 %5246, %v5144
  %v5248 = vpop.permute.xlu0 %5247
  %5249 = vset.pattern.permute.xlu0 0
  %5250 = vperm.xlu0 %5249, %v5145
  %v5251 = vpop.permute.xlu0 %5250
  %5252 = vset.pattern.permute.xlu0 0
  %5253 = vperm.xlu0 %5252, %v5146
  %v5254 = vpop.permute.xlu0 %5253
  %5255 = vset.pattern.permute.xlu0 0
  %5256 = vperm.xlu0 %5255, %v5147
  %v5257 = vpop.permute.xlu0 %5256
  %5258 = vset.pattern.permute.xlu0 0
  %5259 = vperm.xlu0 %5258, %v5148
  %v5260 = vpop.permute.xlu0 %5259
  %5261 = vset.pattern.permute.xlu0 0
  %5262 = vperm.xlu0 %5261, %v5149
  %v5263 = vpop.permute.xlu0 %5262
  %5264 = vset.pattern.permute.xlu0 0
  %5265 = vperm.xlu0 %5264, %v5150
  %v5266 = vpop.permute.xlu0 %5265
  %5267 = vset.pattern.permute.xlu0 0
  %5268 = vperm.xlu0 %5267, %v5151
  %v5269 = vpop.permute.xlu0 %5268
  %5270 = vset.pattern.permute.xlu0 0
  %5271 = vperm.xlu0 %5270, %v5152
  %v5272 = vpop.permute.xlu0 %5271
  %5273 = vset.pattern.permute.xlu0 0
  %5274 = vperm.xlu0 %5273, %v5153
  %v5275 = vpop.permute.xlu0 %5274
  %5276 = vset.pattern.permute.xlu0 0
  %5277 = vperm.xlu0 %5276, %v5154
  %v5278 = vpop.permute.xlu0 %5277
  %5279 = vset.pattern.permute.xlu0 0
  %5280 = vperm.xlu0 %5279, %v5155
  %v5281 = vpop.permute.xlu0 %5280
  %5282 = vset.pattern.permute.xlu0 0
  %5283 = vperm.xlu0 %5282, %v5156
  %v5284 = vpop.permute.xlu0 %5283
  %v5285 = vlaneseq
  %v5286 = vand.u32 %v5285, 127
  %v5287 = vlaneseq
  %v5288 = vshrl.u32 %v5287, 7
  %v5289 = vsub.s32 %v5286, %v5288
  %v5290 = vrot.slane %v5191, %v5289
  %v5291 = vlaneseq
  %v5292 = vshrl.u32 %v5291, 7
  %v5293 = vsub.s32 %v5286, %v5292
  %v5294 = vrot.slane %v5194, %v5293
  %v5295 = vlaneseq
  %v5296 = vshrl.u32 %v5295, 7
  %v5297 = vsub.s32 %v5286, %v5296
  %v5298 = vrot.slane %v5197, %v5297
  %v5299 = vlaneseq
  %v5300 = vshrl.u32 %v5299, 7
  %v5301 = vsub.s32 %v5286, %v5300
  %v5302 = vrot.slane %v5200, %v5301
  %v5303 = vlaneseq
  %v5304 = vshrl.u32 %v5303, 7
  %v5305 = vsub.s32 %v5286, %v5304
  %v5306 = vrot.slane %v5203, %v5305
  %v5307 = vlaneseq
  %v5308 = vshrl.u32 %v5307, 7
  %v5309 = vsub.s32 %v5286, %v5308
  %v5310 = vrot.slane %v5206, %v5309
  %v5311 = vlaneseq
  %v5312 = vshrl.u32 %v5311, 7
  %v5313 = vsub.s32 %v5286, %v5312
  %v5314 = vrot.slane %v5209, %v5313
  %v5315 = vlaneseq
  %v5316 = vshrl.u32 %v5315, 7
  %v5317 = vsub.s32 %v5286, %v5316
  %v5318 = vrot.slane %v5212, %v5317
  %v5319 = vlaneseq
  %v5320 = vshrl.u32 %v5319, 7
  %v5321 = vsub.s32 %v5286, %v5320
  %v5322 = vrot.slane %v5215, %v5321
  %v5323 = vlaneseq
  %v5324 = vshrl.u32 %v5323, 7
  %v5325 = vsub.s32 %v5286, %v5324
  %v5326 = vrot.slane %v5218, %v5325
  %v5327 = vlaneseq
  %v5328 = vshrl.u32 %v5327, 7
  %v5329 = vsub.s32 %v5286, %v5328
  %v5330 = vrot.slane %v5221, %v5329
  %v5331 = vlaneseq
  %v5332 = vshrl.u32 %v5331, 7
  %v5333 = vsub.s32 %v5286, %v5332
  %v5334 = vrot.slane %v5224, %v5333
  %v5335 = vlaneseq
  %v5336 = vshrl.u32 %v5335, 7
  %v5337 = vsub.s32 %v5286, %v5336
  %v5338 = vrot.slane %v5227, %v5337
  %v5339 = vlaneseq
  %v5340 = vshrl.u32 %v5339, 7
  %v5341 = vsub.s32 %v5286, %v5340
  %v5342 = vrot.slane %v5230, %v5341
  %v5343 = vlaneseq
  %v5344 = vshrl.u32 %v5343, 7
  %v5345 = vsub.s32 %v5286, %v5344
  %v5346 = vrot.slane %v5233, %v5345
  %v5347 = vlaneseq
  %v5348 = vshrl.u32 %v5347, 7
  %v5349 = vsub.s32 %v5286, %v5348
  %v5350 = vrot.slane %v5236, %v5349
  %v5351 = vlaneseq
  %v5352 = vshrl.u32 %v5351, 7
  %v5353 = vsub.s32 %v5286, %v5352
  %v5354 = vrot.slane %v5239, %v5353
  %v5355 = vlaneseq
  %v5356 = vshrl.u32 %v5355, 7
  %v5357 = vsub.s32 %v5286, %v5356
  %v5358 = vrot.slane %v5242, %v5357
  %v5359 = vlaneseq
  %v5360 = vshrl.u32 %v5359, 7
  %v5361 = vsub.s32 %v5286, %v5360
  %v5362 = vrot.slane %v5245, %v5361
  %v5363 = vlaneseq
  %v5364 = vshrl.u32 %v5363, 7
  %v5365 = vsub.s32 %v5286, %v5364
  %v5366 = vrot.slane %v5248, %v5365
  %v5367 = vlaneseq
  %v5368 = vshrl.u32 %v5367, 7
  %v5369 = vsub.s32 %v5286, %v5368
  %v5370 = vrot.slane %v5251, %v5369
  %v5371 = vlaneseq
  %v5372 = vshrl.u32 %v5371, 7
  %v5373 = vsub.s32 %v5286, %v5372
  %v5374 = vrot.slane %v5254, %v5373
  %v5375 = vlaneseq
  %v5376 = vshrl.u32 %v5375, 7
  %v5377 = vsub.s32 %v5286, %v5376
  %v5378 = vrot.slane %v5257, %v5377
  %v5379 = vlaneseq
  %v5380 = vshrl.u32 %v5379, 7
  %v5381 = vsub.s32 %v5286, %v5380
  %v5382 = vrot.slane %v5260, %v5381
  %v5383 = vlaneseq
  %v5384 = vshrl.u32 %v5383, 7
  %v5385 = vsub.s32 %v5286, %v5384
  %v5386 = vrot.slane %v5263, %v5385
  %v5387 = vlaneseq
  %v5388 = vshrl.u32 %v5387, 7
  %v5389 = vsub.s32 %v5286, %v5388
  %v5390 = vrot.slane %v5266, %v5389
  %v5391 = vlaneseq
  %v5392 = vshrl.u32 %v5391, 7
  %v5393 = vsub.s32 %v5286, %v5392
  %v5394 = vrot.slane %v5269, %v5393
  %v5395 = vlaneseq
  %v5396 = vshrl.u32 %v5395, 7
  %v5397 = vsub.s32 %v5286, %v5396
  %v5398 = vrot.slane %v5272, %v5397
  %v5399 = vlaneseq
  %v5400 = vshrl.u32 %v5399, 7
  %v5401 = vsub.s32 %v5286, %v5400
  %v5402 = vrot.slane %v5275, %v5401
  %v5403 = vlaneseq
  %v5404 = vshrl.u32 %v5403, 7
  %v5405 = vsub.s32 %v5286, %v5404
  %v5406 = vrot.slane %v5278, %v5405
  %v5407 = vlaneseq
  %v5408 = vshrl.u32 %v5407, 7
  %v5409 = vsub.s32 %v5286, %v5408
  %v5410 = vrot.slane %v5281, %v5409
  %v5411 = vlaneseq
  %v5412 = vshrl.u32 %v5411, 7
  %v5413 = vsub.s32 %v5286, %v5412
  %v5414 = vrot.slane %v5284, %v5413
  %vm5415 = vcmask 1041409
  %v5416 = vsel %vm5415, %v5294, %v5290
  %vm5417 = vcmask 1042434
  %v5418 = vsel %vm5417, %v5298, %v5416
  %vm5419 = vcmask 1043459
  %v5420 = vsel %vm5419, %v5302, %v5418
  %vm5421 = vcmask 1044484
  %v5422 = vsel %vm5421, %v5306, %v5420
  %vm5423 = vcmask 1045509
  %v5424 = vsel %vm5423, %v5310, %v5422
  %vm5425 = vcmask 1046534
  %v5426 = vsel %vm5425, %v5314, %v5424
  %vm5427 = vcmask 1047559
  %v5428 = vsel %vm5427, %v5318, %v5426
  %v5429 = vsel %vm5415, %v5326, %v5322
  %v5430 = vsel %vm5417, %v5330, %v5429
  %v5431 = vsel %vm5419, %v5334, %v5430
  %v5432 = vsel %vm5421, %v5338, %v5431
  %v5433 = vsel %vm5423, %v5342, %v5432
  %v5434 = vsel %vm5425, %v5346, %v5433
  %v5435 = vsel %vm5427, %v5350, %v5434
  %v5436 = vsel %vm5415, %v5358, %v5354
  %v5437 = vsel %vm5417, %v5362, %v5436
  %v5438 = vsel %vm5419, %v5366, %v5437
  %v5439 = vsel %vm5421, %v5370, %v5438
  %v5440 = vsel %vm5423, %v5374, %v5439
  %v5441 = vsel %vm5425, %v5378, %v5440
  %v5442 = vsel %vm5427, %v5382, %v5441
  %v5443 = vsel %vm5415, %v5390, %v5386
  %v5444 = vsel %vm5417, %v5394, %v5443
  %v5445 = vsel %vm5419, %v5398, %v5444
  %v5446 = vsel %vm5421, %v5402, %v5445
  %v5447 = vsel %vm5423, %v5406, %v5446
  %v5448 = vsel %vm5425, %v5410, %v5447
  %v5449 = vsel %vm5427, %v5414, %v5448
  %vm5454 = vcmask 48128
  %5455 = vst.msk [vmem:[%s9] sm:$0xff] %vm5454, %v5428
  %5456 = vst.msk [vmem:[%s9 + $0x8] sm:$0xff] %vm5454, %v5435
  %5457 = vst.msk [vmem:[%s9 + $0x10] sm:$0xff] %vm5454, %v5442
  %5458 = vst.msk [vmem:[%s9 + $0x18] sm:$0xff] %vm5454, %v5449
  %v5459 = vlaneseq
  %v5460 = vshrl.u32 %v5459, 7
  %v5461 = vsub.s32 5, %v5460
  %v5462 = vrot.slane %v3532, %v5461
  %v5463 = vlaneseq
  %v5464 = vshrl.u32 %v5463, 7
  %v5465 = vsub.s32 5, %v5464
  %v5466 = vrot.slane %v3533, %v5465
  %v5467 = vlaneseq
  %v5468 = vshrl.u32 %v5467, 7
  %v5469 = vsub.s32 5, %v5468
  %v5470 = vrot.slane %v3534, %v5469
  %v5471 = vlaneseq
  %v5472 = vshrl.u32 %v5471, 7
  %v5473 = vsub.s32 5, %v5472
  %v5474 = vrot.slane %v3535, %v5473
  %v5475 = vlaneseq
  %v5476 = vshrl.u32 %v5475, 7
  %v5477 = vsub.s32 5, %v5476
  %v5478 = vrot.slane %v3536, %v5477
  %v5479 = vlaneseq
  %v5480 = vshrl.u32 %v5479, 7
  %v5481 = vsub.s32 5, %v5480
  %v5482 = vrot.slane %v3537, %v5481
  %v5483 = vlaneseq
  %v5484 = vshrl.u32 %v5483, 7
  %v5485 = vsub.s32 5, %v5484
  %v5486 = vrot.slane %v3538, %v5485
  %v5487 = vlaneseq
  %v5488 = vshrl.u32 %v5487, 7
  %v5489 = vsub.s32 5, %v5488
  %v5490 = vrot.slane %v3539, %v5489
  %v5491 = vlaneseq
  %v5492 = vshrl.u32 %v5491, 7
  %v5493 = vsub.s32 5, %v5492
  %v5494 = vrot.slane %v3540, %v5493
  %v5495 = vlaneseq
  %v5496 = vshrl.u32 %v5495, 7
  %v5497 = vsub.s32 5, %v5496
  %v5498 = vrot.slane %v3541, %v5497
  %v5499 = vlaneseq
  %v5500 = vshrl.u32 %v5499, 7
  %v5501 = vsub.s32 5, %v5500
  %v5502 = vrot.slane %v3542, %v5501
  %v5503 = vlaneseq
  %v5504 = vshrl.u32 %v5503, 7
  %v5505 = vsub.s32 5, %v5504
  %v5506 = vrot.slane %v3543, %v5505
  %v5507 = vlaneseq
  %v5508 = vshrl.u32 %v5507, 7
  %v5509 = vsub.s32 5, %v5508
  %v5510 = vrot.slane %v3544, %v5509
  %v5511 = vlaneseq
  %v5512 = vshrl.u32 %v5511, 7
  %v5513 = vsub.s32 5, %v5512
  %v5514 = vrot.slane %v3545, %v5513
  %v5515 = vlaneseq
  %v5516 = vshrl.u32 %v5515, 7
  %v5517 = vsub.s32 5, %v5516
  %v5518 = vrot.slane %v3546, %v5517
  %v5519 = vlaneseq
  %v5520 = vshrl.u32 %v5519, 7
  %v5521 = vsub.s32 5, %v5520
  %v5522 = vrot.slane %v3547, %v5521
  %v5523 = vlaneseq
  %v5524 = vshrl.u32 %v5523, 7
  %v5525 = vsub.s32 5, %v5524
  %v5526 = vrot.slane %v3548, %v5525
  %v5527 = vlaneseq
  %v5528 = vshrl.u32 %v5527, 7
  %v5529 = vsub.s32 5, %v5528
  %v5530 = vrot.slane %v3549, %v5529
  %v5531 = vlaneseq
  %v5532 = vshrl.u32 %v5531, 7
  %v5533 = vsub.s32 5, %v5532
  %v5534 = vrot.slane %v3550, %v5533
  %v5535 = vlaneseq
  %v5536 = vshrl.u32 %v5535, 7
  %v5537 = vsub.s32 5, %v5536
  %v5538 = vrot.slane %v3551, %v5537
  %v5539 = vlaneseq
  %v5540 = vshrl.u32 %v5539, 7
  %v5541 = vsub.s32 5, %v5540
  %v5542 = vrot.slane %v3552, %v5541
  %v5543 = vlaneseq
  %v5544 = vshrl.u32 %v5543, 7
  %v5545 = vsub.s32 5, %v5544
  %v5546 = vrot.slane %v3553, %v5545
  %v5547 = vlaneseq
  %v5548 = vshrl.u32 %v5547, 7
  %v5549 = vsub.s32 5, %v5548
  %v5550 = vrot.slane %v3554, %v5549
  %v5551 = vlaneseq
  %v5552 = vshrl.u32 %v5551, 7
  %v5553 = vsub.s32 5, %v5552
  %v5554 = vrot.slane %v3555, %v5553
  %v5555 = vlaneseq
  %v5556 = vshrl.u32 %v5555, 7
  %v5557 = vsub.s32 5, %v5556
  %v5558 = vrot.slane %v3556, %v5557
  %v5559 = vlaneseq
  %v5560 = vshrl.u32 %v5559, 7
  %v5561 = vsub.s32 5, %v5560
  %v5562 = vrot.slane %v3557, %v5561
  %v5563 = vlaneseq
  %v5564 = vshrl.u32 %v5563, 7
  %v5565 = vsub.s32 5, %v5564
  %v5566 = vrot.slane %v3558, %v5565
  %v5567 = vlaneseq
  %v5568 = vshrl.u32 %v5567, 7
  %v5569 = vsub.s32 5, %v5568
  %v5570 = vrot.slane %v3559, %v5569
  %v5571 = vlaneseq
  %v5572 = vshrl.u32 %v5571, 7
  %v5573 = vsub.s32 5, %v5572
  %v5574 = vrot.slane %v3560, %v5573
  %v5575 = vlaneseq
  %v5576 = vshrl.u32 %v5575, 7
  %v5577 = vsub.s32 5, %v5576
  %v5578 = vrot.slane %v3561, %v5577
  %v5579 = vlaneseq
  %v5580 = vshrl.u32 %v5579, 7
  %v5581 = vsub.s32 5, %v5580
  %v5582 = vrot.slane %v3562, %v5581
  %v5583 = vlaneseq
  %v5584 = vshrl.u32 %v5583, 7
  %v5585 = vsub.s32 5, %v5584
  %v5586 = vrot.slane %v3563, %v5585
  %v5587 = vmul.f32 %v3701, %v5462
  %v5588 = vmul.f32 %v3705, %v5466
  %v5589 = vmul.f32 %v3709, %v5470
  %v5590 = vmul.f32 %v3713, %v5474
  %v5591 = vmul.f32 %v3717, %v5478
  %v5592 = vmul.f32 %v3721, %v5482
  %v5593 = vmul.f32 %v3725, %v5486
  %v5594 = vmul.f32 %v3729, %v5490
  %v5595 = vmul.f32 %v3733, %v5494
  %v5596 = vmul.f32 %v3737, %v5498
  %v5597 = vmul.f32 %v3741, %v5502
  %v5598 = vmul.f32 %v3745, %v5506
  %v5599 = vmul.f32 %v3749, %v5510
  %v5600 = vmul.f32 %v3753, %v5514
  %v5601 = vmul.f32 %v3757, %v5518
  %v5602 = vmul.f32 %v3761, %v5522
  %v5603 = vmul.f32 %v3765, %v5526
  %v5604 = vmul.f32 %v3769, %v5530
  %v5605 = vmul.f32 %v3773, %v5534
  %v5606 = vmul.f32 %v3777, %v5538
  %v5607 = vmul.f32 %v3781, %v5542
  %v5608 = vmul.f32 %v3785, %v5546
  %v5609 = vmul.f32 %v3789, %v5550
  %v5610 = vmul.f32 %v3793, %v5554
  %v5611 = vmul.f32 %v3797, %v5558
  %v5612 = vmul.f32 %v3801, %v5562
  %v5613 = vmul.f32 %v3805, %v5566
  %v5614 = vmul.f32 %v3809, %v5570
  %v5615 = vmul.f32 %v3813, %v5574
  %v5616 = vmul.f32 %v3817, %v5578
  %v5617 = vmul.f32 %v3821, %v5582
  %v5618 = vmul.f32 %v3825, %v5586
  %v5619 = vsel %vm4244, %v5587, 0.0
  %5620 = vadd.xlane.f32.xlu0 %v5619
  %v5621 = vpop.xlane.xlu0 %5620
  %v5622 = vsel %vm4244, %v5588, 0.0
  %5623 = vadd.xlane.f32.xlu0 %v5622
  %v5624 = vpop.xlane.xlu0 %5623
  %v5625 = vsel %vm4244, %v5589, 0.0
  %5626 = vadd.xlane.f32.xlu0 %v5625
  %v5627 = vpop.xlane.xlu0 %5626
  %v5628 = vsel %vm4244, %v5590, 0.0
  %5629 = vadd.xlane.f32.xlu0 %v5628
  %v5630 = vpop.xlane.xlu0 %5629
  %v5631 = vsel %vm4244, %v5591, 0.0
  %5632 = vadd.xlane.f32.xlu0 %v5631
  %v5633 = vpop.xlane.xlu0 %5632
  %v5634 = vsel %vm4244, %v5592, 0.0
  %5635 = vadd.xlane.f32.xlu0 %v5634
  %v5636 = vpop.xlane.xlu0 %5635
  %v5637 = vsel %vm4244, %v5593, 0.0
  %5638 = vadd.xlane.f32.xlu0 %v5637
  %v5639 = vpop.xlane.xlu0 %5638
  %v5640 = vsel %vm4244, %v5594, 0.0
  %5641 = vadd.xlane.f32.xlu0 %v5640
  %v5642 = vpop.xlane.xlu0 %5641
  %v5643 = vsel %vm4244, %v5595, 0.0
  %5644 = vadd.xlane.f32.xlu0 %v5643
  %v5645 = vpop.xlane.xlu0 %5644
  %v5646 = vsel %vm4244, %v5596, 0.0
  %5647 = vadd.xlane.f32.xlu0 %v5646
  %v5648 = vpop.xlane.xlu0 %5647
  %v5649 = vsel %vm4244, %v5597, 0.0
  %5650 = vadd.xlane.f32.xlu0 %v5649
  %v5651 = vpop.xlane.xlu0 %5650
  %v5652 = vsel %vm4244, %v5598, 0.0
  %5653 = vadd.xlane.f32.xlu0 %v5652
  %v5654 = vpop.xlane.xlu0 %5653
  %v5655 = vsel %vm4244, %v5599, 0.0
  %5656 = vadd.xlane.f32.xlu0 %v5655
  %v5657 = vpop.xlane.xlu0 %5656
  %v5658 = vsel %vm4244, %v5600, 0.0
  %5659 = vadd.xlane.f32.xlu0 %v5658
  %v5660 = vpop.xlane.xlu0 %5659
  %v5661 = vsel %vm4244, %v5601, 0.0
  %5662 = vadd.xlane.f32.xlu0 %v5661
  %v5663 = vpop.xlane.xlu0 %5662
  %v5664 = vsel %vm4244, %v5602, 0.0
  %5665 = vadd.xlane.f32.xlu0 %v5664
  %v5666 = vpop.xlane.xlu0 %5665
  %v5667 = vsel %vm4244, %v5603, 0.0
  %5668 = vadd.xlane.f32.xlu0 %v5667
  %v5669 = vpop.xlane.xlu0 %5668
  %v5670 = vsel %vm4244, %v5604, 0.0
  %5671 = vadd.xlane.f32.xlu0 %v5670
  %v5672 = vpop.xlane.xlu0 %5671
  %v5673 = vsel %vm4244, %v5605, 0.0
  %5674 = vadd.xlane.f32.xlu0 %v5673
  %v5675 = vpop.xlane.xlu0 %5674
  %v5676 = vsel %vm4244, %v5606, 0.0
  %5677 = vadd.xlane.f32.xlu0 %v5676
  %v5678 = vpop.xlane.xlu0 %5677
  %v5679 = vsel %vm4244, %v5607, 0.0
  %5680 = vadd.xlane.f32.xlu0 %v5679
  %v5681 = vpop.xlane.xlu0 %5680
  %v5682 = vsel %vm4244, %v5608, 0.0
  %5683 = vadd.xlane.f32.xlu0 %v5682
  %v5684 = vpop.xlane.xlu0 %5683
  %v5685 = vsel %vm4244, %v5609, 0.0
  %5686 = vadd.xlane.f32.xlu0 %v5685
  %v5687 = vpop.xlane.xlu0 %5686
  %v5688 = vsel %vm4244, %v5610, 0.0
  %5689 = vadd.xlane.f32.xlu0 %v5688
  %v5690 = vpop.xlane.xlu0 %5689
  %v5691 = vsel %vm4244, %v5611, 0.0
  %5692 = vadd.xlane.f32.xlu0 %v5691
  %v5693 = vpop.xlane.xlu0 %5692
  %v5694 = vsel %vm4244, %v5612, 0.0
  %5695 = vadd.xlane.f32.xlu0 %v5694
  %v5696 = vpop.xlane.xlu0 %5695
  %v5697 = vsel %vm4244, %v5613, 0.0
  %5698 = vadd.xlane.f32.xlu0 %v5697
  %v5699 = vpop.xlane.xlu0 %5698
  %v5700 = vsel %vm4244, %v5614, 0.0
  %5701 = vadd.xlane.f32.xlu0 %v5700
  %v5702 = vpop.xlane.xlu0 %5701
  %v5703 = vsel %vm4244, %v5615, 0.0
  %5704 = vadd.xlane.f32.xlu0 %v5703
  %v5705 = vpop.xlane.xlu0 %5704
  %v5706 = vsel %vm4244, %v5616, 0.0
  %5707 = vadd.xlane.f32.xlu0 %v5706
  %v5708 = vpop.xlane.xlu0 %5707
  %v5709 = vsel %vm4244, %v5617, 0.0
  %5710 = vadd.xlane.f32.xlu0 %v5709
  %v5711 = vpop.xlane.xlu0 %5710
  %v5712 = vsel %vm4244, %v5618, 0.0
  %5713 = vadd.xlane.f32.xlu0 %v5712
  %v5714 = vpop.xlane.xlu0 %5713
  %v5715 = vmul.f32 %v3957, %v4544
  %v5716 = vmul.f32 %v3961, %v4548
  %v5717 = vmul.f32 %v3965, %v4552
  %v5718 = vmul.f32 %v3969, %v4556
  %v5719 = vmul.f32 %v3973, %v4560
  %v5720 = vmul.f32 %v3977, %v4564
  %v5721 = vmul.f32 %v3981, %v4568
  %v5722 = vmul.f32 %v3985, %v4572
  %v5723 = vmul.f32 %v3989, %v4576
  %v5724 = vmul.f32 %v3993, %v4580
  %v5725 = vmul.f32 %v3997, %v4584
  %v5726 = vmul.f32 %v4001, %v4588
  %v5727 = vmul.f32 %v4005, %v4592
  %v5728 = vmul.f32 %v4009, %v4596
  %v5729 = vmul.f32 %v4013, %v4600
  %v5730 = vmul.f32 %v4017, %v4604
  %v5731 = vmul.f32 %v4021, %v4608
  %v5732 = vmul.f32 %v4025, %v4612
  %v5733 = vmul.f32 %v4029, %v4616
  %v5734 = vmul.f32 %v4033, %v4620
  %v5735 = vmul.f32 %v4037, %v4624
  %v5736 = vmul.f32 %v4041, %v4628
  %v5737 = vmul.f32 %v4045, %v4632
  %v5738 = vmul.f32 %v4049, %v4636
  %v5739 = vmul.f32 %v4053, %v4640
  %v5740 = vmul.f32 %v4057, %v4644
  %v5741 = vmul.f32 %v4061, %v4648
  %v5742 = vmul.f32 %v4065, %v4652
  %v5743 = vmul.f32 %v4069, %v4656
  %v5744 = vmul.f32 %v4073, %v4660
  %v5745 = vmul.f32 %v4077, %v4664
  %v5746 = vmul.f32 %v4081, %v4668
  %v5747 = vsel %vm4244, %v5715, 0.0
  %5748 = vadd.xlane.f32.xlu0 %v5747
  %v5749 = vpop.xlane.xlu0 %5748
  %v5750 = vsel %vm4244, %v5716, 0.0
  %5751 = vadd.xlane.f32.xlu0 %v5750
  %v5752 = vpop.xlane.xlu0 %5751
  %v5753 = vsel %vm4244, %v5717, 0.0
  %5754 = vadd.xlane.f32.xlu0 %v5753
  %v5755 = vpop.xlane.xlu0 %5754
  %v5756 = vsel %vm4244, %v5718, 0.0
  %5757 = vadd.xlane.f32.xlu0 %v5756
  %v5758 = vpop.xlane.xlu0 %5757
  %v5759 = vsel %vm4244, %v5719, 0.0
  %5760 = vadd.xlane.f32.xlu0 %v5759
  %v5761 = vpop.xlane.xlu0 %5760
  %v5762 = vsel %vm4244, %v5720, 0.0
  %5763 = vadd.xlane.f32.xlu0 %v5762
  %v5764 = vpop.xlane.xlu0 %5763
  %v5765 = vsel %vm4244, %v5721, 0.0
  %5766 = vadd.xlane.f32.xlu0 %v5765
  %v5767 = vpop.xlane.xlu0 %5766
  %v5768 = vsel %vm4244, %v5722, 0.0
  %5769 = vadd.xlane.f32.xlu0 %v5768
  %v5770 = vpop.xlane.xlu0 %5769
  %v5771 = vsel %vm4244, %v5723, 0.0
  %5772 = vadd.xlane.f32.xlu0 %v5771
  %v5773 = vpop.xlane.xlu0 %5772
  %v5774 = vsel %vm4244, %v5724, 0.0
  %5775 = vadd.xlane.f32.xlu0 %v5774
  %v5776 = vpop.xlane.xlu0 %5775
  %v5777 = vsel %vm4244, %v5725, 0.0
  %5778 = vadd.xlane.f32.xlu0 %v5777
  %v5779 = vpop.xlane.xlu0 %5778
  %v5780 = vsel %vm4244, %v5726, 0.0
  %5781 = vadd.xlane.f32.xlu0 %v5780
  %v5782 = vpop.xlane.xlu0 %5781
  %v5783 = vsel %vm4244, %v5727, 0.0
  %5784 = vadd.xlane.f32.xlu0 %v5783
  %v5785 = vpop.xlane.xlu0 %5784
  %v5786 = vsel %vm4244, %v5728, 0.0
  %5787 = vadd.xlane.f32.xlu0 %v5786
  %v5788 = vpop.xlane.xlu0 %5787
  %v5789 = vsel %vm4244, %v5729, 0.0
  %5790 = vadd.xlane.f32.xlu0 %v5789
  %v5791 = vpop.xlane.xlu0 %5790
  %v5792 = vsel %vm4244, %v5730, 0.0
  %5793 = vadd.xlane.f32.xlu0 %v5792
  %v5794 = vpop.xlane.xlu0 %5793
  %v5795 = vsel %vm4244, %v5731, 0.0
  %5796 = vadd.xlane.f32.xlu0 %v5795
  %v5797 = vpop.xlane.xlu0 %5796
  %v5798 = vsel %vm4244, %v5732, 0.0
  %5799 = vadd.xlane.f32.xlu0 %v5798
  %v5800 = vpop.xlane.xlu0 %5799
  %v5801 = vsel %vm4244, %v5733, 0.0
  %5802 = vadd.xlane.f32.xlu0 %v5801
  %v5803 = vpop.xlane.xlu0 %5802
  %v5804 = vsel %vm4244, %v5734, 0.0
  %5805 = vadd.xlane.f32.xlu0 %v5804
  %v5806 = vpop.xlane.xlu0 %5805
  %v5807 = vsel %vm4244, %v5735, 0.0
  %5808 = vadd.xlane.f32.xlu0 %v5807
  %v5809 = vpop.xlane.xlu0 %5808
  %v5810 = vsel %vm4244, %v5736, 0.0
  %5811 = vadd.xlane.f32.xlu0 %v5810
  %v5812 = vpop.xlane.xlu0 %5811
  %v5813 = vsel %vm4244, %v5737, 0.0
  %5814 = vadd.xlane.f32.xlu0 %v5813
  %v5815 = vpop.xlane.xlu0 %5814
  %v5816 = vsel %vm4244, %v5738, 0.0
  %5817 = vadd.xlane.f32.xlu0 %v5816
  %v5818 = vpop.xlane.xlu0 %5817
  %v5819 = vsel %vm4244, %v5739, 0.0
  %5820 = vadd.xlane.f32.xlu0 %v5819
  %v5821 = vpop.xlane.xlu0 %5820
  %v5822 = vsel %vm4244, %v5740, 0.0
  %5823 = vadd.xlane.f32.xlu0 %v5822
  %v5824 = vpop.xlane.xlu0 %5823
  %v5825 = vsel %vm4244, %v5741, 0.0
  %5826 = vadd.xlane.f32.xlu0 %v5825
  %v5827 = vpop.xlane.xlu0 %5826
  %v5828 = vsel %vm4244, %v5742, 0.0
  %5829 = vadd.xlane.f32.xlu0 %v5828
  %v5830 = vpop.xlane.xlu0 %5829
  %v5831 = vsel %vm4244, %v5743, 0.0
  %5832 = vadd.xlane.f32.xlu0 %v5831
  %v5833 = vpop.xlane.xlu0 %5832
  %v5834 = vsel %vm4244, %v5744, 0.0
  %5835 = vadd.xlane.f32.xlu0 %v5834
  %v5836 = vpop.xlane.xlu0 %5835
  %v5837 = vsel %vm4244, %v5745, 0.0
  %5838 = vadd.xlane.f32.xlu0 %v5837
  %v5839 = vpop.xlane.xlu0 %5838
  %v5840 = vsel %vm4244, %v5746, 0.0
  %5841 = vadd.xlane.f32.xlu0 %v5840
  %v5842 = vpop.xlane.xlu0 %5841
  %v5843 = vadd.f32 %v5621, %v5749
  %v5844 = vadd.f32 %v5624, %v5752
  %v5845 = vadd.f32 %v5627, %v5755
  %v5846 = vadd.f32 %v5630, %v5758
  %v5847 = vadd.f32 %v5633, %v5761
  %v5848 = vadd.f32 %v5636, %v5764
  %v5849 = vadd.f32 %v5639, %v5767
  %v5850 = vadd.f32 %v5642, %v5770
  %v5851 = vadd.f32 %v5645, %v5773
  %v5852 = vadd.f32 %v5648, %v5776
  %v5853 = vadd.f32 %v5651, %v5779
  %v5854 = vadd.f32 %v5654, %v5782
  %v5855 = vadd.f32 %v5657, %v5785
  %v5856 = vadd.f32 %v5660, %v5788
  %v5857 = vadd.f32 %v5663, %v5791
  %v5858 = vadd.f32 %v5666, %v5794
  %v5859 = vadd.f32 %v5669, %v5797
  %v5860 = vadd.f32 %v5672, %v5800
  %v5861 = vadd.f32 %v5675, %v5803
  %v5862 = vadd.f32 %v5678, %v5806
  %v5863 = vadd.f32 %v5681, %v5809
  %v5864 = vadd.f32 %v5684, %v5812
  %v5865 = vadd.f32 %v5687, %v5815
  %v5866 = vadd.f32 %v5690, %v5818
  %v5867 = vadd.f32 %v5693, %v5821
  %v5868 = vadd.f32 %v5696, %v5824
  %v5869 = vadd.f32 %v5699, %v5827
  %v5870 = vadd.f32 %v5702, %v5830
  %v5871 = vadd.f32 %v5705, %v5833
  %v5872 = vadd.f32 %v5708, %v5836
  %v5873 = vadd.f32 %v5711, %v5839
  %v5874 = vadd.f32 %v5714, %v5842
  %v5875 = vld [vmem:[%s8] sm:$0xff]
  %v5876 = vld [vmem:[%s8 + $0x8] sm:$0xff]
  %v5877 = vld [vmem:[%s8 + $0x10] sm:$0xff]
  %v5878 = vld [vmem:[%s8 + $0x18] sm:$0xff]
  %v5883 = vlaneseq
  %v5884 = vshrl.u32 %v5883, 7
  %v5885 = vsub.s32 0, %v5884
  %v5886 = vrot.slane %v5875, %v5885
  %s5888 = sor.u32 256, 6
  %5889 = vbcast.lane.b32.xlu0 %v5886, %s5888
  %v5890 = vpop.permute.xlu0 %5889
  %v5891 = vlaneseq
  %v5892 = vshrl.u32 %v5891, 7
  %v5893 = vsub.s32 1, %v5892
  %v5894 = vrot.slane %v5875, %v5893
  %s5896 = sor.u32 256, 6
  %5897 = vbcast.lane.b32.xlu0 %v5894, %s5896
  %v5898 = vpop.permute.xlu0 %5897
  %v5899 = vlaneseq
  %v5900 = vshrl.u32 %v5899, 7
  %v5901 = vsub.s32 2, %v5900
  %v5902 = vrot.slane %v5875, %v5901
  %s5904 = sor.u32 256, 6
  %5905 = vbcast.lane.b32.xlu0 %v5902, %s5904
  %v5906 = vpop.permute.xlu0 %5905
  %v5907 = vlaneseq
  %v5908 = vshrl.u32 %v5907, 7
  %v5909 = vsub.s32 3, %v5908
  %v5910 = vrot.slane %v5875, %v5909
  %s5912 = sor.u32 256, 6
  %5913 = vbcast.lane.b32.xlu0 %v5910, %s5912
  %v5914 = vpop.permute.xlu0 %5913
  %v5915 = vlaneseq
  %v5916 = vshrl.u32 %v5915, 7
  %v5917 = vsub.s32 4, %v5916
  %v5918 = vrot.slane %v5875, %v5917
  %s5920 = sor.u32 256, 6
  %5921 = vbcast.lane.b32.xlu0 %v5918, %s5920
  %v5922 = vpop.permute.xlu0 %5921
  %v5923 = vlaneseq
  %v5924 = vshrl.u32 %v5923, 7
  %v5925 = vsub.s32 5, %v5924
  %v5926 = vrot.slane %v5875, %v5925
  %s5928 = sor.u32 256, 6
  %5929 = vbcast.lane.b32.xlu0 %v5926, %s5928
  %v5930 = vpop.permute.xlu0 %5929
  %v5931 = vlaneseq
  %v5932 = vshrl.u32 %v5931, 7
  %v5933 = vsub.s32 6, %v5932
  %v5934 = vrot.slane %v5875, %v5933
  %s5936 = sor.u32 256, 6
  %5937 = vbcast.lane.b32.xlu0 %v5934, %s5936
  %v5938 = vpop.permute.xlu0 %5937
  %v5939 = vlaneseq
  %v5940 = vshrl.u32 %v5939, 7
  %v5941 = vsub.s32 7, %v5940
  %v5942 = vrot.slane %v5875, %v5941
  %s5944 = sor.u32 256, 6
  %5945 = vbcast.lane.b32.xlu0 %v5942, %s5944
  %v5946 = vpop.permute.xlu0 %5945
  %v5947 = vlaneseq
  %v5948 = vshrl.u32 %v5947, 7
  %v5949 = vsub.s32 0, %v5948
  %v5950 = vrot.slane %v5876, %v5949
  %s5952 = sor.u32 256, 6
  %5953 = vbcast.lane.b32.xlu0 %v5950, %s5952
  %v5954 = vpop.permute.xlu0 %5953
  %v5955 = vlaneseq
  %v5956 = vshrl.u32 %v5955, 7
  %v5957 = vsub.s32 1, %v5956
  %v5958 = vrot.slane %v5876, %v5957
  %s5960 = sor.u32 256, 6
  %5961 = vbcast.lane.b32.xlu0 %v5958, %s5960
  %v5962 = vpop.permute.xlu0 %5961
  %v5963 = vlaneseq
  %v5964 = vshrl.u32 %v5963, 7
  %v5965 = vsub.s32 2, %v5964
  %v5966 = vrot.slane %v5876, %v5965
  %s5968 = sor.u32 256, 6
  %5969 = vbcast.lane.b32.xlu0 %v5966, %s5968
  %v5970 = vpop.permute.xlu0 %5969
  %v5971 = vlaneseq
  %v5972 = vshrl.u32 %v5971, 7
  %v5973 = vsub.s32 3, %v5972
  %v5974 = vrot.slane %v5876, %v5973
  %s5976 = sor.u32 256, 6
  %5977 = vbcast.lane.b32.xlu0 %v5974, %s5976
  %v5978 = vpop.permute.xlu0 %5977
  %v5979 = vlaneseq
  %v5980 = vshrl.u32 %v5979, 7
  %v5981 = vsub.s32 4, %v5980
  %v5982 = vrot.slane %v5876, %v5981
  %s5984 = sor.u32 256, 6
  %5985 = vbcast.lane.b32.xlu0 %v5982, %s5984
  %v5986 = vpop.permute.xlu0 %5985
  %v5987 = vlaneseq
  %v5988 = vshrl.u32 %v5987, 7
  %v5989 = vsub.s32 5, %v5988
  %v5990 = vrot.slane %v5876, %v5989
  %s5992 = sor.u32 256, 6
  %5993 = vbcast.lane.b32.xlu0 %v5990, %s5992
  %v5994 = vpop.permute.xlu0 %5993
  %v5995 = vlaneseq
  %v5996 = vshrl.u32 %v5995, 7
  %v5997 = vsub.s32 6, %v5996
  %v5998 = vrot.slane %v5876, %v5997
  %s6000 = sor.u32 256, 6
  %6001 = vbcast.lane.b32.xlu0 %v5998, %s6000
  %v6002 = vpop.permute.xlu0 %6001
  %v6003 = vlaneseq
  %v6004 = vshrl.u32 %v6003, 7
  %v6005 = vsub.s32 7, %v6004
  %v6006 = vrot.slane %v5876, %v6005
  %s6008 = sor.u32 256, 6
  %6009 = vbcast.lane.b32.xlu0 %v6006, %s6008
  %v6010 = vpop.permute.xlu0 %6009
  %v6011 = vlaneseq
  %v6012 = vshrl.u32 %v6011, 7
  %v6013 = vsub.s32 0, %v6012
  %v6014 = vrot.slane %v5877, %v6013
  %s6016 = sor.u32 256, 6
  %6017 = vbcast.lane.b32.xlu0 %v6014, %s6016
  %v6018 = vpop.permute.xlu0 %6017
  %v6019 = vlaneseq
  %v6020 = vshrl.u32 %v6019, 7
  %v6021 = vsub.s32 1, %v6020
  %v6022 = vrot.slane %v5877, %v6021
  %s6024 = sor.u32 256, 6
  %6025 = vbcast.lane.b32.xlu0 %v6022, %s6024
  %v6026 = vpop.permute.xlu0 %6025
  %v6027 = vlaneseq
  %v6028 = vshrl.u32 %v6027, 7
  %v6029 = vsub.s32 2, %v6028
  %v6030 = vrot.slane %v5877, %v6029
  %s6032 = sor.u32 256, 6
  %6033 = vbcast.lane.b32.xlu0 %v6030, %s6032
  %v6034 = vpop.permute.xlu0 %6033
  %v6035 = vlaneseq
  %v6036 = vshrl.u32 %v6035, 7
  %v6037 = vsub.s32 3, %v6036
  %v6038 = vrot.slane %v5877, %v6037
  %s6040 = sor.u32 256, 6
  %6041 = vbcast.lane.b32.xlu0 %v6038, %s6040
  %v6042 = vpop.permute.xlu0 %6041
  %v6043 = vlaneseq
  %v6044 = vshrl.u32 %v6043, 7
  %v6045 = vsub.s32 4, %v6044
  %v6046 = vrot.slane %v5877, %v6045
  %s6048 = sor.u32 256, 6
  %6049 = vbcast.lane.b32.xlu0 %v6046, %s6048
  %v6050 = vpop.permute.xlu0 %6049
  %v6051 = vlaneseq
  %v6052 = vshrl.u32 %v6051, 7
  %v6053 = vsub.s32 5, %v6052
  %v6054 = vrot.slane %v5877, %v6053
  %s6056 = sor.u32 256, 6
  %6057 = vbcast.lane.b32.xlu0 %v6054, %s6056
  %v6058 = vpop.permute.xlu0 %6057
  %v6059 = vlaneseq
  %v6060 = vshrl.u32 %v6059, 7
  %v6061 = vsub.s32 6, %v6060
  %v6062 = vrot.slane %v5877, %v6061
  %s6064 = sor.u32 256, 6
  %6065 = vbcast.lane.b32.xlu0 %v6062, %s6064
  %v6066 = vpop.permute.xlu0 %6065
  %v6067 = vlaneseq
  %v6068 = vshrl.u32 %v6067, 7
  %v6069 = vsub.s32 7, %v6068
  %v6070 = vrot.slane %v5877, %v6069
  %s6072 = sor.u32 256, 6
  %6073 = vbcast.lane.b32.xlu0 %v6070, %s6072
  %v6074 = vpop.permute.xlu0 %6073
  %v6075 = vlaneseq
  %v6076 = vshrl.u32 %v6075, 7
  %v6077 = vsub.s32 0, %v6076
  %v6078 = vrot.slane %v5878, %v6077
  %s6080 = sor.u32 256, 6
  %6081 = vbcast.lane.b32.xlu0 %v6078, %s6080
  %v6082 = vpop.permute.xlu0 %6081
  %v6083 = vlaneseq
  %v6084 = vshrl.u32 %v6083, 7
  %v6085 = vsub.s32 1, %v6084
  %v6086 = vrot.slane %v5878, %v6085
  %s6088 = sor.u32 256, 6
  %6089 = vbcast.lane.b32.xlu0 %v6086, %s6088
  %v6090 = vpop.permute.xlu0 %6089
  %v6091 = vlaneseq
  %v6092 = vshrl.u32 %v6091, 7
  %v6093 = vsub.s32 2, %v6092
  %v6094 = vrot.slane %v5878, %v6093
  %s6096 = sor.u32 256, 6
  %6097 = vbcast.lane.b32.xlu0 %v6094, %s6096
  %v6098 = vpop.permute.xlu0 %6097
  %v6099 = vlaneseq
  %v6100 = vshrl.u32 %v6099, 7
  %v6101 = vsub.s32 3, %v6100
  %v6102 = vrot.slane %v5878, %v6101
  %s6104 = sor.u32 256, 6
  %6105 = vbcast.lane.b32.xlu0 %v6102, %s6104
  %v6106 = vpop.permute.xlu0 %6105
  %v6107 = vlaneseq
  %v6108 = vshrl.u32 %v6107, 7
  %v6109 = vsub.s32 4, %v6108
  %v6110 = vrot.slane %v5878, %v6109
  %s6112 = sor.u32 256, 6
  %6113 = vbcast.lane.b32.xlu0 %v6110, %s6112
  %v6114 = vpop.permute.xlu0 %6113
  %v6115 = vlaneseq
  %v6116 = vshrl.u32 %v6115, 7
  %v6117 = vsub.s32 5, %v6116
  %v6118 = vrot.slane %v5878, %v6117
  %s6120 = sor.u32 256, 6
  %6121 = vbcast.lane.b32.xlu0 %v6118, %s6120
  %v6122 = vpop.permute.xlu0 %6121
  %v6123 = vlaneseq
  %v6124 = vshrl.u32 %v6123, 7
  %v6125 = vsub.s32 6, %v6124
  %v6126 = vrot.slane %v5878, %v6125
  %s6128 = sor.u32 256, 6
  %6129 = vbcast.lane.b32.xlu0 %v6126, %s6128
  %v6130 = vpop.permute.xlu0 %6129
  %v6131 = vlaneseq
  %v6132 = vshrl.u32 %v6131, 7
  %v6133 = vsub.s32 7, %v6132
  %v6134 = vrot.slane %v5878, %v6133
  %s6136 = sor.u32 256, 6
  %6137 = vbcast.lane.b32.xlu0 %v6134, %s6136
  %v6138 = vpop.permute.xlu0 %6137
  %v6171 = vadd.f32 %v5843, %v5890
  %v6172 = vadd.f32 %v5844, %v5898
  %v6173 = vadd.f32 %v5845, %v5906
  %v6174 = vadd.f32 %v5846, %v5914
  %v6175 = vadd.f32 %v5847, %v5922
  %v6176 = vadd.f32 %v5848, %v5930
  %v6177 = vadd.f32 %v5849, %v5938
  %v6178 = vadd.f32 %v5850, %v5946
  %v6179 = vadd.f32 %v5851, %v5954
  %v6180 = vadd.f32 %v5852, %v5962
  %v6181 = vadd.f32 %v5853, %v5970
  %v6182 = vadd.f32 %v5854, %v5978
  %v6183 = vadd.f32 %v5855, %v5986
  %v6184 = vadd.f32 %v5856, %v5994
  %v6185 = vadd.f32 %v5857, %v6002
  %v6186 = vadd.f32 %v5858, %v6010
  %v6187 = vadd.f32 %v5859, %v6018
  %v6188 = vadd.f32 %v5860, %v6026
  %v6189 = vadd.f32 %v5861, %v6034
  %v6190 = vadd.f32 %v5862, %v6042
  %v6191 = vadd.f32 %v5863, %v6050
  %v6192 = vadd.f32 %v5864, %v6058
  %v6193 = vadd.f32 %v5865, %v6066
  %v6194 = vadd.f32 %v5866, %v6074
  %v6195 = vadd.f32 %v5867, %v6082
  %v6196 = vadd.f32 %v5868, %v6090
  %v6197 = vadd.f32 %v5869, %v6098
  %v6198 = vadd.f32 %v5870, %v6106
  %v6199 = vadd.f32 %v5871, %v6114
  %v6200 = vadd.f32 %v5872, %v6122
  %v6201 = vadd.f32 %v5873, %v6130
  %v6202 = vadd.f32 %v5874, %v6138
  %6235 = vset.pattern.permute.xlu0 0
  %6236 = vperm.xlu0 %6235, %v6171
  %v6237 = vpop.permute.xlu0 %6236
  %6238 = vset.pattern.permute.xlu0 0
  %6239 = vperm.xlu0 %6238, %v6172
  %v6240 = vpop.permute.xlu0 %6239
  %6241 = vset.pattern.permute.xlu0 0
  %6242 = vperm.xlu0 %6241, %v6173
  %v6243 = vpop.permute.xlu0 %6242
  %6244 = vset.pattern.permute.xlu0 0
  %6245 = vperm.xlu0 %6244, %v6174
  %v6246 = vpop.permute.xlu0 %6245
  %6247 = vset.pattern.permute.xlu0 0
  %6248 = vperm.xlu0 %6247, %v6175
  %v6249 = vpop.permute.xlu0 %6248
  %6250 = vset.pattern.permute.xlu0 0
  %6251 = vperm.xlu0 %6250, %v6176
  %v6252 = vpop.permute.xlu0 %6251
  %6253 = vset.pattern.permute.xlu0 0
  %6254 = vperm.xlu0 %6253, %v6177
  %v6255 = vpop.permute.xlu0 %6254
  %6256 = vset.pattern.permute.xlu0 0
  %6257 = vperm.xlu0 %6256, %v6178
  %v6258 = vpop.permute.xlu0 %6257
  %6259 = vset.pattern.permute.xlu0 0
  %6260 = vperm.xlu0 %6259, %v6179
  %v6261 = vpop.permute.xlu0 %6260
  %6262 = vset.pattern.permute.xlu0 0
  %6263 = vperm.xlu0 %6262, %v6180
  %v6264 = vpop.permute.xlu0 %6263
  %6265 = vset.pattern.permute.xlu0 0
  %6266 = vperm.xlu0 %6265, %v6181
  %v6267 = vpop.permute.xlu0 %6266
  %6268 = vset.pattern.permute.xlu0 0
  %6269 = vperm.xlu0 %6268, %v6182
  %v6270 = vpop.permute.xlu0 %6269
  %6271 = vset.pattern.permute.xlu0 0
  %6272 = vperm.xlu0 %6271, %v6183
  %v6273 = vpop.permute.xlu0 %6272
  %6274 = vset.pattern.permute.xlu0 0
  %6275 = vperm.xlu0 %6274, %v6184
  %v6276 = vpop.permute.xlu0 %6275
  %6277 = vset.pattern.permute.xlu0 0
  %6278 = vperm.xlu0 %6277, %v6185
  %v6279 = vpop.permute.xlu0 %6278
  %6280 = vset.pattern.permute.xlu0 0
  %6281 = vperm.xlu0 %6280, %v6186
  %v6282 = vpop.permute.xlu0 %6281
  %6283 = vset.pattern.permute.xlu0 0
  %6284 = vperm.xlu0 %6283, %v6187
  %v6285 = vpop.permute.xlu0 %6284
  %6286 = vset.pattern.permute.xlu0 0
  %6287 = vperm.xlu0 %6286, %v6188
  %v6288 = vpop.permute.xlu0 %6287
  %6289 = vset.pattern.permute.xlu0 0
  %6290 = vperm.xlu0 %6289, %v6189
  %v6291 = vpop.permute.xlu0 %6290
  %6292 = vset.pattern.permute.xlu0 0
  %6293 = vperm.xlu0 %6292, %v6190
  %v6294 = vpop.permute.xlu0 %6293
  %6295 = vset.pattern.permute.xlu0 0
  %6296 = vperm.xlu0 %6295, %v6191
  %v6297 = vpop.permute.xlu0 %6296
  %6298 = vset.pattern.permute.xlu0 0
  %6299 = vperm.xlu0 %6298, %v6192
  %v6300 = vpop.permute.xlu0 %6299
  %6301 = vset.pattern.permute.xlu0 0
  %6302 = vperm.xlu0 %6301, %v6193
  %v6303 = vpop.permute.xlu0 %6302
  %6304 = vset.pattern.permute.xlu0 0
  %6305 = vperm.xlu0 %6304, %v6194
  %v6306 = vpop.permute.xlu0 %6305
  %6307 = vset.pattern.permute.xlu0 0
  %6308 = vperm.xlu0 %6307, %v6195
  %v6309 = vpop.permute.xlu0 %6308
  %6310 = vset.pattern.permute.xlu0 0
  %6311 = vperm.xlu0 %6310, %v6196
  %v6312 = vpop.permute.xlu0 %6311
  %6313 = vset.pattern.permute.xlu0 0
  %6314 = vperm.xlu0 %6313, %v6197
  %v6315 = vpop.permute.xlu0 %6314
  %6316 = vset.pattern.permute.xlu0 0
  %6317 = vperm.xlu0 %6316, %v6198
  %v6318 = vpop.permute.xlu0 %6317
  %6319 = vset.pattern.permute.xlu0 0
  %6320 = vperm.xlu0 %6319, %v6199
  %v6321 = vpop.permute.xlu0 %6320
  %6322 = vset.pattern.permute.xlu0 0
  %6323 = vperm.xlu0 %6322, %v6200
  %v6324 = vpop.permute.xlu0 %6323
  %6325 = vset.pattern.permute.xlu0 0
  %6326 = vperm.xlu0 %6325, %v6201
  %v6327 = vpop.permute.xlu0 %6326
  %6328 = vset.pattern.permute.xlu0 0
  %6329 = vperm.xlu0 %6328, %v6202
  %v6330 = vpop.permute.xlu0 %6329
  %v6331 = vadd.s32 %v5286, 4294967290
  %v6332 = vlaneseq
  %v6333 = vshrl.u32 %v6332, 7
  %v6334 = vsub.s32 %v6331, %v6333
  %v6335 = vrot.slane %v6237, %v6334
  %v6336 = vlaneseq
  %v6337 = vshrl.u32 %v6336, 7
  %v6338 = vsub.s32 %v6331, %v6337
  %v6339 = vrot.slane %v6240, %v6338
  %v6340 = vlaneseq
  %v6341 = vshrl.u32 %v6340, 7
  %v6342 = vsub.s32 %v6331, %v6341
  %v6343 = vrot.slane %v6243, %v6342
  %v6344 = vlaneseq
  %v6345 = vshrl.u32 %v6344, 7
  %v6346 = vsub.s32 %v6331, %v6345
  %v6347 = vrot.slane %v6246, %v6346
  %v6348 = vlaneseq
  %v6349 = vshrl.u32 %v6348, 7
  %v6350 = vsub.s32 %v6331, %v6349
  %v6351 = vrot.slane %v6249, %v6350
  %v6352 = vlaneseq
  %v6353 = vshrl.u32 %v6352, 7
  %v6354 = vsub.s32 %v6331, %v6353
  %v6355 = vrot.slane %v6252, %v6354
  %v6356 = vlaneseq
  %v6357 = vshrl.u32 %v6356, 7
  %v6358 = vsub.s32 %v6331, %v6357
  %v6359 = vrot.slane %v6255, %v6358
  %v6360 = vlaneseq
  %v6361 = vshrl.u32 %v6360, 7
  %v6362 = vsub.s32 %v6331, %v6361
  %v6363 = vrot.slane %v6258, %v6362
  %v6364 = vlaneseq
  %v6365 = vshrl.u32 %v6364, 7
  %v6366 = vsub.s32 %v6331, %v6365
  %v6367 = vrot.slane %v6261, %v6366
  %v6368 = vlaneseq
  %v6369 = vshrl.u32 %v6368, 7
  %v6370 = vsub.s32 %v6331, %v6369
  %v6371 = vrot.slane %v6264, %v6370
  %v6372 = vlaneseq
  %v6373 = vshrl.u32 %v6372, 7
  %v6374 = vsub.s32 %v6331, %v6373
  %v6375 = vrot.slane %v6267, %v6374
  %v6376 = vlaneseq
  %v6377 = vshrl.u32 %v6376, 7
  %v6378 = vsub.s32 %v6331, %v6377
  %v6379 = vrot.slane %v6270, %v6378
  %v6380 = vlaneseq
  %v6381 = vshrl.u32 %v6380, 7
  %v6382 = vsub.s32 %v6331, %v6381
  %v6383 = vrot.slane %v6273, %v6382
  %v6384 = vlaneseq
  %v6385 = vshrl.u32 %v6384, 7
  %v6386 = vsub.s32 %v6331, %v6385
  %v6387 = vrot.slane %v6276, %v6386
  %v6388 = vlaneseq
  %v6389 = vshrl.u32 %v6388, 7
  %v6390 = vsub.s32 %v6331, %v6389
  %v6391 = vrot.slane %v6279, %v6390
  %v6392 = vlaneseq
  %v6393 = vshrl.u32 %v6392, 7
  %v6394 = vsub.s32 %v6331, %v6393
  %v6395 = vrot.slane %v6282, %v6394
  %v6396 = vlaneseq
  %v6397 = vshrl.u32 %v6396, 7
  %v6398 = vsub.s32 %v6331, %v6397
  %v6399 = vrot.slane %v6285, %v6398
  %v6400 = vlaneseq
  %v6401 = vshrl.u32 %v6400, 7
  %v6402 = vsub.s32 %v6331, %v6401
  %v6403 = vrot.slane %v6288, %v6402
  %v6404 = vlaneseq
  %v6405 = vshrl.u32 %v6404, 7
  %v6406 = vsub.s32 %v6331, %v6405
  %v6407 = vrot.slane %v6291, %v6406
  %v6408 = vlaneseq
  %v6409 = vshrl.u32 %v6408, 7
  %v6410 = vsub.s32 %v6331, %v6409
  %v6411 = vrot.slane %v6294, %v6410
  %v6412 = vlaneseq
  %v6413 = vshrl.u32 %v6412, 7
  %v6414 = vsub.s32 %v6331, %v6413
  %v6415 = vrot.slane %v6297, %v6414
  %v6416 = vlaneseq
  %v6417 = vshrl.u32 %v6416, 7
  %v6418 = vsub.s32 %v6331, %v6417
  %v6419 = vrot.slane %v6300, %v6418
  %v6420 = vlaneseq
  %v6421 = vshrl.u32 %v6420, 7
  %v6422 = vsub.s32 %v6331, %v6421
  %v6423 = vrot.slane %v6303, %v6422
  %v6424 = vlaneseq
  %v6425 = vshrl.u32 %v6424, 7
  %v6426 = vsub.s32 %v6331, %v6425
  %v6427 = vrot.slane %v6306, %v6426
  %v6428 = vlaneseq
  %v6429 = vshrl.u32 %v6428, 7
  %v6430 = vsub.s32 %v6331, %v6429
  %v6431 = vrot.slane %v6309, %v6430
  %v6432 = vlaneseq
  %v6433 = vshrl.u32 %v6432, 7
  %v6434 = vsub.s32 %v6331, %v6433
  %v6435 = vrot.slane %v6312, %v6434
  %v6436 = vlaneseq
  %v6437 = vshrl.u32 %v6436, 7
  %v6438 = vsub.s32 %v6331, %v6437
  %v6439 = vrot.slane %v6315, %v6438
  %v6440 = vlaneseq
  %v6441 = vshrl.u32 %v6440, 7
  %v6442 = vsub.s32 %v6331, %v6441
  %v6443 = vrot.slane %v6318, %v6442
  %v6444 = vlaneseq
  %v6445 = vshrl.u32 %v6444, 7
  %v6446 = vsub.s32 %v6331, %v6445
  %v6447 = vrot.slane %v6321, %v6446
  %v6448 = vlaneseq
  %v6449 = vshrl.u32 %v6448, 7
  %v6450 = vsub.s32 %v6331, %v6449
  %v6451 = vrot.slane %v6324, %v6450
  %v6452 = vlaneseq
  %v6453 = vshrl.u32 %v6452, 7
  %v6454 = vsub.s32 %v6331, %v6453
  %v6455 = vrot.slane %v6327, %v6454
  %v6456 = vlaneseq
  %v6457 = vshrl.u32 %v6456, 7
  %v6458 = vsub.s32 %v6331, %v6457
  %v6459 = vrot.slane %v6330, %v6458
  %v6460 = vsel %vm5415, %v6339, %v6335
  %v6461 = vsel %vm5417, %v6343, %v6460
  %v6462 = vsel %vm5419, %v6347, %v6461
  %v6463 = vsel %vm5421, %v6351, %v6462
  %v6464 = vsel %vm5423, %v6355, %v6463
  %v6465 = vsel %vm5425, %v6359, %v6464
  %v6466 = vsel %vm5427, %v6363, %v6465
  %v6467 = vsel %vm5415, %v6371, %v6367
  %v6468 = vsel %vm5417, %v6375, %v6467
  %v6469 = vsel %vm5419, %v6379, %v6468
  %v6470 = vsel %vm5421, %v6383, %v6469
  %v6471 = vsel %vm5423, %v6387, %v6470
  %v6472 = vsel %vm5425, %v6391, %v6471
  %v6473 = vsel %vm5427, %v6395, %v6472
  %v6474 = vsel %vm5415, %v6403, %v6399
  %v6475 = vsel %vm5417, %v6407, %v6474
  %v6476 = vsel %vm5419, %v6411, %v6475
  %v6477 = vsel %vm5421, %v6415, %v6476
  %v6478 = vsel %vm5423, %v6419, %v6477
  %v6479 = vsel %vm5425, %v6423, %v6478
  %v6480 = vsel %vm5427, %v6427, %v6479
  %v6481 = vsel %vm5415, %v6435, %v6431
  %v6482 = vsel %vm5417, %v6439, %v6481
  %v6483 = vsel %vm5419, %v6443, %v6482
  %v6484 = vsel %vm5421, %v6447, %v6483
  %v6485 = vsel %vm5423, %v6451, %v6484
  %v6486 = vsel %vm5425, %v6455, %v6485
  %v6487 = vsel %vm5427, %v6459, %v6486
  %vm6492 = vcmask 97328
  %6493 = vst.msk [vmem:[%s9] sm:$0xff] %vm6492, %v6466
  %6494 = vst.msk [vmem:[%s9 + $0x8] sm:$0xff] %vm6492, %v6473
  %6495 = vst.msk [vmem:[%s9 + $0x10] sm:$0xff] %vm6492, %v6480
  %6496 = vst.msk [vmem:[%s9 + $0x18] sm:$0xff] %vm6492, %v6487
  %v6497 = vlaneseq
  %v6498 = vshrl.u32 %v6497, 7
  %v6499 = vsub.s32 6, %v6498
  %v6500 = vrot.slane %v3532, %v6499
  %v6501 = vlaneseq
  %v6502 = vshrl.u32 %v6501, 7
  %v6503 = vsub.s32 6, %v6502
  %v6504 = vrot.slane %v3533, %v6503
  %v6505 = vlaneseq
  %v6506 = vshrl.u32 %v6505, 7
  %v6507 = vsub.s32 6, %v6506
  %v6508 = vrot.slane %v3534, %v6507
  %v6509 = vlaneseq
  %v6510 = vshrl.u32 %v6509, 7
  %v6511 = vsub.s32 6, %v6510
  %v6512 = vrot.slane %v3535, %v6511
  %v6513 = vlaneseq
  %v6514 = vshrl.u32 %v6513, 7
  %v6515 = vsub.s32 6, %v6514
  %v6516 = vrot.slane %v3536, %v6515
  %v6517 = vlaneseq
  %v6518 = vshrl.u32 %v6517, 7
  %v6519 = vsub.s32 6, %v6518
  %v6520 = vrot.slane %v3537, %v6519
  %v6521 = vlaneseq
  %v6522 = vshrl.u32 %v6521, 7
  %v6523 = vsub.s32 6, %v6522
  %v6524 = vrot.slane %v3538, %v6523
  %v6525 = vlaneseq
  %v6526 = vshrl.u32 %v6525, 7
  %v6527 = vsub.s32 6, %v6526
  %v6528 = vrot.slane %v3539, %v6527
  %v6529 = vlaneseq
  %v6530 = vshrl.u32 %v6529, 7
  %v6531 = vsub.s32 6, %v6530
  %v6532 = vrot.slane %v3540, %v6531
  %v6533 = vlaneseq
  %v6534 = vshrl.u32 %v6533, 7
  %v6535 = vsub.s32 6, %v6534
  %v6536 = vrot.slane %v3541, %v6535
  %v6537 = vlaneseq
  %v6538 = vshrl.u32 %v6537, 7
  %v6539 = vsub.s32 6, %v6538
  %v6540 = vrot.slane %v3542, %v6539
  %v6541 = vlaneseq
  %v6542 = vshrl.u32 %v6541, 7
  %v6543 = vsub.s32 6, %v6542
  %v6544 = vrot.slane %v3543, %v6543
  %v6545 = vlaneseq
  %v6546 = vshrl.u32 %v6545, 7
  %v6547 = vsub.s32 6, %v6546
  %v6548 = vrot.slane %v3544, %v6547
  %v6549 = vlaneseq
  %v6550 = vshrl.u32 %v6549, 7
  %v6551 = vsub.s32 6, %v6550
  %v6552 = vrot.slane %v3545, %v6551
  %v6553 = vlaneseq
  %v6554 = vshrl.u32 %v6553, 7
  %v6555 = vsub.s32 6, %v6554
  %v6556 = vrot.slane %v3546, %v6555
  %v6557 = vlaneseq
  %v6558 = vshrl.u32 %v6557, 7
  %v6559 = vsub.s32 6, %v6558
  %v6560 = vrot.slane %v3547, %v6559
  %v6561 = vlaneseq
  %v6562 = vshrl.u32 %v6561, 7
  %v6563 = vsub.s32 6, %v6562
  %v6564 = vrot.slane %v3548, %v6563
  %v6565 = vlaneseq
  %v6566 = vshrl.u32 %v6565, 7
  %v6567 = vsub.s32 6, %v6566
  %v6568 = vrot.slane %v3549, %v6567
  %v6569 = vlaneseq
  %v6570 = vshrl.u32 %v6569, 7
  %v6571 = vsub.s32 6, %v6570
  %v6572 = vrot.slane %v3550, %v6571
  %v6573 = vlaneseq
  %v6574 = vshrl.u32 %v6573, 7
  %v6575 = vsub.s32 6, %v6574
  %v6576 = vrot.slane %v3551, %v6575
  %v6577 = vlaneseq
  %v6578 = vshrl.u32 %v6577, 7
  %v6579 = vsub.s32 6, %v6578
  %v6580 = vrot.slane %v3552, %v6579
  %v6581 = vlaneseq
  %v6582 = vshrl.u32 %v6581, 7
  %v6583 = vsub.s32 6, %v6582
  %v6584 = vrot.slane %v3553, %v6583
  %v6585 = vlaneseq
  %v6586 = vshrl.u32 %v6585, 7
  %v6587 = vsub.s32 6, %v6586
  %v6588 = vrot.slane %v3554, %v6587
  %v6589 = vlaneseq
  %v6590 = vshrl.u32 %v6589, 7
  %v6591 = vsub.s32 6, %v6590
  %v6592 = vrot.slane %v3555, %v6591
  %v6593 = vlaneseq
  %v6594 = vshrl.u32 %v6593, 7
  %v6595 = vsub.s32 6, %v6594
  %v6596 = vrot.slane %v3556, %v6595
  %v6597 = vlaneseq
  %v6598 = vshrl.u32 %v6597, 7
  %v6599 = vsub.s32 6, %v6598
  %v6600 = vrot.slane %v3557, %v6599
  %v6601 = vlaneseq
  %v6602 = vshrl.u32 %v6601, 7
  %v6603 = vsub.s32 6, %v6602
  %v6604 = vrot.slane %v3558, %v6603
  %v6605 = vlaneseq
  %v6606 = vshrl.u32 %v6605, 7
  %v6607 = vsub.s32 6, %v6606
  %v6608 = vrot.slane %v3559, %v6607
  %v6609 = vlaneseq
  %v6610 = vshrl.u32 %v6609, 7
  %v6611 = vsub.s32 6, %v6610
  %v6612 = vrot.slane %v3560, %v6611
  %v6613 = vlaneseq
  %v6614 = vshrl.u32 %v6613, 7
  %v6615 = vsub.s32 6, %v6614
  %v6616 = vrot.slane %v3561, %v6615
  %v6617 = vlaneseq
  %v6618 = vshrl.u32 %v6617, 7
  %v6619 = vsub.s32 6, %v6618
  %v6620 = vrot.slane %v3562, %v6619
  %v6621 = vlaneseq
  %v6622 = vshrl.u32 %v6621, 7
  %v6623 = vsub.s32 6, %v6622
  %v6624 = vrot.slane %v3563, %v6623
  %v6625 = vmul.f32 %v3702, %v6500
  %v6626 = vmul.f32 %v3706, %v6504
  %v6627 = vmul.f32 %v3710, %v6508
  %v6628 = vmul.f32 %v3714, %v6512
  %v6629 = vmul.f32 %v3718, %v6516
  %v6630 = vmul.f32 %v3722, %v6520
  %v6631 = vmul.f32 %v3726, %v6524
  %v6632 = vmul.f32 %v3730, %v6528
  %v6633 = vmul.f32 %v3734, %v6532
  %v6634 = vmul.f32 %v3738, %v6536
  %v6635 = vmul.f32 %v3742, %v6540
  %v6636 = vmul.f32 %v3746, %v6544
  %v6637 = vmul.f32 %v3750, %v6548
  %v6638 = vmul.f32 %v3754, %v6552
  %v6639 = vmul.f32 %v3758, %v6556
  %v6640 = vmul.f32 %v3762, %v6560
  %v6641 = vmul.f32 %v3766, %v6564
  %v6642 = vmul.f32 %v3770, %v6568
  %v6643 = vmul.f32 %v3774, %v6572
  %v6644 = vmul.f32 %v3778, %v6576
  %v6645 = vmul.f32 %v3782, %v6580
  %v6646 = vmul.f32 %v3786, %v6584
  %v6647 = vmul.f32 %v3790, %v6588
  %v6648 = vmul.f32 %v3794, %v6592
  %v6649 = vmul.f32 %v3798, %v6596
  %v6650 = vmul.f32 %v3802, %v6600
  %v6651 = vmul.f32 %v3806, %v6604
  %v6652 = vmul.f32 %v3810, %v6608
  %v6653 = vmul.f32 %v3814, %v6612
  %v6654 = vmul.f32 %v3818, %v6616
  %v6655 = vmul.f32 %v3822, %v6620
  %v6656 = vmul.f32 %v3826, %v6624
  %v6657 = vsel %vm4244, %v6625, 0.0
  %6658 = vadd.xlane.f32.xlu0 %v6657
  %v6659 = vpop.xlane.xlu0 %6658
  %v6660 = vsel %vm4244, %v6626, 0.0
  %6661 = vadd.xlane.f32.xlu0 %v6660
  %v6662 = vpop.xlane.xlu0 %6661
  %v6663 = vsel %vm4244, %v6627, 0.0
  %6664 = vadd.xlane.f32.xlu0 %v6663
  %v6665 = vpop.xlane.xlu0 %6664
  %v6666 = vsel %vm4244, %v6628, 0.0
  %6667 = vadd.xlane.f32.xlu0 %v6666
  %v6668 = vpop.xlane.xlu0 %6667
  %v6669 = vsel %vm4244, %v6629, 0.0
  %6670 = vadd.xlane.f32.xlu0 %v6669
  %v6671 = vpop.xlane.xlu0 %6670
  %v6672 = vsel %vm4244, %v6630, 0.0
  %6673 = vadd.xlane.f32.xlu0 %v6672
  %v6674 = vpop.xlane.xlu0 %6673
  %v6675 = vsel %vm4244, %v6631, 0.0
  %6676 = vadd.xlane.f32.xlu0 %v6675
  %v6677 = vpop.xlane.xlu0 %6676
  %v6678 = vsel %vm4244, %v6632, 0.0
  %6679 = vadd.xlane.f32.xlu0 %v6678
  %v6680 = vpop.xlane.xlu0 %6679
  %v6681 = vsel %vm4244, %v6633, 0.0
  %6682 = vadd.xlane.f32.xlu0 %v6681
  %v6683 = vpop.xlane.xlu0 %6682
  %v6684 = vsel %vm4244, %v6634, 0.0
  %6685 = vadd.xlane.f32.xlu0 %v6684
  %v6686 = vpop.xlane.xlu0 %6685
  %v6687 = vsel %vm4244, %v6635, 0.0
  %6688 = vadd.xlane.f32.xlu0 %v6687
  %v6689 = vpop.xlane.xlu0 %6688
  %v6690 = vsel %vm4244, %v6636, 0.0
  %6691 = vadd.xlane.f32.xlu0 %v6690
  %v6692 = vpop.xlane.xlu0 %6691
  %v6693 = vsel %vm4244, %v6637, 0.0
  %6694 = vadd.xlane.f32.xlu0 %v6693
  %v6695 = vpop.xlane.xlu0 %6694
  %v6696 = vsel %vm4244, %v6638, 0.0
  %6697 = vadd.xlane.f32.xlu0 %v6696
  %v6698 = vpop.xlane.xlu0 %6697
  %v6699 = vsel %vm4244, %v6639, 0.0
  %6700 = vadd.xlane.f32.xlu0 %v6699
  %v6701 = vpop.xlane.xlu0 %6700
  %v6702 = vsel %vm4244, %v6640, 0.0
  %6703 = vadd.xlane.f32.xlu0 %v6702
  %v6704 = vpop.xlane.xlu0 %6703
  %v6705 = vsel %vm4244, %v6641, 0.0
  %6706 = vadd.xlane.f32.xlu0 %v6705
  %v6707 = vpop.xlane.xlu0 %6706
  %v6708 = vsel %vm4244, %v6642, 0.0
  %6709 = vadd.xlane.f32.xlu0 %v6708
  %v6710 = vpop.xlane.xlu0 %6709
  %v6711 = vsel %vm4244, %v6643, 0.0
  %6712 = vadd.xlane.f32.xlu0 %v6711
  %v6713 = vpop.xlane.xlu0 %6712
  %v6714 = vsel %vm4244, %v6644, 0.0
  %6715 = vadd.xlane.f32.xlu0 %v6714
  %v6716 = vpop.xlane.xlu0 %6715
  %v6717 = vsel %vm4244, %v6645, 0.0
  %6718 = vadd.xlane.f32.xlu0 %v6717
  %v6719 = vpop.xlane.xlu0 %6718
  %v6720 = vsel %vm4244, %v6646, 0.0
  %6721 = vadd.xlane.f32.xlu0 %v6720
  %v6722 = vpop.xlane.xlu0 %6721
  %v6723 = vsel %vm4244, %v6647, 0.0
  %6724 = vadd.xlane.f32.xlu0 %v6723
  %v6725 = vpop.xlane.xlu0 %6724
  %v6726 = vsel %vm4244, %v6648, 0.0
  %6727 = vadd.xlane.f32.xlu0 %v6726
  %v6728 = vpop.xlane.xlu0 %6727
  %v6729 = vsel %vm4244, %v6649, 0.0
  %6730 = vadd.xlane.f32.xlu0 %v6729
  %v6731 = vpop.xlane.xlu0 %6730
  %v6732 = vsel %vm4244, %v6650, 0.0
  %6733 = vadd.xlane.f32.xlu0 %v6732
  %v6734 = vpop.xlane.xlu0 %6733
  %v6735 = vsel %vm4244, %v6651, 0.0
  %6736 = vadd.xlane.f32.xlu0 %v6735
  %v6737 = vpop.xlane.xlu0 %6736
  %v6738 = vsel %vm4244, %v6652, 0.0
  %6739 = vadd.xlane.f32.xlu0 %v6738
  %v6740 = vpop.xlane.xlu0 %6739
  %v6741 = vsel %vm4244, %v6653, 0.0
  %6742 = vadd.xlane.f32.xlu0 %v6741
  %v6743 = vpop.xlane.xlu0 %6742
  %v6744 = vsel %vm4244, %v6654, 0.0
  %6745 = vadd.xlane.f32.xlu0 %v6744
  %v6746 = vpop.xlane.xlu0 %6745
  %v6747 = vsel %vm4244, %v6655, 0.0
  %6748 = vadd.xlane.f32.xlu0 %v6747
  %v6749 = vpop.xlane.xlu0 %6748
  %v6750 = vsel %vm4244, %v6656, 0.0
  %6751 = vadd.xlane.f32.xlu0 %v6750
  %v6752 = vpop.xlane.xlu0 %6751
  %v6753 = vmul.f32 %v3958, %v4544
  %v6754 = vmul.f32 %v3962, %v4548
  %v6755 = vmul.f32 %v3966, %v4552
  %v6756 = vmul.f32 %v3970, %v4556
  %v6757 = vmul.f32 %v3974, %v4560
  %v6758 = vmul.f32 %v3978, %v4564
  %v6759 = vmul.f32 %v3982, %v4568
  %v6760 = vmul.f32 %v3986, %v4572
  %v6761 = vmul.f32 %v3990, %v4576
  %v6762 = vmul.f32 %v3994, %v4580
  %v6763 = vmul.f32 %v3998, %v4584
  %v6764 = vmul.f32 %v4002, %v4588
  %v6765 = vmul.f32 %v4006, %v4592
  %v6766 = vmul.f32 %v4010, %v4596
  %v6767 = vmul.f32 %v4014, %v4600
  %v6768 = vmul.f32 %v4018, %v4604
  %v6769 = vmul.f32 %v4022, %v4608
  %v6770 = vmul.f32 %v4026, %v4612
  %v6771 = vmul.f32 %v4030, %v4616
  %v6772 = vmul.f32 %v4034, %v4620
  %v6773 = vmul.f32 %v4038, %v4624
  %v6774 = vmul.f32 %v4042, %v4628
  %v6775 = vmul.f32 %v4046, %v4632
  %v6776 = vmul.f32 %v4050, %v4636
  %v6777 = vmul.f32 %v4054, %v4640
  %v6778 = vmul.f32 %v4058, %v4644
  %v6779 = vmul.f32 %v4062, %v4648
  %v6780 = vmul.f32 %v4066, %v4652
  %v6781 = vmul.f32 %v4070, %v4656
  %v6782 = vmul.f32 %v4074, %v4660
  %v6783 = vmul.f32 %v4078, %v4664
  %v6784 = vmul.f32 %v4082, %v4668
  %v6785 = vsel %vm4244, %v6753, 0.0
  %6786 = vadd.xlane.f32.xlu0 %v6785
  %v6787 = vpop.xlane.xlu0 %6786
  %v6788 = vsel %vm4244, %v6754, 0.0
  %6789 = vadd.xlane.f32.xlu0 %v6788
  %v6790 = vpop.xlane.xlu0 %6789
  %v6791 = vsel %vm4244, %v6755, 0.0
  %6792 = vadd.xlane.f32.xlu0 %v6791
  %v6793 = vpop.xlane.xlu0 %6792
  %v6794 = vsel %vm4244, %v6756, 0.0
  %6795 = vadd.xlane.f32.xlu0 %v6794
  %v6796 = vpop.xlane.xlu0 %6795
  %v6797 = vsel %vm4244, %v6757, 0.0
  %6798 = vadd.xlane.f32.xlu0 %v6797
  %v6799 = vpop.xlane.xlu0 %6798
  %v6800 = vsel %vm4244, %v6758, 0.0
  %6801 = vadd.xlane.f32.xlu0 %v6800
  %v6802 = vpop.xlane.xlu0 %6801
  %v6803 = vsel %vm4244, %v6759, 0.0
  %6804 = vadd.xlane.f32.xlu0 %v6803
  %v6805 = vpop.xlane.xlu0 %6804
  %v6806 = vsel %vm4244, %v6760, 0.0
  %6807 = vadd.xlane.f32.xlu0 %v6806
  %v6808 = vpop.xlane.xlu0 %6807
  %v6809 = vsel %vm4244, %v6761, 0.0
  %6810 = vadd.xlane.f32.xlu0 %v6809
  %v6811 = vpop.xlane.xlu0 %6810
  %v6812 = vsel %vm4244, %v6762, 0.0
  %6813 = vadd.xlane.f32.xlu0 %v6812
  %v6814 = vpop.xlane.xlu0 %6813
  %v6815 = vsel %vm4244, %v6763, 0.0
  %6816 = vadd.xlane.f32.xlu0 %v6815
  %v6817 = vpop.xlane.xlu0 %6816
  %v6818 = vsel %vm4244, %v6764, 0.0
  %6819 = vadd.xlane.f32.xlu0 %v6818
  %v6820 = vpop.xlane.xlu0 %6819
  %v6821 = vsel %vm4244, %v6765, 0.0
  %6822 = vadd.xlane.f32.xlu0 %v6821
  %v6823 = vpop.xlane.xlu0 %6822
  %v6824 = vsel %vm4244, %v6766, 0.0
  %6825 = vadd.xlane.f32.xlu0 %v6824
  %v6826 = vpop.xlane.xlu0 %6825
  %v6827 = vsel %vm4244, %v6767, 0.0
  %6828 = vadd.xlane.f32.xlu0 %v6827
  %v6829 = vpop.xlane.xlu0 %6828
  %v6830 = vsel %vm4244, %v6768, 0.0
  %6831 = vadd.xlane.f32.xlu0 %v6830
  %v6832 = vpop.xlane.xlu0 %6831
  %v6833 = vsel %vm4244, %v6769, 0.0
  %6834 = vadd.xlane.f32.xlu0 %v6833
  %v6835 = vpop.xlane.xlu0 %6834
  %v6836 = vsel %vm4244, %v6770, 0.0
  %6837 = vadd.xlane.f32.xlu0 %v6836
  %v6838 = vpop.xlane.xlu0 %6837
  %v6839 = vsel %vm4244, %v6771, 0.0
  %6840 = vadd.xlane.f32.xlu0 %v6839
  %v6841 = vpop.xlane.xlu0 %6840
  %v6842 = vsel %vm4244, %v6772, 0.0
  %6843 = vadd.xlane.f32.xlu0 %v6842
  %v6844 = vpop.xlane.xlu0 %6843
  %v6845 = vsel %vm4244, %v6773, 0.0
  %6846 = vadd.xlane.f32.xlu0 %v6845
  %v6847 = vpop.xlane.xlu0 %6846
  %v6848 = vsel %vm4244, %v6774, 0.0
  %6849 = vadd.xlane.f32.xlu0 %v6848
  %v6850 = vpop.xlane.xlu0 %6849
  %v6851 = vsel %vm4244, %v6775, 0.0
  %6852 = vadd.xlane.f32.xlu0 %v6851
  %v6853 = vpop.xlane.xlu0 %6852
  %v6854 = vsel %vm4244, %v6776, 0.0
  %6855 = vadd.xlane.f32.xlu0 %v6854
  %v6856 = vpop.xlane.xlu0 %6855
  %v6857 = vsel %vm4244, %v6777, 0.0
  %6858 = vadd.xlane.f32.xlu0 %v6857
  %v6859 = vpop.xlane.xlu0 %6858
  %v6860 = vsel %vm4244, %v6778, 0.0
  %6861 = vadd.xlane.f32.xlu0 %v6860
  %v6862 = vpop.xlane.xlu0 %6861
  %v6863 = vsel %vm4244, %v6779, 0.0
  %6864 = vadd.xlane.f32.xlu0 %v6863
  %v6865 = vpop.xlane.xlu0 %6864
  %v6866 = vsel %vm4244, %v6780, 0.0
  %6867 = vadd.xlane.f32.xlu0 %v6866
  %v6868 = vpop.xlane.xlu0 %6867
  %v6869 = vsel %vm4244, %v6781, 0.0
  %6870 = vadd.xlane.f32.xlu0 %v6869
  %v6871 = vpop.xlane.xlu0 %6870
  %v6872 = vsel %vm4244, %v6782, 0.0
  %6873 = vadd.xlane.f32.xlu0 %v6872
  %v6874 = vpop.xlane.xlu0 %6873
  %v6875 = vsel %vm4244, %v6783, 0.0
  %6876 = vadd.xlane.f32.xlu0 %v6875
  %v6877 = vpop.xlane.xlu0 %6876
  %v6878 = vsel %vm4244, %v6784, 0.0
  %6879 = vadd.xlane.f32.xlu0 %v6878
  %v6880 = vpop.xlane.xlu0 %6879
  %v6881 = vadd.f32 %v6659, %v6787
  %v6882 = vadd.f32 %v6662, %v6790
  %v6883 = vadd.f32 %v6665, %v6793
  %v6884 = vadd.f32 %v6668, %v6796
  %v6885 = vadd.f32 %v6671, %v6799
  %v6886 = vadd.f32 %v6674, %v6802
  %v6887 = vadd.f32 %v6677, %v6805
  %v6888 = vadd.f32 %v6680, %v6808
  %v6889 = vadd.f32 %v6683, %v6811
  %v6890 = vadd.f32 %v6686, %v6814
  %v6891 = vadd.f32 %v6689, %v6817
  %v6892 = vadd.f32 %v6692, %v6820
  %v6893 = vadd.f32 %v6695, %v6823
  %v6894 = vadd.f32 %v6698, %v6826
  %v6895 = vadd.f32 %v6701, %v6829
  %v6896 = vadd.f32 %v6704, %v6832
  %v6897 = vadd.f32 %v6707, %v6835
  %v6898 = vadd.f32 %v6710, %v6838
  %v6899 = vadd.f32 %v6713, %v6841
  %v6900 = vadd.f32 %v6716, %v6844
  %v6901 = vadd.f32 %v6719, %v6847
  %v6902 = vadd.f32 %v6722, %v6850
  %v6903 = vadd.f32 %v6725, %v6853
  %v6904 = vadd.f32 %v6728, %v6856
  %v6905 = vadd.f32 %v6731, %v6859
  %v6906 = vadd.f32 %v6734, %v6862
  %v6907 = vadd.f32 %v6737, %v6865
  %v6908 = vadd.f32 %v6740, %v6868
  %v6909 = vadd.f32 %v6743, %v6871
  %v6910 = vadd.f32 %v6746, %v6874
  %v6911 = vadd.f32 %v6749, %v6877
  %v6912 = vadd.f32 %v6752, %v6880
  %v6913 = vld [vmem:[%s8] sm:$0xff]
  %v6914 = vld [vmem:[%s8 + $0x8] sm:$0xff]
  %v6915 = vld [vmem:[%s8 + $0x10] sm:$0xff]
  %v6916 = vld [vmem:[%s8 + $0x18] sm:$0xff]
  %v6921 = vlaneseq
  %v6922 = vshrl.u32 %v6921, 7
  %v6923 = vsub.s32 0, %v6922
  %v6924 = vrot.slane %v6913, %v6923
  %s6926 = sor.u32 256, 12
  %6927 = vbcast.lane.b32.xlu0 %v6924, %s6926
  %v6928 = vpop.permute.xlu0 %6927
  %v6929 = vlaneseq
  %v6930 = vshrl.u32 %v6929, 7
  %v6931 = vsub.s32 1, %v6930
  %v6932 = vrot.slane %v6913, %v6931
  %s6934 = sor.u32 256, 12
  %6935 = vbcast.lane.b32.xlu0 %v6932, %s6934
  %v6936 = vpop.permute.xlu0 %6935
  %v6937 = vlaneseq
  %v6938 = vshrl.u32 %v6937, 7
  %v6939 = vsub.s32 2, %v6938
  %v6940 = vrot.slane %v6913, %v6939
  %s6942 = sor.u32 256, 12
  %6943 = vbcast.lane.b32.xlu0 %v6940, %s6942
  %v6944 = vpop.permute.xlu0 %6943
  %v6945 = vlaneseq
  %v6946 = vshrl.u32 %v6945, 7
  %v6947 = vsub.s32 3, %v6946
  %v6948 = vrot.slane %v6913, %v6947
  %s6950 = sor.u32 256, 12
  %6951 = vbcast.lane.b32.xlu0 %v6948, %s6950
  %v6952 = vpop.permute.xlu0 %6951
  %v6953 = vlaneseq
  %v6954 = vshrl.u32 %v6953, 7
  %v6955 = vsub.s32 4, %v6954
  %v6956 = vrot.slane %v6913, %v6955
  %s6958 = sor.u32 256, 12
  %6959 = vbcast.lane.b32.xlu0 %v6956, %s6958
  %v6960 = vpop.permute.xlu0 %6959
  %v6961 = vlaneseq
  %v6962 = vshrl.u32 %v6961, 7
  %v6963 = vsub.s32 5, %v6962
  %v6964 = vrot.slane %v6913, %v6963
  %s6966 = sor.u32 256, 12
  %6967 = vbcast.lane.b32.xlu0 %v6964, %s6966
  %v6968 = vpop.permute.xlu0 %6967
  %v6969 = vlaneseq
  %v6970 = vshrl.u32 %v6969, 7
  %v6971 = vsub.s32 6, %v6970
  %v6972 = vrot.slane %v6913, %v6971
  %s6974 = sor.u32 256, 12
  %6975 = vbcast.lane.b32.xlu0 %v6972, %s6974
  %v6976 = vpop.permute.xlu0 %6975
  %v6977 = vlaneseq
  %v6978 = vshrl.u32 %v6977, 7
  %v6979 = vsub.s32 7, %v6978
  %v6980 = vrot.slane %v6913, %v6979
  %s6982 = sor.u32 256, 12
  %6983 = vbcast.lane.b32.xlu0 %v6980, %s6982
  %v6984 = vpop.permute.xlu0 %6983
  %v6985 = vlaneseq
  %v6986 = vshrl.u32 %v6985, 7
  %v6987 = vsub.s32 0, %v6986
  %v6988 = vrot.slane %v6914, %v6987
  %s6990 = sor.u32 256, 12
  %6991 = vbcast.lane.b32.xlu0 %v6988, %s6990
  %v6992 = vpop.permute.xlu0 %6991
  %v6993 = vlaneseq
  %v6994 = vshrl.u32 %v6993, 7
  %v6995 = vsub.s32 1, %v6994
  %v6996 = vrot.slane %v6914, %v6995
  %s6998 = sor.u32 256, 12
  %6999 = vbcast.lane.b32.xlu0 %v6996, %s6998
  %v7000 = vpop.permute.xlu0 %6999
  %v7001 = vlaneseq
  %v7002 = vshrl.u32 %v7001, 7
  %v7003 = vsub.s32 2, %v7002
  %v7004 = vrot.slane %v6914, %v7003
  %s7006 = sor.u32 256, 12
  %7007 = vbcast.lane.b32.xlu0 %v7004, %s7006
  %v7008 = vpop.permute.xlu0 %7007
  %v7009 = vlaneseq
  %v7010 = vshrl.u32 %v7009, 7
  %v7011 = vsub.s32 3, %v7010
  %v7012 = vrot.slane %v6914, %v7011
  %s7014 = sor.u32 256, 12
  %7015 = vbcast.lane.b32.xlu0 %v7012, %s7014
  %v7016 = vpop.permute.xlu0 %7015
  %v7017 = vlaneseq
  %v7018 = vshrl.u32 %v7017, 7
  %v7019 = vsub.s32 4, %v7018
  %v7020 = vrot.slane %v6914, %v7019
  %s7022 = sor.u32 256, 12
  %7023 = vbcast.lane.b32.xlu0 %v7020, %s7022
  %v7024 = vpop.permute.xlu0 %7023
  %v7025 = vlaneseq
  %v7026 = vshrl.u32 %v7025, 7
  %v7027 = vsub.s32 5, %v7026
  %v7028 = vrot.slane %v6914, %v7027
  %s7030 = sor.u32 256, 12
  %7031 = vbcast.lane.b32.xlu0 %v7028, %s7030
  %v7032 = vpop.permute.xlu0 %7031
  %v7033 = vlaneseq
  %v7034 = vshrl.u32 %v7033, 7
  %v7035 = vsub.s32 6, %v7034
  %v7036 = vrot.slane %v6914, %v7035
  %s7038 = sor.u32 256, 12
  %7039 = vbcast.lane.b32.xlu0 %v7036, %s7038
  %v7040 = vpop.permute.xlu0 %7039
  %v7041 = vlaneseq
  %v7042 = vshrl.u32 %v7041, 7
  %v7043 = vsub.s32 7, %v7042
  %v7044 = vrot.slane %v6914, %v7043
  %s7046 = sor.u32 256, 12
  %7047 = vbcast.lane.b32.xlu0 %v7044, %s7046
  %v7048 = vpop.permute.xlu0 %7047
  %v7049 = vlaneseq
  %v7050 = vshrl.u32 %v7049, 7
  %v7051 = vsub.s32 0, %v7050
  %v7052 = vrot.slane %v6915, %v7051
  %s7054 = sor.u32 256, 12
  %7055 = vbcast.lane.b32.xlu0 %v7052, %s7054
  %v7056 = vpop.permute.xlu0 %7055
  %v7057 = vlaneseq
  %v7058 = vshrl.u32 %v7057, 7
  %v7059 = vsub.s32 1, %v7058
  %v7060 = vrot.slane %v6915, %v7059
  %s7062 = sor.u32 256, 12
  %7063 = vbcast.lane.b32.xlu0 %v7060, %s7062
  %v7064 = vpop.permute.xlu0 %7063
  %v7065 = vlaneseq
  %v7066 = vshrl.u32 %v7065, 7
  %v7067 = vsub.s32 2, %v7066
  %v7068 = vrot.slane %v6915, %v7067
  %s7070 = sor.u32 256, 12
  %7071 = vbcast.lane.b32.xlu0 %v7068, %s7070
  %v7072 = vpop.permute.xlu0 %7071
  %v7073 = vlaneseq
  %v7074 = vshrl.u32 %v7073, 7
  %v7075 = vsub.s32 3, %v7074
  %v7076 = vrot.slane %v6915, %v7075
  %s7078 = sor.u32 256, 12
  %7079 = vbcast.lane.b32.xlu0 %v7076, %s7078
  %v7080 = vpop.permute.xlu0 %7079
  %v7081 = vlaneseq
  %v7082 = vshrl.u32 %v7081, 7
  %v7083 = vsub.s32 4, %v7082
  %v7084 = vrot.slane %v6915, %v7083
  %s7086 = sor.u32 256, 12
  %7087 = vbcast.lane.b32.xlu0 %v7084, %s7086
  %v7088 = vpop.permute.xlu0 %7087
  %v7089 = vlaneseq
  %v7090 = vshrl.u32 %v7089, 7
  %v7091 = vsub.s32 5, %v7090
  %v7092 = vrot.slane %v6915, %v7091
  %s7094 = sor.u32 256, 12
  %7095 = vbcast.lane.b32.xlu0 %v7092, %s7094
  %v7096 = vpop.permute.xlu0 %7095
  %v7097 = vlaneseq
  %v7098 = vshrl.u32 %v7097, 7
  %v7099 = vsub.s32 6, %v7098
  %v7100 = vrot.slane %v6915, %v7099
  %s7102 = sor.u32 256, 12
  %7103 = vbcast.lane.b32.xlu0 %v7100, %s7102
  %v7104 = vpop.permute.xlu0 %7103
  %v7105 = vlaneseq
  %v7106 = vshrl.u32 %v7105, 7
  %v7107 = vsub.s32 7, %v7106
  %v7108 = vrot.slane %v6915, %v7107
  %s7110 = sor.u32 256, 12
  %7111 = vbcast.lane.b32.xlu0 %v7108, %s7110
  %v7112 = vpop.permute.xlu0 %7111
  %v7113 = vlaneseq
  %v7114 = vshrl.u32 %v7113, 7
  %v7115 = vsub.s32 0, %v7114
  %v7116 = vrot.slane %v6916, %v7115
  %s7118 = sor.u32 256, 12
  %7119 = vbcast.lane.b32.xlu0 %v7116, %s7118
  %v7120 = vpop.permute.xlu0 %7119
  %v7121 = vlaneseq
  %v7122 = vshrl.u32 %v7121, 7
  %v7123 = vsub.s32 1, %v7122
  %v7124 = vrot.slane %v6916, %v7123
  %s7126 = sor.u32 256, 12
  %7127 = vbcast.lane.b32.xlu0 %v7124, %s7126
  %v7128 = vpop.permute.xlu0 %7127
  %v7129 = vlaneseq
  %v7130 = vshrl.u32 %v7129, 7
  %v7131 = vsub.s32 2, %v7130
  %v7132 = vrot.slane %v6916, %v7131
  %s7134 = sor.u32 256, 12
  %7135 = vbcast.lane.b32.xlu0 %v7132, %s7134
  %v7136 = vpop.permute.xlu0 %7135
  %v7137 = vlaneseq
  %v7138 = vshrl.u32 %v7137, 7
  %v7139 = vsub.s32 3, %v7138
  %v7140 = vrot.slane %v6916, %v7139
  %s7142 = sor.u32 256, 12
  %7143 = vbcast.lane.b32.xlu0 %v7140, %s7142
  %v7144 = vpop.permute.xlu0 %7143
  %v7145 = vlaneseq
  %v7146 = vshrl.u32 %v7145, 7
  %v7147 = vsub.s32 4, %v7146
  %v7148 = vrot.slane %v6916, %v7147
  %s7150 = sor.u32 256, 12
  %7151 = vbcast.lane.b32.xlu0 %v7148, %s7150
  %v7152 = vpop.permute.xlu0 %7151
  %v7153 = vlaneseq
  %v7154 = vshrl.u32 %v7153, 7
  %v7155 = vsub.s32 5, %v7154
  %v7156 = vrot.slane %v6916, %v7155
  %s7158 = sor.u32 256, 12
  %7159 = vbcast.lane.b32.xlu0 %v7156, %s7158
  %v7160 = vpop.permute.xlu0 %7159
  %v7161 = vlaneseq
  %v7162 = vshrl.u32 %v7161, 7
  %v7163 = vsub.s32 6, %v7162
  %v7164 = vrot.slane %v6916, %v7163
  %s7166 = sor.u32 256, 12
  %7167 = vbcast.lane.b32.xlu0 %v7164, %s7166
  %v7168 = vpop.permute.xlu0 %7167
  %v7169 = vlaneseq
  %v7170 = vshrl.u32 %v7169, 7
  %v7171 = vsub.s32 7, %v7170
  %v7172 = vrot.slane %v6916, %v7171
  %s7174 = sor.u32 256, 12
  %7175 = vbcast.lane.b32.xlu0 %v7172, %s7174
  %v7176 = vpop.permute.xlu0 %7175
  %v7209 = vadd.f32 %v6881, %v6928
  %v7210 = vadd.f32 %v6882, %v6936
  %v7211 = vadd.f32 %v6883, %v6944
  %v7212 = vadd.f32 %v6884, %v6952
  %v7213 = vadd.f32 %v6885, %v6960
  %v7214 = vadd.f32 %v6886, %v6968
  %v7215 = vadd.f32 %v6887, %v6976
  %v7216 = vadd.f32 %v6888, %v6984
  %v7217 = vadd.f32 %v6889, %v6992
  %v7218 = vadd.f32 %v6890, %v7000
  %v7219 = vadd.f32 %v6891, %v7008
  %v7220 = vadd.f32 %v6892, %v7016
  %v7221 = vadd.f32 %v6893, %v7024
  %v7222 = vadd.f32 %v6894, %v7032
  %v7223 = vadd.f32 %v6895, %v7040
  %v7224 = vadd.f32 %v6896, %v7048
  %v7225 = vadd.f32 %v6897, %v7056
  %v7226 = vadd.f32 %v6898, %v7064
  %v7227 = vadd.f32 %v6899, %v7072
  %v7228 = vadd.f32 %v6900, %v7080
  %v7229 = vadd.f32 %v6901, %v7088
  %v7230 = vadd.f32 %v6902, %v7096
  %v7231 = vadd.f32 %v6903, %v7104
  %v7232 = vadd.f32 %v6904, %v7112
  %v7233 = vadd.f32 %v6905, %v7120
  %v7234 = vadd.f32 %v6906, %v7128
  %v7235 = vadd.f32 %v6907, %v7136
  %v7236 = vadd.f32 %v6908, %v7144
  %v7237 = vadd.f32 %v6909, %v7152
  %v7238 = vadd.f32 %v6910, %v7160
  %v7239 = vadd.f32 %v6911, %v7168
  %v7240 = vadd.f32 %v6912, %v7176
  %7273 = vset.pattern.permute.xlu0 0
  %7274 = vperm.xlu0 %7273, %v7209
  %v7275 = vpop.permute.xlu0 %7274
  %7276 = vset.pattern.permute.xlu0 0
  %7277 = vperm.xlu0 %7276, %v7210
  %v7278 = vpop.permute.xlu0 %7277
  %7279 = vset.pattern.permute.xlu0 0
  %7280 = vperm.xlu0 %7279, %v7211
  %v7281 = vpop.permute.xlu0 %7280
  %7282 = vset.pattern.permute.xlu0 0
  %7283 = vperm.xlu0 %7282, %v7212
  %v7284 = vpop.permute.xlu0 %7283
  %7285 = vset.pattern.permute.xlu0 0
  %7286 = vperm.xlu0 %7285, %v7213
  %v7287 = vpop.permute.xlu0 %7286
  %7288 = vset.pattern.permute.xlu0 0
  %7289 = vperm.xlu0 %7288, %v7214
  %v7290 = vpop.permute.xlu0 %7289
  %7291 = vset.pattern.permute.xlu0 0
  %7292 = vperm.xlu0 %7291, %v7215
  %v7293 = vpop.permute.xlu0 %7292
  %7294 = vset.pattern.permute.xlu0 0
  %7295 = vperm.xlu0 %7294, %v7216
  %v7296 = vpop.permute.xlu0 %7295
  %7297 = vset.pattern.permute.xlu0 0
  %7298 = vperm.xlu0 %7297, %v7217
  %v7299 = vpop.permute.xlu0 %7298
  %7300 = vset.pattern.permute.xlu0 0
  %7301 = vperm.xlu0 %7300, %v7218
  %v7302 = vpop.permute.xlu0 %7301
  %7303 = vset.pattern.permute.xlu0 0
  %7304 = vperm.xlu0 %7303, %v7219
  %v7305 = vpop.permute.xlu0 %7304
  %7306 = vset.pattern.permute.xlu0 0
  %7307 = vperm.xlu0 %7306, %v7220
  %v7308 = vpop.permute.xlu0 %7307
  %7309 = vset.pattern.permute.xlu0 0
  %7310 = vperm.xlu0 %7309, %v7221
  %v7311 = vpop.permute.xlu0 %7310
  %7312 = vset.pattern.permute.xlu0 0
  %7313 = vperm.xlu0 %7312, %v7222
  %v7314 = vpop.permute.xlu0 %7313
  %7315 = vset.pattern.permute.xlu0 0
  %7316 = vperm.xlu0 %7315, %v7223
  %v7317 = vpop.permute.xlu0 %7316
  %7318 = vset.pattern.permute.xlu0 0
  %7319 = vperm.xlu0 %7318, %v7224
  %v7320 = vpop.permute.xlu0 %7319
  %7321 = vset.pattern.permute.xlu0 0
  %7322 = vperm.xlu0 %7321, %v7225
  %v7323 = vpop.permute.xlu0 %7322
  %7324 = vset.pattern.permute.xlu0 0
  %7325 = vperm.xlu0 %7324, %v7226
  %v7326 = vpop.permute.xlu0 %7325
  %7327 = vset.pattern.permute.xlu0 0
  %7328 = vperm.xlu0 %7327, %v7227
  %v7329 = vpop.permute.xlu0 %7328
  %7330 = vset.pattern.permute.xlu0 0
  %7331 = vperm.xlu0 %7330, %v7228
  %v7332 = vpop.permute.xlu0 %7331
  %7333 = vset.pattern.permute.xlu0 0
  %7334 = vperm.xlu0 %7333, %v7229
  %v7335 = vpop.permute.xlu0 %7334
  %7336 = vset.pattern.permute.xlu0 0
  %7337 = vperm.xlu0 %7336, %v7230
  %v7338 = vpop.permute.xlu0 %7337
  %7339 = vset.pattern.permute.xlu0 0
  %7340 = vperm.xlu0 %7339, %v7231
  %v7341 = vpop.permute.xlu0 %7340
  %7342 = vset.pattern.permute.xlu0 0
  %7343 = vperm.xlu0 %7342, %v7232
  %v7344 = vpop.permute.xlu0 %7343
  %7345 = vset.pattern.permute.xlu0 0
  %7346 = vperm.xlu0 %7345, %v7233
  %v7347 = vpop.permute.xlu0 %7346
  %7348 = vset.pattern.permute.xlu0 0
  %7349 = vperm.xlu0 %7348, %v7234
  %v7350 = vpop.permute.xlu0 %7349
  %7351 = vset.pattern.permute.xlu0 0
  %7352 = vperm.xlu0 %7351, %v7235
  %v7353 = vpop.permute.xlu0 %7352
  %7354 = vset.pattern.permute.xlu0 0
  %7355 = vperm.xlu0 %7354, %v7236
  %v7356 = vpop.permute.xlu0 %7355
  %7357 = vset.pattern.permute.xlu0 0
  %7358 = vperm.xlu0 %7357, %v7237
  %v7359 = vpop.permute.xlu0 %7358
  %7360 = vset.pattern.permute.xlu0 0
  %7361 = vperm.xlu0 %7360, %v7238
  %v7362 = vpop.permute.xlu0 %7361
  %7363 = vset.pattern.permute.xlu0 0
  %7364 = vperm.xlu0 %7363, %v7239
  %v7365 = vpop.permute.xlu0 %7364
  %7366 = vset.pattern.permute.xlu0 0
  %7367 = vperm.xlu0 %7366, %v7240
  %v7368 = vpop.permute.xlu0 %7367
  %v7369 = vadd.s32 %v5286, 4294967284
  %v7370 = vlaneseq
  %v7371 = vshrl.u32 %v7370, 7
  %v7372 = vsub.s32 %v7369, %v7371
  %v7373 = vrot.slane %v7275, %v7372
  %v7374 = vlaneseq
  %v7375 = vshrl.u32 %v7374, 7
  %v7376 = vsub.s32 %v7369, %v7375
  %v7377 = vrot.slane %v7278, %v7376
  %v7378 = vlaneseq
  %v7379 = vshrl.u32 %v7378, 7
  %v7380 = vsub.s32 %v7369, %v7379
  %v7381 = vrot.slane %v7281, %v7380
  %v7382 = vlaneseq
  %v7383 = vshrl.u32 %v7382, 7
  %v7384 = vsub.s32 %v7369, %v7383
  %v7385 = vrot.slane %v7284, %v7384
  %v7386 = vlaneseq
  %v7387 = vshrl.u32 %v7386, 7
  %v7388 = vsub.s32 %v7369, %v7387
  %v7389 = vrot.slane %v7287, %v7388
  %v7390 = vlaneseq
  %v7391 = vshrl.u32 %v7390, 7
  %v7392 = vsub.s32 %v7369, %v7391
  %v7393 = vrot.slane %v7290, %v7392
  %v7394 = vlaneseq
  %v7395 = vshrl.u32 %v7394, 7
  %v7396 = vsub.s32 %v7369, %v7395
  %v7397 = vrot.slane %v7293, %v7396
  %v7398 = vlaneseq
  %v7399 = vshrl.u32 %v7398, 7
  %v7400 = vsub.s32 %v7369, %v7399
  %v7401 = vrot.slane %v7296, %v7400
  %v7402 = vlaneseq
  %v7403 = vshrl.u32 %v7402, 7
  %v7404 = vsub.s32 %v7369, %v7403
  %v7405 = vrot.slane %v7299, %v7404
  %v7406 = vlaneseq
  %v7407 = vshrl.u32 %v7406, 7
  %v7408 = vsub.s32 %v7369, %v7407
  %v7409 = vrot.slane %v7302, %v7408
  %v7410 = vlaneseq
  %v7411 = vshrl.u32 %v7410, 7
  %v7412 = vsub.s32 %v7369, %v7411
  %v7413 = vrot.slane %v7305, %v7412
  %v7414 = vlaneseq
  %v7415 = vshrl.u32 %v7414, 7
  %v7416 = vsub.s32 %v7369, %v7415
  %v7417 = vrot.slane %v7308, %v7416
  %v7418 = vlaneseq
  %v7419 = vshrl.u32 %v7418, 7
  %v7420 = vsub.s32 %v7369, %v7419
  %v7421 = vrot.slane %v7311, %v7420
  %v7422 = vlaneseq
  %v7423 = vshrl.u32 %v7422, 7
  %v7424 = vsub.s32 %v7369, %v7423
  %v7425 = vrot.slane %v7314, %v7424
  %v7426 = vlaneseq
  %v7427 = vshrl.u32 %v7426, 7
  %v7428 = vsub.s32 %v7369, %v7427
  %v7429 = vrot.slane %v7317, %v7428
  %v7430 = vlaneseq
  %v7431 = vshrl.u32 %v7430, 7
  %v7432 = vsub.s32 %v7369, %v7431
  %v7433 = vrot.slane %v7320, %v7432
  %v7434 = vlaneseq
  %v7435 = vshrl.u32 %v7434, 7
  %v7436 = vsub.s32 %v7369, %v7435
  %v7437 = vrot.slane %v7323, %v7436
  %v7438 = vlaneseq
  %v7439 = vshrl.u32 %v7438, 7
  %v7440 = vsub.s32 %v7369, %v7439
  %v7441 = vrot.slane %v7326, %v7440
  %v7442 = vlaneseq
  %v7443 = vshrl.u32 %v7442, 7
  %v7444 = vsub.s32 %v7369, %v7443
  %v7445 = vrot.slane %v7329, %v7444
  %v7446 = vlaneseq
  %v7447 = vshrl.u32 %v7446, 7
  %v7448 = vsub.s32 %v7369, %v7447
  %v7449 = vrot.slane %v7332, %v7448
  %v7450 = vlaneseq
  %v7451 = vshrl.u32 %v7450, 7
  %v7452 = vsub.s32 %v7369, %v7451
  %v7453 = vrot.slane %v7335, %v7452
  %v7454 = vlaneseq
  %v7455 = vshrl.u32 %v7454, 7
  %v7456 = vsub.s32 %v7369, %v7455
  %v7457 = vrot.slane %v7338, %v7456
  %v7458 = vlaneseq
  %v7459 = vshrl.u32 %v7458, 7
  %v7460 = vsub.s32 %v7369, %v7459
  %v7461 = vrot.slane %v7341, %v7460
  %v7462 = vlaneseq
  %v7463 = vshrl.u32 %v7462, 7
  %v7464 = vsub.s32 %v7369, %v7463
  %v7465 = vrot.slane %v7344, %v7464
  %v7466 = vlaneseq
  %v7467 = vshrl.u32 %v7466, 7
  %v7468 = vsub.s32 %v7369, %v7467
  %v7469 = vrot.slane %v7347, %v7468
  %v7470 = vlaneseq
  %v7471 = vshrl.u32 %v7470, 7
  %v7472 = vsub.s32 %v7369, %v7471
  %v7473 = vrot.slane %v7350, %v7472
  %v7474 = vlaneseq
  %v7475 = vshrl.u32 %v7474, 7
  %v7476 = vsub.s32 %v7369, %v7475
  %v7477 = vrot.slane %v7353, %v7476
  %v7478 = vlaneseq
  %v7479 = vshrl.u32 %v7478, 7
  %v7480 = vsub.s32 %v7369, %v7479
  %v7481 = vrot.slane %v7356, %v7480
  %v7482 = vlaneseq
  %v7483 = vshrl.u32 %v7482, 7
  %v7484 = vsub.s32 %v7369, %v7483
  %v7485 = vrot.slane %v7359, %v7484
  %v7486 = vlaneseq
  %v7487 = vshrl.u32 %v7486, 7
  %v7488 = vsub.s32 %v7369, %v7487
  %v7489 = vrot.slane %v7362, %v7488
  %v7490 = vlaneseq
  %v7491 = vshrl.u32 %v7490, 7
  %v7492 = vsub.s32 %v7369, %v7491
  %v7493 = vrot.slane %v7365, %v7492
  %v7494 = vlaneseq
  %v7495 = vshrl.u32 %v7494, 7
  %v7496 = vsub.s32 %v7369, %v7495
  %v7497 = vrot.slane %v7368, %v7496
  %v7498 = vsel %vm5415, %v7377, %v7373
  %v7499 = vsel %vm5417, %v7381, %v7498
  %v7500 = vsel %vm5419, %v7385, %v7499
  %v7501 = vsel %vm5421, %v7389, %v7500
  %v7502 = vsel %vm5423, %v7393, %v7501
  %v7503 = vsel %vm5425, %v7397, %v7502
  %v7504 = vsel %vm5427, %v7401, %v7503
  %v7505 = vsel %vm5415, %v7409, %v7405
  %v7506 = vsel %vm5417, %v7413, %v7505
  %v7507 = vsel %vm5419, %v7417, %v7506
  %v7508 = vsel %vm5421, %v7421, %v7507
  %v7509 = vsel %vm5423, %v7425, %v7508
  %v7510 = vsel %vm5425, %v7429, %v7509
  %v7511 = vsel %vm5427, %v7433, %v7510
  %v7512 = vsel %vm5415, %v7441, %v7437
  %v7513 = vsel %vm5417, %v7445, %v7512
  %v7514 = vsel %vm5419, %v7449, %v7513
  %v7515 = vsel %vm5421, %v7453, %v7514
  %v7516 = vsel %vm5423, %v7457, %v7515
  %v7517 = vsel %vm5425, %v7461, %v7516
  %v7518 = vsel %vm5427, %v7465, %v7517
  %v7519 = vsel %vm5415, %v7473, %v7469
  %v7520 = vsel %vm5417, %v7477, %v7519
  %v7521 = vsel %vm5419, %v7481, %v7520
  %v7522 = vsel %vm5421, %v7485, %v7521
  %v7523 = vsel %vm5423, %v7489, %v7522
  %v7524 = vsel %vm5425, %v7493, %v7523
  %v7525 = vsel %vm5427, %v7497, %v7524
  %vm7530 = vcmask 146528
  %7531 = vst.msk [vmem:[%s9] sm:$0xff] %vm7530, %v7504
  %7532 = vst.msk [vmem:[%s9 + $0x8] sm:$0xff] %vm7530, %v7511
  %7533 = vst.msk [vmem:[%s9 + $0x10] sm:$0xff] %vm7530, %v7518
  %7534 = vst.msk [vmem:[%s9 + $0x18] sm:$0xff] %vm7530, %v7525
  %v7535 = vlaneseq
  %v7536 = vshrl.u32 %v7535, 7
  %v7537 = vsub.s32 7, %v7536
  %v7538 = vrot.slane %v3532, %v7537
  %v7539 = vlaneseq
  %v7540 = vshrl.u32 %v7539, 7
  %v7541 = vsub.s32 7, %v7540
  %v7542 = vrot.slane %v3533, %v7541
  %v7543 = vlaneseq
  %v7544 = vshrl.u32 %v7543, 7
  %v7545 = vsub.s32 7, %v7544
  %v7546 = vrot.slane %v3534, %v7545
  %v7547 = vlaneseq
  %v7548 = vshrl.u32 %v7547, 7
  %v7549 = vsub.s32 7, %v7548
  %v7550 = vrot.slane %v3535, %v7549
  %v7551 = vlaneseq
  %v7552 = vshrl.u32 %v7551, 7
  %v7553 = vsub.s32 7, %v7552
  %v7554 = vrot.slane %v3536, %v7553
  %v7555 = vlaneseq
  %v7556 = vshrl.u32 %v7555, 7
  %v7557 = vsub.s32 7, %v7556
  %v7558 = vrot.slane %v3537, %v7557
  %v7559 = vlaneseq
  %v7560 = vshrl.u32 %v7559, 7
  %v7561 = vsub.s32 7, %v7560
  %v7562 = vrot.slane %v3538, %v7561
  %v7563 = vlaneseq
  %v7564 = vshrl.u32 %v7563, 7
  %v7565 = vsub.s32 7, %v7564
  %v7566 = vrot.slane %v3539, %v7565
  %v7567 = vlaneseq
  %v7568 = vshrl.u32 %v7567, 7
  %v7569 = vsub.s32 7, %v7568
  %v7570 = vrot.slane %v3540, %v7569
  %v7571 = vlaneseq
  %v7572 = vshrl.u32 %v7571, 7
  %v7573 = vsub.s32 7, %v7572
  %v7574 = vrot.slane %v3541, %v7573
  %v7575 = vlaneseq
  %v7576 = vshrl.u32 %v7575, 7
  %v7577 = vsub.s32 7, %v7576
  %v7578 = vrot.slane %v3542, %v7577
  %v7579 = vlaneseq
  %v7580 = vshrl.u32 %v7579, 7
  %v7581 = vsub.s32 7, %v7580
  %v7582 = vrot.slane %v3543, %v7581
  %v7583 = vlaneseq
  %v7584 = vshrl.u32 %v7583, 7
  %v7585 = vsub.s32 7, %v7584
  %v7586 = vrot.slane %v3544, %v7585
  %v7587 = vlaneseq
  %v7588 = vshrl.u32 %v7587, 7
  %v7589 = vsub.s32 7, %v7588
  %v7590 = vrot.slane %v3545, %v7589
  %v7591 = vlaneseq
  %v7592 = vshrl.u32 %v7591, 7
  %v7593 = vsub.s32 7, %v7592
  %v7594 = vrot.slane %v3546, %v7593
  %v7595 = vlaneseq
  %v7596 = vshrl.u32 %v7595, 7
  %v7597 = vsub.s32 7, %v7596
  %v7598 = vrot.slane %v3547, %v7597
  %v7599 = vlaneseq
  %v7600 = vshrl.u32 %v7599, 7
  %v7601 = vsub.s32 7, %v7600
  %v7602 = vrot.slane %v3548, %v7601
  %v7603 = vlaneseq
  %v7604 = vshrl.u32 %v7603, 7
  %v7605 = vsub.s32 7, %v7604
  %v7606 = vrot.slane %v3549, %v7605
  %v7607 = vlaneseq
  %v7608 = vshrl.u32 %v7607, 7
  %v7609 = vsub.s32 7, %v7608
  %v7610 = vrot.slane %v3550, %v7609
  %v7611 = vlaneseq
  %v7612 = vshrl.u32 %v7611, 7
  %v7613 = vsub.s32 7, %v7612
  %v7614 = vrot.slane %v3551, %v7613
  %v7615 = vlaneseq
  %v7616 = vshrl.u32 %v7615, 7
  %v7617 = vsub.s32 7, %v7616
  %v7618 = vrot.slane %v3552, %v7617
  %v7619 = vlaneseq
  %v7620 = vshrl.u32 %v7619, 7
  %v7621 = vsub.s32 7, %v7620
  %v7622 = vrot.slane %v3553, %v7621
  %v7623 = vlaneseq
  %v7624 = vshrl.u32 %v7623, 7
  %v7625 = vsub.s32 7, %v7624
  %v7626 = vrot.slane %v3554, %v7625
  %v7627 = vlaneseq
  %v7628 = vshrl.u32 %v7627, 7
  %v7629 = vsub.s32 7, %v7628
  %v7630 = vrot.slane %v3555, %v7629
  %v7631 = vlaneseq
  %v7632 = vshrl.u32 %v7631, 7
  %v7633 = vsub.s32 7, %v7632
  %v7634 = vrot.slane %v3556, %v7633
  %v7635 = vlaneseq
  %v7636 = vshrl.u32 %v7635, 7
  %v7637 = vsub.s32 7, %v7636
  %v7638 = vrot.slane %v3557, %v7637
  %v7639 = vlaneseq
  %v7640 = vshrl.u32 %v7639, 7
  %v7641 = vsub.s32 7, %v7640
  %v7642 = vrot.slane %v3558, %v7641
  %v7643 = vlaneseq
  %v7644 = vshrl.u32 %v7643, 7
  %v7645 = vsub.s32 7, %v7644
  %v7646 = vrot.slane %v3559, %v7645
  %v7647 = vlaneseq
  %v7648 = vshrl.u32 %v7647, 7
  %v7649 = vsub.s32 7, %v7648
  %v7650 = vrot.slane %v3560, %v7649
  %v7651 = vlaneseq
  %v7652 = vshrl.u32 %v7651, 7
  %v7653 = vsub.s32 7, %v7652
  %v7654 = vrot.slane %v3561, %v7653
  %v7655 = vlaneseq
  %v7656 = vshrl.u32 %v7655, 7
  %v7657 = vsub.s32 7, %v7656
  %v7658 = vrot.slane %v3562, %v7657
  %v7659 = vlaneseq
  %v7660 = vshrl.u32 %v7659, 7
  %v7661 = vsub.s32 7, %v7660
  %v7662 = vrot.slane %v3563, %v7661
  %v7663 = vmul.f32 %v3703, %v7538
  %v7664 = vmul.f32 %v3707, %v7542
  %v7665 = vmul.f32 %v3711, %v7546
  %v7666 = vmul.f32 %v3715, %v7550
  %v7667 = vmul.f32 %v3719, %v7554
  %v7668 = vmul.f32 %v3723, %v7558
  %v7669 = vmul.f32 %v3727, %v7562
  %v7670 = vmul.f32 %v3731, %v7566
  %v7671 = vmul.f32 %v3735, %v7570
  %v7672 = vmul.f32 %v3739, %v7574
  %v7673 = vmul.f32 %v3743, %v7578
  %v7674 = vmul.f32 %v3747, %v7582
  %v7675 = vmul.f32 %v3751, %v7586
  %v7676 = vmul.f32 %v3755, %v7590
  %v7677 = vmul.f32 %v3759, %v7594
  %v7678 = vmul.f32 %v3763, %v7598
  %v7679 = vmul.f32 %v3767, %v7602
  %v7680 = vmul.f32 %v3771, %v7606
  %v7681 = vmul.f32 %v3775, %v7610
  %v7682 = vmul.f32 %v3779, %v7614
  %v7683 = vmul.f32 %v3783, %v7618
  %v7684 = vmul.f32 %v3787, %v7622
  %v7685 = vmul.f32 %v3791, %v7626
  %v7686 = vmul.f32 %v3795, %v7630
  %v7687 = vmul.f32 %v3799, %v7634
  %v7688 = vmul.f32 %v3803, %v7638
  %v7689 = vmul.f32 %v3807, %v7642
  %v7690 = vmul.f32 %v3811, %v7646
  %v7691 = vmul.f32 %v3815, %v7650
  %v7692 = vmul.f32 %v3819, %v7654
  %v7693 = vmul.f32 %v3823, %v7658
  %v7694 = vmul.f32 %v3827, %v7662
  %v7695 = vsel %vm4244, %v7663, 0.0
  %7696 = vadd.xlane.f32.xlu0 %v7695
  %v7697 = vpop.xlane.xlu0 %7696
  %v7698 = vsel %vm4244, %v7664, 0.0
  %7699 = vadd.xlane.f32.xlu0 %v7698
  %v7700 = vpop.xlane.xlu0 %7699
  %v7701 = vsel %vm4244, %v7665, 0.0
  %7702 = vadd.xlane.f32.xlu0 %v7701
  %v7703 = vpop.xlane.xlu0 %7702
  %v7704 = vsel %vm4244, %v7666, 0.0
  %7705 = vadd.xlane.f32.xlu0 %v7704
  %v7706 = vpop.xlane.xlu0 %7705
  %v7707 = vsel %vm4244, %v7667, 0.0
  %7708 = vadd.xlane.f32.xlu0 %v7707
  %v7709 = vpop.xlane.xlu0 %7708
  %v7710 = vsel %vm4244, %v7668, 0.0
  %7711 = vadd.xlane.f32.xlu0 %v7710
  %v7712 = vpop.xlane.xlu0 %7711
  %v7713 = vsel %vm4244, %v7669, 0.0
  %7714 = vadd.xlane.f32.xlu0 %v7713
  %v7715 = vpop.xlane.xlu0 %7714
  %v7716 = vsel %vm4244, %v7670, 0.0
  %7717 = vadd.xlane.f32.xlu0 %v7716
  %v7718 = vpop.xlane.xlu0 %7717
  %v7719 = vsel %vm4244, %v7671, 0.0
  %7720 = vadd.xlane.f32.xlu0 %v7719
  %v7721 = vpop.xlane.xlu0 %7720
  %v7722 = vsel %vm4244, %v7672, 0.0
  %7723 = vadd.xlane.f32.xlu0 %v7722
  %v7724 = vpop.xlane.xlu0 %7723
  %v7725 = vsel %vm4244, %v7673, 0.0
  %7726 = vadd.xlane.f32.xlu0 %v7725
  %v7727 = vpop.xlane.xlu0 %7726
  %v7728 = vsel %vm4244, %v7674, 0.0
  %7729 = vadd.xlane.f32.xlu0 %v7728
  %v7730 = vpop.xlane.xlu0 %7729
  %v7731 = vsel %vm4244, %v7675, 0.0
  %7732 = vadd.xlane.f32.xlu0 %v7731
  %v7733 = vpop.xlane.xlu0 %7732
  %v7734 = vsel %vm4244, %v7676, 0.0
  %7735 = vadd.xlane.f32.xlu0 %v7734
  %v7736 = vpop.xlane.xlu0 %7735
  %v7737 = vsel %vm4244, %v7677, 0.0
  %7738 = vadd.xlane.f32.xlu0 %v7737
  %v7739 = vpop.xlane.xlu0 %7738
  %v7740 = vsel %vm4244, %v7678, 0.0
  %7741 = vadd.xlane.f32.xlu0 %v7740
  %v7742 = vpop.xlane.xlu0 %7741
  %v7743 = vsel %vm4244, %v7679, 0.0
  %7744 = vadd.xlane.f32.xlu0 %v7743
  %v7745 = vpop.xlane.xlu0 %7744
  %v7746 = vsel %vm4244, %v7680, 0.0
  %7747 = vadd.xlane.f32.xlu0 %v7746
  %v7748 = vpop.xlane.xlu0 %7747
  %v7749 = vsel %vm4244, %v7681, 0.0
  %7750 = vadd.xlane.f32.xlu0 %v7749
  %v7751 = vpop.xlane.xlu0 %7750
  %v7752 = vsel %vm4244, %v7682, 0.0
  %7753 = vadd.xlane.f32.xlu0 %v7752
  %v7754 = vpop.xlane.xlu0 %7753
  %v7755 = vsel %vm4244, %v7683, 0.0
  %7756 = vadd.xlane.f32.xlu0 %v7755
  %v7757 = vpop.xlane.xlu0 %7756
  %v7758 = vsel %vm4244, %v7684, 0.0
  %7759 = vadd.xlane.f32.xlu0 %v7758
  %v7760 = vpop.xlane.xlu0 %7759
  %v7761 = vsel %vm4244, %v7685, 0.0
  %7762 = vadd.xlane.f32.xlu0 %v7761
  %v7763 = vpop.xlane.xlu0 %7762
  %v7764 = vsel %vm4244, %v7686, 0.0
  %7765 = vadd.xlane.f32.xlu0 %v7764
  %v7766 = vpop.xlane.xlu0 %7765
  %v7767 = vsel %vm4244, %v7687, 0.0
  %7768 = vadd.xlane.f32.xlu0 %v7767
  %v7769 = vpop.xlane.xlu0 %7768
  %v7770 = vsel %vm4244, %v7688, 0.0
  %7771 = vadd.xlane.f32.xlu0 %v7770
  %v7772 = vpop.xlane.xlu0 %7771
  %v7773 = vsel %vm4244, %v7689, 0.0
  %7774 = vadd.xlane.f32.xlu0 %v7773
  %v7775 = vpop.xlane.xlu0 %7774
  %v7776 = vsel %vm4244, %v7690, 0.0
  %7777 = vadd.xlane.f32.xlu0 %v7776
  %v7778 = vpop.xlane.xlu0 %7777
  %v7779 = vsel %vm4244, %v7691, 0.0
  %7780 = vadd.xlane.f32.xlu0 %v7779
  %v7781 = vpop.xlane.xlu0 %7780
  %v7782 = vsel %vm4244, %v7692, 0.0
  %7783 = vadd.xlane.f32.xlu0 %v7782
  %v7784 = vpop.xlane.xlu0 %7783
  %v7785 = vsel %vm4244, %v7693, 0.0
  %7786 = vadd.xlane.f32.xlu0 %v7785
  %v7787 = vpop.xlane.xlu0 %7786
  %v7788 = vsel %vm4244, %v7694, 0.0
  %7789 = vadd.xlane.f32.xlu0 %v7788
  %v7790 = vpop.xlane.xlu0 %7789
  %v7791 = vmul.f32 %v3959, %v4544
  %v7792 = vmul.f32 %v3963, %v4548
  %v7793 = vmul.f32 %v3967, %v4552
  %v7794 = vmul.f32 %v3971, %v4556
  %v7795 = vmul.f32 %v3975, %v4560
  %v7796 = vmul.f32 %v3979, %v4564
  %v7797 = vmul.f32 %v3983, %v4568
  %v7798 = vmul.f32 %v3987, %v4572
  %v7799 = vmul.f32 %v3991, %v4576
  %v7800 = vmul.f32 %v3995, %v4580
  %v7801 = vmul.f32 %v3999, %v4584
  %v7802 = vmul.f32 %v4003, %v4588
  %v7803 = vmul.f32 %v4007, %v4592
  %v7804 = vmul.f32 %v4011, %v4596
  %v7805 = vmul.f32 %v4015, %v4600
  %v7806 = vmul.f32 %v4019, %v4604
  %v7807 = vmul.f32 %v4023, %v4608
  %v7808 = vmul.f32 %v4027, %v4612
  %v7809 = vmul.f32 %v4031, %v4616
  %v7810 = vmul.f32 %v4035, %v4620
  %v7811 = vmul.f32 %v4039, %v4624
  %v7812 = vmul.f32 %v4043, %v4628
  %v7813 = vmul.f32 %v4047, %v4632
  %v7814 = vmul.f32 %v4051, %v4636
  %v7815 = vmul.f32 %v4055, %v4640
  %v7816 = vmul.f32 %v4059, %v4644
  %v7817 = vmul.f32 %v4063, %v4648
  %v7818 = vmul.f32 %v4067, %v4652
  %v7819 = vmul.f32 %v4071, %v4656
  %v7820 = vmul.f32 %v4075, %v4660
  %v7821 = vmul.f32 %v4079, %v4664
  %v7822 = vmul.f32 %v4083, %v4668
  %v7823 = vsel %vm4244, %v7791, 0.0
  %7824 = vadd.xlane.f32.xlu0 %v7823
  %v7825 = vpop.xlane.xlu0 %7824
  %v7826 = vsel %vm4244, %v7792, 0.0
  %7827 = vadd.xlane.f32.xlu0 %v7826
  %v7828 = vpop.xlane.xlu0 %7827
  %v7829 = vsel %vm4244, %v7793, 0.0
  %7830 = vadd.xlane.f32.xlu0 %v7829
  %v7831 = vpop.xlane.xlu0 %7830
  %v7832 = vsel %vm4244, %v7794, 0.0
  %7833 = vadd.xlane.f32.xlu0 %v7832
  %v7834 = vpop.xlane.xlu0 %7833
  %v7835 = vsel %vm4244, %v7795, 0.0
  %7836 = vadd.xlane.f32.xlu0 %v7835
  %v7837 = vpop.xlane.xlu0 %7836
  %v7838 = vsel %vm4244, %v7796, 0.0
  %7839 = vadd.xlane.f32.xlu0 %v7838
  %v7840 = vpop.xlane.xlu0 %7839
  %v7841 = vsel %vm4244, %v7797, 0.0
  %7842 = vadd.xlane.f32.xlu0 %v7841
  %v7843 = vpop.xlane.xlu0 %7842
  %v7844 = vsel %vm4244, %v7798, 0.0
  %7845 = vadd.xlane.f32.xlu0 %v7844
  %v7846 = vpop.xlane.xlu0 %7845
  %v7847 = vsel %vm4244, %v7799, 0.0
  %7848 = vadd.xlane.f32.xlu0 %v7847
  %v7849 = vpop.xlane.xlu0 %7848
  %v7850 = vsel %vm4244, %v7800, 0.0
  %7851 = vadd.xlane.f32.xlu0 %v7850
  %v7852 = vpop.xlane.xlu0 %7851
  %v7853 = vsel %vm4244, %v7801, 0.0
  %7854 = vadd.xlane.f32.xlu0 %v7853
  %v7855 = vpop.xlane.xlu0 %7854
  %v7856 = vsel %vm4244, %v7802, 0.0
  %7857 = vadd.xlane.f32.xlu0 %v7856
  %v7858 = vpop.xlane.xlu0 %7857
  %v7859 = vsel %vm4244, %v7803, 0.0
  %7860 = vadd.xlane.f32.xlu0 %v7859
  %v7861 = vpop.xlane.xlu0 %7860
  %v7862 = vsel %vm4244, %v7804, 0.0
  %7863 = vadd.xlane.f32.xlu0 %v7862
  %v7864 = vpop.xlane.xlu0 %7863
  %v7865 = vsel %vm4244, %v7805, 0.0
  %7866 = vadd.xlane.f32.xlu0 %v7865
  %v7867 = vpop.xlane.xlu0 %7866
  %v7868 = vsel %vm4244, %v7806, 0.0
  %7869 = vadd.xlane.f32.xlu0 %v7868
  %v7870 = vpop.xlane.xlu0 %7869
  %v7871 = vsel %vm4244, %v7807, 0.0
  %7872 = vadd.xlane.f32.xlu0 %v7871
  %v7873 = vpop.xlane.xlu0 %7872
  %v7874 = vsel %vm4244, %v7808, 0.0
  %7875 = vadd.xlane.f32.xlu0 %v7874
  %v7876 = vpop.xlane.xlu0 %7875
  %v7877 = vsel %vm4244, %v7809, 0.0
  %7878 = vadd.xlane.f32.xlu0 %v7877
  %v7879 = vpop.xlane.xlu0 %7878
  %v7880 = vsel %vm4244, %v7810, 0.0
  %7881 = vadd.xlane.f32.xlu0 %v7880
  %v7882 = vpop.xlane.xlu0 %7881
  %v7883 = vsel %vm4244, %v7811, 0.0
  %7884 = vadd.xlane.f32.xlu0 %v7883
  %v7885 = vpop.xlane.xlu0 %7884
  %v7886 = vsel %vm4244, %v7812, 0.0
  %7887 = vadd.xlane.f32.xlu0 %v7886
  %v7888 = vpop.xlane.xlu0 %7887
  %v7889 = vsel %vm4244, %v7813, 0.0
  %7890 = vadd.xlane.f32.xlu0 %v7889
  %v7891 = vpop.xlane.xlu0 %7890
  %v7892 = vsel %vm4244, %v7814, 0.0
  %7893 = vadd.xlane.f32.xlu0 %v7892
  %v7894 = vpop.xlane.xlu0 %7893
  %v7895 = vsel %vm4244, %v7815, 0.0
  %7896 = vadd.xlane.f32.xlu0 %v7895
  %v7897 = vpop.xlane.xlu0 %7896
  %v7898 = vsel %vm4244, %v7816, 0.0
  %7899 = vadd.xlane.f32.xlu0 %v7898
  %v7900 = vpop.xlane.xlu0 %7899
  %v7901 = vsel %vm4244, %v7817, 0.0
  %7902 = vadd.xlane.f32.xlu0 %v7901
  %v7903 = vpop.xlane.xlu0 %7902
  %v7904 = vsel %vm4244, %v7818, 0.0
  %7905 = vadd.xlane.f32.xlu0 %v7904
  %v7906 = vpop.xlane.xlu0 %7905
  %v7907 = vsel %vm4244, %v7819, 0.0
  %7908 = vadd.xlane.f32.xlu0 %v7907
  %v7909 = vpop.xlane.xlu0 %7908
  %v7910 = vsel %vm4244, %v7820, 0.0
  %7911 = vadd.xlane.f32.xlu0 %v7910
  %v7912 = vpop.xlane.xlu0 %7911
  %v7913 = vsel %vm4244, %v7821, 0.0
  %7914 = vadd.xlane.f32.xlu0 %v7913
  %v7915 = vpop.xlane.xlu0 %7914
  %v7916 = vsel %vm4244, %v7822, 0.0
  %7917 = vadd.xlane.f32.xlu0 %v7916
  %v7918 = vpop.xlane.xlu0 %7917
  %v7919 = vadd.f32 %v7697, %v7825
  %v7920 = vadd.f32 %v7700, %v7828
  %v7921 = vadd.f32 %v7703, %v7831
  %v7922 = vadd.f32 %v7706, %v7834
  %v7923 = vadd.f32 %v7709, %v7837
  %v7924 = vadd.f32 %v7712, %v7840
  %v7925 = vadd.f32 %v7715, %v7843
  %v7926 = vadd.f32 %v7718, %v7846
  %v7927 = vadd.f32 %v7721, %v7849
  %v7928 = vadd.f32 %v7724, %v7852
  %v7929 = vadd.f32 %v7727, %v7855
  %v7930 = vadd.f32 %v7730, %v7858
  %v7931 = vadd.f32 %v7733, %v7861
  %v7932 = vadd.f32 %v7736, %v7864
  %v7933 = vadd.f32 %v7739, %v7867
  %v7934 = vadd.f32 %v7742, %v7870
  %v7935 = vadd.f32 %v7745, %v7873
  %v7936 = vadd.f32 %v7748, %v7876
  %v7937 = vadd.f32 %v7751, %v7879
  %v7938 = vadd.f32 %v7754, %v7882
  %v7939 = vadd.f32 %v7757, %v7885
  %v7940 = vadd.f32 %v7760, %v7888
  %v7941 = vadd.f32 %v7763, %v7891
  %v7942 = vadd.f32 %v7766, %v7894
  %v7943 = vadd.f32 %v7769, %v7897
  %v7944 = vadd.f32 %v7772, %v7900
  %v7945 = vadd.f32 %v7775, %v7903
  %v7946 = vadd.f32 %v7778, %v7906
  %v7947 = vadd.f32 %v7781, %v7909
  %v7948 = vadd.f32 %v7784, %v7912
  %v7949 = vadd.f32 %v7787, %v7915
  %v7950 = vadd.f32 %v7790, %v7918
  %v7951 = vld [vmem:[%s8] sm:$0xff]
  %v7952 = vld [vmem:[%s8 + $0x8] sm:$0xff]
  %v7953 = vld [vmem:[%s8 + $0x10] sm:$0xff]
  %v7954 = vld [vmem:[%s8 + $0x18] sm:$0xff]
  %v7959 = vlaneseq
  %v7960 = vshrl.u32 %v7959, 7
  %v7961 = vsub.s32 0, %v7960
  %v7962 = vrot.slane %v7951, %v7961
  %s7964 = sor.u32 256, 18
  %7965 = vbcast.lane.b32.xlu0 %v7962, %s7964
  %v7966 = vpop.permute.xlu0 %7965
  %v7967 = vlaneseq
  %v7968 = vshrl.u32 %v7967, 7
  %v7969 = vsub.s32 1, %v7968
  %v7970 = vrot.slane %v7951, %v7969
  %s7972 = sor.u32 256, 18
  %7973 = vbcast.lane.b32.xlu0 %v7970, %s7972
  %v7974 = vpop.permute.xlu0 %7973
  %v7975 = vlaneseq
  %v7976 = vshrl.u32 %v7975, 7
  %v7977 = vsub.s32 2, %v7976
  %v7978 = vrot.slane %v7951, %v7977
  %s7980 = sor.u32 256, 18
  %7981 = vbcast.lane.b32.xlu0 %v7978, %s7980
  %v7982 = vpop.permute.xlu0 %7981
  %v7983 = vlaneseq
  %v7984 = vshrl.u32 %v7983, 7
  %v7985 = vsub.s32 3, %v7984
  %v7986 = vrot.slane %v7951, %v7985
  %s7988 = sor.u32 256, 18
  %7989 = vbcast.lane.b32.xlu0 %v7986, %s7988
  %v7990 = vpop.permute.xlu0 %7989
  %v7991 = vlaneseq
  %v7992 = vshrl.u32 %v7991, 7
  %v7993 = vsub.s32 4, %v7992
  %v7994 = vrot.slane %v7951, %v7993
  %s7996 = sor.u32 256, 18
  %7997 = vbcast.lane.b32.xlu0 %v7994, %s7996
  %v7998 = vpop.permute.xlu0 %7997
  %v7999 = vlaneseq
  %v8000 = vshrl.u32 %v7999, 7
  %v8001 = vsub.s32 5, %v8000
  %v8002 = vrot.slane %v7951, %v8001
  %s8004 = sor.u32 256, 18
  %8005 = vbcast.lane.b32.xlu0 %v8002, %s8004
  %v8006 = vpop.permute.xlu0 %8005
  %v8007 = vlaneseq
  %v8008 = vshrl.u32 %v8007, 7
  %v8009 = vsub.s32 6, %v8008
  %v8010 = vrot.slane %v7951, %v8009
  %s8012 = sor.u32 256, 18
  %8013 = vbcast.lane.b32.xlu0 %v8010, %s8012
  %v8014 = vpop.permute.xlu0 %8013
  %v8015 = vlaneseq
  %v8016 = vshrl.u32 %v8015, 7
  %v8017 = vsub.s32 7, %v8016
  %v8018 = vrot.slane %v7951, %v8017
  %s8020 = sor.u32 256, 18
  %8021 = vbcast.lane.b32.xlu0 %v8018, %s8020
  %v8022 = vpop.permute.xlu0 %8021
  %v8023 = vlaneseq
  %v8024 = vshrl.u32 %v8023, 7
  %v8025 = vsub.s32 0, %v8024
  %v8026 = vrot.slane %v7952, %v8025
  %s8028 = sor.u32 256, 18
  %8029 = vbcast.lane.b32.xlu0 %v8026, %s8028
  %v8030 = vpop.permute.xlu0 %8029
  %v8031 = vlaneseq
  %v8032 = vshrl.u32 %v8031, 7
  %v8033 = vsub.s32 1, %v8032
  %v8034 = vrot.slane %v7952, %v8033
  %s8036 = sor.u32 256, 18
  %8037 = vbcast.lane.b32.xlu0 %v8034, %s8036
  %v8038 = vpop.permute.xlu0 %8037
  %v8039 = vlaneseq
  %v8040 = vshrl.u32 %v8039, 7
  %v8041 = vsub.s32 2, %v8040
  %v8042 = vrot.slane %v7952, %v8041
  %s8044 = sor.u32 256, 18
  %8045 = vbcast.lane.b32.xlu0 %v8042, %s8044
  %v8046 = vpop.permute.xlu0 %8045
  %v8047 = vlaneseq
  %v8048 = vshrl.u32 %v8047, 7
  %v8049 = vsub.s32 3, %v8048
  %v8050 = vrot.slane %v7952, %v8049
  %s8052 = sor.u32 256, 18
  %8053 = vbcast.lane.b32.xlu0 %v8050, %s8052
  %v8054 = vpop.permute.xlu0 %8053
  %v8055 = vlaneseq
  %v8056 = vshrl.u32 %v8055, 7
  %v8057 = vsub.s32 4, %v8056
  %v8058 = vrot.slane %v7952, %v8057
  %s8060 = sor.u32 256, 18
  %8061 = vbcast.lane.b32.xlu0 %v8058, %s8060
  %v8062 = vpop.permute.xlu0 %8061
  %v8063 = vlaneseq
  %v8064 = vshrl.u32 %v8063, 7
  %v8065 = vsub.s32 5, %v8064
  %v8066 = vrot.slane %v7952, %v8065
  %s8068 = sor.u32 256, 18
  %8069 = vbcast.lane.b32.xlu0 %v8066, %s8068
  %v8070 = vpop.permute.xlu0 %8069
  %v8071 = vlaneseq
  %v8072 = vshrl.u32 %v8071, 7
  %v8073 = vsub.s32 6, %v8072
  %v8074 = vrot.slane %v7952, %v8073
  %s8076 = sor.u32 256, 18
  %8077 = vbcast.lane.b32.xlu0 %v8074, %s8076
  %v8078 = vpop.permute.xlu0 %8077
  %v8079 = vlaneseq
  %v8080 = vshrl.u32 %v8079, 7
  %v8081 = vsub.s32 7, %v8080
  %v8082 = vrot.slane %v7952, %v8081
  %s8084 = sor.u32 256, 18
  %8085 = vbcast.lane.b32.xlu0 %v8082, %s8084
  %v8086 = vpop.permute.xlu0 %8085
  %v8087 = vlaneseq
  %v8088 = vshrl.u32 %v8087, 7
  %v8089 = vsub.s32 0, %v8088
  %v8090 = vrot.slane %v7953, %v8089
  %s8092 = sor.u32 256, 18
  %8093 = vbcast.lane.b32.xlu0 %v8090, %s8092
  %v8094 = vpop.permute.xlu0 %8093
  %v8095 = vlaneseq
  %v8096 = vshrl.u32 %v8095, 7
  %v8097 = vsub.s32 1, %v8096
  %v8098 = vrot.slane %v7953, %v8097
  %s8100 = sor.u32 256, 18
  %8101 = vbcast.lane.b32.xlu0 %v8098, %s8100
  %v8102 = vpop.permute.xlu0 %8101
  %v8103 = vlaneseq
  %v8104 = vshrl.u32 %v8103, 7
  %v8105 = vsub.s32 2, %v8104
  %v8106 = vrot.slane %v7953, %v8105
  %s8108 = sor.u32 256, 18
  %8109 = vbcast.lane.b32.xlu0 %v8106, %s8108
  %v8110 = vpop.permute.xlu0 %8109
  %v8111 = vlaneseq
  %v8112 = vshrl.u32 %v8111, 7
  %v8113 = vsub.s32 3, %v8112
  %v8114 = vrot.slane %v7953, %v8113
  %s8116 = sor.u32 256, 18
  %8117 = vbcast.lane.b32.xlu0 %v8114, %s8116
  %v8118 = vpop.permute.xlu0 %8117
  %v8119 = vlaneseq
  %v8120 = vshrl.u32 %v8119, 7
  %v8121 = vsub.s32 4, %v8120
  %v8122 = vrot.slane %v7953, %v8121
  %s8124 = sor.u32 256, 18
  %8125 = vbcast.lane.b32.xlu0 %v8122, %s8124
  %v8126 = vpop.permute.xlu0 %8125
  %v8127 = vlaneseq
  %v8128 = vshrl.u32 %v8127, 7
  %v8129 = vsub.s32 5, %v8128
  %v8130 = vrot.slane %v7953, %v8129
  %s8132 = sor.u32 256, 18
  %8133 = vbcast.lane.b32.xlu0 %v8130, %s8132
  %v8134 = vpop.permute.xlu0 %8133
  %v8135 = vlaneseq
  %v8136 = vshrl.u32 %v8135, 7
  %v8137 = vsub.s32 6, %v8136
  %v8138 = vrot.slane %v7953, %v8137
  %s8140 = sor.u32 256, 18
  %8141 = vbcast.lane.b32.xlu0 %v8138, %s8140
  %v8142 = vpop.permute.xlu0 %8141
  %v8143 = vlaneseq
  %v8144 = vshrl.u32 %v8143, 7
  %v8145 = vsub.s32 7, %v8144
  %v8146 = vrot.slane %v7953, %v8145
  %s8148 = sor.u32 256, 18
  %8149 = vbcast.lane.b32.xlu0 %v8146, %s8148
  %v8150 = vpop.permute.xlu0 %8149
  %v8151 = vlaneseq
  %v8152 = vshrl.u32 %v8151, 7
  %v8153 = vsub.s32 0, %v8152
  %v8154 = vrot.slane %v7954, %v8153
  %s8156 = sor.u32 256, 18
  %8157 = vbcast.lane.b32.xlu0 %v8154, %s8156
  %v8158 = vpop.permute.xlu0 %8157
  %v8159 = vlaneseq
  %v8160 = vshrl.u32 %v8159, 7
  %v8161 = vsub.s32 1, %v8160
  %v8162 = vrot.slane %v7954, %v8161
  %s8164 = sor.u32 256, 18
  %8165 = vbcast.lane.b32.xlu0 %v8162, %s8164
  %v8166 = vpop.permute.xlu0 %8165
  %v8167 = vlaneseq
  %v8168 = vshrl.u32 %v8167, 7
  %v8169 = vsub.s32 2, %v8168
  %v8170 = vrot.slane %v7954, %v8169
  %s8172 = sor.u32 256, 18
  %8173 = vbcast.lane.b32.xlu0 %v8170, %s8172
  %v8174 = vpop.permute.xlu0 %8173
  %v8175 = vlaneseq
  %v8176 = vshrl.u32 %v8175, 7
  %v8177 = vsub.s32 3, %v8176
  %v8178 = vrot.slane %v7954, %v8177
  %s8180 = sor.u32 256, 18
  %8181 = vbcast.lane.b32.xlu0 %v8178, %s8180
  %v8182 = vpop.permute.xlu0 %8181
  %v8183 = vlaneseq
  %v8184 = vshrl.u32 %v8183, 7
  %v8185 = vsub.s32 4, %v8184
  %v8186 = vrot.slane %v7954, %v8185
  %s8188 = sor.u32 256, 18
  %8189 = vbcast.lane.b32.xlu0 %v8186, %s8188
  %v8190 = vpop.permute.xlu0 %8189
  %v8191 = vlaneseq
  %v8192 = vshrl.u32 %v8191, 7
  %v8193 = vsub.s32 5, %v8192
  %v8194 = vrot.slane %v7954, %v8193
  %s8196 = sor.u32 256, 18
  %8197 = vbcast.lane.b32.xlu0 %v8194, %s8196
  %v8198 = vpop.permute.xlu0 %8197
  %v8199 = vlaneseq
  %v8200 = vshrl.u32 %v8199, 7
  %v8201 = vsub.s32 6, %v8200
  %v8202 = vrot.slane %v7954, %v8201
  %s8204 = sor.u32 256, 18
  %8205 = vbcast.lane.b32.xlu0 %v8202, %s8204
  %v8206 = vpop.permute.xlu0 %8205
  %v8207 = vlaneseq
  %v8208 = vshrl.u32 %v8207, 7
  %v8209 = vsub.s32 7, %v8208
  %v8210 = vrot.slane %v7954, %v8209
  %s8212 = sor.u32 256, 18
  %8213 = vbcast.lane.b32.xlu0 %v8210, %s8212
  %v8214 = vpop.permute.xlu0 %8213
  %v8247 = vadd.f32 %v7919, %v7966
  %v8248 = vadd.f32 %v7920, %v7974
  %v8249 = vadd.f32 %v7921, %v7982
  %v8250 = vadd.f32 %v7922, %v7990
  %v8251 = vadd.f32 %v7923, %v7998
  %v8252 = vadd.f32 %v7924, %v8006
  %v8253 = vadd.f32 %v7925, %v8014
  %v8254 = vadd.f32 %v7926, %v8022
  %v8255 = vadd.f32 %v7927, %v8030
  %v8256 = vadd.f32 %v7928, %v8038
  %v8257 = vadd.f32 %v7929, %v8046
  %v8258 = vadd.f32 %v7930, %v8054
  %v8259 = vadd.f32 %v7931, %v8062
  %v8260 = vadd.f32 %v7932, %v8070
  %v8261 = vadd.f32 %v7933, %v8078
  %v8262 = vadd.f32 %v7934, %v8086
  %v8263 = vadd.f32 %v7935, %v8094
  %v8264 = vadd.f32 %v7936, %v8102
  %v8265 = vadd.f32 %v7937, %v8110
  %v8266 = vadd.f32 %v7938, %v8118
  %v8267 = vadd.f32 %v7939, %v8126
  %v8268 = vadd.f32 %v7940, %v8134
  %v8269 = vadd.f32 %v7941, %v8142
  %v8270 = vadd.f32 %v7942, %v8150
  %v8271 = vadd.f32 %v7943, %v8158
  %v8272 = vadd.f32 %v7944, %v8166
  %v8273 = vadd.f32 %v7945, %v8174
  %v8274 = vadd.f32 %v7946, %v8182
  %v8275 = vadd.f32 %v7947, %v8190
  %v8276 = vadd.f32 %v7948, %v8198
  %v8277 = vadd.f32 %v7949, %v8206
  %v8278 = vadd.f32 %v7950, %v8214
  %8311 = vset.pattern.permute.xlu0 0
  %8312 = vperm.xlu0 %8311, %v8247
  %v8313 = vpop.permute.xlu0 %8312
  %8314 = vset.pattern.permute.xlu0 0
  %8315 = vperm.xlu0 %8314, %v8248
  %v8316 = vpop.permute.xlu0 %8315
  %8317 = vset.pattern.permute.xlu0 0
  %8318 = vperm.xlu0 %8317, %v8249
  %v8319 = vpop.permute.xlu0 %8318
  %8320 = vset.pattern.permute.xlu0 0
  %8321 = vperm.xlu0 %8320, %v8250
  %v8322 = vpop.permute.xlu0 %8321
  %8323 = vset.pattern.permute.xlu0 0
  %8324 = vperm.xlu0 %8323, %v8251
  %v8325 = vpop.permute.xlu0 %8324
  %8326 = vset.pattern.permute.xlu0 0
  %8327 = vperm.xlu0 %8326, %v8252
  %v8328 = vpop.permute.xlu0 %8327
  %8329 = vset.pattern.permute.xlu0 0
  %8330 = vperm.xlu0 %8329, %v8253
  %v8331 = vpop.permute.xlu0 %8330
  %8332 = vset.pattern.permute.xlu0 0
  %8333 = vperm.xlu0 %8332, %v8254
  %v8334 = vpop.permute.xlu0 %8333
  %8335 = vset.pattern.permute.xlu0 0
  %8336 = vperm.xlu0 %8335, %v8255
  %v8337 = vpop.permute.xlu0 %8336
  %8338 = vset.pattern.permute.xlu0 0
  %8339 = vperm.xlu0 %8338, %v8256
  %v8340 = vpop.permute.xlu0 %8339
  %8341 = vset.pattern.permute.xlu0 0
  %8342 = vperm.xlu0 %8341, %v8257
  %v8343 = vpop.permute.xlu0 %8342
  %8344 = vset.pattern.permute.xlu0 0
  %8345 = vperm.xlu0 %8344, %v8258
  %v8346 = vpop.permute.xlu0 %8345
  %8347 = vset.pattern.permute.xlu0 0
  %8348 = vperm.xlu0 %8347, %v8259
  %v8349 = vpop.permute.xlu0 %8348
  %8350 = vset.pattern.permute.xlu0 0
  %8351 = vperm.xlu0 %8350, %v8260
  %v8352 = vpop.permute.xlu0 %8351
  %8353 = vset.pattern.permute.xlu0 0
  %8354 = vperm.xlu0 %8353, %v8261
  %v8355 = vpop.permute.xlu0 %8354
  %8356 = vset.pattern.permute.xlu0 0
  %8357 = vperm.xlu0 %8356, %v8262
  %v8358 = vpop.permute.xlu0 %8357
  %8359 = vset.pattern.permute.xlu0 0
  %8360 = vperm.xlu0 %8359, %v8263
  %v8361 = vpop.permute.xlu0 %8360
  %8362 = vset.pattern.permute.xlu0 0
  %8363 = vperm.xlu0 %8362, %v8264
  %v8364 = vpop.permute.xlu0 %8363
  %8365 = vset.pattern.permute.xlu0 0
  %8366 = vperm.xlu0 %8365, %v8265
  %v8367 = vpop.permute.xlu0 %8366
  %8368 = vset.pattern.permute.xlu0 0
  %8369 = vperm.xlu0 %8368, %v8266
  %v8370 = vpop.permute.xlu0 %8369
  %8371 = vset.pattern.permute.xlu0 0
  %8372 = vperm.xlu0 %8371, %v8267
  %v8373 = vpop.permute.xlu0 %8372
  %8374 = vset.pattern.permute.xlu0 0
  %8375 = vperm.xlu0 %8374, %v8268
  %v8376 = vpop.permute.xlu0 %8375
  %8377 = vset.pattern.permute.xlu0 0
  %8378 = vperm.xlu0 %8377, %v8269
  %v8379 = vpop.permute.xlu0 %8378
  %8380 = vset.pattern.permute.xlu0 0
  %8381 = vperm.xlu0 %8380, %v8270
  %v8382 = vpop.permute.xlu0 %8381
  %8383 = vset.pattern.permute.xlu0 0
  %8384 = vperm.xlu0 %8383, %v8271
  %v8385 = vpop.permute.xlu0 %8384
  %8386 = vset.pattern.permute.xlu0 0
  %8387 = vperm.xlu0 %8386, %v8272
  %v8388 = vpop.permute.xlu0 %8387
  %8389 = vset.pattern.permute.xlu0 0
  %8390 = vperm.xlu0 %8389, %v8273
  %v8391 = vpop.permute.xlu0 %8390
  %8392 = vset.pattern.permute.xlu0 0
  %8393 = vperm.xlu0 %8392, %v8274
  %v8394 = vpop.permute.xlu0 %8393
  %8395 = vset.pattern.permute.xlu0 0
  %8396 = vperm.xlu0 %8395, %v8275
  %v8397 = vpop.permute.xlu0 %8396
  %8398 = vset.pattern.permute.xlu0 0
  %8399 = vperm.xlu0 %8398, %v8276
  %v8400 = vpop.permute.xlu0 %8399
  %8401 = vset.pattern.permute.xlu0 0
  %8402 = vperm.xlu0 %8401, %v8277
  %v8403 = vpop.permute.xlu0 %8402
  %8404 = vset.pattern.permute.xlu0 0
  %8405 = vperm.xlu0 %8404, %v8278
  %v8406 = vpop.permute.xlu0 %8405
  %v8407 = vadd.s32 %v5286, 4294967278
  %v8408 = vlaneseq
  %v8409 = vshrl.u32 %v8408, 7
  %v8410 = vsub.s32 %v8407, %v8409
  %v8411 = vrot.slane %v8313, %v8410
  %v8412 = vlaneseq
  %v8413 = vshrl.u32 %v8412, 7
  %v8414 = vsub.s32 %v8407, %v8413
  %v8415 = vrot.slane %v8316, %v8414
  %v8416 = vlaneseq
  %v8417 = vshrl.u32 %v8416, 7
  %v8418 = vsub.s32 %v8407, %v8417
  %v8419 = vrot.slane %v8319, %v8418
  %v8420 = vlaneseq
  %v8421 = vshrl.u32 %v8420, 7
  %v8422 = vsub.s32 %v8407, %v8421
  %v8423 = vrot.slane %v8322, %v8422
  %v8424 = vlaneseq
  %v8425 = vshrl.u32 %v8424, 7
  %v8426 = vsub.s32 %v8407, %v8425
  %v8427 = vrot.slane %v8325, %v8426
  %v8428 = vlaneseq
  %v8429 = vshrl.u32 %v8428, 7
  %v8430 = vsub.s32 %v8407, %v8429
  %v8431 = vrot.slane %v8328, %v8430
  %v8432 = vlaneseq
  %v8433 = vshrl.u32 %v8432, 7
  %v8434 = vsub.s32 %v8407, %v8433
  %v8435 = vrot.slane %v8331, %v8434
  %v8436 = vlaneseq
  %v8437 = vshrl.u32 %v8436, 7
  %v8438 = vsub.s32 %v8407, %v8437
  %v8439 = vrot.slane %v8334, %v8438
  %v8440 = vlaneseq
  %v8441 = vshrl.u32 %v8440, 7
  %v8442 = vsub.s32 %v8407, %v8441
  %v8443 = vrot.slane %v8337, %v8442
  %v8444 = vlaneseq
  %v8445 = vshrl.u32 %v8444, 7
  %v8446 = vsub.s32 %v8407, %v8445
  %v8447 = vrot.slane %v8340, %v8446
  %v8448 = vlaneseq
  %v8449 = vshrl.u32 %v8448, 7
  %v8450 = vsub.s32 %v8407, %v8449
  %v8451 = vrot.slane %v8343, %v8450
  %v8452 = vlaneseq
  %v8453 = vshrl.u32 %v8452, 7
  %v8454 = vsub.s32 %v8407, %v8453
  %v8455 = vrot.slane %v8346, %v8454
  %v8456 = vlaneseq
  %v8457 = vshrl.u32 %v8456, 7
  %v8458 = vsub.s32 %v8407, %v8457
  %v8459 = vrot.slane %v8349, %v8458
  %v8460 = vlaneseq
  %v8461 = vshrl.u32 %v8460, 7
  %v8462 = vsub.s32 %v8407, %v8461
  %v8463 = vrot.slane %v8352, %v8462
  %v8464 = vlaneseq
  %v8465 = vshrl.u32 %v8464, 7
  %v8466 = vsub.s32 %v8407, %v8465
  %v8467 = vrot.slane %v8355, %v8466
  %v8468 = vlaneseq
  %v8469 = vshrl.u32 %v8468, 7
  %v8470 = vsub.s32 %v8407, %v8469
  %v8471 = vrot.slane %v8358, %v8470
  %v8472 = vlaneseq
  %v8473 = vshrl.u32 %v8472, 7
  %v8474 = vsub.s32 %v8407, %v8473
  %v8475 = vrot.slane %v8361, %v8474
  %v8476 = vlaneseq
  %v8477 = vshrl.u32 %v8476, 7
  %v8478 = vsub.s32 %v8407, %v8477
  %v8479 = vrot.slane %v8364, %v8478
  %v8480 = vlaneseq
  %v8481 = vshrl.u32 %v8480, 7
  %v8482 = vsub.s32 %v8407, %v8481
  %v8483 = vrot.slane %v8367, %v8482
  %v8484 = vlaneseq
  %v8485 = vshrl.u32 %v8484, 7
  %v8486 = vsub.s32 %v8407, %v8485
  %v8487 = vrot.slane %v8370, %v8486
  %v8488 = vlaneseq
  %v8489 = vshrl.u32 %v8488, 7
  %v8490 = vsub.s32 %v8407, %v8489
  %v8491 = vrot.slane %v8373, %v8490
  %v8492 = vlaneseq
  %v8493 = vshrl.u32 %v8492, 7
  %v8494 = vsub.s32 %v8407, %v8493
  %v8495 = vrot.slane %v8376, %v8494
  %v8496 = vlaneseq
  %v8497 = vshrl.u32 %v8496, 7
  %v8498 = vsub.s32 %v8407, %v8497
  %v8499 = vrot.slane %v8379, %v8498
  %v8500 = vlaneseq
  %v8501 = vshrl.u32 %v8500, 7
  %v8502 = vsub.s32 %v8407, %v8501
  %v8503 = vrot.slane %v8382, %v8502
  %v8504 = vlaneseq
  %v8505 = vshrl.u32 %v8504, 7
  %v8506 = vsub.s32 %v8407, %v8505
  %v8507 = vrot.slane %v8385, %v8506
  %v8508 = vlaneseq
  %v8509 = vshrl.u32 %v8508, 7
  %v8510 = vsub.s32 %v8407, %v8509
  %v8511 = vrot.slane %v8388, %v8510
  %v8512 = vlaneseq
  %v8513 = vshrl.u32 %v8512, 7
  %v8514 = vsub.s32 %v8407, %v8513
  %v8515 = vrot.slane %v8391, %v8514
  %v8516 = vlaneseq
  %v8517 = vshrl.u32 %v8516, 7
  %v8518 = vsub.s32 %v8407, %v8517
  %v8519 = vrot.slane %v8394, %v8518
  %v8520 = vlaneseq
  %v8521 = vshrl.u32 %v8520, 7
  %v8522 = vsub.s32 %v8407, %v8521
  %v8523 = vrot.slane %v8397, %v8522
  %v8524 = vlaneseq
  %v8525 = vshrl.u32 %v8524, 7
  %v8526 = vsub.s32 %v8407, %v8525
  %v8527 = vrot.slane %v8400, %v8526
  %v8528 = vlaneseq
  %v8529 = vshrl.u32 %v8528, 7
  %v8530 = vsub.s32 %v8407, %v8529
  %v8531 = vrot.slane %v8403, %v8530
  %v8532 = vlaneseq
  %v8533 = vshrl.u32 %v8532, 7
  %v8534 = vsub.s32 %v8407, %v8533
  %v8535 = vrot.slane %v8406, %v8534
  %v8536 = vsel %vm5415, %v8415, %v8411
  %v8537 = vsel %vm5417, %v8419, %v8536
  %v8538 = vsel %vm5419, %v8423, %v8537
  %v8539 = vsel %vm5421, %v8427, %v8538
  %v8540 = vsel %vm5423, %v8431, %v8539
  %v8541 = vsel %vm5425, %v8435, %v8540
  %v8542 = vsel %vm5427, %v8439, %v8541
  %v8543 = vsel %vm5415, %v8447, %v8443
  %v8544 = vsel %vm5417, %v8451, %v8543
  %v8545 = vsel %vm5419, %v8455, %v8544
  %v8546 = vsel %vm5421, %v8459, %v8545
  %v8547 = vsel %vm5423, %v8463, %v8546
  %v8548 = vsel %vm5425, %v8467, %v8547
  %v8549 = vsel %vm5427, %v8471, %v8548
  %v8550 = vsel %vm5415, %v8479, %v8475
  %v8551 = vsel %vm5417, %v8483, %v8550
  %v8552 = vsel %vm5419, %v8487, %v8551
  %v8553 = vsel %vm5421, %v8491, %v8552
  %v8554 = vsel %vm5423, %v8495, %v8553
  %v8555 = vsel %vm5425, %v8499, %v8554
  %v8556 = vsel %vm5427, %v8503, %v8555
  %v8557 = vsel %vm5415, %v8511, %v8507
  %v8558 = vsel %vm5417, %v8515, %v8557
  %v8559 = vsel %vm5419, %v8519, %v8558
  %v8560 = vsel %vm5421, %v8523, %v8559
  %v8561 = vsel %vm5423, %v8527, %v8560
  %v8562 = vsel %vm5425, %v8531, %v8561
  %v8563 = vsel %vm5427, %v8535, %v8562
  %vm8568 = vcmask 195728
  %8569 = vst.msk [vmem:[%s9] sm:$0xff] %vm8568, %v8542
  %8570 = vst.msk [vmem:[%s9 + $0x8] sm:$0xff] %vm8568, %v8549
  %8571 = vst.msk [vmem:[%s9 + $0x10] sm:$0xff] %vm8568, %v8556
  %8572 = vst.msk [vmem:[%s9 + $0x18] sm:$0xff] %vm8568, %v8563
  // Predicated region
  $region38: #{tpu_custom_call.1} parent=0 // pred_check
    _
  $region39: #{tpu_custom_call.1} parent=0 // pred_check_branch
    %8574 = sbr.rel (0) target = $region41
  $region40: #{tpu_custom_call.1} parent=0 // pred_region
    _
  $region41: #{tpu_custom_call.1} parent=0 // pred_fallthru
    _
  // Predicated region
  $region42: #{tpu_custom_call.1} parent=0 // pred_check
    _
  $region43: #{tpu_custom_call.1} parent=0 // pred_check_branch
    %8576 = sbr.rel (0) target = $region45
  $region44: #{tpu_custom_call.1} parent=0 // pred_region
    _
  $region45: #{tpu_custom_call.1} parent=0 // pred_fallthru
    _

</llo_original>
